<compile_context>
chip_gen: v5e
topology: v5e:2x2
jax: 0.10.0
libtpu: 0.0.40
codegen_flags: <defaults>
</compile_context>

<pallas_src>
import math
import numpy as np

import jax
import jax.numpy as jnp
from jax.experimental import pallas as pl
from jax.experimental.pallas import tpu as pltpu


# ---------------------------------------------------------------------------
# helpers
# ---------------------------------------------------------------------------
def _round_up(x, m):
    return ((x + m - 1) // m) * m


def _vmem_budget(working_set_bytes):
    # generous headroom; floored at v5e's 16 MiB scoped default, capped for v7x
    return int(min(64 * 2 ** 20, max(16 * 2 ** 20, 4 * working_set_bytes)))


# ---------------------------------------------------------------------------
# Fused matmul + bias + ReLU kernel (used for the 2x2 / stride-2 convs)
# ---------------------------------------------------------------------------
def _mm_kernel(relu):
    def kernel(x_ref, w_ref, b_ref, o_ref):
        acc = jnp.dot(x_ref[...], w_ref[...], preferred_element_type=jnp.float32)
        acc = acc + b_ref[...]
        if relu:
            acc = jnp.maximum(acc, 0.0)
        o_ref[...] = acc.astype(o_ref.dtype)
    return kernel


def fused_matmul(x, w, b, relu=False, tm_cap=512):
    """x:(M,K), w:(K,N) bf16, b:(N,) f32 -> relu(x @ w + b), f32 (M,N)."""
    M, K = x.shape
    Kw, N = w.shape
    assert K == Kw, (K, Kw)
    # >=2 grid blocks whenever possible so both v7x TensorCores get work.
    tm = max(8, min(tm_cap, _round_up(pl.cdiv(M, 2), 8)))
    grid = (pl.cdiv(M, tm),)

    x = x.astype(jnp.bfloat16)
    w = w.astype(jnp.bfloat16)
    b2 = b.reshape(1, N).astype(jnp.float32)

    ws = 2 * (tm * K * 2 + K * N * 2 + tm * N * 4) + N * 4
    return pl.pallas_call(
        _mm_kernel(relu),
        out_shape=jax.ShapeDtypeStruct((M, N), jnp.float32),
        grid=grid,
        in_specs=[
            pl.BlockSpec((tm, K), lambda i: (i, 0)),
            pl.BlockSpec((K, N), lambda i: (0, 0)),
            pl.BlockSpec((1, N), lambda i: (0, 0)),
        ],
        out_specs=pl.BlockSpec((tm, N), lambda i: (i, 0)),
        compiler_params=pltpu.CompilerParams(
            dimension_semantics=("parallel",),
            vmem_limit_bytes=_vmem_budget(ws)),
    )(x, w, b2)


# ---------------------------------------------------------------------------
# Fused 3x3 "same" conv kernel: 9 taps accumulated in-kernel (no im2col),
# bias (+ optional per-position extra bias) + ReLU epilogue.
# ---------------------------------------------------------------------------
def _conv3x3_kernel(S, relu, has_extra):
    def kernel(*refs):
        if has_extra:
            x_ref, w_ref, b_ref, e_ref, o_ref = refs
        else:
            x_ref, w_ref, b_ref, o_ref = refs
        _, M, N = o_ref.shape
        acc = jnp.zeros((M, N), jnp.float32) + b_ref[...]
        for kh in range(3):
            for kw in range(3):
                off = kh * S + kw                      # static window offset
                win = x_ref[0, off:off + M, :].astype(jnp.bfloat16)
                acc = acc + jnp.dot(win, w_ref[kh * 3 + kw],
                                    preferred_element_type=jnp.float32)
        if has_extra:
            acc = acc + e_ref[0]
        if relu:
            acc = jnp.maximum(acc, 0.0)
        o_ref[0] = acc.astype(o_ref.dtype)
    return kernel


def conv2d_3x3_same(x_nhwc, w9, b, extra=None, relu=True):
    """3x3 stride-1 pad-1 conv on NHWC input.
      x_nhwc: (B,H,W,C) f32      w9: (9,C,N) bf16 (tap, Cin, Cout)   b: (N,) f32
      extra : optional (B,H,W,N) f32 per-position bias (camera fold)
    One grid step per batch element; the activation is passed as a flattened
    zero-padded buffer so every tap window is a contiguous row slice."""
    B, H, W, C = x_nhwc.shape
    N = w9.shape[-1]
    S = W + 2                    # padded row pitch
    P = (H + 3) * S              # flattened padded rows (+1 safety row so the
                                 # discarded junk columns never read OOB)
    M = H * S                    # rows computed per image (cols >= W are junk)

    xp = jnp.pad(x_nhwc.astype(jnp.float32),
                 ((0, 0), (1, 2), (1, 1), (0, 0))).reshape(B, P, C)
    b2 = b.reshape(1, N).astype(jnp.float32)

    args = [xp, w9.astype(jnp.bfloat16), b2]
    in_specs = [
        pl.BlockSpec((1, P, C), lambda bi: (bi, 0, 0)),
        pl.BlockSpec((9, C, N), lambda bi: (0, 0, 0)),
        pl.BlockSpec((1, N), lambda bi: (0, 0)),
    ]
    if extra is not None:
        e = jnp.pad(extra.astype(jnp.float32),
                    ((0, 0), (0, 0), (0, 2), (0, 0))).reshape(B, M, N)
        args.append(e)
        in_specs.append(pl.BlockSpec((1, M, N), lambda bi: (bi, 0, 0)))

    ws = 2 * (P * C * 4 + 9 * C * N * 2
              + M * N * 4 * (2 if extra is not None else 1))
    out = pl.pallas_call(
        _conv3x3_kernel(S, relu, extra is not None),
        out_shape=jax.ShapeDtypeStruct((B, M, N), jnp.float32),
        grid=(B,),
        in_specs=in_specs,
        out_specs=pl.BlockSpec((1, M, N), lambda bi: (bi, 0, 0)),
        compiler_params=pltpu.CompilerParams(
            dimension_semantics=("parallel",),
            vmem_limit_bytes=_vmem_budget(ws)),
    )(*args)
    # drop the junk (padding-pitch) columns
    return out.reshape(B, H, S, N)[:, :, :W, :]


# ---------------------------------------------------------------------------
# 2x2 / stride-2 conv (pure reshape im2col: no data duplication)
# ---------------------------------------------------------------------------
def conv2d_k2s2(x_nhwc, w, b, relu=True):
    """w: (K, Cout) bf16 with K rows ordered (kh, kw, c); K may be zero-padded
    up to a lane-friendly size (e.g. nc*4=12 -> 128 for the first conv)."""
    B, H, W, C = x_nhwc.shape
    Ho, Wo = H // 2, W // 2
    p = x_nhwc.reshape(B, Ho, 2, Wo, 2, C)
    p = jnp.transpose(p, (0, 1, 3, 2, 4, 5)).reshape(B * Ho * Wo, 4 * C)
    K = w.shape[0]
    if K > 4 * C:
        p = jnp.pad(p, ((0, 0), (0, K - 4 * C)))
    y = fused_matmul(p, w, b, relu=relu)
    return y.reshape(B, Ho, Wo, w.shape[1])


# ---------------------------------------------------------------------------
# CameraEncoder + camera->bias fold for the `enc` residual block
# ---------------------------------------------------------------------------
def camera_encode(cam):
    """(B,5) -> (B,7): [pos(3), cos(yaw), sin(yaw), cos(pitch), sin(pitch)]."""
    cam = cam.reshape(cam.shape[0], -1)
    pos, yaw, pitch = cam[:, :3], cam[:, 3:4], cam[:, 4:5]
    return jnp.concatenate(
        [pos, jnp.cos(yaw), jnp.sin(yaw), jnp.cos(pitch), jnp.sin(pitch)],
        axis=1)


def camera_bias_map(cm, w_cam9, w_skip_cam, H, W):
    """Exact contribution of the (spatially constant, zero-padded) camera
    channels through the 3x3 main conv + 1x1 skip conv, as a per-position
    bias.  cm:(B,7)  w_cam9:(9,7,N)  w_skip_cam:(7,N)  ->  (B,H,W,N) f32."""
    B = cm.shape[0]
    N = w_cam9.shape[-1]
    taps = jnp.einsum('bc,tcn->btn', cm, w_cam9).reshape(B, 3, 3, N)
    k = jnp.arange(3)
    yy = jnp.arange(H)[:, None] + k[None, :]            # padded row hit by tap
    xx = jnp.arange(W)[:, None] + k[None, :]
    vy = ((yy >= 1) & (yy <= H)).astype(jnp.float32)    # tap inside image?
    vx = ((xx >= 1) & (xx <= W)).astype(jnp.float32)
    valid = vy[:, None, :, None] * vx[None, :, None, :]  # (H,W,3,3)
    contrib = jnp.einsum('hwij,bijn->bhwn', valid, taps)
    skip = cm @ w_skip_cam                               # (B,N)
    return contrib + skip[:, None, None, :]


# ---------------------------------------------------------------------------
# Parameters: generated in PyTorch Conv2d layout, then prepared for the kernels
# ---------------------------------------------------------------------------
def _torch_conv_init(key, cout, cin, k):
    fan_in = cin * k * k
    bound = 1.0 / math.sqrt(fan_in)
    wk, bk = jax.random.split(key)
    w = jax.random.uniform(wk, (cout, cin, k, k), minval=-bound, maxval=bound,
                           dtype=jnp.float32)
    b = jax.random.uniform(bk, (cout,), minval=-bound, maxval=bound,
                           dtype=jnp.float32)
    return w, b


def make_raw_params(key, nc=3):
    ks = jax.random.split(key, 8)
    return {
        "c1":      _torch_conv_init(ks[0], 256, nc, 2),    # Conv2d(nc,256,2,2)
        "r1_main": _torch_conv_init(ks[1], 128, 256, 3),   # ResConv(256,128).main
        "r1_skip": _torch_conv_init(ks[2], 128, 256, 1),   # ResConv(256,128).skip
        "c2":      _torch_conv_init(ks[3], 256, 128, 2),   # Conv2d(128,256,2,2)
        "r2_main": _torch_conv_init(ks[4], 128, 263, 3),   # ResConv(263,128).main
        "r2_skip": _torch_conv_init(ks[5], 128, 263, 1),   # ResConv(263,128).skip
        "e1":      _torch_conv_init(ks[6], 256, 128, 3),   # Conv2d(128,256,3,p=1)
        "e2":      _torch_conv_init(ks[7], 256, 256, 3),   # Conv2d(256,256,3,p=1)
    }


def _k2s2_mat(w, pad_k_to=None):
    """(Cout,Cin,2,2) -> (K,Cout) bf16, K rows ordered (kh,kw,c)."""
    cout = w.shape[0]
    m = jnp.transpose(w, (2, 3, 1, 0)).reshape(-1, cout)
    if pad_k_to is not None and pad_k_to > m.shape[0]:
        m = jnp.pad(m, ((0, pad_k_to - m.shape[0]), (0, 0)))
    return m.astype(jnp.bfloat16)


def _c3_taps(w):
    """(Cout,Cin,3,3) -> (9,Cin,Cout) f32, tap index = kh*3+kw."""
    cout, cin = w.shape[0], w.shape[1]
    return jnp.transpose(w, (2, 3, 1, 0)).reshape(9, cin, cout)


def prepare_params(raw):
    """Transpose PyTorch (Cout,Cin,kh,kw) weights into kernel layouts, fold the
    1x1 skips into the 3x3 center taps, split out the camera rows of the enc
    residual block, and cast matmul weights to bf16."""
    p = {}
    # img_enc
    p["c1_w"] = _k2s2_mat(raw["c1"][0], pad_k_to=128)      # pad tiny K to 128
    p["c1_b"] = raw["c1"][1]

    r1 = _c3_taps(raw["r1_main"][0])                       # (9,256,128)
    r1 = r1.at[4].add(raw["r1_skip"][0][:, :, 0, 0].T)     # fold 1x1 skip
    p["r1_w9"] = r1.astype(jnp.bfloat16)
    p["r1_b"] = raw["r1_main"][1] + raw["r1_skip"][1]

    p["c2_w"] = _k2s2_mat(raw["c2"][0])
    p["c2_b"] = raw["c2"][1]

    # enc: residual block on concat([image(256), camera(7)]) channels
    r2_main_w, r2_main_b = raw["r2_main"]
    r2_skip_w, r2_skip_b = raw["r2_skip"]
    r2_img = _c3_taps(r2_main_w[:, :256])                  # (9,256,128)
    r2_img = r2_img.at[4].add(r2_skip_w[:, :256, 0, 0].T)  # fold 1x1 skip
    p["r2_w9"] = r2_img.astype(jnp.bfloat16)
    p["r2_wcam9"] = _c3_taps(r2_main_w[:, 256:])           # (9,7,128) f32
    p["r2_wskipcam"] = r2_skip_w[:, 256:, 0, 0].T          # (7,128)  f32
    p["r2_b"] = r2_main_b + r2_skip_b

    p["e1_w9"] = _c3_taps(raw["e1"][0]).astype(jnp.bfloat16)
    p["e1_b"] = raw["e1"][1]
    p["e2_w9"] = _c3_taps(raw["e2"][0]).astype(jnp.bfloat16)
    p["e2_b"] = raw["e2"][1]
    return p


# ---------------------------------------------------------------------------
# TowerRepresentationNetwork forward
# ---------------------------------------------------------------------------
def repnet_forward(params, image_nchw, camera):
    """image: (B,nc,H,W) NCHW, camera: (B,5) -> (B,256,H//4,W//4) NCHW."""
    x = jnp.transpose(image_nchw, (0, 2, 3, 1))            # NHWC internally
    B, H, W, _ = x.shape

    # img_enc
    h = conv2d_k2s2(x, params["c1_w"], params["c1_b"], relu=True)
    h = conv2d_3x3_same(h, params["r1_w9"], params["r1_b"], relu=True)
    h = conv2d_k2s2(h, params["c2_w"], params["c2_b"], relu=True)

    # enc: camera channels folded into a per-position bias (no 263-ch concat)
    cm = camera_encode(camera)
    Hq, Wq = H // 4, W // 4
    cam_bias = camera_bias_map(cm, params["r2_wcam9"], params["r2_wskipcam"],
                               Hq, Wq)
    h = conv2d_3x3_same(h, params["r2_w9"], params["r2_b"],
                        extra=cam_bias, relu=True)
    h = conv2d_3x3_same(h, params["e1_w9"], params["e1_b"], relu=True)
    h = conv2d_3x3_same(h, params["e2_w9"], params["e2_b"], relu=True)
    # TODO(synk): use_instance_norm=True branch (InstanceNorm2d) not implemented.
    # TODO(synk): r2/e1/e2 could be fused into one kernel keeping the 4x4
    #             intermediates in VMEM scratch; left separate for robustness.
    return jnp.transpose(h, (0, 3, 1, 2))                  # back to NCHW


_repnet_jit = jax.jit(repnet_forward)


# ---------------------------------------------------------------------------
# ContextNetwork forward (train_init_representation=False, use_mean=False)
# ---------------------------------------------------------------------------
def context_network_forward(params, contexts, nheight=16, nwidth=16, nz=256):
    context_sizes = [c[0].shape[0] if c[0] is not None else 0 for c in contexts]
    with_init_context_sizes = [s + 1 for s in context_sizes]

    images = [c[0] for c in contexts if c[0] is not None]
    cameras = [c[1] for c in contexts if c[0] is not None]

    reps_list, keys_list = [], []
    if len(images) > 0:
        packed_images = jnp.concatenate(images, axis=0)
        packed_cameras = jnp.concatenate(cameras, axis=0)
        packed_reps = _repnet_jit(params, packed_images, packed_cameras)
        packed_keys = camera_encode(packed_cameras).reshape(-1, 7, 1, 1)
        nz_sizes = [s for s in context_sizes if s > 0]
        splits = [int(v) for v in np.cumsum(nz_sizes)[:-1]]
        reps_list = jnp.split(packed_reps, splits, axis=0) if splits else [packed_reps]
        keys_list = jnp.split(packed_keys, splits, axis=0) if splits else [packed_keys]

    Hh, Ww = nheight // 4, nwidth // 4
    representations, keys = [], []
    idx = 0
    for s in context_sizes:
        init_rep = jnp.zeros((1, nz, Hh, Ww), jnp.float32)  # train_init_representation=False
        init_key = jnp.zeros((1, 7, 1, 1), jnp.float32)
        if s > 0:
            representations.append(jnp.concatenate([init_rep, reps_list[idx]], axis=0))
            keys.append(jnp.concatenate([init_key, keys_list[idx]], axis=0))
            idx += 1
        else:
            representations.append(init_rep)
            keys.append(init_key)
    return representations, keys, with_init_context_sizes


# ---------------------------------------------------------------------------
# Main
# ---------------------------------------------------------------------------
if __name__ == "__main__":
    H = W = 16     # small spatial size (must be a multiple of 4)
    NC = 3
    key = jax.random.PRNGKey(0)
    pkey, d0, d1, c0, c1 = jax.random.split(key, 5)

    params = prepare_params(make_raw_params(pkey, nc=NC))

    # Two episodes: episode 0 has 2 context images, episode 1 has 1.
    contexts = [
        (jax.random.normal(d0, (2, NC, H, W), jnp.float32),
         jax.random.normal(c0, (2, 5), jnp.float32)),
        (jax.random.normal(d1, (1, NC, H, W), jnp.float32),
         jax.random.normal(c1, (1, 5), jnp.float32)),
    ]

    representations, keys, with_init_sizes = context_network_forward(
        params, contexts, nheight=H, nwidth=W, nz=256)

    for r in representations:
        jax.block_until_ready(r)
    for k in keys:
        jax.block_until_ready(k)

    assert representations[0].shape == (3, 256, H // 4, W // 4)
    assert representations[1].shape == (2, 256, H // 4, W // 4)
    assert keys[0].shape == (3, 7, 1, 1)
    assert keys[1].shape == (2, 7, 1, 1)
    assert with_init_sizes == [3, 2]
    for r in representations:
        assert bool(jnp.all(jnp.isfinite(r)))

    print("KERNEL_OK")
</pallas_src>

<mosaic_0001>
module attributes {stable_mosaic.version = 11 : i64} {
  func.func @kernel(%arg0: i32, %arg1: memref<96x128xbf16, #tpu.memory_space<vmem>>, %arg2: memref<128x256xbf16, #tpu.memory_space<vmem>>, %arg3: memref<1x256xf32, #tpu.memory_space<vmem>>, %arg4: memref<96x256xf32, #tpu.memory_space<vmem>>) attributes {dimension_semantics = [#tpu.dimension_semantics<parallel>], iteration_bounds = array<i64: 2>, scalar_prefetch = 0 : i64, scratch_operands = 0 : i64, tpu.core_type = #tpu.core_type<tc>, window_params = [{transform_indices = @transform_0, window_bounds = array<i64: 96, 128>}, {pipeline_mode = #tpu.pipeline_mode<synchronous>, transform_indices = @transform_1, window_bounds = array<i64: 128, 256>}, {pipeline_mode = #tpu.pipeline_mode<synchronous>, transform_indices = @transform_2, window_bounds = array<i64: 1, 256>}, {transform_indices = @transform_3, window_bounds = array<i64: 96, 256>}]} {
    %c0 = arith.constant 0 : index
    %c0_0 = arith.constant 0 : index
    %0 = vector.load %arg1[%c0, %c0_0] : memref<96x128xbf16, #tpu.memory_space<vmem>>, vector<96x128xbf16>
    %c0_1 = arith.constant 0 : index
    %c0_2 = arith.constant 0 : index
    %1 = vector.load %arg2[%c0_1, %c0_2] : memref<128x256xbf16, #tpu.memory_space<vmem>>, vector<128x256xbf16>
    %cst = arith.constant dense<0.000000e+00> : vector<96x256xf32>
    %2 = tpu.matmul %0, %1, %cst {dimension_numbers = #tpu.dot_dimension_numbers<[1], [0], [0], [1], [0, 0, 1, 1], [], []>} : vector<96x128xbf16>, vector<128x256xbf16>, vector<96x256xf32> -> vector<96x256xf32>
    %c0_3 = arith.constant 0 : index
    %c0_4 = arith.constant 0 : index
    %3 = vector.load %arg3[%c0_3, %c0_4] : memref<1x256xf32, #tpu.memory_space<vmem>>, vector<1x256xf32>
    %4 = vector.broadcast %3 : vector<1x256xf32> to vector<96x256xf32>
    %5 = arith.addf %2, %4 : vector<96x256xf32>
    %cst_5 = arith.constant 0.000000e+00 : f32
    %6 = vector.broadcast %cst_5 : f32 to vector<96x256xf32>
    %7 = arith.maximumf %5, %6 : vector<96x256xf32>
    %c0_6 = arith.constant 0 : index
    %c0_7 = arith.constant 0 : index
    %8 = vector.load %arg4[%c0_6, %c0_7] : memref<96x256xf32, #tpu.memory_space<vmem>>, vector<96x256xf32>
    tpu.vector_store %arg4[%c0_6, %c0_7], %7 {strides = array<i32>} : memref<96x256xf32, #tpu.memory_space<vmem>>, vector<96x256xf32>,
    return
  }
  func.func @transform_0(%arg0: i32) -> (i32, i32) {
    %c0_i32 = arith.constant 0 : i32
    %c0_i32_0 = arith.constant 0 : i32
    return %arg0, %c0_i32 : i32, i32
  }
  func.func @transform_1(%arg0: i32) -> (i32, i32) {
    %c0_i32 = arith.constant 0 : i32
    %c0_i32_0 = arith.constant 0 : i32
    %c0_i32_1 = arith.constant 0 : i32
    return %c0_i32, %c0_i32_0 : i32, i32
  }
  func.func @transform_2(%arg0: i32) -> (i32, i32) {
    %c0_i32 = arith.constant 0 : i32
    %c0_i32_0 = arith.constant 0 : i32
    %c0_i32_1 = arith.constant 0 : i32
    return %c0_i32, %c0_i32_0 : i32, i32
  }
  func.func @transform_3(%arg0: i32) -> (i32, i32) {
    %c0_i32 = arith.constant 0 : i32
    %c0_i32_0 = arith.constant 0 : i32
    return %arg0, %c0_i32 : i32, i32
  }
}

module attributes {stable_mosaic.version = 11 : i64} {
  func.func @kernel(%arg0: i32, %arg1: memref<1x110x256xf32, #tpu.memory_space<vmem>>, %arg2: memref<9x256x128xbf16, #tpu.memory_space<vmem>>, %arg3: memref<1x128xf32, #tpu.memory_space<vmem>>, %arg4: memref<1x80x128xf32, #tpu.memory_space<vmem>>) attributes {dimension_semantics = [#tpu.dimension_semantics<parallel>], iteration_bounds = array<i64: 3>, scalar_prefetch = 0 : i64, scratch_operands = 0 : i64, tpu.core_type = #tpu.core_type<tc>, window_params = [{transform_indices = @transform_0, window_bounds = array<i64: 1, 110, 256>}, {pipeline_mode = #tpu.pipeline_mode<synchronous>, transform_indices = @transform_1, window_bounds = array<i64: 9, 256, 128>}, {pipeline_mode = #tpu.pipeline_mode<synchronous>, transform_indices = @transform_2, window_bounds = array<i64: 1, 128>}, {transform_indices = @transform_3, window_bounds = array<i64: 1, 80, 128>}]} {
    %cst = arith.constant 0.000000e+00 : f32
    %0 = vector.broadcast %cst : f32 to vector<80x128xf32>
    %c0 = arith.constant 0 : index
    %c0_0 = arith.constant 0 : index
    %1 = vector.load %arg3[%c0, %c0_0] : memref<1x128xf32, #tpu.memory_space<vmem>>, vector<1x128xf32>
    %2 = vector.broadcast %1 : vector<1x128xf32> to vector<80x128xf32>
    %3 = arith.addf %0, %2 : vector<80x128xf32>
    %c0_1 = arith.constant 0 : index
    %c0_2 = arith.constant 0 : index
    %c0_3 = arith.constant 0 : index
    %4 = vector.load %arg1[%c0_1, %c0_2, %c0_3] : memref<1x110x256xf32, #tpu.memory_space<vmem>>, vector<1x80x256xf32>
    %5 = vector.shape_cast %4 : vector<1x80x256xf32> to vector<80x256xf32>
    %6 = arith.truncf %5 : vector<80x256xf32> to vector<80x256xbf16>
    %c0_4 = arith.constant 0 : index
    %c0_5 = arith.constant 0 : index
    %c0_6 = arith.constant 0 : index
    %7 = vector.load %arg2[%c0_4, %c0_5, %c0_6] : memref<9x256x128xbf16, #tpu.memory_space<vmem>>, vector<1x256x128xbf16>
    %8 = vector.shape_cast %7 : vector<1x256x128xbf16> to vector<256x128xbf16>
    %cst_7 = arith.constant dense<0.000000e+00> : vector<80x128xf32>
    %9 = tpu.matmul %6, %8, %cst_7 {dimension_numbers = #tpu.dot_dimension_numbers<[1], [0], [0], [1], [0, 0, 1, 1], [], []>} : vector<80x256xbf16>, vector<256x128xbf16>, vector<80x128xf32> -> vector<80x128xf32>
    %10 = arith.addf %3, %9 : vector<80x128xf32>
    %c0_8 = arith.constant 0 : index
    %c1 = arith.constant 1 : index
    %c0_9 = arith.constant 0 : index
    %11 = vector.load %arg1[%c0_8, %c1, %c0_9] : memref<1x110x256xf32, #tpu.memory_space<vmem>>, vector<1x80x256xf32>
    %12 = vector.shape_cast %11 : vector<1x80x256xf32> to vector<80x256xf32>
    %13 = arith.truncf %12 : vector<80x256xf32> to vector<80x256xbf16>
    %c1_10 = arith.constant 1 : index
    %c0_11 = arith.constant 0 : index
    %c0_12 = arith.constant 0 : index
    %14 = vector.load %arg2[%c1_10, %c0_11, %c0_12] : memref<9x256x128xbf16, #tpu.memory_space<vmem>>, vector<1x256x128xbf16>
    %15 = vector.shape_cast %14 : vector<1x256x128xbf16> to vector<256x128xbf16>
    %cst_13 = arith.constant dense<0.000000e+00> : vector<80x128xf32>
    %16 = tpu.matmul %13, %15, %cst_13 {dimension_numbers = #tpu.dot_dimension_numbers<[1], [0], [0], [1], [0, 0, 1, 1], [], []>} : vector<80x256xbf16>, vector<256x128xbf16>, vector<80x128xf32> -> vector<80x128xf32>
    %17 = arith.addf %10, %16 : vector<80x128xf32>
    %c0_14 = arith.constant 0 : index
    %c2 = arith.constant 2 : index
    %c0_15 = arith.constant 0 : index
    %18 = vector.load %arg1[%c0_14, %c2, %c0_15] : memref<1x110x256xf32, #tpu.memory_space<vmem>>, vector<1x80x256xf32>
    %19 = vector.shape_cast %18 : vector<1x80x256xf32> to vector<80x256xf32>
    %20 = arith.truncf %19 : vector<80x256xf32> to vector<80x256xbf16>
    %c2_16 = arith.constant 2 : index
    %c0_17 = arith.constant 0 : index
    %c0_18 = arith.constant 0 : index
    %21 = vector.load %arg2[%c2_16, %c0_17, %c0_18] : memref<9x256x128xbf16, #tpu.memory_space<vmem>>, vector<1x256x128xbf16>
    %22 = vector.shape_cast %21 : vector<1x256x128xbf16> to vector<256x128xbf16>
    %cst_19 = arith.constant dense<0.000000e+00> : vector<80x128xf32>
    %23 = tpu.matmul %20, %22, %cst_19 {dimension_numbers = #tpu.dot_dimension_numbers<[1], [0], [0], [1], [0, 0, 1, 1], [], []>} : vector<80x256xbf16>, vector<256x128xbf16>, vector<80x128xf32> -> vector<80x128xf32>
    %24 = arith.addf %17, %23 : vector<80x128xf32>
    %c0_20 = arith.constant 0 : index
    %c10 = arith.constant 10 : index
    %c0_21 = arith.constant 0 : index
    %25 = vector.load %arg1[%c0_20, %c10, %c0_21] : memref<1x110x256xf32, #tpu.memory_space<vmem>>, vector<1x80x256xf32>
    %26 = vector.shape_cast %25 : vector<1x80x256xf32> to vector<80x256xf32>
    %27 = arith.truncf %26 : vector<80x256xf32> to vector<80x256xbf16>
    %c3 = arith.constant 3 : index
    %c0_22 = arith.constant 0 : index
    %c0_23 = arith.constant 0 : index
    %28 = vector.load %arg2[%c3, %c0_22, %c0_23] : memref<9x256x128xbf16, #tpu.memory_space<vmem>>, vector<1x256x128xbf16>
    %29 = vector.shape_cast %28 : vector<1x256x128xbf16> to vector<256x128xbf16>
    %cst_24 = arith.constant dense<0.000000e+00> : vector<80x128xf32>
    %30 = tpu.matmul %27, %29, %cst_24 {dimension_numbers = #tpu.dot_dimension_numbers<[1], [0], [0], [1], [0, 0, 1, 1], [], []>} : vector<80x256xbf16>, vector<256x128xbf16>, vector<80x128xf32> -> vector<80x128xf32>
    %31 = arith.addf %24, %30 : vector<80x128xf32>
    %c0_25 = arith.constant 0 : index
    %c11 = arith.constant 11 : index
    %c0_26 = arith.constant 0 : index
    %32 = vector.load %arg1[%c0_25, %c11, %c0_26] : memref<1x110x256xf32, #tpu.memory_space<vmem>>, vector<1x80x256xf32>
    %33 = vector.shape_cast %32 : vector<1x80x256xf32> to vector<80x256xf32>
    %34 = arith.truncf %33 : vector<80x256xf32> to vector<80x256xbf16>
    %c4 = arith.constant 4 : index
    %c0_27 = arith.constant 0 : index
    %c0_28 = arith.constant 0 : index
    %35 = vector.load %arg2[%c4, %c0_27, %c0_28] : memref<9x256x128xbf16, #tpu.memory_space<vmem>>, vector<1x256x128xbf16>
    %36 = vector.shape_cast %35 : vector<1x256x128xbf16> to vector<256x128xbf16>
    %cst_29 = arith.constant dense<0.000000e+00> : vector<80x128xf32>
    %37 = tpu.matmul %34, %36, %cst_29 {dimension_numbers = #tpu.dot_dimension_numbers<[1], [0], [0], [1], [0, 0, 1, 1], [], []>} : vector<80x256xbf16>, vector<256x128xbf16>, vector<80x128xf32> -> vector<80x128xf32>
    %38 = arith.addf %31, %37 : vector<80x128xf32>
    %c0_30 = arith.constant 0 : index
    %c12 = arith.constant 12 : index
    %c0_31 = arith.constant 0 : index
    %39 = vector.load %arg1[%c0_30, %c12, %c0_31] : memref<1x110x256xf32, #tpu.memory_space<vmem>>, vector<1x80x256xf32>
    %40 = vector.shape_cast %39 : vector<1x80x256xf32> to vector<80x256xf32>
    %41 = arith.truncf %40 : vector<80x256xf32> to vector<80x256xbf16>
    %c5 = arith.constant 5 : index
    %c0_32 = arith.constant 0 : index
    %c0_33 = arith.constant 0 : index
    %42 = vector.load %arg2[%c5, %c0_32, %c0_33] : memref<9x256x128xbf16, #tpu.memory_space<vmem>>, vector<1x256x128xbf16>
    %43 = vector.shape_cast %42 : vector<1x256x128xbf16> to vector<256x128xbf16>
    %cst_34 = arith.constant dense<0.000000e+00> : vector<80x128xf32>
    %44 = tpu.matmul %41, %43, %cst_34 {dimension_numbers = #tpu.dot_dimension_numbers<[1], [0], [0], [1], [0, 0, 1, 1], [], []>} : vector<80x256xbf16>, vector<256x128xbf16>, vector<80x128xf32> -> vector<80x128xf32>
    %45 = arith.addf %38, %44 : vector<80x128xf32>
    %c0_35 = arith.constant 0 : index
    %c20 = arith.constant 20 : index
    %c0_36 = arith.constant 0 : index
    %46 = vector.load %arg1[%c0_35, %c20, %c0_36] : memref<1x110x256xf32, #tpu.memory_space<vmem>>, vector<1x80x256xf32>
    %47 = vector.shape_cast %46 : vector<1x80x256xf32> to vector<80x256xf32>
    %48 = arith.truncf %47 : vector<80x256xf32> to vector<80x256xbf16>
    %c6 = arith.constant 6 : index
    %c0_37 = arith.constant 0 : index
    %c0_38 = arith.constant 0 : index
    %49 = vector.load %arg2[%c6, %c0_37, %c0_38] : memref<9x256x128xbf16, #tpu.memory_space<vmem>>, vector<1x256x128xbf16>
    %50 = vector.shape_cast %49 : vector<1x256x128xbf16> to vector<256x128xbf16>
    %cst_39 = arith.constant dense<0.000000e+00> : vector<80x128xf32>
    %51 = tpu.matmul %48, %50, %cst_39 {dimension_numbers = #tpu.dot_dimension_numbers<[1], [0], [0], [1], [0, 0, 1, 1], [], []>} : vector<80x256xbf16>, vector<256x128xbf16>, vector<80x128xf32> -> vector<80x128xf32>
    %52 = arith.addf %45, %51 : vector<80x128xf32>
    %c0_40 = arith.constant 0 : index
    %c21 = arith.constant 21 : index
    %c0_41 = arith.constant 0 : index
    %53 = vector.load %arg1[%c0_40, %c21, %c0_41] : memref<1x110x256xf32, #tpu.memory_space<vmem>>, vector<1x80x256xf32>
    %54 = vector.shape_cast %53 : vector<1x80x256xf32> to vector<80x256xf32>
    %55 = arith.truncf %54 : vector<80x256xf32> to vector<80x256xbf16>
    %c7 = arith.constant 7 : index
    %c0_42 = arith.constant 0 : index
    %c0_43 = arith.constant 0 : index
    %56 = vector.load %arg2[%c7, %c0_42, %c0_43] : memref<9x256x128xbf16, #tpu.memory_space<vmem>>, vector<1x256x128xbf16>
    %57 = vector.shape_cast %56 : vector<1x256x128xbf16> to vector<256x128xbf16>
    %cst_44 = arith.constant dense<0.000000e+00> : vector<80x128xf32>
    %58 = tpu.matmul %55, %57, %cst_44 {dimension_numbers = #tpu.dot_dimension_numbers<[1], [0], [0], [1], [0, 0, 1, 1], [], []>} : vector<80x256xbf16>, vector<256x128xbf16>, vector<80x128xf32> -> vector<80x128xf32>
    %59 = arith.addf %52, %58 : vector<80x128xf32>
    %c0_45 = arith.constant 0 : index
    %c22 = arith.constant 22 : index
    %c0_46 = arith.constant 0 : index
    %60 = vector.load %arg1[%c0_45, %c22, %c0_46] : memref<1x110x256xf32, #tpu.memory_space<vmem>>, vector<1x80x256xf32>
    %61 = vector.shape_cast %60 : vector<1x80x256xf32> to vector<80x256xf32>
    %62 = arith.truncf %61 : vector<80x256xf32> to vector<80x256xbf16>
    %c8 = arith.constant 8 : index
    %c0_47 = arith.constant 0 : index
    %c0_48 = arith.constant 0 : index
    %63 = vector.load %arg2[%c8, %c0_47, %c0_48] : memref<9x256x128xbf16, #tpu.memory_space<vmem>>, vector<1x256x128xbf16>
    %64 = vector.shape_cast %63 : vector<1x256x128xbf16> to vector<256x128xbf16>
    %cst_49 = arith.constant dense<0.000000e+00> : vector<80x128xf32>
    %65 = tpu.matmul %62, %64, %cst_49 {dimension_numbers = #tpu.dot_dimension_numbers<[1], [0], [0], [1], [0, 0, 1, 1], [], []>} : vector<80x256xbf16>, vector<256x128xbf16>, vector<80x128xf32> -> vector<80x128xf32>
    %66 = arith.addf %59, %65 : vector<80x128xf32>
    %cst_50 = arith.constant 0.000000e+00 : f32
    %67 = vector.broadcast %cst_50 : f32 to vector<80x128xf32>
    %68 = arith.maximumf %66, %67 : vector<80x128xf32>
    %c0_51 = arith.constant 0 : index
    %c0_52 = arith.constant 0 : index
    %c0_53 = arith.constant 0 : index
    %69 = vector.load %arg4[%c0_51, %c0_52, %c0_53] : memref<1x80x128xf32, #tpu.memory_space<vmem>>, vector<1x80x128xf32>
    %70 = vector.shape_cast %69 : vector<1x80x128xf32> to vector<80x128xf32>
    %71 = vector.shape_cast %68 : vector<80x128xf32> to vector<1x80x128xf32>
    tpu.vector_store %arg4[%c0_51, %c0_52, %c0_53], %71 {strides = array<i32>} : memref<1x80x128xf32, #tpu.memory_space<vmem>>, vector<1x80x128xf32>,
    return
  }
  func.func @transform_0(%arg0: i32) -> (i32, i32, i32) {
    %c0_i32 = arith.constant 0 : i32
    %c0_i32_0 = arith.constant 0 : i32
    %c0_i32_1 = arith.constant 0 : i32
    return %arg0, %c0_i32, %c0_i32_0 : i32, i32, i32
  }
  func.func @transform_1(%arg0: i32) -> (i32, i32, i32) {
    %c0_i32 = arith.constant 0 : i32
    %c0_i32_0 = arith.constant 0 : i32
    %c0_i32_1 = arith.constant 0 : i32
    %c0_i32_2 = arith.constant 0 : i32
    return %c0_i32, %c0_i32_0, %c0_i32_1 : i32, i32, i32
  }
  func.func @transform_2(%arg0: i32) -> (i32, i32) {
    %c0_i32 = arith.constant 0 : i32
    %c0_i32_0 = arith.constant 0 : i32
    %c0_i32_1 = arith.constant 0 : i32
    return %c0_i32, %c0_i32_0 : i32, i32
  }
  func.func @transform_3(%arg0: i32) -> (i32, i32, i32) {
    %c0_i32 = arith.constant 0 : i32
    %c0_i32_0 = arith.constant 0 : i32
    %c0_i32_1 = arith.constant 0 : i32
    return %arg0, %c0_i32, %c0_i32_0 : i32, i32, i32
  }
}

module attributes {stable_mosaic.version = 11 : i64} {
  func.func @kernel(%arg0: i32, %arg1: memref<24x512xbf16, #tpu.memory_space<vmem>>, %arg2: memref<512x256xbf16, #tpu.memory_space<vmem>>, %arg3: memref<1x256xf32, #tpu.memory_space<vmem>>, %arg4: memref<24x256xf32, #tpu.memory_space<vmem>>) attributes {dimension_semantics = [#tpu.dimension_semantics<parallel>], iteration_bounds = array<i64: 2>, scalar_prefetch = 0 : i64, scratch_operands = 0 : i64, tpu.core_type = #tpu.core_type<tc>, window_params = [{transform_indices = @transform_0, window_bounds = array<i64: 24, 512>}, {pipeline_mode = #tpu.pipeline_mode<synchronous>, transform_indices = @transform_1, window_bounds = array<i64: 512, 256>}, {pipeline_mode = #tpu.pipeline_mode<synchronous>, transform_indices = @transform_2, window_bounds = array<i64: 1, 256>}, {transform_indices = @transform_3, window_bounds = array<i64: 24, 256>}]} {
    %c0 = arith.constant 0 : index
    %c0_0 = arith.constant 0 : index
    %0 = vector.load %arg1[%c0, %c0_0] : memref<24x512xbf16, #tpu.memory_space<vmem>>, vector<24x512xbf16>
    %c0_1 = arith.constant 0 : index
    %c0_2 = arith.constant 0 : index
    %1 = vector.load %arg2[%c0_1, %c0_2] : memref<512x256xbf16, #tpu.memory_space<vmem>>, vector<512x256xbf16>
    %cst = arith.constant dense<0.000000e+00> : vector<24x256xf32>
    %2 = tpu.matmul %0, %1, %cst {dimension_numbers = #tpu.dot_dimension_numbers<[1], [0], [0], [1], [0, 0, 1, 1], [], []>} : vector<24x512xbf16>, vector<512x256xbf16>, vector<24x256xf32> -> vector<24x256xf32>
    %c0_3 = arith.constant 0 : index
    %c0_4 = arith.constant 0 : index
    %3 = vector.load %arg3[%c0_3, %c0_4] : memref<1x256xf32, #tpu.memory_space<vmem>>, vector<1x256xf32>
    %4 = vector.broadcast %3 : vector<1x256xf32> to vector<24x256xf32>
    %5 = arith.addf %2, %4 : vector<24x256xf32>
    %cst_5 = arith.constant 0.000000e+00 : f32
    %6 = vector.broadcast %cst_5 : f32 to vector<24x256xf32>
    %7 = arith.maximumf %5, %6 : vector<24x256xf32>
    %c0_6 = arith.constant 0 : index
    %c0_7 = arith.constant 0 : index
    %8 = vector.load %arg4[%c0_6, %c0_7] : memref<24x256xf32, #tpu.memory_space<vmem>>, vector<24x256xf32>
    tpu.vector_store %arg4[%c0_6, %c0_7], %7 {strides = array<i32>} : memref<24x256xf32, #tpu.memory_space<vmem>>, vector<24x256xf32>,
    return
  }
  func.func @transform_0(%arg0: i32) -> (i32, i32) {
    %c0_i32 = arith.constant 0 : i32
    %c0_i32_0 = arith.constant 0 : i32
    return %arg0, %c0_i32 : i32, i32
  }
  func.func @transform_1(%arg0: i32) -> (i32, i32) {
    %c0_i32 = arith.constant 0 : i32
    %c0_i32_0 = arith.constant 0 : i32
    %c0_i32_1 = arith.constant 0 : i32
    return %c0_i32, %c0_i32_0 : i32, i32
  }
  func.func @transform_2(%arg0: i32) -> (i32, i32) {
    %c0_i32 = arith.constant 0 : i32
    %c0_i32_0 = arith.constant 0 : i32
    %c0_i32_1 = arith.constant 0 : i32
    return %c0_i32, %c0_i32_0 : i32, i32
  }
  func.func @transform_3(%arg0: i32) -> (i32, i32) {
    %c0_i32 = arith.constant 0 : i32
    %c0_i32_0 = arith.constant 0 : i32
    return %arg0, %c0_i32 : i32, i32
  }
}

module attributes {stable_mosaic.version = 11 : i64} {
  func.func @kernel(%arg0: i32, %arg1: memref<1x42x256xf32, #tpu.memory_space<vmem>>, %arg2: memref<9x256x128xbf16, #tpu.memory_space<vmem>>, %arg3: memref<1x128xf32, #tpu.memory_space<vmem>>, %arg4: memref<1x24x128xf32, #tpu.memory_space<vmem>>, %arg5: memref<1x24x128xf32, #tpu.memory_space<vmem>>) attributes {dimension_semantics = [#tpu.dimension_semantics<parallel>], iteration_bounds = array<i64: 3>, scalar_prefetch = 0 : i64, scratch_operands = 0 : i64, tpu.core_type = #tpu.core_type<tc>, window_params = [{transform_indices = @transform_0, window_bounds = array<i64: 1, 42, 256>}, {pipeline_mode = #tpu.pipeline_mode<synchronous>, transform_indices = @transform_1, window_bounds = array<i64: 9, 256, 128>}, {pipeline_mode = #tpu.pipeline_mode<synchronous>, transform_indices = @transform_2, window_bounds = array<i64: 1, 128>}, {transform_indices = @transform_3, window_bounds = array<i64: 1, 24, 128>}, {transform_indices = @transform_4, window_bounds = array<i64: 1, 24, 128>}]} {
    %cst = arith.constant 0.000000e+00 : f32
    %0 = vector.broadcast %cst : f32 to vector<24x128xf32>
    %c0 = arith.constant 0 : index
    %c0_0 = arith.constant 0 : index
    %1 = vector.load %arg3[%c0, %c0_0] : memref<1x128xf32, #tpu.memory_space<vmem>>, vector<1x128xf32>
    %2 = vector.broadcast %1 : vector<1x128xf32> to vector<24x128xf32>
    %3 = arith.addf %0, %2 : vector<24x128xf32>
    %c0_1 = arith.constant 0 : index
    %c0_2 = arith.constant 0 : index
    %c0_3 = arith.constant 0 : index
    %4 = vector.load %arg1[%c0_1, %c0_2, %c0_3] : memref<1x42x256xf32, #tpu.memory_space<vmem>>, vector<1x24x256xf32>
    %5 = vector.shape_cast %4 : vector<1x24x256xf32> to vector<24x256xf32>
    %6 = arith.truncf %5 : vector<24x256xf32> to vector<24x256xbf16>
    %c0_4 = arith.constant 0 : index
    %c0_5 = arith.constant 0 : index
    %c0_6 = arith.constant 0 : index
    %7 = vector.load %arg2[%c0_4, %c0_5, %c0_6] : memref<9x256x128xbf16, #tpu.memory_space<vmem>>, vector<1x256x128xbf16>
    %8 = vector.shape_cast %7 : vector<1x256x128xbf16> to vector<256x128xbf16>
    %cst_7 = arith.constant dense<0.000000e+00> : vector<24x128xf32>
    %9 = tpu.matmul %6, %8, %cst_7 {dimension_numbers = #tpu.dot_dimension_numbers<[1], [0], [0], [1], [0, 0, 1, 1], [], []>} : vector<24x256xbf16>, vector<256x128xbf16>, vector<24x128xf32> -> vector<24x128xf32>
    %10 = arith.addf %3, %9 : vector<24x128xf32>
    %c0_8 = arith.constant 0 : index
    %c1 = arith.constant 1 : index
    %c0_9 = arith.constant 0 : index
    %11 = vector.load %arg1[%c0_8, %c1, %c0_9] : memref<1x42x256xf32, #tpu.memory_space<vmem>>, vector<1x24x256xf32>
    %12 = vector.shape_cast %11 : vector<1x24x256xf32> to vector<24x256xf32>
    %13 = arith.truncf %12 : vector<24x256xf32> to vector<24x256xbf16>
    %c1_10 = arith.constant 1 : index
    %c0_11 = arith.constant 0 : index
    %c0_12 = arith.constant 0 : index
    %14 = vector.load %arg2[%c1_10, %c0_11, %c0_12] : memref<9x256x128xbf16, #tpu.memory_space<vmem>>, vector<1x256x128xbf16>
    %15 = vector.shape_cast %14 : vector<1x256x128xbf16> to vector<256x128xbf16>
    %cst_13 = arith.constant dense<0.000000e+00> : vector<24x128xf32>
    %16 = tpu.matmul %13, %15, %cst_13 {dimension_numbers = #tpu.dot_dimension_numbers<[1], [0], [0], [1], [0, 0, 1, 1], [], []>} : vector<24x256xbf16>, vector<256x128xbf16>, vector<24x128xf32> -> vector<24x128xf32>
    %17 = arith.addf %10, %16 : vector<24x128xf32>
    %c0_14 = arith.constant 0 : index
    %c2 = arith.constant 2 : index
    %c0_15 = arith.constant 0 : index
    %18 = vector.load %arg1[%c0_14, %c2, %c0_15] : memref<1x42x256xf32, #tpu.memory_space<vmem>>, vector<1x24x256xf32>
    %19 = vector.shape_cast %18 : vector<1x24x256xf32> to vector<24x256xf32>
    %20 = arith.truncf %19 : vector<24x256xf32> to vector<24x256xbf16>
    %c2_16 = arith.constant 2 : index
    %c0_17 = arith.constant 0 : index
    %c0_18 = arith.constant 0 : index
    %21 = vector.load %arg2[%c2_16, %c0_17, %c0_18] : memref<9x256x128xbf16, #tpu.memory_space<vmem>>, vector<1x256x128xbf16>
    %22 = vector.shape_cast %21 : vector<1x256x128xbf16> to vector<256x128xbf16>
    %cst_19 = arith.constant dense<0.000000e+00> : vector<24x128xf32>
    %23 = tpu.matmul %20, %22, %cst_19 {dimension_numbers = #tpu.dot_dimension_numbers<[1], [0], [0], [1], [0, 0, 1, 1], [], []>} : vector<24x256xbf16>, vector<256x128xbf16>, vector<24x128xf32> -> vector<24x128xf32>
    %24 = arith.addf %17, %23 : vector<24x128xf32>
    %c0_20 = arith.constant 0 : index
    %c6 = arith.constant 6 : index
    %c0_21 = arith.constant 0 : index
    %25 = vector.load %arg1[%c0_20, %c6, %c0_21] : memref<1x42x256xf32, #tpu.memory_space<vmem>>, vector<1x24x256xf32>
    %26 = vector.shape_cast %25 : vector<1x24x256xf32> to vector<24x256xf32>
    %27 = arith.truncf %26 : vector<24x256xf32> to vector<24x256xbf16>
    %c3 = arith.constant 3 : index
    %c0_22 = arith.constant 0 : index
    %c0_23 = arith.constant 0 : index
    %28 = vector.load %arg2[%c3, %c0_22, %c0_23] : memref<9x256x128xbf16, #tpu.memory_space<vmem>>, vector<1x256x128xbf16>
    %29 = vector.shape_cast %28 : vector<1x256x128xbf16> to vector<256x128xbf16>
    %cst_24 = arith.constant dense<0.000000e+00> : vector<24x128xf32>
    %30 = tpu.matmul %27, %29, %cst_24 {dimension_numbers = #tpu.dot_dimension_numbers<[1], [0], [0], [1], [0, 0, 1, 1], [], []>} : vector<24x256xbf16>, vector<256x128xbf16>, vector<24x128xf32> -> vector<24x128xf32>
    %31 = arith.addf %24, %30 : vector<24x128xf32>
    %c0_25 = arith.constant 0 : index
    %c7 = arith.constant 7 : index
    %c0_26 = arith.constant 0 : index
    %32 = vector.load %arg1[%c0_25, %c7, %c0_26] : memref<1x42x256xf32, #tpu.memory_space<vmem>>, vector<1x24x256xf32>
    %33 = vector.shape_cast %32 : vector<1x24x256xf32> to vector<24x256xf32>
    %34 = arith.truncf %33 : vector<24x256xf32> to vector<24x256xbf16>
    %c4 = arith.constant 4 : index
    %c0_27 = arith.constant 0 : index
    %c0_28 = arith.constant 0 : index
    %35 = vector.load %arg2[%c4, %c0_27, %c0_28] : memref<9x256x128xbf16, #tpu.memory_space<vmem>>, vector<1x256x128xbf16>
    %36 = vector.shape_cast %35 : vector<1x256x128xbf16> to vector<256x128xbf16>
    %cst_29 = arith.constant dense<0.000000e+00> : vector<24x128xf32>
    %37 = tpu.matmul %34, %36, %cst_29 {dimension_numbers = #tpu.dot_dimension_numbers<[1], [0], [0], [1], [0, 0, 1, 1], [], []>} : vector<24x256xbf16>, vector<256x128xbf16>, vector<24x128xf32> -> vector<24x128xf32>
    %38 = arith.addf %31, %37 : vector<24x128xf32>
    %c0_30 = arith.constant 0 : index
    %c8 = arith.constant 8 : index
    %c0_31 = arith.constant 0 : index
    %39 = vector.load %arg1[%c0_30, %c8, %c0_31] : memref<1x42x256xf32, #tpu.memory_space<vmem>>, vector<1x24x256xf32>
    %40 = vector.shape_cast %39 : vector<1x24x256xf32> to vector<24x256xf32>
    %41 = arith.truncf %40 : vector<24x256xf32> to vector<24x256xbf16>
    %c5 = arith.constant 5 : index
    %c0_32 = arith.constant 0 : index
    %c0_33 = arith.constant 0 : index
    %42 = vector.load %arg2[%c5, %c0_32, %c0_33] : memref<9x256x128xbf16, #tpu.memory_space<vmem>>, vector<1x256x128xbf16>
    %43 = vector.shape_cast %42 : vector<1x256x128xbf16> to vector<256x128xbf16>
    %cst_34 = arith.constant dense<0.000000e+00> : vector<24x128xf32>
    %44 = tpu.matmul %41, %43, %cst_34 {dimension_numbers = #tpu.dot_dimension_numbers<[1], [0], [0], [1], [0, 0, 1, 1], [], []>} : vector<24x256xbf16>, vector<256x128xbf16>, vector<24x128xf32> -> vector<24x128xf32>
    %45 = arith.addf %38, %44 : vector<24x128xf32>
    %c0_35 = arith.constant 0 : index
    %c12 = arith.constant 12 : index
    %c0_36 = arith.constant 0 : index
    %46 = vector.load %arg1[%c0_35, %c12, %c0_36] : memref<1x42x256xf32, #tpu.memory_space<vmem>>, vector<1x24x256xf32>
    %47 = vector.shape_cast %46 : vector<1x24x256xf32> to vector<24x256xf32>
    %48 = arith.truncf %47 : vector<24x256xf32> to vector<24x256xbf16>
    %c6_37 = arith.constant 6 : index
    %c0_38 = arith.constant 0 : index
    %c0_39 = arith.constant 0 : index
    %49 = vector.load %arg2[%c6_37, %c0_38, %c0_39] : memref<9x256x128xbf16, #tpu.memory_space<vmem>>, vector<1x256x128xbf16>
    %50 = vector.shape_cast %49 : vector<1x256x128xbf16> to vector<256x128xbf16>
    %cst_40 = arith.constant dense<0.000000e+00> : vector<24x128xf32>
    %51 = tpu.matmul %48, %50, %cst_40 {dimension_numbers = #tpu.dot_dimension_numbers<[1], [0], [0], [1], [0, 0, 1, 1], [], []>} : vector<24x256xbf16>, vector<256x128xbf16>, vector<24x128xf32> -> vector<24x128xf32>
    %52 = arith.addf %45, %51 : vector<24x128xf32>
    %c0_41 = arith.constant 0 : index
    %c13 = arith.constant 13 : index
    %c0_42 = arith.constant 0 : index
    %53 = vector.load %arg1[%c0_41, %c13, %c0_42] : memref<1x42x256xf32, #tpu.memory_space<vmem>>, vector<1x24x256xf32>
    %54 = vector.shape_cast %53 : vector<1x24x256xf32> to vector<24x256xf32>
    %55 = arith.truncf %54 : vector<24x256xf32> to vector<24x256xbf16>
    %c7_43 = arith.constant 7 : index
    %c0_44 = arith.constant 0 : index
    %c0_45 = arith.constant 0 : index
    %56 = vector.load %arg2[%c7_43, %c0_44, %c0_45] : memref<9x256x128xbf16, #tpu.memory_space<vmem>>, vector<1x256x128xbf16>
    %57 = vector.shape_cast %56 : vector<1x256x128xbf16> to vector<256x128xbf16>
    %cst_46 = arith.constant dense<0.000000e+00> : vector<24x128xf32>
    %58 = tpu.matmul %55, %57, %cst_46 {dimension_numbers = #tpu.dot_dimension_numbers<[1], [0], [0], [1], [0, 0, 1, 1], [], []>} : vector<24x256xbf16>, vector<256x128xbf16>, vector<24x128xf32> -> vector<24x128xf32>
    %59 = arith.addf %52, %58 : vector<24x128xf32>
    %c0_47 = arith.constant 0 : index
    %c14 = arith.constant 14 : index
    %c0_48 = arith.constant 0 : index
    %60 = vector.load %arg1[%c0_47, %c14, %c0_48] : memref<1x42x256xf32, #tpu.memory_space<vmem>>, vector<1x24x256xf32>
    %61 = vector.shape_cast %60 : vector<1x24x256xf32> to vector<24x256xf32>
    %62 = arith.truncf %61 : vector<24x256xf32> to vector<24x256xbf16>
    %c8_49 = arith.constant 8 : index
    %c0_50 = arith.constant 0 : index
    %c0_51 = arith.constant 0 : index
    %63 = vector.load %arg2[%c8_49, %c0_50, %c0_51] : memref<9x256x128xbf16, #tpu.memory_space<vmem>>, vector<1x256x128xbf16>
    %64 = vector.shape_cast %63 : vector<1x256x128xbf16> to vector<256x128xbf16>
    %cst_52 = arith.constant dense<0.000000e+00> : vector<24x128xf32>
    %65 = tpu.matmul %62, %64, %cst_52 {dimension_numbers = #tpu.dot_dimension_numbers<[1], [0], [0], [1], [0, 0, 1, 1], [], []>} : vector<24x256xbf16>, vector<256x128xbf16>, vector<24x128xf32> -> vector<24x128xf32>
    %66 = arith.addf %59, %65 : vector<24x128xf32>
    %c0_53 = arith.constant 0 : index
    %c0_54 = arith.constant 0 : index
    %c0_55 = arith.constant 0 : index
    %67 = vector.load %arg4[%c0_53, %c0_54, %c0_55] : memref<1x24x128xf32, #tpu.memory_space<vmem>>, vector<1x24x128xf32>
    %68 = vector.shape_cast %67 : vector<1x24x128xf32> to vector<24x128xf32>
    %69 = arith.addf %66, %68 : vector<24x128xf32>
    %cst_56 = arith.constant 0.000000e+00 : f32
    %70 = vector.broadcast %cst_56 : f32 to vector<24x128xf32>
    %71 = arith.maximumf %69, %70 : vector<24x128xf32>
    %c0_57 = arith.constant 0 : index
    %c0_58 = arith.constant 0 : index
    %c0_59 = arith.constant 0 : index
    %72 = vector.load %arg5[%c0_57, %c0_58, %c0_59] : memref<1x24x128xf32, #tpu.memory_space<vmem>>, vector<1x24x128xf32>
    %73 = vector.shape_cast %72 : vector<1x24x128xf32> to vector<24x128xf32>
    %74 = vector.shape_cast %71 : vector<24x128xf32> to vector<1x24x128xf32>
    tpu.vector_store %arg5[%c0_57, %c0_58, %c0_59], %74 {strides = array<i32>} : memref<1x24x128xf32, #tpu.memory_space<vmem>>, vector<1x24x128xf32>,
    return
  }
  func.func @transform_0(%arg0: i32) -> (i32, i32, i32) {
    %c0_i32 = arith.constant 0 : i32
    %c0_i32_0 = arith.constant 0 : i32
    %c0_i32_1 = arith.constant 0 : i32
    return %arg0, %c0_i32, %c0_i32_0 : i32, i32, i32
  }
  func.func @transform_1(%arg0: i32) -> (i32, i32, i32) {
    %c0_i32 = arith.constant 0 : i32
    %c0_i32_0 = arith.constant 0 : i32
    %c0_i32_1 = arith.constant 0 : i32
    %c0_i32_2 = arith.constant 0 : i32
    return %c0_i32, %c0_i32_0, %c0_i32_1 : i32, i32, i32
  }
  func.func @transform_2(%arg0: i32) -> (i32, i32) {
    %c0_i32 = arith.constant 0 : i32
    %c0_i32_0 = arith.constant 0 : i32
    %c0_i32_1 = arith.constant 0 : i32
    return %c0_i32, %c0_i32_0 : i32, i32
  }
  func.func @transform_3(%arg0: i32) -> (i32, i32, i32) {
    %c0_i32 = arith.constant 0 : i32
    %c0_i32_0 = arith.constant 0 : i32
    %c0_i32_1 = arith.constant 0 : i32
    return %arg0, %c0_i32, %c0_i32_0 : i32, i32, i32
  }
  func.func @transform_4(%arg0: i32) -> (i32, i32, i32) {
    %c0_i32 = arith.constant 0 : i32
    %c0_i32_0 = arith.constant 0 : i32
    %c0_i32_1 = arith.constant 0 : i32
    return %arg0, %c0_i32, %c0_i32_0 : i32, i32, i32
  }
}

module attributes {stable_mosaic.version = 11 : i64} {
  func.func @kernel(%arg0: i32, %arg1: memref<1x42x128xf32, #tpu.memory_space<vmem>>, %arg2: memref<9x128x256xbf16, #tpu.memory_space<vmem>>, %arg3: memref<1x256xf32, #tpu.memory_space<vmem>>, %arg4: memref<1x24x256xf32, #tpu.memory_space<vmem>>) attributes {dimension_semantics = [#tpu.dimension_semantics<parallel>], iteration_bounds = array<i64: 3>, scalar_prefetch = 0 : i64, scratch_operands = 0 : i64, tpu.core_type = #tpu.core_type<tc>, window_params = [{transform_indices = @transform_0, window_bounds = array<i64: 1, 42, 128>}, {pipeline_mode = #tpu.pipeline_mode<synchronous>, transform_indices = @transform_1, window_bounds = array<i64: 9, 128, 256>}, {pipeline_mode = #tpu.pipeline_mode<synchronous>, transform_indices = @transform_2, window_bounds = array<i64: 1, 256>}, {transform_indices = @transform_3, window_bounds = array<i64: 1, 24, 256>}]} {
    %cst = arith.constant 0.000000e+00 : f32
    %0 = vector.broadcast %cst : f32 to vector<24x256xf32>
    %c0 = arith.constant 0 : index
    %c0_0 = arith.constant 0 : index
    %1 = vector.load %arg3[%c0, %c0_0] : memref<1x256xf32, #tpu.memory_space<vmem>>, vector<1x256xf32>
    %2 = vector.broadcast %1 : vector<1x256xf32> to vector<24x256xf32>
    %3 = arith.addf %0, %2 : vector<24x256xf32>
    %c0_1 = arith.constant 0 : index
    %c0_2 = arith.constant 0 : index
    %c0_3 = arith.constant 0 : index
    %4 = vector.load %arg1[%c0_1, %c0_2, %c0_3] : memref<1x42x128xf32, #tpu.memory_space<vmem>>, vector<1x24x128xf32>
    %5 = vector.shape_cast %4 : vector<1x24x128xf32> to vector<24x128xf32>
    %6 = arith.truncf %5 : vector<24x128xf32> to vector<24x128xbf16>
    %c0_4 = arith.constant 0 : index
    %c0_5 = arith.constant 0 : index
    %c0_6 = arith.constant 0 : index
    %7 = vector.load %arg2[%c0_4, %c0_5, %c0_6] : memref<9x128x256xbf16, #tpu.memory_space<vmem>>, vector<1x128x256xbf16>
    %8 = vector.shape_cast %7 : vector<1x128x256xbf16> to vector<128x256xbf16>
    %cst_7 = arith.constant dense<0.000000e+00> : vector<24x256xf32>
    %9 = tpu.matmul %6, %8, %cst_7 {dimension_numbers = #tpu.dot_dimension_numbers<[1], [0], [0], [1], [0, 0, 1, 1], [], []>} : vector<24x128xbf16>, vector<128x256xbf16>, vector<24x256xf32> -> vector<24x256xf32>
    %10 = arith.addf %3, %9 : vector<24x256xf32>
    %c0_8 = arith.constant 0 : index
    %c1 = arith.constant 1 : index
    %c0_9 = arith.constant 0 : index
    %11 = vector.load %arg1[%c0_8, %c1, %c0_9] : memref<1x42x128xf32, #tpu.memory_space<vmem>>, vector<1x24x128xf32>
    %12 = vector.shape_cast %11 : vector<1x24x128xf32> to vector<24x128xf32>
    %13 = arith.truncf %12 : vector<24x128xf32> to vector<24x128xbf16>
    %c1_10 = arith.constant 1 : index
    %c0_11 = arith.constant 0 : index
    %c0_12 = arith.constant 0 : index
    %14 = vector.load %arg2[%c1_10, %c0_11, %c0_12] : memref<9x128x256xbf16, #tpu.memory_space<vmem>>, vector<1x128x256xbf16>
    %15 = vector.shape_cast %14 : vector<1x128x256xbf16> to vector<128x256xbf16>
    %cst_13 = arith.constant dense<0.000000e+00> : vector<24x256xf32>
    %16 = tpu.matmul %13, %15, %cst_13 {dimension_numbers = #tpu.dot_dimension_numbers<[1], [0], [0], [1], [0, 0, 1, 1], [], []>} : vector<24x128xbf16>, vector<128x256xbf16>, vector<24x256xf32> -> vector<24x256xf32>
    %17 = arith.addf %10, %16 : vector<24x256xf32>
    %c0_14 = arith.constant 0 : index
    %c2 = arith.constant 2 : index
    %c0_15 = arith.constant 0 : index
    %18 = vector.load %arg1[%c0_14, %c2, %c0_15] : memref<1x42x128xf32, #tpu.memory_space<vmem>>, vector<1x24x128xf32>
    %19 = vector.shape_cast %18 : vector<1x24x128xf32> to vector<24x128xf32>
    %20 = arith.truncf %19 : vector<24x128xf32> to vector<24x128xbf16>
    %c2_16 = arith.constant 2 : index
    %c0_17 = arith.constant 0 : index
    %c0_18 = arith.constant 0 : index
    %21 = vector.load %arg2[%c2_16, %c0_17, %c0_18] : memref<9x128x256xbf16, #tpu.memory_space<vmem>>, vector<1x128x256xbf16>
    %22 = vector.shape_cast %21 : vector<1x128x256xbf16> to vector<128x256xbf16>
    %cst_19 = arith.constant dense<0.000000e+00> : vector<24x256xf32>
    %23 = tpu.matmul %20, %22, %cst_19 {dimension_numbers = #tpu.dot_dimension_numbers<[1], [0], [0], [1], [0, 0, 1, 1], [], []>} : vector<24x128xbf16>, vector<128x256xbf16>, vector<24x256xf32> -> vector<24x256xf32>
    %24 = arith.addf %17, %23 : vector<24x256xf32>
    %c0_20 = arith.constant 0 : index
    %c6 = arith.constant 6 : index
    %c0_21 = arith.constant 0 : index
    %25 = vector.load %arg1[%c0_20, %c6, %c0_21] : memref<1x42x128xf32, #tpu.memory_space<vmem>>, vector<1x24x128xf32>
    %26 = vector.shape_cast %25 : vector<1x24x128xf32> to vector<24x128xf32>
    %27 = arith.truncf %26 : vector<24x128xf32> to vector<24x128xbf16>
    %c3 = arith.constant 3 : index
    %c0_22 = arith.constant 0 : index
    %c0_23 = arith.constant 0 : index
    %28 = vector.load %arg2[%c3, %c0_22, %c0_23] : memref<9x128x256xbf16, #tpu.memory_space<vmem>>, vector<1x128x256xbf16>
    %29 = vector.shape_cast %28 : vector<1x128x256xbf16> to vector<128x256xbf16>
    %cst_24 = arith.constant dense<0.000000e+00> : vector<24x256xf32>
    %30 = tpu.matmul %27, %29, %cst_24 {dimension_numbers = #tpu.dot_dimension_numbers<[1], [0], [0], [1], [0, 0, 1, 1], [], []>} : vector<24x128xbf16>, vector<128x256xbf16>, vector<24x256xf32> -> vector<24x256xf32>
    %31 = arith.addf %24, %30 : vector<24x256xf32>
    %c0_25 = arith.constant 0 : index
    %c7 = arith.constant 7 : index
    %c0_26 = arith.constant 0 : index
    %32 = vector.load %arg1[%c0_25, %c7, %c0_26] : memref<1x42x128xf32, #tpu.memory_space<vmem>>, vector<1x24x128xf32>
    %33 = vector.shape_cast %32 : vector<1x24x128xf32> to vector<24x128xf32>
    %34 = arith.truncf %33 : vector<24x128xf32> to vector<24x128xbf16>
    %c4 = arith.constant 4 : index
    %c0_27 = arith.constant 0 : index
    %c0_28 = arith.constant 0 : index
    %35 = vector.load %arg2[%c4, %c0_27, %c0_28] : memref<9x128x256xbf16, #tpu.memory_space<vmem>>, vector<1x128x256xbf16>
    %36 = vector.shape_cast %35 : vector<1x128x256xbf16> to vector<128x256xbf16>
    %cst_29 = arith.constant dense<0.000000e+00> : vector<24x256xf32>
    %37 = tpu.matmul %34, %36, %cst_29 {dimension_numbers = #tpu.dot_dimension_numbers<[1], [0], [0], [1], [0, 0, 1, 1], [], []>} : vector<24x128xbf16>, vector<128x256xbf16>, vector<24x256xf32> -> vector<24x256xf32>
    %38 = arith.addf %31, %37 : vector<24x256xf32>
    %c0_30 = arith.constant 0 : index
    %c8 = arith.constant 8 : index
    %c0_31 = arith.constant 0 : index
    %39 = vector.load %arg1[%c0_30, %c8, %c0_31] : memref<1x42x128xf32, #tpu.memory_space<vmem>>, vector<1x24x128xf32>
    %40 = vector.shape_cast %39 : vector<1x24x128xf32> to vector<24x128xf32>
    %41 = arith.truncf %40 : vector<24x128xf32> to vector<24x128xbf16>
    %c5 = arith.constant 5 : index
    %c0_32 = arith.constant 0 : index
    %c0_33 = arith.constant 0 : index
    %42 = vector.load %arg2[%c5, %c0_32, %c0_33] : memref<9x128x256xbf16, #tpu.memory_space<vmem>>, vector<1x128x256xbf16>
    %43 = vector.shape_cast %42 : vector<1x128x256xbf16> to vector<128x256xbf16>
    %cst_34 = arith.constant dense<0.000000e+00> : vector<24x256xf32>
    %44 = tpu.matmul %41, %43, %cst_34 {dimension_numbers = #tpu.dot_dimension_numbers<[1], [0], [0], [1], [0, 0, 1, 1], [], []>} : vector<24x128xbf16>, vector<128x256xbf16>, vector<24x256xf32> -> vector<24x256xf32>
    %45 = arith.addf %38, %44 : vector<24x256xf32>
    %c0_35 = arith.constant 0 : index
    %c12 = arith.constant 12 : index
    %c0_36 = arith.constant 0 : index
    %46 = vector.load %arg1[%c0_35, %c12, %c0_36] : memref<1x42x128xf32, #tpu.memory_space<vmem>>, vector<1x24x128xf32>
    %47 = vector.shape_cast %46 : vector<1x24x128xf32> to vector<24x128xf32>
    %48 = arith.truncf %47 : vector<24x128xf32> to vector<24x128xbf16>
    %c6_37 = arith.constant 6 : index
    %c0_38 = arith.constant 0 : index
    %c0_39 = arith.constant 0 : index
    %49 = vector.load %arg2[%c6_37, %c0_38, %c0_39] : memref<9x128x256xbf16, #tpu.memory_space<vmem>>, vector<1x128x256xbf16>
    %50 = vector.shape_cast %49 : vector<1x128x256xbf16> to vector<128x256xbf16>
    %cst_40 = arith.constant dense<0.000000e+00> : vector<24x256xf32>
    %51 = tpu.matmul %48, %50, %cst_40 {dimension_numbers = #tpu.dot_dimension_numbers<[1], [0], [0], [1], [0, 0, 1, 1], [], []>} : vector<24x128xbf16>, vector<128x256xbf16>, vector<24x256xf32> -> vector<24x256xf32>
    %52 = arith.addf %45, %51 : vector<24x256xf32>
    %c0_41 = arith.constant 0 : index
    %c13 = arith.constant 13 : index
    %c0_42 = arith.constant 0 : index
    %53 = vector.load %arg1[%c0_41, %c13, %c0_42] : memref<1x42x128xf32, #tpu.memory_space<vmem>>, vector<1x24x128xf32>
    %54 = vector.shape_cast %53 : vector<1x24x128xf32> to vector<24x128xf32>
    %55 = arith.truncf %54 : vector<24x128xf32> to vector<24x128xbf16>
    %c7_43 = arith.constant 7 : index
    %c0_44 = arith.constant 0 : index
    %c0_45 = arith.constant 0 : index
    %56 = vector.load %arg2[%c7_43, %c0_44, %c0_45] : memref<9x128x256xbf16, #tpu.memory_space<vmem>>, vector<1x128x256xbf16>
    %57 = vector.shape_cast %56 : vector<1x128x256xbf16> to vector<128x256xbf16>
    %cst_46 = arith.constant dense<0.000000e+00> : vector<24x256xf32>
    %58 = tpu.matmul %55, %57, %cst_46 {dimension_numbers = #tpu.dot_dimension_numbers<[1], [0], [0], [1], [0, 0, 1, 1], [], []>} : vector<24x128xbf16>, vector<128x256xbf16>, vector<24x256xf32> -> vector<24x256xf32>
    %59 = arith.addf %52, %58 : vector<24x256xf32>
    %c0_47 = arith.constant 0 : index
    %c14 = arith.constant 14 : index
    %c0_48 = arith.constant 0 : index
    %60 = vector.load %arg1[%c0_47, %c14, %c0_48] : memref<1x42x128xf32, #tpu.memory_space<vmem>>, vector<1x24x128xf32>
    %61 = vector.shape_cast %60 : vector<1x24x128xf32> to vector<24x128xf32>
    %62 = arith.truncf %61 : vector<24x128xf32> to vector<24x128xbf16>
    %c8_49 = arith.constant 8 : index
    %c0_50 = arith.constant 0 : index
    %c0_51 = arith.constant 0 : index
    %63 = vector.load %arg2[%c8_49, %c0_50, %c0_51] : memref<9x128x256xbf16, #tpu.memory_space<vmem>>, vector<1x128x256xbf16>
    %64 = vector.shape_cast %63 : vector<1x128x256xbf16> to vector<128x256xbf16>
    %cst_52 = arith.constant dense<0.000000e+00> : vector<24x256xf32>
    %65 = tpu.matmul %62, %64, %cst_52 {dimension_numbers = #tpu.dot_dimension_numbers<[1], [0], [0], [1], [0, 0, 1, 1], [], []>} : vector<24x128xbf16>, vector<128x256xbf16>, vector<24x256xf32> -> vector<24x256xf32>
    %66 = arith.addf %59, %65 : vector<24x256xf32>
    %cst_53 = arith.constant 0.000000e+00 : f32
    %67 = vector.broadcast %cst_53 : f32 to vector<24x256xf32>
    %68 = arith.maximumf %66, %67 : vector<24x256xf32>
    %c0_54 = arith.constant 0 : index
    %c0_55 = arith.constant 0 : index
    %c0_56 = arith.constant 0 : index
    %69 = vector.load %arg4[%c0_54, %c0_55, %c0_56] : memref<1x24x256xf32, #tpu.memory_space<vmem>>, vector<1x24x256xf32>
    %70 = vector.shape_cast %69 : vector<1x24x256xf32> to vector<24x256xf32>
    %71 = vector.shape_cast %68 : vector<24x256xf32> to vector<1x24x256xf32>
    tpu.vector_store %arg4[%c0_54, %c0_55, %c0_56], %71 {strides = array<i32>} : memref<1x24x256xf32, #tpu.memory_space<vmem>>, vector<1x24x256xf32>,
    return
  }
  func.func @transform_0(%arg0: i32) -> (i32, i32, i32) {
    %c0_i32 = arith.constant 0 : i32
    %c0_i32_0 = arith.constant 0 : i32
    %c0_i32_1 = arith.constant 0 : i32
    return %arg0, %c0_i32, %c0_i32_0 : i32, i32, i32
  }
  func.func @transform_1(%arg0: i32) -> (i32, i32, i32) {
    %c0_i32 = arith.constant 0 : i32
    %c0_i32_0 = arith.constant 0 : i32
    %c0_i32_1 = arith.constant 0 : i32
    %c0_i32_2 = arith.constant 0 : i32
    return %c0_i32, %c0_i32_0, %c0_i32_1 : i32, i32, i32
  }
  func.func @transform_2(%arg0: i32) -> (i32, i32) {
    %c0_i32 = arith.constant 0 : i32
    %c0_i32_0 = arith.constant 0 : i32
    %c0_i32_1 = arith.constant 0 : i32
    return %c0_i32, %c0_i32_0 : i32, i32
  }
  func.func @transform_3(%arg0: i32) -> (i32, i32, i32) {
    %c0_i32 = arith.constant 0 : i32
    %c0_i32_0 = arith.constant 0 : i32
    %c0_i32_1 = arith.constant 0 : i32
    return %arg0, %c0_i32, %c0_i32_0 : i32, i32, i32
  }
}

module attributes {stable_mosaic.version = 11 : i64} {
  func.func @kernel(%arg0: i32, %arg1: memref<1x42x256xf32, #tpu.memory_space<vmem>>, %arg2: memref<9x256x256xbf16, #tpu.memory_space<vmem>>, %arg3: memref<1x256xf32, #tpu.memory_space<vmem>>, %arg4: memref<1x24x256xf32, #tpu.memory_space<vmem>>) attributes {dimension_semantics = [#tpu.dimension_semantics<parallel>], iteration_bounds = array<i64: 3>, scalar_prefetch = 0 : i64, scratch_operands = 0 : i64, tpu.core_type = #tpu.core_type<tc>, window_params = [{transform_indices = @transform_0, window_bounds = array<i64: 1, 42, 256>}, {pipeline_mode = #tpu.pipeline_mode<synchronous>, transform_indices = @transform_1, window_bounds = array<i64: 9, 256, 256>}, {pipeline_mode = #tpu.pipeline_mode<synchronous>, transform_indices = @transform_2, window_bounds = array<i64: 1, 256>}, {transform_indices = @transform_3, window_bounds = array<i64: 1, 24, 256>}]} {
    %cst = arith.constant 0.000000e+00 : f32
    %0 = vector.broadcast %cst : f32 to vector<24x256xf32>
    %c0 = arith.constant 0 : index
    %c0_0 = arith.constant 0 : index
    %1 = vector.load %arg3[%c0, %c0_0] : memref<1x256xf32, #tpu.memory_space<vmem>>, vector<1x256xf32>
    %2 = vector.broadcast %1 : vector<1x256xf32> to vector<24x256xf32>
    %3 = arith.addf %0, %2 : vector<24x256xf32>
    %c0_1 = arith.constant 0 : index
    %c0_2 = arith.constant 0 : index
    %c0_3 = arith.constant 0 : index
    %4 = vector.load %arg1[%c0_1, %c0_2, %c0_3] : memref<1x42x256xf32, #tpu.memory_space<vmem>>, vector<1x24x256xf32>
    %5 = vector.shape_cast %4 : vector<1x24x256xf32> to vector<24x256xf32>
    %6 = arith.truncf %5 : vector<24x256xf32> to vector<24x256xbf16>
    %c0_4 = arith.constant 0 : index
    %c0_5 = arith.constant 0 : index
    %c0_6 = arith.constant 0 : index
    %7 = vector.load %arg2[%c0_4, %c0_5, %c0_6] : memref<9x256x256xbf16, #tpu.memory_space<vmem>>, vector<1x256x256xbf16>
    %8 = vector.shape_cast %7 : vector<1x256x256xbf16> to vector<256x256xbf16>
    %cst_7 = arith.constant dense<0.000000e+00> : vector<24x256xf32>
    %9 = tpu.matmul %6, %8, %cst_7 {dimension_numbers = #tpu.dot_dimension_numbers<[1], [0], [0], [1], [0, 0, 1, 1], [], []>} : vector<24x256xbf16>, vector<256x256xbf16>, vector<24x256xf32> -> vector<24x256xf32>
    %10 = arith.addf %3, %9 : vector<24x256xf32>
    %c0_8 = arith.constant 0 : index
    %c1 = arith.constant 1 : index
    %c0_9 = arith.constant 0 : index
    %11 = vector.load %arg1[%c0_8, %c1, %c0_9] : memref<1x42x256xf32, #tpu.memory_space<vmem>>, vector<1x24x256xf32>
    %12 = vector.shape_cast %11 : vector<1x24x256xf32> to vector<24x256xf32>
    %13 = arith.truncf %12 : vector<24x256xf32> to vector<24x256xbf16>
    %c1_10 = arith.constant 1 : index
    %c0_11 = arith.constant 0 : index
    %c0_12 = arith.constant 0 : index
    %14 = vector.load %arg2[%c1_10, %c0_11, %c0_12] : memref<9x256x256xbf16, #tpu.memory_space<vmem>>, vector<1x256x256xbf16>
    %15 = vector.shape_cast %14 : vector<1x256x256xbf16> to vector<256x256xbf16>
    %cst_13 = arith.constant dense<0.000000e+00> : vector<24x256xf32>
    %16 = tpu.matmul %13, %15, %cst_13 {dimension_numbers = #tpu.dot_dimension_numbers<[1], [0], [0], [1], [0, 0, 1, 1], [], []>} : vector<24x256xbf16>, vector<256x256xbf16>, vector<24x256xf32> -> vector<24x256xf32>
    %17 = arith.addf %10, %16 : vector<24x256xf32>
    %c0_14 = arith.constant 0 : index
    %c2 = arith.constant 2 : index
    %c0_15 = arith.constant 0 : index
    %18 = vector.load %arg1[%c0_14, %c2, %c0_15] : memref<1x42x256xf32, #tpu.memory_space<vmem>>, vector<1x24x256xf32>
    %19 = vector.shape_cast %18 : vector<1x24x256xf32> to vector<24x256xf32>
    %20 = arith.truncf %19 : vector<24x256xf32> to vector<24x256xbf16>
    %c2_16 = arith.constant 2 : index
    %c0_17 = arith.constant 0 : index
    %c0_18 = arith.constant 0 : index
    %21 = vector.load %arg2[%c2_16, %c0_17, %c0_18] : memref<9x256x256xbf16, #tpu.memory_space<vmem>>, vector<1x256x256xbf16>
    %22 = vector.shape_cast %21 : vector<1x256x256xbf16> to vector<256x256xbf16>
    %cst_19 = arith.constant dense<0.000000e+00> : vector<24x256xf32>
    %23 = tpu.matmul %20, %22, %cst_19 {dimension_numbers = #tpu.dot_dimension_numbers<[1], [0], [0], [1], [0, 0, 1, 1], [], []>} : vector<24x256xbf16>, vector<256x256xbf16>, vector<24x256xf32> -> vector<24x256xf32>
    %24 = arith.addf %17, %23 : vector<24x256xf32>
    %c0_20 = arith.constant 0 : index
    %c6 = arith.constant 6 : index
    %c0_21 = arith.constant 0 : index
    %25 = vector.load %arg1[%c0_20, %c6, %c0_21] : memref<1x42x256xf32, #tpu.memory_space<vmem>>, vector<1x24x256xf32>
    %26 = vector.shape_cast %25 : vector<1x24x256xf32> to vector<24x256xf32>
    %27 = arith.truncf %26 : vector<24x256xf32> to vector<24x256xbf16>
    %c3 = arith.constant 3 : index
    %c0_22 = arith.constant 0 : index
    %c0_23 = arith.constant 0 : index
    %28 = vector.load %arg2[%c3, %c0_22, %c0_23] : memref<9x256x256xbf16, #tpu.memory_space<vmem>>, vector<1x256x256xbf16>
    %29 = vector.shape_cast %28 : vector<1x256x256xbf16> to vector<256x256xbf16>
    %cst_24 = arith.constant dense<0.000000e+00> : vector<24x256xf32>
    %30 = tpu.matmul %27, %29, %cst_24 {dimension_numbers = #tpu.dot_dimension_numbers<[1], [0], [0], [1], [0, 0, 1, 1], [], []>} : vector<24x256xbf16>, vector<256x256xbf16>, vector<24x256xf32> -> vector<24x256xf32>
    %31 = arith.addf %24, %30 : vector<24x256xf32>
    %c0_25 = arith.constant 0 : index
    %c7 = arith.constant 7 : index
    %c0_26 = arith.constant 0 : index
    %32 = vector.load %arg1[%c0_25, %c7, %c0_26] : memref<1x42x256xf32, #tpu.memory_space<vmem>>, vector<1x24x256xf32>
    %33 = vector.shape_cast %32 : vector<1x24x256xf32> to vector<24x256xf32>
    %34 = arith.truncf %33 : vector<24x256xf32> to vector<24x256xbf16>
    %c4 = arith.constant 4 : index
    %c0_27 = arith.constant 0 : index
    %c0_28 = arith.constant 0 : index
    %35 = vector.load %arg2[%c4, %c0_27, %c0_28] : memref<9x256x256xbf16, #tpu.memory_space<vmem>>, vector<1x256x256xbf16>
    %36 = vector.shape_cast %35 : vector<1x256x256xbf16> to vector<256x256xbf16>
    %cst_29 = arith.constant dense<0.000000e+00> : vector<24x256xf32>
    %37 = tpu.matmul %34, %36, %cst_29 {dimension_numbers = #tpu.dot_dimension_numbers<[1], [0], [0], [1], [0, 0, 1, 1], [], []>} : vector<24x256xbf16>, vector<256x256xbf16>, vector<24x256xf32> -> vector<24x256xf32>
    %38 = arith.addf %31, %37 : vector<24x256xf32>
    %c0_30 = arith.constant 0 : index
    %c8 = arith.constant 8 : index
    %c0_31 = arith.constant 0 : index
    %39 = vector.load %arg1[%c0_30, %c8, %c0_31] : memref<1x42x256xf32, #tpu.memory_space<vmem>>, vector<1x24x256xf32>
    %40 = vector.shape_cast %39 : vector<1x24x256xf32> to vector<24x256xf32>
    %41 = arith.truncf %40 : vector<24x256xf32> to vector<24x256xbf16>
    %c5 = arith.constant 5 : index
    %c0_32 = arith.constant 0 : index
    %c0_33 = arith.constant 0 : index
    %42 = vector.load %arg2[%c5, %c0_32, %c0_33] : memref<9x256x256xbf16, #tpu.memory_space<vmem>>, vector<1x256x256xbf16>
    %43 = vector.shape_cast %42 : vector<1x256x256xbf16> to vector<256x256xbf16>
    %cst_34 = arith.constant dense<0.000000e+00> : vector<24x256xf32>
    %44 = tpu.matmul %41, %43, %cst_34 {dimension_numbers = #tpu.dot_dimension_numbers<[1], [0], [0], [1], [0, 0, 1, 1], [], []>} : vector<24x256xbf16>, vector<256x256xbf16>, vector<24x256xf32> -> vector<24x256xf32>
    %45 = arith.addf %38, %44 : vector<24x256xf32>
    %c0_35 = arith.constant 0 : index
    %c12 = arith.constant 12 : index
    %c0_36 = arith.constant 0 : index
    %46 = vector.load %arg1[%c0_35, %c12, %c0_36] : memref<1x42x256xf32, #tpu.memory_space<vmem>>, vector<1x24x256xf32>
    %47 = vector.shape_cast %46 : vector<1x24x256xf32> to vector<24x256xf32>
    %48 = arith.truncf %47 : vector<24x256xf32> to vector<24x256xbf16>
    %c6_37 = arith.constant 6 : index
    %c0_38 = arith.constant 0 : index
    %c0_39 = arith.constant 0 : index
    %49 = vector.load %arg2[%c6_37, %c0_38, %c0_39] : memref<9x256x256xbf16, #tpu.memory_space<vmem>>, vector<1x256x256xbf16>
    %50 = vector.shape_cast %49 : vector<1x256x256xbf16> to vector<256x256xbf16>
    %cst_40 = arith.constant dense<0.000000e+00> : vector<24x256xf32>
    %51 = tpu.matmul %48, %50, %cst_40 {dimension_numbers = #tpu.dot_dimension_numbers<[1], [0], [0], [1], [0, 0, 1, 1], [], []>} : vector<24x256xbf16>, vector<256x256xbf16>, vector<24x256xf32> -> vector<24x256xf32>
    %52 = arith.addf %45, %51 : vector<24x256xf32>
    %c0_41 = arith.constant 0 : index
    %c13 = arith.constant 13 : index
    %c0_42 = arith.constant 0 : index
    %53 = vector.load %arg1[%c0_41, %c13, %c0_42] : memref<1x42x256xf32, #tpu.memory_space<vmem>>, vector<1x24x256xf32>
    %54 = vector.shape_cast %53 : vector<1x24x256xf32> to vector<24x256xf32>
    %55 = arith.truncf %54 : vector<24x256xf32> to vector<24x256xbf16>
    %c7_43 = arith.constant 7 : index
    %c0_44 = arith.constant 0 : index
    %c0_45 = arith.constant 0 : index
    %56 = vector.load %arg2[%c7_43, %c0_44, %c0_45] : memref<9x256x256xbf16, #tpu.memory_space<vmem>>, vector<1x256x256xbf16>
    %57 = vector.shape_cast %56 : vector<1x256x256xbf16> to vector<256x256xbf16>
    %cst_46 = arith.constant dense<0.000000e+00> : vector<24x256xf32>
    %58 = tpu.matmul %55, %57, %cst_46 {dimension_numbers = #tpu.dot_dimension_numbers<[1], [0], [0], [1], [0, 0, 1, 1], [], []>} : vector<24x256xbf16>, vector<256x256xbf16>, vector<24x256xf32> -> vector<24x256xf32>
    %59 = arith.addf %52, %58 : vector<24x256xf32>
    %c0_47 = arith.constant 0 : index
    %c14 = arith.constant 14 : index
    %c0_48 = arith.constant 0 : index
    %60 = vector.load %arg1[%c0_47, %c14, %c0_48] : memref<1x42x256xf32, #tpu.memory_space<vmem>>, vector<1x24x256xf32>
    %61 = vector.shape_cast %60 : vector<1x24x256xf32> to vector<24x256xf32>
    %62 = arith.truncf %61 : vector<24x256xf32> to vector<24x256xbf16>
    %c8_49 = arith.constant 8 : index
    %c0_50 = arith.constant 0 : index
    %c0_51 = arith.constant 0 : index
    %63 = vector.load %arg2[%c8_49, %c0_50, %c0_51] : memref<9x256x256xbf16, #tpu.memory_space<vmem>>, vector<1x256x256xbf16>
    %64 = vector.shape_cast %63 : vector<1x256x256xbf16> to vector<256x256xbf16>
    %cst_52 = arith.constant dense<0.000000e+00> : vector<24x256xf32>
    %65 = tpu.matmul %62, %64, %cst_52 {dimension_numbers = #tpu.dot_dimension_numbers<[1], [0], [0], [1], [0, 0, 1, 1], [], []>} : vector<24x256xbf16>, vector<256x256xbf16>, vector<24x256xf32> -> vector<24x256xf32>
    %66 = arith.addf %59, %65 : vector<24x256xf32>
    %cst_53 = arith.constant 0.000000e+00 : f32
    %67 = vector.broadcast %cst_53 : f32 to vector<24x256xf32>
    %68 = arith.maximumf %66, %67 : vector<24x256xf32>
    %c0_54 = arith.constant 0 : index
    %c0_55 = arith.constant 0 : index
    %c0_56 = arith.constant 0 : index
    %69 = vector.load %arg4[%c0_54, %c0_55, %c0_56] : memref<1x24x256xf32, #tpu.memory_space<vmem>>, vector<1x24x256xf32>
    %70 = vector.shape_cast %69 : vector<1x24x256xf32> to vector<24x256xf32>
    %71 = vector.shape_cast %68 : vector<24x256xf32> to vector<1x24x256xf32>
    tpu.vector_store %arg4[%c0_54, %c0_55, %c0_56], %71 {strides = array<i32>} : memref<1x24x256xf32, #tpu.memory_space<vmem>>, vector<1x24x256xf32>,
    return
  }
  func.func @transform_0(%arg0: i32) -> (i32, i32, i32) {
    %c0_i32 = arith.constant 0 : i32
    %c0_i32_0 = arith.constant 0 : i32
    %c0_i32_1 = arith.constant 0 : i32
    return %arg0, %c0_i32, %c0_i32_0 : i32, i32, i32
  }
  func.func @transform_1(%arg0: i32) -> (i32, i32, i32) {
    %c0_i32 = arith.constant 0 : i32
    %c0_i32_0 = arith.constant 0 : i32
    %c0_i32_1 = arith.constant 0 : i32
    %c0_i32_2 = arith.constant 0 : i32
    return %c0_i32, %c0_i32_0, %c0_i32_1 : i32, i32, i32
  }
  func.func @transform_2(%arg0: i32) -> (i32, i32) {
    %c0_i32 = arith.constant 0 : i32
    %c0_i32_0 = arith.constant 0 : i32
    %c0_i32_1 = arith.constant 0 : i32
    return %c0_i32, %c0_i32_0 : i32, i32
  }
  func.func @transform_3(%arg0: i32) -> (i32, i32, i32) {
    %c0_i32 = arith.constant 0 : i32
    %c0_i32_0 = arith.constant 0 : i32
    %c0_i32_1 = arith.constant 0 : i32
    return %arg0, %c0_i32, %c0_i32_0 : i32, i32, i32
  }
}

</mosaic_0001>

<llo_original>
// kernel: repnet_forward.6
$region0: #{repnet_forward.6}
  #allocation0 [shape = 'u32[]', space=smem, size = 0x4, offset = 0x4, fixed_abs, tag = 'smem constant byte address 0x4 - core index']
  #allocation1 [shape = 'u32[72,128]{1,0:T(1,128)}', space=vmem, size = 0x9000, scoped, tag = 'internal scratch']
  %s0 = inlined_call_operand.vmem [shape: bf16[192,128], index: 0, kind: input, shape index: {}]
  %s1 = inlined_call_operand.hbm [shape: bf16[128,256], index: 1, kind: input, shape index: {}]
  %s2 = inlined_call_operand.hbm [shape: f32[1,256], index: 2, kind: input, shape index: {}]
  %s3 = inlined_call_operand.vmem [shape: f32[192,256], index: 3, kind: output, shape index: {}]
  %s4 = sld [smem:[#allocation0]]
  $region53: #{repnet_forward.6} parent=0
    _
  %s6 = ssub.s32 1, %s4
  %s7 = scalar_select 0, %s6, %s4
  $region1: #{repnet_forward.6} parent=0
    #allocation2 [shape = 'u8[65536]{0}', space=vmem, size = 0x10000, scoped, tag = 'input window, operand 1, single buffered']
    #allocation3 [shape = 's32[2]{0}', space=sflag, size = 0x8, scoped, tag = 'scoped memory for repnet_forward.6']
    #allocation4 [shape = 'u8[1024]{0}', space=vmem, size = 0x400, scoped, tag = 'input window, operand 2, single buffered']
    #allocation5 [shape = 's32[1]{0}', space=sflag, size = 0x4, scoped, tag = 'scoped memory for repnet_forward.6']
    %8 = vsyncpa [#allocation3], 0
    %9 = vsyncpa [#allocation5], 0
    loop: start=0, step=1, limit=4
    $region2: #{repnet_forward.6} parent=1 // loop_pre_header
      _
    $region3: #{repnet_forward.6} parent=1 // loop_header
      %s11 = sphi 0, %s15
      %p12 = scmp.ge.s32.totalorder %s11, 4
      %s21 = sphi 0, %s23
      %s24 = sphi 0, %s21
      %s25 = sphi 0, %s24
      %s41 = sphi 0, %s25
      %s45 = sphi 0, %s45
      %s47 = sphi 0, %s45
      %s48 = sphi 0, %s47
      %s62 = sphi 0, %s48
      %s66 = sphi 0, %s66
      %s68 = sphi 0, %s66
      %s69 = sphi 0, %s68
      %s83 = sphi 0, %s69
      %s89 = sphi 0, %s91
      %s92 = sphi 0, %s89
      %s93 = sphi 0, %s92
      %s109 = sphi 0, %s93
    $region4: #{repnet_forward.6} parent=1 // loop_header_branch
      %14 = sbr.rel (%p12) target = $region8
    $region5: #{repnet_forward.6} parent=1 // loop_body
      %s16 = ssub.s32 %s11, 1
      %s17 = ssub.s32 %s11, 2
      %s18 = sadd.s32 %s11, 1
      %s19 = ssub.s32 %s11, %s18
      %p20 = scmp.eq.s32.totalorder %s19, 0
      %s22 = sadd.s32 %s21, 1
      %s23 = scalar_select %p20, %s21, %s22
      %p26 = pneg %p20
      %p27 = scmp.eq.s32.totalorder %s11, 1
      %p28 = por %p26, %p27
      %p29 = scmp.ne.s32.totalorder %s21, %s24
      %p30 = scmp.eq.s32.totalorder %s11, 0
      %p31 = por %p29, %p30
      %p32 = scmp.ne.s32.totalorder %s21, %s24
      %p33 = scmp.eq.s32.totalorder %s16, 1
      %p34 = por %p32, %p33
      %p35 = scmp.ne.s32.totalorder %s24, %s25
      %p36 = scmp.eq.s32.totalorder %s16, 0
      %p37 = por %p35, %p36
      %p38 = scmp.ne.s32.totalorder %s24, %s25
      %p39 = scmp.eq.s32.totalorder %s17, 1
      %p40 = por %p38, %p39
      %p42 = scmp.ne.s32.totalorder %s25, %s41
      %p43 = scmp.eq.s32.totalorder %s17, 0
      %p44 = por %p42, %p43
      %s46 = sadd.s32 %s45, 1
      %p49 = scmp.eq.s32.totalorder %s11, 1
      %p50 = scmp.ne.s32.totalorder %s45, %s47
      %p51 = scmp.eq.s32.totalorder %s11, 0
      %p52 = por %p50, %p51
      %p53 = scmp.ne.s32.totalorder %s45, %s47
      %p54 = scmp.eq.s32.totalorder %s16, 1
      %p55 = por %p53, %p54
      %p56 = scmp.ne.s32.totalorder %s47, %s48
      %p57 = scmp.eq.s32.totalorder %s16, 0
      %p58 = por %p56, %p57
      %p59 = scmp.ne.s32.totalorder %s47, %s48
      %p60 = scmp.eq.s32.totalorder %s17, 1
      %p61 = por %p59, %p60
      %p63 = scmp.ne.s32.totalorder %s48, %s62
      %p64 = scmp.eq.s32.totalorder %s17, 0
      %p65 = por %p63, %p64
      %s67 = sadd.s32 %s66, 1
      %p70 = scmp.eq.s32.totalorder %s11, 1
      %p71 = scmp.ne.s32.totalorder %s66, %s68
      %p72 = scmp.eq.s32.totalorder %s11, 0
      %p73 = por %p71, %p72
      %p74 = scmp.ne.s32.totalorder %s66, %s68
      %p75 = scmp.eq.s32.totalorder %s16, 1
      %p76 = por %p74, %p75
      %p77 = scmp.ne.s32.totalorder %s68, %s69
      %p78 = scmp.eq.s32.totalorder %s16, 0
      %p79 = por %p77, %p78
      %p80 = scmp.ne.s32.totalorder %s68, %s69
      %p81 = scmp.eq.s32.totalorder %s17, 1
      %p82 = por %p80, %p81
      %p84 = scmp.ne.s32.totalorder %s69, %s83
      %p85 = scmp.eq.s32.totalorder %s17, 0
      %p86 = por %p84, %p85
      %s87 = ssub.s32 %s11, %s18
      %p88 = scmp.eq.s32.totalorder %s87, 0
      %s90 = sadd.s32 %s89, 1
      %s91 = scalar_select %p88, %s89, %s90
      %p94 = pneg %p88
      %p95 = scmp.eq.s32.totalorder %s11, 1
      %p96 = por %p94, %p95
      %p97 = scmp.ne.s32.totalorder %s89, %s92
      %p98 = scmp.eq.s32.totalorder %s11, 0
      %p99 = por %p97, %p98
      %p100 = scmp.ne.s32.totalorder %s89, %s92
      %p101 = scmp.eq.s32.totalorder %s16, 1
      %p102 = por %p100, %p101
      %p103 = scmp.ne.s32.totalorder %s92, %s93
      %p104 = scmp.eq.s32.totalorder %s16, 0
      %p105 = por %p103, %p104
      %p106 = scmp.ne.s32.totalorder %s92, %s93
      %p107 = scmp.eq.s32.totalorder %s17, 1
      %p108 = por %p106, %p107
      %p110 = scmp.ne.s32.totalorder %s93, %s109
      %p111 = scmp.eq.s32.totalorder %s17, 0
      %p112 = por %p110, %p111
      %p113 = scmp.le.s32.totalorder 1, %s11
      %p114 = scmp.lt.s32.totalorder %s11, 3
      %p115 = pnand %p113, %p114
      %p116 = pneg %p115
      // Predicated region
      $region9: #{repnet_forward.6} parent=5 // pred_check
        _
      $region10: #{repnet_forward.6} parent=5 // pred_check_branch
        %118 = sbr.rel (%p115) target = $region12
      $region11: #{repnet_forward.6} parent=5 // pred_region
        %s119 = ssub.s32 %s11, 1
        // Predicated region
        $region13: #{repnet_forward.6} parent=11 // pred_check
          %p120 = pneg %p58
        $region14: #{repnet_forward.6} parent=11 // pred_check_branch
          %122 = sbr.rel (%p120) target = $region16
        $region15: #{repnet_forward.6} parent=11 // pred_region
          %124 = vsyncadd [#allocation3], 0
          %s125 = sshll.u32 %s1, 4
          %s126 = int_to_ptr.hbm [resolvable:$true] %s125
          %s127 = sshll.u32 [#allocation2], 4
          %s128 = int_to_ptr.vmem [resolvable:$true] %s127
          %133 = dma.hbm_to_vmem [thread:$0]  %s126, 2048, %s128, [#allocation3], 128, 128, 8
        $region16: #{repnet_forward.6} parent=11 // pred_fallthru
          _
        // Predicated region
        $region17: #{repnet_forward.6} parent=11 // pred_check
          %p134 = pneg %p79
        $region18: #{repnet_forward.6} parent=11 // pred_check_branch
          %136 = sbr.rel (%p134) target = $region20
        $region19: #{repnet_forward.6} parent=11 // pred_region
          %138 = vsyncadd [#allocation5], 0
          %s140 = sshll.u32 %s2, 4
          %s141 = int_to_ptr.hbm [resolvable:$true] %s140
          %s142 = sshll.u32 [#allocation4], 4
          %s143 = int_to_ptr.vmem [resolvable:$true] %s142
          %145 = dma.hbm_to_vmem [thread:$0]  %s141, 32, %s143, [#allocation5]
        $region20: #{repnet_forward.6} parent=11 // pred_fallthru
          _
      $region12: #{repnet_forward.6} parent=5 // pred_fallthru
        _
      %p146 = scmp.lt.s32.totalorder %s11, 2
      // Predicated region
      $region21: #{repnet_forward.6} parent=5 // pred_check
        %p147 = pneg %p146
      $region22: #{repnet_forward.6} parent=5 // pred_check_branch
        %149 = sbr.rel (%p147) target = $region24
      $region23: #{repnet_forward.6} parent=5 // pred_region
        // Predicated region
        $region25: #{repnet_forward.6} parent=23 // pred_check
          %p150 = pneg %p31
        $region26: #{repnet_forward.6} parent=23 // pred_check_branch
          %152 = sbr.rel (%p150) target = $region28
        $region27: #{repnet_forward.6} parent=23 // pred_region
          %s153 = smul.u32 12, %s11
          %p154 = scmp.lt.s32.totalorder %s153, 23
          %s155 = scalar_select %p154, %s153, 23
          %s156 = smul.addr %s155, 4
          %s157 = scalar_lea.vmem %s0, %s156
          %s158 = smul.u32 12, %s11
        $region28: #{repnet_forward.6} parent=23 // pred_fallthru
          _
      $region24: #{repnet_forward.6} parent=5 // pred_fallthru
        _
      %p159 = scmp.le.s32.totalorder 1, %s11
      %p160 = scmp.lt.s32.totalorder %s11, 3
      %p161 = pnand %p159, %p160
      %p162 = pneg %p161
      // Predicated region
      $region29: #{repnet_forward.6} parent=5 // pred_check
        _
      $region30: #{repnet_forward.6} parent=5 // pred_check_branch
        %164 = sbr.rel (%p161) target = $region32
      $region31: #{repnet_forward.6} parent=5 // pred_region
        %s165 = ssub.s32 %s11, 1
        // Predicated region
        $region33: #{repnet_forward.6} parent=31 // pred_check
          %p166 = pneg %p58
        $region34: #{repnet_forward.6} parent=31 // pred_check_branch
          %168 = sbr.rel (%p166) target = $region36
        $region35: #{repnet_forward.6} parent=31 // pred_region
          %170 = dma.done [#allocation3], 2048
        $region36: #{repnet_forward.6} parent=31 // pred_fallthru
          _
        // Predicated region
        $region37: #{repnet_forward.6} parent=31 // pred_check
          %p171 = pneg %p79
        $region38: #{repnet_forward.6} parent=31 // pred_check_branch
          %173 = sbr.rel (%p171) target = $region40
        $region39: #{repnet_forward.6} parent=31 // pred_region
          %175 = dma.done [#allocation5], 32
        $region40: #{repnet_forward.6} parent=31 // pred_fallthru
          _
        %s176 = smul.u32 12, %s16
        %p177 = scmp.lt.s32.totalorder %s176, 23
        %s178 = scalar_select %p177, %s176, 23
        %s179 = smul.addr %s178, 4
        %s180 = scalar_lea.vmem %s0, %s179
        %p181 = pneg %p37
        %p182 = pneg %p34
        %p183 = pneg %p58
        %p184 = pneg %p55
        %p185 = pneg %p79
        %p186 = pneg %p76
        %p187 = pneg %p105
        %p188 = pneg %p102
        %s189 = smul.u32 12, %s16
        %p190 = scmp.lt.s32.totalorder %s189, 23
        %s191 = scalar_select %p190, %s189, 23
        %s192 = smul.addr %s191, 2
        %s193 = smul.addr %s192, 8
        %s194 = scalar_lea.vmem %s3, %s193
        %s195 = smul.u32 12, %s16
        %p196 = scmp.lt.s32.totalorder %s195, 23
        %s197 = scalar_select %p196, %s195, 23
        %s198 = smul.addr %s197, 4
        %s199 = scalar_lea.vmem %s0, %s198
        %s200 = smul.u32 12, %s16
        %s201 = smul.u32 12, %s16
        %p202 = scmp.lt.s32.totalorder %s201, 23
        %s203 = scalar_select %p202, %s201, 23
        %s204 = smul.addr %s203, 2
        %s205 = smul.addr %s204, 8
        %s206 = scalar_lea.vmem %s3, %s205
        %s207 = smul.u32 12, %s16
        %v208 = vld [vmem:[%s199] sm:$0xf]
        %v209 = vld [vmem:[%s199 + $0x4] sm:$0xf]
        %v210 = vld [vmem:[%s199 + $0x8] sm:$0xf]
        %v211 = vld [vmem:[%s199 + $0xc] sm:$0xf]
        %v212 = vld [vmem:[%s199 + $0x10] sm:$0xf]
        %v213 = vld [vmem:[%s199 + $0x14] sm:$0xf]
        %v214 = vld [vmem:[%s199 + $0x18] sm:$0xf]
        %v215 = vld [vmem:[%s199 + $0x1c] sm:$0xf]
        %v216 = vld [vmem:[%s199 + $0x20] sm:$0xf]
        %v217 = vld [vmem:[%s199 + $0x24] sm:$0xf]
        %v218 = vld [vmem:[%s199 + $0x28] sm:$0xf]
        %v219 = vld [vmem:[%s199 + $0x2c] sm:$0xf]
        %v220 = vld [vmem:[#allocation2] sm:$0xff]
        %v221 = vld [vmem:[#allocation2 + $0x8] sm:$0xff]
        %v222 = vld [vmem:[#allocation2 + $0x10] sm:$0xff]
        %v223 = vld [vmem:[#allocation2 + $0x18] sm:$0xff]
        %v224 = vld [vmem:[#allocation2 + $0x20] sm:$0xff]
        %v225 = vld [vmem:[#allocation2 + $0x28] sm:$0xff]
        %v226 = vld [vmem:[#allocation2 + $0x30] sm:$0xff]
        %v227 = vld [vmem:[#allocation2 + $0x38] sm:$0xff]
        %v228 = vld [vmem:[#allocation2 + $0x40] sm:$0xff]
        %v229 = vld [vmem:[#allocation2 + $0x48] sm:$0xff]
        %v230 = vld [vmem:[#allocation2 + $0x50] sm:$0xff]
        %v231 = vld [vmem:[#allocation2 + $0x58] sm:$0xff]
        %v232 = vld [vmem:[#allocation2 + $0x60] sm:$0xff]
        %v233 = vld [vmem:[#allocation2 + $0x68] sm:$0xff]
        %v234 = vld [vmem:[#allocation2 + $0x70] sm:$0xff]
        %v235 = vld [vmem:[#allocation2 + $0x78] sm:$0xff]
        %v236 = vld [vmem:[#allocation4] sm:$0x3]
        %v238 = vperm.slane %v236, 0
        %v239 = vperm.slane %v236, 1
        %v254 = vunpack.c.l.b16 %v208
        %v255 = vunpack.c.l.b16 %v209
        %v256 = vunpack.c.l.b16 %v210
        %v257 = vunpack.c.l.b16 %v211
        %v258 = vunpack.c.l.b16 %v212
        %v259 = vunpack.c.l.b16 %v213
        %v260 = vunpack.c.l.b16 %v214
        %v261 = vunpack.c.l.b16 %v215
        %v262 = vunpack.c.l.b16 %v216
        %v263 = vunpack.c.l.b16 %v217
        %v264 = vunpack.c.l.b16 %v218
        %v265 = vunpack.c.l.b16 %v219
        %v266 = vpack.c.b16 %v255, %v254
        %v267 = vpack.c.b16 %v257, %v256
        %v268 = vpack.c.b16 %v259, %v258
        %v269 = vpack.c.b16 %v261, %v260
        %v270 = vpack.c.b16 %v263, %v262
        %v271 = vpack.c.b16 %v265, %v264
        %v294 = vunpack.c.l.b16 %v220
        %v295 = vunpack.c.h.b16 %v220
        %v296 = vunpack.c.l.b16 %v221
        %v297 = vunpack.c.h.b16 %v221
        %v298 = vunpack.c.l.b16 %v222
        %v299 = vunpack.c.h.b16 %v222
        %v300 = vunpack.c.l.b16 %v223
        %v301 = vunpack.c.h.b16 %v223
        %v302 = vunpack.c.l.b16 %v224
        %v303 = vunpack.c.h.b16 %v224
        %v304 = vunpack.c.l.b16 %v225
        %v305 = vunpack.c.h.b16 %v225
        %v306 = vunpack.c.l.b16 %v226
        %v307 = vunpack.c.h.b16 %v226
        %v308 = vunpack.c.l.b16 %v227
        %v309 = vunpack.c.h.b16 %v227
        %v310 = vunpack.c.l.b16 %v228
        %v311 = vunpack.c.h.b16 %v228
        %v312 = vunpack.c.l.b16 %v229
        %v313 = vunpack.c.h.b16 %v229
        %v314 = vunpack.c.l.b16 %v230
        %v315 = vunpack.c.h.b16 %v230
        %v316 = vunpack.c.l.b16 %v231
        %v317 = vunpack.c.h.b16 %v231
        %v318 = vunpack.c.l.b16 %v232
        %v319 = vunpack.c.h.b16 %v232
        %v320 = vunpack.c.l.b16 %v233
        %v321 = vunpack.c.h.b16 %v233
        %v322 = vunpack.c.l.b16 %v234
        %v323 = vunpack.c.h.b16 %v234
        %v324 = vunpack.c.l.b16 %v235
        %v325 = vunpack.c.h.b16 %v235
        %v326 = vpack.c.b16 %v296, %v294
        %v327 = vpack.c.b16 %v297, %v295
        %v328 = vpack.c.b16 %v300, %v298
        %v329 = vpack.c.b16 %v301, %v299
        %v330 = vpack.c.b16 %v304, %v302
        %v331 = vpack.c.b16 %v305, %v303
        %v332 = vpack.c.b16 %v308, %v306
        %v333 = vpack.c.b16 %v309, %v307
        %v334 = vpack.c.b16 %v312, %v310
        %v335 = vpack.c.b16 %v313, %v311
        %v336 = vpack.c.b16 %v316, %v314
        %v337 = vpack.c.b16 %v317, %v315
        %v338 = vpack.c.b16 %v320, %v318
        %v339 = vpack.c.b16 %v321, %v319
        %v340 = vpack.c.b16 %v324, %v322
        %v341 = vpack.c.b16 %v325, %v323
        %358 = vmatpush.bf16.msra.mxu0 %v340
        %359 = vmatpush.bf16.msra.mxu0 %v338
        %360 = vmatpush.bf16.msra.mxu0 %v336
        %361 = vmatpush.bf16.msra.mxu0 %v334
        %362 = vmatpush.bf16.msra.mxu0 %v332
        %363 = vmatpush.bf16.msra.mxu0 %v330
        %364 = vmatpush.bf16.msra.mxu0 %v328
        %365 = vmatpush.bf16.msra.mxu0 %v326
        %366 = vmatmul.bf16.gmra.mxu0 %v266
        %v367 = vpop.f32.mrf.mxu0
        %v368 = vadd.f32 %v238, %v367
        %v369 = vpop.f32.mrf.mxu0
        %v370 = vadd.f32 %v238, %v369
        %371 = vmatmul.bf16.gmra.mxu0 %v267
        %v372 = vpop.f32.mrf.mxu0
        %v373 = vadd.f32 %v238, %v372
        %v374 = vpop.f32.mrf.mxu0
        %v375 = vadd.f32 %v238, %v374
        %376 = vmatmul.bf16.gmra.mxu0 %v268
        %v377 = vpop.f32.mrf.mxu0
        %v378 = vadd.f32 %v238, %v377
        %v379 = vpop.f32.mrf.mxu0
        %v380 = vadd.f32 %v238, %v379
        %381 = vmatmul.bf16.gmra.mxu0 %v269
        %v382 = vpop.f32.mrf.mxu0
        %v383 = vadd.f32 %v238, %v382
        %v384 = vpop.f32.mrf.mxu0
        %v385 = vadd.f32 %v238, %v384
        %386 = vmatmul.bf16.gmra.mxu0 %v270
        %v387 = vpop.f32.mrf.mxu0
        %v388 = vadd.f32 %v238, %v387
        %v389 = vpop.f32.mrf.mxu0
        %v390 = vadd.f32 %v238, %v389
        %391 = vmatmul.bf16.gmra.mxu0 %v271
        %v392 = vpop.f32.mrf.mxu0
        %v393 = vadd.f32 %v238, %v392
        %v394 = vpop.f32.mrf.mxu0
        %v395 = vadd.f32 %v238, %v394
        %396 = vdwg.mxu0
        %397 = vmatpush.bf16.msra.mxu0 %v341
        %398 = vmatpush.bf16.msra.mxu0 %v339
        %399 = vmatpush.bf16.msra.mxu0 %v337
        %400 = vmatpush.bf16.msra.mxu0 %v335
        %401 = vmatpush.bf16.msra.mxu0 %v333
        %402 = vmatpush.bf16.msra.mxu0 %v331
        %403 = vmatpush.bf16.msra.mxu0 %v329
        %404 = vmatpush.bf16.msra.mxu0 %v327
        %405 = vmatmul.bf16.gmra.mxu0 %v266
        %v406 = vpop.f32.mrf.mxu0
        %v407 = vadd.f32 %v239, %v406
        %v408 = vpop.f32.mrf.mxu0
        %v409 = vadd.f32 %v239, %v408
        %410 = vmatmul.bf16.gmra.mxu0 %v267
        %v411 = vpop.f32.mrf.mxu0
        %v412 = vadd.f32 %v239, %v411
        %v413 = vpop.f32.mrf.mxu0
        %v414 = vadd.f32 %v239, %v413
        %415 = vmatmul.bf16.gmra.mxu0 %v268
        %v416 = vpop.f32.mrf.mxu0
        %v417 = vadd.f32 %v239, %v416
        %v418 = vpop.f32.mrf.mxu0
        %v419 = vadd.f32 %v239, %v418
        %420 = vmatmul.bf16.gmra.mxu0 %v269
        %v421 = vpop.f32.mrf.mxu0
        %v422 = vadd.f32 %v239, %v421
        %v423 = vpop.f32.mrf.mxu0
        %v424 = vadd.f32 %v239, %v423
        %425 = vmatmul.bf16.gmra.mxu0 %v270
        %v426 = vpop.f32.mrf.mxu0
        %v427 = vadd.f32 %v239, %v426
        %v428 = vpop.f32.mrf.mxu0
        %v429 = vadd.f32 %v239, %v428
        %430 = vmatmul.bf16.gmra.mxu0 %v271
        %v431 = vpop.f32.mrf.mxu0
        %v432 = vadd.f32 %v239, %v431
        %v433 = vpop.f32.mrf.mxu0
        %v434 = vadd.f32 %v239, %v433
        %435 = vdwg.mxu0
        %v436 = vmax.f32 %v368, 0.0
        %v437 = vmax.f32 %v407, 0.0
        %v438 = vmax.f32 %v370, 0.0
        %v439 = vmax.f32 %v409, 0.0
        %v440 = vmax.f32 %v373, 0.0
        %v441 = vmax.f32 %v412, 0.0
        %v442 = vmax.f32 %v375, 0.0
        %v443 = vmax.f32 %v414, 0.0
        %v444 = vmax.f32 %v378, 0.0
        %v445 = vmax.f32 %v417, 0.0
        %v446 = vmax.f32 %v380, 0.0
        %v447 = vmax.f32 %v419, 0.0
        %v448 = vmax.f32 %v383, 0.0
        %v449 = vmax.f32 %v422, 0.0
        %v450 = vmax.f32 %v385, 0.0
        %v451 = vmax.f32 %v424, 0.0
        %v452 = vmax.f32 %v388, 0.0
        %v453 = vmax.f32 %v427, 0.0
        %v454 = vmax.f32 %v390, 0.0
        %v455 = vmax.f32 %v429, 0.0
        %v456 = vmax.f32 %v393, 0.0
        %v457 = vmax.f32 %v432, 0.0
        %v458 = vmax.f32 %v395, 0.0
        %v459 = vmax.f32 %v434, 0.0
        %460 = vst [vmem:[%s206] sm:$0xff] %v436
        %461 = vst [vmem:[%s206 + $0x8] sm:$0xff] %v437
        %462 = vst [vmem:[%s206 + $0x10] sm:$0xff] %v438
        %463 = vst [vmem:[%s206 + $0x18] sm:$0xff] %v439
        %464 = vst [vmem:[%s206 + $0x20] sm:$0xff] %v440
        %465 = vst [vmem:[%s206 + $0x28] sm:$0xff] %v441
        %466 = vst [vmem:[%s206 + $0x30] sm:$0xff] %v442
        %467 = vst [vmem:[%s206 + $0x38] sm:$0xff] %v443
        %468 = vst [vmem:[%s206 + $0x40] sm:$0xff] %v444
        %469 = vst [vmem:[%s206 + $0x48] sm:$0xff] %v445
        %470 = vst [vmem:[%s206 + $0x50] sm:$0xff] %v446
        %471 = vst [vmem:[%s206 + $0x58] sm:$0xff] %v447
        %472 = vst [vmem:[%s206 + $0x60] sm:$0xff] %v448
        %473 = vst [vmem:[%s206 + $0x68] sm:$0xff] %v449
        %474 = vst [vmem:[%s206 + $0x70] sm:$0xff] %v450
        %475 = vst [vmem:[%s206 + $0x78] sm:$0xff] %v451
        %476 = vst [vmem:[%s206 + $0x80] sm:$0xff] %v452
        %477 = vst [vmem:[%s206 + $0x88] sm:$0xff] %v453
        %478 = vst [vmem:[%s206 + $0x90] sm:$0xff] %v454
        %479 = vst [vmem:[%s206 + $0x98] sm:$0xff] %v455
        %480 = vst [vmem:[%s206 + $0xa0] sm:$0xff] %v456
        %481 = vst [vmem:[%s206 + $0xa8] sm:$0xff] %v457
        %482 = vst [vmem:[%s206 + $0xb0] sm:$0xff] %v458
        %483 = vst [vmem:[%s206 + $0xb8] sm:$0xff] %v459
        %s484 = smul.u32 12, %s16
        %p485 = scmp.lt.s32.totalorder %s484, 23
        %s486 = scalar_select %p485, %s484, 23
        %s487 = smul.addr %s486, 2
        %s488 = smul.addr %s487, 8
        %s489 = scalar_lea.vmem %s3, %s488
        // Predicated region
        $region41: #{repnet_forward.6} parent=31 // pred_check
          %p490 = pneg %p102
        $region42: #{repnet_forward.6} parent=31 // pred_check_branch
          %492 = sbr.rel (%p490) target = $region44
        $region43: #{repnet_forward.6} parent=31 // pred_region
          %s493 = smul.u32 12, %s16
        $region44: #{repnet_forward.6} parent=31 // pred_fallthru
          _
      $region32: #{repnet_forward.6} parent=5 // pred_fallthru
        _
      %p494 = scmp.le.s32.totalorder 2, %s11
      // Predicated region
      $region45: #{repnet_forward.6} parent=5 // pred_check
        %p495 = pneg %p494
      $region46: #{repnet_forward.6} parent=5 // pred_check_branch
        %497 = sbr.rel (%p495) target = $region48
      $region47: #{repnet_forward.6} parent=5 // pred_region
        %s498 = ssub.s32 %s11, 2
        // Predicated region
        $region49: #{repnet_forward.6} parent=47 // pred_check
          %p499 = pneg %p108
        $region50: #{repnet_forward.6} parent=47 // pred_check_branch
          %501 = sbr.rel (%p499) target = $region52
        $region51: #{repnet_forward.6} parent=47 // pred_region
          %s502 = smul.u32 12, %s17
          %p503 = scmp.lt.s32.totalorder %s502, 23
          %s504 = scalar_select %p503, %s502, 23
          %s505 = smul.addr %s504, 2
          %s506 = smul.addr %s505, 8
          %s507 = scalar_lea.vmem %s3, %s506
        $region52: #{repnet_forward.6} parent=47 // pred_fallthru
          _
      $region48: #{repnet_forward.6} parent=5 // pred_fallthru
        _
    $region6: #{repnet_forward.6} parent=1 // loop_footer
      %s15 = sadd.s32 1, %s11
    $region7: #{repnet_forward.6} parent=1 // loop_footer_branch
      %10 = sbr.rel target = $region3
    $region8: #{repnet_forward.6} parent=1 // loop_exit
      _
    %508 = vsyncpa [#allocation3], 1
    %s509 = scalar_lea.sflag [#allocation3], 1
    %510 = vsyncpa %s509, 1
    %511 = vsyncpa [#allocation5], 1

// kernel: repnet_forward.8
$region0: #{repnet_forward.8}
  #allocation0 [shape = 'u32[]', space=smem, size = 0x4, offset = 0x4, fixed_abs, tag = 'smem constant byte address 0x4 - core index']
  #allocation1 [shape = 'u32[72,128]{1,0:T(1,128)}', space=vmem, size = 0x9000, scoped, tag = 'internal scratch']
  %s0 = inlined_call_operand.vmem [shape: bf16[48,512], index: 0, kind: input, shape index: {}]
  %s1 = inlined_call_operand.vmem [shape: bf16[512,256], index: 1, kind: input, shape index: {}]
  %s2 = inlined_call_operand.vmem [shape: f32[1,256], index: 2, kind: input, shape index: {}]
  %s3 = inlined_call_operand.vmem [shape: f32[48,256], index: 3, kind: output, shape index: {}]
  %s4 = sld [smem:[#allocation0]]
  $region45: #{repnet_forward.8} parent=0
    _
  %s6 = ssub.s32 1, %s4
  %s7 = scalar_select 0, %s6, %s4
  loop: start=0, step=1, limit=4
  $region2: #{repnet_forward.8} parent=0 // loop_pre_header
    _
  $region3: #{repnet_forward.8} parent=0 // loop_header
    %s9 = sphi 0, %s13
    %p10 = scmp.ge.s32.totalorder %s9, 4
    %s19 = sphi 0, %s21
    %s22 = sphi 0, %s19
    %s23 = sphi 0, %s22
    %s39 = sphi 0, %s23
    %s43 = sphi 0, %s43
    %s45 = sphi 0, %s43
    %s46 = sphi 0, %s45
    %s60 = sphi 0, %s46
    %s64 = sphi 0, %s64
    %s66 = sphi 0, %s64
    %s67 = sphi 0, %s66
    %s81 = sphi 0, %s67
    %s87 = sphi 0, %s89
    %s90 = sphi 0, %s87
    %s91 = sphi 0, %s90
    %s107 = sphi 0, %s91
  $region4: #{repnet_forward.8} parent=0 // loop_header_branch
    %12 = sbr.rel (%p10) target = $region8
  $region5: #{repnet_forward.8} parent=0 // loop_body
    %s14 = ssub.s32 %s9, 1
    %s15 = ssub.s32 %s9, 2
    %s16 = sadd.s32 %s9, 1
    %s17 = ssub.s32 %s9, %s16
    %p18 = scmp.eq.s32.totalorder %s17, 0
    %s20 = sadd.s32 %s19, 1
    %s21 = scalar_select %p18, %s19, %s20
    %p24 = pneg %p18
    %p25 = scmp.eq.s32.totalorder %s9, 1
    %p26 = por %p24, %p25
    %p27 = scmp.ne.s32.totalorder %s19, %s22
    %p28 = scmp.eq.s32.totalorder %s9, 0
    %p29 = por %p27, %p28
    %p30 = scmp.ne.s32.totalorder %s19, %s22
    %p31 = scmp.eq.s32.totalorder %s14, 1
    %p32 = por %p30, %p31
    %p33 = scmp.ne.s32.totalorder %s22, %s23
    %p34 = scmp.eq.s32.totalorder %s14, 0
    %p35 = por %p33, %p34
    %p36 = scmp.ne.s32.totalorder %s22, %s23
    %p37 = scmp.eq.s32.totalorder %s15, 1
    %p38 = por %p36, %p37
    %p40 = scmp.ne.s32.totalorder %s23, %s39
    %p41 = scmp.eq.s32.totalorder %s15, 0
    %p42 = por %p40, %p41
    %s44 = sadd.s32 %s43, 1
    %p47 = scmp.eq.s32.totalorder %s9, 1
    %p48 = scmp.ne.s32.totalorder %s43, %s45
    %p49 = scmp.eq.s32.totalorder %s9, 0
    %p50 = por %p48, %p49
    %p51 = scmp.ne.s32.totalorder %s43, %s45
    %p52 = scmp.eq.s32.totalorder %s14, 1
    %p53 = por %p51, %p52
    %p54 = scmp.ne.s32.totalorder %s45, %s46
    %p55 = scmp.eq.s32.totalorder %s14, 0
    %p56 = por %p54, %p55
    %p57 = scmp.ne.s32.totalorder %s45, %s46
    %p58 = scmp.eq.s32.totalorder %s15, 1
    %p59 = por %p57, %p58
    %p61 = scmp.ne.s32.totalorder %s46, %s60
    %p62 = scmp.eq.s32.totalorder %s15, 0
    %p63 = por %p61, %p62
    %s65 = sadd.s32 %s64, 1
    %p68 = scmp.eq.s32.totalorder %s9, 1
    %p69 = scmp.ne.s32.totalorder %s64, %s66
    %p70 = scmp.eq.s32.totalorder %s9, 0
    %p71 = por %p69, %p70
    %p72 = scmp.ne.s32.totalorder %s64, %s66
    %p73 = scmp.eq.s32.totalorder %s14, 1
    %p74 = por %p72, %p73
    %p75 = scmp.ne.s32.totalorder %s66, %s67
    %p76 = scmp.eq.s32.totalorder %s14, 0
    %p77 = por %p75, %p76
    %p78 = scmp.ne.s32.totalorder %s66, %s67
    %p79 = scmp.eq.s32.totalorder %s15, 1
    %p80 = por %p78, %p79
    %p82 = scmp.ne.s32.totalorder %s67, %s81
    %p83 = scmp.eq.s32.totalorder %s15, 0
    %p84 = por %p82, %p83
    %s85 = ssub.s32 %s9, %s16
    %p86 = scmp.eq.s32.totalorder %s85, 0
    %s88 = sadd.s32 %s87, 1
    %s89 = scalar_select %p86, %s87, %s88
    %p92 = pneg %p86
    %p93 = scmp.eq.s32.totalorder %s9, 1
    %p94 = por %p92, %p93
    %p95 = scmp.ne.s32.totalorder %s87, %s90
    %p96 = scmp.eq.s32.totalorder %s9, 0
    %p97 = por %p95, %p96
    %p98 = scmp.ne.s32.totalorder %s87, %s90
    %p99 = scmp.eq.s32.totalorder %s14, 1
    %p100 = por %p98, %p99
    %p101 = scmp.ne.s32.totalorder %s90, %s91
    %p102 = scmp.eq.s32.totalorder %s14, 0
    %p103 = por %p101, %p102
    %p104 = scmp.ne.s32.totalorder %s90, %s91
    %p105 = scmp.eq.s32.totalorder %s15, 1
    %p106 = por %p104, %p105
    %p108 = scmp.ne.s32.totalorder %s91, %s107
    %p109 = scmp.eq.s32.totalorder %s15, 0
    %p110 = por %p108, %p109
    %p111 = scmp.le.s32.totalorder 1, %s9
    %p112 = scmp.lt.s32.totalorder %s9, 3
    %p113 = pnand %p111, %p112
    %p114 = pneg %p113
    // Predicated region
    $region9: #{repnet_forward.8} parent=5 // pred_check
      _
    $region10: #{repnet_forward.8} parent=5 // pred_check_branch
      %116 = sbr.rel (%p113) target = $region12
    $region11: #{repnet_forward.8} parent=5 // pred_region
      %s117 = ssub.s32 %s9, 1
      // Predicated region
      $region13: #{repnet_forward.8} parent=11 // pred_check
        %p118 = pneg %p56
      $region14: #{repnet_forward.8} parent=11 // pred_check_branch
        %120 = sbr.rel (%p118) target = $region16
      $region15: #{repnet_forward.8} parent=11 // pred_region
        _
      $region16: #{repnet_forward.8} parent=11 // pred_fallthru
        _
      // Predicated region
      $region17: #{repnet_forward.8} parent=11 // pred_check
        %p121 = pneg %p77
      $region18: #{repnet_forward.8} parent=11 // pred_check_branch
        %123 = sbr.rel (%p121) target = $region20
      $region19: #{repnet_forward.8} parent=11 // pred_region
        _
      $region20: #{repnet_forward.8} parent=11 // pred_fallthru
        _
    $region12: #{repnet_forward.8} parent=5 // pred_fallthru
      _
    %p124 = scmp.lt.s32.totalorder %s9, 2
    // Predicated region
    $region21: #{repnet_forward.8} parent=5 // pred_check
      %p125 = pneg %p124
    $region22: #{repnet_forward.8} parent=5 // pred_check_branch
      %127 = sbr.rel (%p125) target = $region24
    $region23: #{repnet_forward.8} parent=5 // pred_region
      // Predicated region
      $region25: #{repnet_forward.8} parent=23 // pred_check
        %p128 = pneg %p29
      $region26: #{repnet_forward.8} parent=23 // pred_check_branch
        %130 = sbr.rel (%p128) target = $region28
      $region27: #{repnet_forward.8} parent=23 // pred_region
        %s131 = smul.u32 3, %s9
        %p132 = scmp.lt.s32.totalorder %s131, 5
        %s133 = scalar_select %p132, %s131, 5
        %s134 = smul.addr %s133, 4
        %s135 = smul.addr %s134, 4
        %s136 = scalar_lea.vmem %s0, %s135
        %s137 = smul.u32 3, %s9
      $region28: #{repnet_forward.8} parent=23 // pred_fallthru
        _
    $region24: #{repnet_forward.8} parent=5 // pred_fallthru
      _
    %p138 = scmp.le.s32.totalorder 1, %s9
    %p139 = scmp.lt.s32.totalorder %s9, 3
    %p140 = pnand %p138, %p139
    %p141 = pneg %p140
    // Predicated region
    $region29: #{repnet_forward.8} parent=5 // pred_check
      _
    $region30: #{repnet_forward.8} parent=5 // pred_check_branch
      %143 = sbr.rel (%p140) target = $region32
    $region31: #{repnet_forward.8} parent=5 // pred_region
      %s144 = ssub.s32 %s9, 1
      %s145 = smul.u32 3, %s14
      %p146 = scmp.lt.s32.totalorder %s145, 5
      %s147 = scalar_select %p146, %s145, 5
      %s148 = smul.addr %s147, 4
      %s149 = smul.addr %s148, 4
      %s150 = scalar_lea.vmem %s0, %s149
      %p151 = pneg %p35
      %p152 = pneg %p32
      %p153 = pneg %p56
      %p154 = pneg %p53
      %p155 = pneg %p77
      %p156 = pneg %p74
      %p157 = pneg %p103
      %p158 = pneg %p100
      %s159 = smul.u32 3, %s14
      %p160 = scmp.lt.s32.totalorder %s159, 5
      %s161 = scalar_select %p160, %s159, 5
      %s162 = smul.addr %s161, 2
      %s163 = smul.addr %s162, 8
      %s164 = scalar_lea.vmem %s3, %s163
      %s165 = smul.u32 3, %s14
      %p166 = scmp.lt.s32.totalorder %s165, 5
      %s167 = scalar_select %p166, %s165, 5
      %s168 = smul.addr %s167, 4
      %s169 = smul.addr %s168, 4
      %s170 = scalar_lea.vmem %s0, %s169
      %s171 = smul.u32 3, %s14
      %s172 = smul.u32 3, %s14
      %p173 = scmp.lt.s32.totalorder %s172, 5
      %s174 = scalar_select %p173, %s172, 5
      %s175 = smul.addr %s174, 2
      %s176 = smul.addr %s175, 8
      %s177 = scalar_lea.vmem %s3, %s176
      %s178 = smul.u32 3, %s14
      %v179 = vld [vmem:[%s170] sm:$0xff]
      %v180 = vld [vmem:[%s170 + $0x8] sm:$0xff]
      %v181 = vld [vmem:[%s170 + $0x10] sm:$0xff]
      %v182 = vld [vmem:[%s170 + $0x18] sm:$0xff]
      %v183 = vld [vmem:[%s170 + $0x20] sm:$0xff]
      %v184 = vld [vmem:[%s170 + $0x28] sm:$0xff]
      %v185 = vld [vmem:[%s1] sm:$0xff]
      %v186 = vld [vmem:[%s1 + $0x8] sm:$0xff]
      %v187 = vld [vmem:[%s1 + $0x10] sm:$0xff]
      %v188 = vld [vmem:[%s1 + $0x18] sm:$0xff]
      %v189 = vld [vmem:[%s1 + $0x20] sm:$0xff]
      %v190 = vld [vmem:[%s1 + $0x28] sm:$0xff]
      %v191 = vld [vmem:[%s1 + $0x30] sm:$0xff]
      %v192 = vld [vmem:[%s1 + $0x38] sm:$0xff]
      %v193 = vld [vmem:[%s1 + $0x40] sm:$0xff]
      %v194 = vld [vmem:[%s1 + $0x48] sm:$0xff]
      %v195 = vld [vmem:[%s1 + $0x50] sm:$0xff]
      %v196 = vld [vmem:[%s1 + $0x58] sm:$0xff]
      %v197 = vld [vmem:[%s1 + $0x60] sm:$0xff]
      %v198 = vld [vmem:[%s1 + $0x68] sm:$0xff]
      %v199 = vld [vmem:[%s1 + $0x70] sm:$0xff]
      %v200 = vld [vmem:[%s1 + $0x78] sm:$0xff]
      %v201 = vld [vmem:[%s1 + $0x80] sm:$0xff]
      %v202 = vld [vmem:[%s1 + $0x88] sm:$0xff]
      %v203 = vld [vmem:[%s1 + $0x90] sm:$0xff]
      %v204 = vld [vmem:[%s1 + $0x98] sm:$0xff]
      %v205 = vld [vmem:[%s1 + $0xa0] sm:$0xff]
      %v206 = vld [vmem:[%s1 + $0xa8] sm:$0xff]
      %v207 = vld [vmem:[%s1 + $0xb0] sm:$0xff]
      %v208 = vld [vmem:[%s1 + $0xb8] sm:$0xff]
      %v209 = vld [vmem:[%s1 + $0xc0] sm:$0xff]
      %v210 = vld [vmem:[%s1 + $0xc8] sm:$0xff]
      %v211 = vld [vmem:[%s1 + $0xd0] sm:$0xff]
      %v212 = vld [vmem:[%s1 + $0xd8] sm:$0xff]
      %v213 = vld [vmem:[%s1 + $0xe0] sm:$0xff]
      %v214 = vld [vmem:[%s1 + $0xe8] sm:$0xff]
      %v215 = vld [vmem:[%s1 + $0xf0] sm:$0xff]
      %v216 = vld [vmem:[%s1 + $0xf8] sm:$0xff]
      %v217 = vld [vmem:[%s1 + $0x100] sm:$0xff]
      %v218 = vld [vmem:[%s1 + $0x108] sm:$0xff]
      %v219 = vld [vmem:[%s1 + $0x110] sm:$0xff]
      %v220 = vld [vmem:[%s1 + $0x118] sm:$0xff]
      %v221 = vld [vmem:[%s1 + $0x120] sm:$0xff]
      %v222 = vld [vmem:[%s1 + $0x128] sm:$0xff]
      %v223 = vld [vmem:[%s1 + $0x130] sm:$0xff]
      %v224 = vld [vmem:[%s1 + $0x138] sm:$0xff]
      %v225 = vld [vmem:[%s1 + $0x140] sm:$0xff]
      %v226 = vld [vmem:[%s1 + $0x148] sm:$0xff]
      %v227 = vld [vmem:[%s1 + $0x150] sm:$0xff]
      %v228 = vld [vmem:[%s1 + $0x158] sm:$0xff]
      %v229 = vld [vmem:[%s1 + $0x160] sm:$0xff]
      %v230 = vld [vmem:[%s1 + $0x168] sm:$0xff]
      %v231 = vld [vmem:[%s1 + $0x170] sm:$0xff]
      %v232 = vld [vmem:[%s1 + $0x178] sm:$0xff]
      %v233 = vld [vmem:[%s1 + $0x180] sm:$0xff]
      %v234 = vld [vmem:[%s1 + $0x188] sm:$0xff]
      %v235 = vld [vmem:[%s1 + $0x190] sm:$0xff]
      %v236 = vld [vmem:[%s1 + $0x198] sm:$0xff]
      %v237 = vld [vmem:[%s1 + $0x1a0] sm:$0xff]
      %v238 = vld [vmem:[%s1 + $0x1a8] sm:$0xff]
      %v239 = vld [vmem:[%s1 + $0x1b0] sm:$0xff]
      %v240 = vld [vmem:[%s1 + $0x1b8] sm:$0xff]
      %v241 = vld [vmem:[%s1 + $0x1c0] sm:$0xff]
      %v242 = vld [vmem:[%s1 + $0x1c8] sm:$0xff]
      %v243 = vld [vmem:[%s1 + $0x1d0] sm:$0xff]
      %v244 = vld [vmem:[%s1 + $0x1d8] sm:$0xff]
      %v245 = vld [vmem:[%s1 + $0x1e0] sm:$0xff]
      %v246 = vld [vmem:[%s1 + $0x1e8] sm:$0xff]
      %v247 = vld [vmem:[%s1 + $0x1f0] sm:$0xff]
      %v248 = vld [vmem:[%s1 + $0x1f8] sm:$0xff]
      %v249 = vld [vmem:[%s2] sm:$0x3]
      %v251 = vperm.slane %v249, 0
      %v252 = vperm.slane %v249, 1
      %v261 = vunpack.c.l.b16 %v179
      %v262 = vunpack.c.h.b16 %v179
      %v263 = vunpack.c.l.b16 %v180
      %v264 = vunpack.c.h.b16 %v180
      %v265 = vunpack.c.l.b16 %v181
      %v266 = vunpack.c.h.b16 %v181
      %v267 = vunpack.c.l.b16 %v182
      %v268 = vunpack.c.h.b16 %v182
      %v269 = vunpack.c.l.b16 %v183
      %v270 = vunpack.c.h.b16 %v183
      %v271 = vunpack.c.l.b16 %v184
      %v272 = vunpack.c.h.b16 %v184
      %v273 = vpack.c.b16 %v265, %v261
      %v274 = vpack.c.b16 %v266, %v262
      %v275 = vpack.c.b16 %v267, %v263
      %v276 = vpack.c.b16 %v268, %v264
      %v277 = vpack.c.b16 %v269, %v269
      %v278 = vpack.c.b16 %v270, %v270
      %v279 = vpack.c.b16 %v271, %v271
      %v280 = vpack.c.b16 %v272, %v272
      %v353 = vunpack.c.l.b16 %v185
      %v354 = vunpack.c.h.b16 %v185
      %v355 = vunpack.c.l.b16 %v186
      %v356 = vunpack.c.h.b16 %v186
      %v357 = vunpack.c.l.b16 %v187
      %v358 = vunpack.c.h.b16 %v187
      %v359 = vunpack.c.l.b16 %v188
      %v360 = vunpack.c.h.b16 %v188
      %v361 = vunpack.c.l.b16 %v189
      %v362 = vunpack.c.h.b16 %v189
      %v363 = vunpack.c.l.b16 %v190
      %v364 = vunpack.c.h.b16 %v190
      %v365 = vunpack.c.l.b16 %v191
      %v366 = vunpack.c.h.b16 %v191
      %v367 = vunpack.c.l.b16 %v192
      %v368 = vunpack.c.h.b16 %v192
      %v369 = vunpack.c.l.b16 %v193
      %v370 = vunpack.c.h.b16 %v193
      %v371 = vunpack.c.l.b16 %v194
      %v372 = vunpack.c.h.b16 %v194
      %v373 = vunpack.c.l.b16 %v195
      %v374 = vunpack.c.h.b16 %v195
      %v375 = vunpack.c.l.b16 %v196
      %v376 = vunpack.c.h.b16 %v196
      %v377 = vunpack.c.l.b16 %v197
      %v378 = vunpack.c.h.b16 %v197
      %v379 = vunpack.c.l.b16 %v198
      %v380 = vunpack.c.h.b16 %v198
      %v381 = vunpack.c.l.b16 %v199
      %v382 = vunpack.c.h.b16 %v199
      %v383 = vunpack.c.l.b16 %v200
      %v384 = vunpack.c.h.b16 %v200
      %v385 = vunpack.c.l.b16 %v201
      %v386 = vunpack.c.h.b16 %v201
      %v387 = vunpack.c.l.b16 %v202
      %v388 = vunpack.c.h.b16 %v202
      %v389 = vunpack.c.l.b16 %v203
      %v390 = vunpack.c.h.b16 %v203
      %v391 = vunpack.c.l.b16 %v204
      %v392 = vunpack.c.h.b16 %v204
      %v393 = vunpack.c.l.b16 %v205
      %v394 = vunpack.c.h.b16 %v205
      %v395 = vunpack.c.l.b16 %v206
      %v396 = vunpack.c.h.b16 %v206
      %v397 = vunpack.c.l.b16 %v207
      %v398 = vunpack.c.h.b16 %v207
      %v399 = vunpack.c.l.b16 %v208
      %v400 = vunpack.c.h.b16 %v208
      %v401 = vunpack.c.l.b16 %v209
      %v402 = vunpack.c.h.b16 %v209
      %v403 = vunpack.c.l.b16 %v210
      %v404 = vunpack.c.h.b16 %v210
      %v405 = vunpack.c.l.b16 %v211
      %v406 = vunpack.c.h.b16 %v211
      %v407 = vunpack.c.l.b16 %v212
      %v408 = vunpack.c.h.b16 %v212
      %v409 = vunpack.c.l.b16 %v213
      %v410 = vunpack.c.h.b16 %v213
      %v411 = vunpack.c.l.b16 %v214
      %v412 = vunpack.c.h.b16 %v214
      %v413 = vunpack.c.l.b16 %v215
      %v414 = vunpack.c.h.b16 %v215
      %v415 = vunpack.c.l.b16 %v216
      %v416 = vunpack.c.h.b16 %v216
      %v417 = vunpack.c.l.b16 %v217
      %v418 = vunpack.c.h.b16 %v217
      %v419 = vunpack.c.l.b16 %v218
      %v420 = vunpack.c.h.b16 %v218
      %v421 = vunpack.c.l.b16 %v219
      %v422 = vunpack.c.h.b16 %v219
      %v423 = vunpack.c.l.b16 %v220
      %v424 = vunpack.c.h.b16 %v220
      %v425 = vunpack.c.l.b16 %v221
      %v426 = vunpack.c.h.b16 %v221
      %v427 = vunpack.c.l.b16 %v222
      %v428 = vunpack.c.h.b16 %v222
      %v429 = vunpack.c.l.b16 %v223
      %v430 = vunpack.c.h.b16 %v223
      %v431 = vunpack.c.l.b16 %v224
      %v432 = vunpack.c.h.b16 %v224
      %v433 = vunpack.c.l.b16 %v225
      %v434 = vunpack.c.h.b16 %v225
      %v435 = vunpack.c.l.b16 %v226
      %v436 = vunpack.c.h.b16 %v226
      %v437 = vunpack.c.l.b16 %v227
      %v438 = vunpack.c.h.b16 %v227
      %v439 = vunpack.c.l.b16 %v228
      %v440 = vunpack.c.h.b16 %v228
      %v441 = vunpack.c.l.b16 %v229
      %v442 = vunpack.c.h.b16 %v229
      %v443 = vunpack.c.l.b16 %v230
      %v444 = vunpack.c.h.b16 %v230
      %v445 = vunpack.c.l.b16 %v231
      %v446 = vunpack.c.h.b16 %v231
      %v447 = vunpack.c.l.b16 %v232
      %v448 = vunpack.c.h.b16 %v232
      %v449 = vunpack.c.l.b16 %v233
      %v450 = vunpack.c.h.b16 %v233
      %v451 = vunpack.c.l.b16 %v234
      %v452 = vunpack.c.h.b16 %v234
      %v453 = vunpack.c.l.b16 %v235
      %v454 = vunpack.c.h.b16 %v235
      %v455 = vunpack.c.l.b16 %v236
      %v456 = vunpack.c.h.b16 %v236
      %v457 = vunpack.c.l.b16 %v237
      %v458 = vunpack.c.h.b16 %v237
      %v459 = vunpack.c.l.b16 %v238
      %v460 = vunpack.c.h.b16 %v238
      %v461 = vunpack.c.l.b16 %v239
      %v462 = vunpack.c.h.b16 %v239
      %v463 = vunpack.c.l.b16 %v240
      %v464 = vunpack.c.h.b16 %v240
      %v465 = vunpack.c.l.b16 %v241
      %v466 = vunpack.c.h.b16 %v241
      %v467 = vunpack.c.l.b16 %v242
      %v468 = vunpack.c.h.b16 %v242
      %v469 = vunpack.c.l.b16 %v243
      %v470 = vunpack.c.h.b16 %v243
      %v471 = vunpack.c.l.b16 %v244
      %v472 = vunpack.c.h.b16 %v244
      %v473 = vunpack.c.l.b16 %v245
      %v474 = vunpack.c.h.b16 %v245
      %v475 = vunpack.c.l.b16 %v246
      %v476 = vunpack.c.h.b16 %v246
      %v477 = vunpack.c.l.b16 %v247
      %v478 = vunpack.c.h.b16 %v247
      %v479 = vunpack.c.l.b16 %v248
      %v480 = vunpack.c.h.b16 %v248
      %v481 = vpack.c.b16 %v355, %v353
      %v482 = vpack.c.b16 %v356, %v354
      %v483 = vpack.c.b16 %v359, %v357
      %v484 = vpack.c.b16 %v360, %v358
      %v485 = vpack.c.b16 %v363, %v361
      %v486 = vpack.c.b16 %v364, %v362
      %v487 = vpack.c.b16 %v367, %v365
      %v488 = vpack.c.b16 %v368, %v366
      %v489 = vpack.c.b16 %v371, %v369
      %v490 = vpack.c.b16 %v372, %v370
      %v491 = vpack.c.b16 %v375, %v373
      %v492 = vpack.c.b16 %v376, %v374
      %v493 = vpack.c.b16 %v379, %v377
      %v494 = vpack.c.b16 %v380, %v378
      %v495 = vpack.c.b16 %v383, %v381
      %v496 = vpack.c.b16 %v384, %v382
      %v497 = vpack.c.b16 %v387, %v385
      %v498 = vpack.c.b16 %v388, %v386
      %v499 = vpack.c.b16 %v391, %v389
      %v500 = vpack.c.b16 %v392, %v390
      %v501 = vpack.c.b16 %v395, %v393
      %v502 = vpack.c.b16 %v396, %v394
      %v503 = vpack.c.b16 %v399, %v397
      %v504 = vpack.c.b16 %v400, %v398
      %v505 = vpack.c.b16 %v403, %v401
      %v506 = vpack.c.b16 %v404, %v402
      %v507 = vpack.c.b16 %v407, %v405
      %v508 = vpack.c.b16 %v408, %v406
      %v509 = vpack.c.b16 %v411, %v409
      %v510 = vpack.c.b16 %v412, %v410
      %v511 = vpack.c.b16 %v415, %v413
      %v512 = vpack.c.b16 %v416, %v414
      %v513 = vpack.c.b16 %v419, %v417
      %v514 = vpack.c.b16 %v420, %v418
      %v515 = vpack.c.b16 %v423, %v421
      %v516 = vpack.c.b16 %v424, %v422
      %v517 = vpack.c.b16 %v427, %v425
      %v518 = vpack.c.b16 %v428, %v426
      %v519 = vpack.c.b16 %v431, %v429
      %v520 = vpack.c.b16 %v432, %v430
      %v521 = vpack.c.b16 %v435, %v433
      %v522 = vpack.c.b16 %v436, %v434
      %v523 = vpack.c.b16 %v439, %v437
      %v524 = vpack.c.b16 %v440, %v438
      %v525 = vpack.c.b16 %v443, %v441
      %v526 = vpack.c.b16 %v444, %v442
      %v527 = vpack.c.b16 %v447, %v445
      %v528 = vpack.c.b16 %v448, %v446
      %v529 = vpack.c.b16 %v451, %v449
      %v530 = vpack.c.b16 %v452, %v450
      %v531 = vpack.c.b16 %v455, %v453
      %v532 = vpack.c.b16 %v456, %v454
      %v533 = vpack.c.b16 %v459, %v457
      %v534 = vpack.c.b16 %v460, %v458
      %v535 = vpack.c.b16 %v463, %v461
      %v536 = vpack.c.b16 %v464, %v462
      %v537 = vpack.c.b16 %v467, %v465
      %v538 = vpack.c.b16 %v468, %v466
      %v539 = vpack.c.b16 %v471, %v469
      %v540 = vpack.c.b16 %v472, %v470
      %v541 = vpack.c.b16 %v475, %v473
      %v542 = vpack.c.b16 %v476, %v474
      %v543 = vpack.c.b16 %v479, %v477
      %v544 = vpack.c.b16 %v480, %v478
      %609 = vmatpush.bf16.msra.mxu0 %v495
      %610 = vmatpush.bf16.msra.mxu0 %v493
      %611 = vmatpush.bf16.msra.mxu0 %v491
      %612 = vmatpush.bf16.msra.mxu0 %v489
      %613 = vmatpush.bf16.msra.mxu0 %v487
      %614 = vmatpush.bf16.msra.mxu0 %v485
      %615 = vmatpush.bf16.msra.mxu0 %v483
      %616 = vmatpush.bf16.msra.mxu0 %v481
      %617 = vmatmul.bf16.gmra.mxu0 %v273
      %v618 = vpop.f32.mrf.mxu0
      %v619 = vadd.f32 %v251, %v618
      %v620 = vpop.f32.mrf.mxu0
      %v621 = vadd.f32 %v251, %v620
      %622 = vmatmul.bf16.gmra.mxu0 %v277
      %v623 = vpop.f32.mrf.mxu0
      %v624 = vadd.f32 %v251, %v623
      %v625 = vpop.f32.mrf.mxu0
      %626 = vdwg.mxu0
      %627 = vmatpush.bf16.msra.mxu0 %v511
      %628 = vmatpush.bf16.msra.mxu0 %v509
      %629 = vmatpush.bf16.msra.mxu0 %v507
      %630 = vmatpush.bf16.msra.mxu0 %v505
      %631 = vmatpush.bf16.msra.mxu0 %v503
      %632 = vmatpush.bf16.msra.mxu0 %v501
      %633 = vmatpush.bf16.msra.mxu0 %v499
      %634 = vmatpush.bf16.msra.mxu0 %v497
      %635 = vmatmul.bf16.gmra.mxu0 %v274
      %v636 = vpop.f32.mrf.mxu0
      %v637 = vadd.f32 %v619, %v636
      %v638 = vpop.f32.mrf.mxu0
      %v639 = vadd.f32 %v621, %v638
      %640 = vmatmul.bf16.gmra.mxu0 %v278
      %v641 = vpop.f32.mrf.mxu0
      %v642 = vadd.f32 %v624, %v641
      %v643 = vpop.f32.mrf.mxu0
      %644 = vdwg.mxu0
      %645 = vmatpush.bf16.msra.mxu0 %v527
      %646 = vmatpush.bf16.msra.mxu0 %v525
      %647 = vmatpush.bf16.msra.mxu0 %v523
      %648 = vmatpush.bf16.msra.mxu0 %v521
      %649 = vmatpush.bf16.msra.mxu0 %v519
      %650 = vmatpush.bf16.msra.mxu0 %v517
      %651 = vmatpush.bf16.msra.mxu0 %v515
      %652 = vmatpush.bf16.msra.mxu0 %v513
      %653 = vmatmul.bf16.gmra.mxu0 %v275
      %v654 = vpop.f32.mrf.mxu0
      %v655 = vadd.f32 %v637, %v654
      %v656 = vpop.f32.mrf.mxu0
      %v657 = vadd.f32 %v639, %v656
      %658 = vmatmul.bf16.gmra.mxu0 %v279
      %v659 = vpop.f32.mrf.mxu0
      %v660 = vadd.f32 %v642, %v659
      %v661 = vpop.f32.mrf.mxu0
      %662 = vdwg.mxu0
      %663 = vmatpush.bf16.msra.mxu0 %v543
      %664 = vmatpush.bf16.msra.mxu0 %v541
      %665 = vmatpush.bf16.msra.mxu0 %v539
      %666 = vmatpush.bf16.msra.mxu0 %v537
      %667 = vmatpush.bf16.msra.mxu0 %v535
      %668 = vmatpush.bf16.msra.mxu0 %v533
      %669 = vmatpush.bf16.msra.mxu0 %v531
      %670 = vmatpush.bf16.msra.mxu0 %v529
      %671 = vmatmul.bf16.gmra.mxu0 %v276
      %v672 = vpop.f32.mrf.mxu0
      %v673 = vadd.f32 %v655, %v672
      %v674 = vpop.f32.mrf.mxu0
      %v675 = vadd.f32 %v657, %v674
      %676 = vmatmul.bf16.gmra.mxu0 %v280
      %v677 = vpop.f32.mrf.mxu0
      %v678 = vadd.f32 %v660, %v677
      %v679 = vpop.f32.mrf.mxu0
      %680 = vdwg.mxu0
      %681 = vmatpush.bf16.msra.mxu0 %v496
      %682 = vmatpush.bf16.msra.mxu0 %v494
      %683 = vmatpush.bf16.msra.mxu0 %v492
      %684 = vmatpush.bf16.msra.mxu0 %v490
      %685 = vmatpush.bf16.msra.mxu0 %v488
      %686 = vmatpush.bf16.msra.mxu0 %v486
      %687 = vmatpush.bf16.msra.mxu0 %v484
      %688 = vmatpush.bf16.msra.mxu0 %v482
      %689 = vmatmul.bf16.gmra.mxu0 %v273
      %v690 = vpop.f32.mrf.mxu0
      %v691 = vadd.f32 %v252, %v690
      %v692 = vpop.f32.mrf.mxu0
      %v693 = vadd.f32 %v252, %v692
      %694 = vmatmul.bf16.gmra.mxu0 %v277
      %v695 = vpop.f32.mrf.mxu0
      %v696 = vadd.f32 %v252, %v695
      %v697 = vpop.f32.mrf.mxu0
      %698 = vdwg.mxu0
      %699 = vmatpush.bf16.msra.mxu0 %v512
      %700 = vmatpush.bf16.msra.mxu0 %v510
      %701 = vmatpush.bf16.msra.mxu0 %v508
      %702 = vmatpush.bf16.msra.mxu0 %v506
      %703 = vmatpush.bf16.msra.mxu0 %v504
      %704 = vmatpush.bf16.msra.mxu0 %v502
      %705 = vmatpush.bf16.msra.mxu0 %v500
      %706 = vmatpush.bf16.msra.mxu0 %v498
      %707 = vmatmul.bf16.gmra.mxu0 %v274
      %v708 = vpop.f32.mrf.mxu0
      %v709 = vadd.f32 %v691, %v708
      %v710 = vpop.f32.mrf.mxu0
      %v711 = vadd.f32 %v693, %v710
      %712 = vmatmul.bf16.gmra.mxu0 %v278
      %v713 = vpop.f32.mrf.mxu0
      %v714 = vadd.f32 %v696, %v713
      %v715 = vpop.f32.mrf.mxu0
      %716 = vdwg.mxu0
      %717 = vmatpush.bf16.msra.mxu0 %v528
      %718 = vmatpush.bf16.msra.mxu0 %v526
      %719 = vmatpush.bf16.msra.mxu0 %v524
      %720 = vmatpush.bf16.msra.mxu0 %v522
      %721 = vmatpush.bf16.msra.mxu0 %v520
      %722 = vmatpush.bf16.msra.mxu0 %v518
      %723 = vmatpush.bf16.msra.mxu0 %v516
      %724 = vmatpush.bf16.msra.mxu0 %v514
      %725 = vmatmul.bf16.gmra.mxu0 %v275
      %v726 = vpop.f32.mrf.mxu0
      %v727 = vadd.f32 %v709, %v726
      %v728 = vpop.f32.mrf.mxu0
      %v729 = vadd.f32 %v711, %v728
      %730 = vmatmul.bf16.gmra.mxu0 %v279
      %v731 = vpop.f32.mrf.mxu0
      %v732 = vadd.f32 %v714, %v731
      %v733 = vpop.f32.mrf.mxu0
      %734 = vdwg.mxu0
      %735 = vmatpush.bf16.msra.mxu0 %v544
      %736 = vmatpush.bf16.msra.mxu0 %v542
      %737 = vmatpush.bf16.msra.mxu0 %v540
      %738 = vmatpush.bf16.msra.mxu0 %v538
      %739 = vmatpush.bf16.msra.mxu0 %v536
      %740 = vmatpush.bf16.msra.mxu0 %v534
      %741 = vmatpush.bf16.msra.mxu0 %v532
      %742 = vmatpush.bf16.msra.mxu0 %v530
      %743 = vmatmul.bf16.gmra.mxu0 %v276
      %v744 = vpop.f32.mrf.mxu0
      %v745 = vadd.f32 %v727, %v744
      %v746 = vpop.f32.mrf.mxu0
      %v747 = vadd.f32 %v729, %v746
      %748 = vmatmul.bf16.gmra.mxu0 %v280
      %v749 = vpop.f32.mrf.mxu0
      %v750 = vadd.f32 %v732, %v749
      %v751 = vpop.f32.mrf.mxu0
      %752 = vdwg.mxu0
      %v753 = vmax.f32 %v673, 0.0
      %v754 = vmax.f32 %v745, 0.0
      %v755 = vmax.f32 %v675, 0.0
      %v756 = vmax.f32 %v747, 0.0
      %v757 = vmax.f32 %v678, 0.0
      %v758 = vmax.f32 %v750, 0.0
      %759 = vst [vmem:[%s177] sm:$0xff] %v753
      %760 = vst [vmem:[%s177 + $0x8] sm:$0xff] %v754
      %761 = vst [vmem:[%s177 + $0x10] sm:$0xff] %v755
      %762 = vst [vmem:[%s177 + $0x18] sm:$0xff] %v756
      %763 = vst [vmem:[%s177 + $0x20] sm:$0xff] %v757
      %764 = vst [vmem:[%s177 + $0x28] sm:$0xff] %v758
      %s765 = smul.u32 3, %s14
      %p766 = scmp.lt.s32.totalorder %s765, 5
      %s767 = scalar_select %p766, %s765, 5
      %s768 = smul.addr %s767, 2
      %s769 = smul.addr %s768, 8
      %s770 = scalar_lea.vmem %s3, %s769
      // Predicated region
      $region33: #{repnet_forward.8} parent=31 // pred_check
        %p771 = pneg %p100
      $region34: #{repnet_forward.8} parent=31 // pred_check_branch
        %773 = sbr.rel (%p771) target = $region36
      $region35: #{repnet_forward.8} parent=31 // pred_region
        %s774 = smul.u32 3, %s14
      $region36: #{repnet_forward.8} parent=31 // pred_fallthru
        _
    $region32: #{repnet_forward.8} parent=5 // pred_fallthru
      _
    %p775 = scmp.le.s32.totalorder 2, %s9
    // Predicated region
    $region37: #{repnet_forward.8} parent=5 // pred_check
      %p776 = pneg %p775
    $region38: #{repnet_forward.8} parent=5 // pred_check_branch
      %778 = sbr.rel (%p776) target = $region40
    $region39: #{repnet_forward.8} parent=5 // pred_region
      %s779 = ssub.s32 %s9, 2
      // Predicated region
      $region41: #{repnet_forward.8} parent=39 // pred_check
        %p780 = pneg %p106
      $region42: #{repnet_forward.8} parent=39 // pred_check_branch
        %782 = sbr.rel (%p780) target = $region44
      $region43: #{repnet_forward.8} parent=39 // pred_region
        %s783 = smul.u32 3, %s15
        %p784 = scmp.lt.s32.totalorder %s783, 5
        %s785 = scalar_select %p784, %s783, 5
        %s786 = smul.addr %s785, 2
        %s787 = smul.addr %s786, 8
        %s788 = scalar_lea.vmem %s3, %s787
      $region44: #{repnet_forward.8} parent=39 // pred_fallthru
        _
    $region40: #{repnet_forward.8} parent=5 // pred_fallthru
      _
  $region6: #{repnet_forward.8} parent=0 // loop_footer
    %s13 = sadd.s32 1, %s9
  $region7: #{repnet_forward.8} parent=0 // loop_footer_branch
    %8 = sbr.rel target = $region3
  $region8: #{repnet_forward.8} parent=0 // loop_exit
    _

// kernel: repnet_forward.7
$region0: #{repnet_forward.7}
  #allocation0 [shape = 'u32[]', space=smem, size = 0x4, offset = 0x4, fixed_abs, tag = 'smem constant byte address 0x4 - core index']
  #allocation1 [shape = 'u32[72,128]{1,0:T(1,128)}', space=vmem, size = 0x9000, scoped, tag = 'internal scratch']
  %s0 = inlined_call_operand.vmem [shape: f32[3,110,256], index: 0, kind: input, shape index: {}]
  %s1 = inlined_call_operand.vmem [shape: bf16[9,256,128], index: 1, kind: input, shape index: {}]
  %s2 = inlined_call_operand.vmem [shape: f32[1,128], index: 2, kind: input, shape index: {}]
  %s3 = inlined_call_operand.vmem [shape: f32[3,80,128], index: 3, kind: output, shape index: {}]
  %s4 = sld [smem:[#allocation0]]
  $region45: #{repnet_forward.7} parent=0
    _
  %s6 = ssub.s32 1, %s4
  %s7 = scalar_select 0, %s6, %s4
  loop: start=0, step=1, limit=5
  $region2: #{repnet_forward.7} parent=0 // loop_pre_header
    _
  $region3: #{repnet_forward.7} parent=0 // loop_header
    %s9 = sphi 0, %s13
    %p10 = scmp.ge.s32.totalorder %s9, 5
    %s19 = sphi 0, %s21
    %s22 = sphi 0, %s19
    %s23 = sphi 0, %s22
    %s39 = sphi 0, %s23
    %s43 = sphi 0, %s43
    %s45 = sphi 0, %s43
    %s46 = sphi 0, %s45
    %s60 = sphi 0, %s46
    %s64 = sphi 0, %s64
    %s66 = sphi 0, %s64
    %s67 = sphi 0, %s66
    %s81 = sphi 0, %s67
    %s87 = sphi 0, %s89
    %s90 = sphi 0, %s87
    %s91 = sphi 0, %s90
    %s107 = sphi 0, %s91
  $region4: #{repnet_forward.7} parent=0 // loop_header_branch
    %12 = sbr.rel (%p10) target = $region8
  $region5: #{repnet_forward.7} parent=0 // loop_body
    %s14 = ssub.s32 %s9, 1
    %s15 = ssub.s32 %s9, 2
    %s16 = sadd.s32 %s9, 1
    %s17 = ssub.s32 %s9, %s16
    %p18 = scmp.eq.s32.totalorder %s17, 0
    %s20 = sadd.s32 %s19, 1
    %s21 = scalar_select %p18, %s19, %s20
    %p24 = pneg %p18
    %p25 = scmp.eq.s32.totalorder %s9, 2
    %p26 = por %p24, %p25
    %p27 = scmp.ne.s32.totalorder %s19, %s22
    %p28 = scmp.eq.s32.totalorder %s9, 0
    %p29 = por %p27, %p28
    %p30 = scmp.ne.s32.totalorder %s19, %s22
    %p31 = scmp.eq.s32.totalorder %s14, 2
    %p32 = por %p30, %p31
    %p33 = scmp.ne.s32.totalorder %s22, %s23
    %p34 = scmp.eq.s32.totalorder %s14, 0
    %p35 = por %p33, %p34
    %p36 = scmp.ne.s32.totalorder %s22, %s23
    %p37 = scmp.eq.s32.totalorder %s15, 2
    %p38 = por %p36, %p37
    %p40 = scmp.ne.s32.totalorder %s23, %s39
    %p41 = scmp.eq.s32.totalorder %s15, 0
    %p42 = por %p40, %p41
    %s44 = sadd.s32 %s43, 1
    %p47 = scmp.eq.s32.totalorder %s9, 2
    %p48 = scmp.ne.s32.totalorder %s43, %s45
    %p49 = scmp.eq.s32.totalorder %s9, 0
    %p50 = por %p48, %p49
    %p51 = scmp.ne.s32.totalorder %s43, %s45
    %p52 = scmp.eq.s32.totalorder %s14, 2
    %p53 = por %p51, %p52
    %p54 = scmp.ne.s32.totalorder %s45, %s46
    %p55 = scmp.eq.s32.totalorder %s14, 0
    %p56 = por %p54, %p55
    %p57 = scmp.ne.s32.totalorder %s45, %s46
    %p58 = scmp.eq.s32.totalorder %s15, 2
    %p59 = por %p57, %p58
    %p61 = scmp.ne.s32.totalorder %s46, %s60
    %p62 = scmp.eq.s32.totalorder %s15, 0
    %p63 = por %p61, %p62
    %s65 = sadd.s32 %s64, 1
    %p68 = scmp.eq.s32.totalorder %s9, 2
    %p69 = scmp.ne.s32.totalorder %s64, %s66
    %p70 = scmp.eq.s32.totalorder %s9, 0
    %p71 = por %p69, %p70
    %p72 = scmp.ne.s32.totalorder %s64, %s66
    %p73 = scmp.eq.s32.totalorder %s14, 2
    %p74 = por %p72, %p73
    %p75 = scmp.ne.s32.totalorder %s66, %s67
    %p76 = scmp.eq.s32.totalorder %s14, 0
    %p77 = por %p75, %p76
    %p78 = scmp.ne.s32.totalorder %s66, %s67
    %p79 = scmp.eq.s32.totalorder %s15, 2
    %p80 = por %p78, %p79
    %p82 = scmp.ne.s32.totalorder %s67, %s81
    %p83 = scmp.eq.s32.totalorder %s15, 0
    %p84 = por %p82, %p83
    %s85 = ssub.s32 %s9, %s16
    %p86 = scmp.eq.s32.totalorder %s85, 0
    %s88 = sadd.s32 %s87, 1
    %s89 = scalar_select %p86, %s87, %s88
    %p92 = pneg %p86
    %p93 = scmp.eq.s32.totalorder %s9, 2
    %p94 = por %p92, %p93
    %p95 = scmp.ne.s32.totalorder %s87, %s90
    %p96 = scmp.eq.s32.totalorder %s9, 0
    %p97 = por %p95, %p96
    %p98 = scmp.ne.s32.totalorder %s87, %s90
    %p99 = scmp.eq.s32.totalorder %s14, 2
    %p100 = por %p98, %p99
    %p101 = scmp.ne.s32.totalorder %s90, %s91
    %p102 = scmp.eq.s32.totalorder %s14, 0
    %p103 = por %p101, %p102
    %p104 = scmp.ne.s32.totalorder %s90, %s91
    %p105 = scmp.eq.s32.totalorder %s15, 2
    %p106 = por %p104, %p105
    %p108 = scmp.ne.s32.totalorder %s91, %s107
    %p109 = scmp.eq.s32.totalorder %s15, 0
    %p110 = por %p108, %p109
    %p111 = scmp.le.s32.totalorder 1, %s9
    %p112 = scmp.lt.s32.totalorder %s9, 4
    %p113 = pnand %p111, %p112
    %p114 = pneg %p113
    // Predicated region
    $region9: #{repnet_forward.7} parent=5 // pred_check
      _
    $region10: #{repnet_forward.7} parent=5 // pred_check_branch
      %116 = sbr.rel (%p113) target = $region12
    $region11: #{repnet_forward.7} parent=5 // pred_region
      %s117 = ssub.s32 %s9, 1
      // Predicated region
      $region13: #{repnet_forward.7} parent=11 // pred_check
        %p118 = pneg %p56
      $region14: #{repnet_forward.7} parent=11 // pred_check_branch
        %120 = sbr.rel (%p118) target = $region16
      $region15: #{repnet_forward.7} parent=11 // pred_region
        _
      $region16: #{repnet_forward.7} parent=11 // pred_fallthru
        _
      // Predicated region
      $region17: #{repnet_forward.7} parent=11 // pred_check
        %p121 = pneg %p77
      $region18: #{repnet_forward.7} parent=11 // pred_check_branch
        %123 = sbr.rel (%p121) target = $region20
      $region19: #{repnet_forward.7} parent=11 // pred_region
        _
      $region20: #{repnet_forward.7} parent=11 // pred_fallthru
        _
    $region12: #{repnet_forward.7} parent=5 // pred_fallthru
      _
    %p124 = scmp.lt.s32.totalorder %s9, 3
    // Predicated region
    $region21: #{repnet_forward.7} parent=5 // pred_check
      %p125 = pneg %p124
    $region22: #{repnet_forward.7} parent=5 // pred_check_branch
      %127 = sbr.rel (%p125) target = $region24
    $region23: #{repnet_forward.7} parent=5 // pred_region
      // Predicated region
      $region25: #{repnet_forward.7} parent=23 // pred_check
        %p128 = pneg %p29
      $region26: #{repnet_forward.7} parent=23 // pred_check_branch
        %130 = sbr.rel (%p128) target = $region28
      $region27: #{repnet_forward.7} parent=23 // pred_region
        %p131 = scmp.lt.s32.totalorder %s9, 2
        %s132 = scalar_select %p131, %s9, 2
        %s133 = smul.addr %s132, 28
        %s134 = smul.addr %s133, 8
        %s135 = scalar_lea.vmem %s0, %s134
      $region28: #{repnet_forward.7} parent=23 // pred_fallthru
        _
    $region24: #{repnet_forward.7} parent=5 // pred_fallthru
      _
    %p136 = scmp.le.s32.totalorder 1, %s9
    %p137 = scmp.lt.s32.totalorder %s9, 4
    %p138 = pnand %p136, %p137
    %p139 = pneg %p138
    // Predicated region
    $region29: #{repnet_forward.7} parent=5 // pred_check
      _
    $region30: #{repnet_forward.7} parent=5 // pred_check_branch
      %141 = sbr.rel (%p138) target = $region32
    $region31: #{repnet_forward.7} parent=5 // pred_region
      %s142 = ssub.s32 %s9, 1
      %p143 = scmp.lt.s32.totalorder %s14, 2
      %s144 = scalar_select %p143, %s14, 2
      %s145 = smul.addr %s144, 28
      %s146 = smul.addr %s145, 8
      %s147 = scalar_lea.vmem %s0, %s146
      %p148 = pneg %p35
      %p149 = pneg %p32
      %p150 = pneg %p56
      %p151 = pneg %p53
      %p152 = pneg %p77
      %p153 = pneg %p74
      %p154 = pneg %p103
      %p155 = pneg %p100
      %p156 = scmp.lt.s32.totalorder %s14, 2
      %s157 = scalar_select %p156, %s14, 2
      %s158 = smul.addr %s157, 10
      %s159 = smul.addr %s158, 8
      %s160 = scalar_lea.vmem %s3, %s159
      %p161 = scmp.lt.s32.totalorder %s14, 2
      %s162 = scalar_select %p161, %s14, 2
      %s163 = smul.addr %s162, 28
      %s164 = smul.addr %s163, 8
      %s165 = scalar_lea.vmem %s0, %s164
      %p166 = scmp.lt.s32.totalorder %s14, 2
      %s167 = scalar_select %p166, %s14, 2
      %s168 = smul.addr %s167, 10
      %s169 = smul.addr %s168, 8
      %s170 = scalar_lea.vmem %s3, %s169
      %v171 = vld [vmem:[%s2] sm:$0x1]
      %v173 = vperm.slane %v171, 0
      %v175 = vadd.f32 %v173, 0.0
      %v176 = vld [vmem:[%s165] sm:$0xff]
      %v177 = vld [vmem:[%s165 + $0x8] sm:$0xff]
      %v178 = vld [vmem:[%s165 + $0x10] sm:$0xff]
      %v179 = vld [vmem:[%s165 + $0x18] sm:$0xff]
      %v180 = vld [vmem:[%s165 + $0x20] sm:$0xff]
      %v181 = vld [vmem:[%s165 + $0x28] sm:$0xff]
      %v182 = vld [vmem:[%s165 + $0x30] sm:$0xff]
      %v183 = vld [vmem:[%s165 + $0x38] sm:$0xff]
      %v184 = vld [vmem:[%s165 + $0x40] sm:$0xff]
      %v185 = vld [vmem:[%s165 + $0x48] sm:$0xff]
      %v186 = vld [vmem:[%s165 + $0x50] sm:$0xff]
      %v187 = vld [vmem:[%s165 + $0x58] sm:$0xff]
      %v188 = vld [vmem:[%s165 + $0x60] sm:$0xff]
      %v189 = vld [vmem:[%s165 + $0x68] sm:$0xff]
      %v190 = vld [vmem:[%s165 + $0x70] sm:$0xff]
      %v191 = vld [vmem:[%s165 + $0x78] sm:$0xff]
      %v192 = vld [vmem:[%s165 + $0x80] sm:$0xff]
      %v193 = vld [vmem:[%s165 + $0x88] sm:$0xff]
      %v194 = vld [vmem:[%s165 + $0x90] sm:$0xff]
      %v195 = vld [vmem:[%s165 + $0x98] sm:$0xff]
      %v196 = vpack.c.bf16 %v178, %v176
      %v197 = vpack.c.bf16 %v179, %v177
      %v198 = vpack.c.bf16 %v182, %v180
      %v199 = vpack.c.bf16 %v183, %v181
      %v200 = vpack.c.bf16 %v186, %v184
      %v201 = vpack.c.bf16 %v187, %v185
      %v202 = vpack.c.bf16 %v190, %v188
      %v203 = vpack.c.bf16 %v191, %v189
      %v204 = vpack.c.bf16 %v194, %v192
      %v205 = vpack.c.bf16 %v195, %v193
      %v206 = vld [vmem:[%s1] sm:$0xf]
      %v207 = vld [vmem:[%s1 + $0x4] sm:$0xf]
      %v208 = vld [vmem:[%s1 + $0x8] sm:$0xf]
      %v209 = vld [vmem:[%s1 + $0xc] sm:$0xf]
      %v210 = vld [vmem:[%s1 + $0x10] sm:$0xf]
      %v211 = vld [vmem:[%s1 + $0x14] sm:$0xf]
      %v212 = vld [vmem:[%s1 + $0x18] sm:$0xf]
      %v213 = vld [vmem:[%s1 + $0x1c] sm:$0xf]
      %v214 = vld [vmem:[%s1 + $0x20] sm:$0xf]
      %v215 = vld [vmem:[%s1 + $0x24] sm:$0xf]
      %v216 = vld [vmem:[%s1 + $0x28] sm:$0xf]
      %v217 = vld [vmem:[%s1 + $0x2c] sm:$0xf]
      %v218 = vld [vmem:[%s1 + $0x30] sm:$0xf]
      %v219 = vld [vmem:[%s1 + $0x34] sm:$0xf]
      %v220 = vld [vmem:[%s1 + $0x38] sm:$0xf]
      %v221 = vld [vmem:[%s1 + $0x3c] sm:$0xf]
      %v222 = vld [vmem:[%s1 + $0x40] sm:$0xf]
      %v223 = vld [vmem:[%s1 + $0x44] sm:$0xf]
      %v224 = vld [vmem:[%s1 + $0x48] sm:$0xf]
      %v225 = vld [vmem:[%s1 + $0x4c] sm:$0xf]
      %v226 = vld [vmem:[%s1 + $0x50] sm:$0xf]
      %v227 = vld [vmem:[%s1 + $0x54] sm:$0xf]
      %v228 = vld [vmem:[%s1 + $0x58] sm:$0xf]
      %v229 = vld [vmem:[%s1 + $0x5c] sm:$0xf]
      %v230 = vld [vmem:[%s1 + $0x60] sm:$0xf]
      %v231 = vld [vmem:[%s1 + $0x64] sm:$0xf]
      %v232 = vld [vmem:[%s1 + $0x68] sm:$0xf]
      %v233 = vld [vmem:[%s1 + $0x6c] sm:$0xf]
      %v234 = vld [vmem:[%s1 + $0x70] sm:$0xf]
      %v235 = vld [vmem:[%s1 + $0x74] sm:$0xf]
      %v236 = vld [vmem:[%s1 + $0x78] sm:$0xf]
      %v237 = vld [vmem:[%s1 + $0x7c] sm:$0xf]
      %v270 = vunpack.c.l.b16 %v206
      %v271 = vunpack.c.l.b16 %v207
      %v272 = vunpack.c.l.b16 %v208
      %v273 = vunpack.c.l.b16 %v209
      %v274 = vunpack.c.l.b16 %v210
      %v275 = vunpack.c.l.b16 %v211
      %v276 = vunpack.c.l.b16 %v212
      %v277 = vunpack.c.l.b16 %v213
      %v278 = vunpack.c.l.b16 %v214
      %v279 = vunpack.c.l.b16 %v215
      %v280 = vunpack.c.l.b16 %v216
      %v281 = vunpack.c.l.b16 %v217
      %v282 = vunpack.c.l.b16 %v218
      %v283 = vunpack.c.l.b16 %v219
      %v284 = vunpack.c.l.b16 %v220
      %v285 = vunpack.c.l.b16 %v221
      %v286 = vunpack.c.l.b16 %v222
      %v287 = vunpack.c.l.b16 %v223
      %v288 = vunpack.c.l.b16 %v224
      %v289 = vunpack.c.l.b16 %v225
      %v290 = vunpack.c.l.b16 %v226
      %v291 = vunpack.c.l.b16 %v227
      %v292 = vunpack.c.l.b16 %v228
      %v293 = vunpack.c.l.b16 %v229
      %v294 = vunpack.c.l.b16 %v230
      %v295 = vunpack.c.l.b16 %v231
      %v296 = vunpack.c.l.b16 %v232
      %v297 = vunpack.c.l.b16 %v233
      %v298 = vunpack.c.l.b16 %v234
      %v299 = vunpack.c.l.b16 %v235
      %v300 = vunpack.c.l.b16 %v236
      %v301 = vunpack.c.l.b16 %v237
      %v302 = vpack.c.b16 %v271, %v270
      %v303 = vpack.c.b16 %v273, %v272
      %v304 = vpack.c.b16 %v275, %v274
      %v305 = vpack.c.b16 %v277, %v276
      %v306 = vpack.c.b16 %v279, %v278
      %v307 = vpack.c.b16 %v281, %v280
      %v308 = vpack.c.b16 %v283, %v282
      %v309 = vpack.c.b16 %v285, %v284
      %v310 = vpack.c.b16 %v287, %v286
      %v311 = vpack.c.b16 %v289, %v288
      %v312 = vpack.c.b16 %v291, %v290
      %v313 = vpack.c.b16 %v293, %v292
      %v314 = vpack.c.b16 %v295, %v294
      %v315 = vpack.c.b16 %v297, %v296
      %v316 = vpack.c.b16 %v299, %v298
      %v317 = vpack.c.b16 %v301, %v300
      %334 = vmatpush.bf16.msra.mxu0 %v309
      %335 = vmatpush.bf16.msra.mxu0 %v308
      %336 = vmatpush.bf16.msra.mxu0 %v307
      %337 = vmatpush.bf16.msra.mxu0 %v306
      %338 = vmatpush.bf16.msra.mxu0 %v305
      %339 = vmatpush.bf16.msra.mxu0 %v304
      %340 = vmatpush.bf16.msra.mxu0 %v303
      %341 = vmatpush.bf16.msra.mxu0 %v302
      %342 = vmatmul.bf16.gmra.mxu0 %v196
      %v343 = vpop.f32.mrf.mxu0
      %v344 = vadd.f32 0.0, %v343
      %v345 = vpop.f32.mrf.mxu0
      %v346 = vadd.f32 0.0, %v345
      %347 = vmatmul.bf16.gmra.mxu0 %v198
      %v348 = vpop.f32.mrf.mxu0
      %v349 = vadd.f32 0.0, %v348
      %v350 = vpop.f32.mrf.mxu0
      %v351 = vadd.f32 0.0, %v350
      %352 = vmatmul.bf16.gmra.mxu0 %v200
      %v353 = vpop.f32.mrf.mxu0
      %v354 = vadd.f32 0.0, %v353
      %v355 = vpop.f32.mrf.mxu0
      %v356 = vadd.f32 0.0, %v355
      %357 = vmatmul.bf16.gmra.mxu0 %v202
      %v358 = vpop.f32.mrf.mxu0
      %v359 = vadd.f32 0.0, %v358
      %v360 = vpop.f32.mrf.mxu0
      %v361 = vadd.f32 0.0, %v360
      %362 = vmatmul.bf16.gmra.mxu0 %v204
      %v363 = vpop.f32.mrf.mxu0
      %v364 = vadd.f32 0.0, %v363
      %v365 = vpop.f32.mrf.mxu0
      %v366 = vadd.f32 0.0, %v365
      %367 = vdwg.mxu0
      %368 = vmatpush.bf16.msra.mxu0 %v317
      %369 = vmatpush.bf16.msra.mxu0 %v316
      %370 = vmatpush.bf16.msra.mxu0 %v315
      %371 = vmatpush.bf16.msra.mxu0 %v314
      %372 = vmatpush.bf16.msra.mxu0 %v313
      %373 = vmatpush.bf16.msra.mxu0 %v312
      %374 = vmatpush.bf16.msra.mxu0 %v311
      %375 = vmatpush.bf16.msra.mxu0 %v310
      %376 = vmatmul.bf16.gmra.mxu0 %v197
      %v377 = vpop.f32.mrf.mxu0
      %v378 = vadd.f32 %v344, %v377
      %v379 = vpop.f32.mrf.mxu0
      %v380 = vadd.f32 %v346, %v379
      %381 = vmatmul.bf16.gmra.mxu0 %v199
      %v382 = vpop.f32.mrf.mxu0
      %v383 = vadd.f32 %v349, %v382
      %v384 = vpop.f32.mrf.mxu0
      %v385 = vadd.f32 %v351, %v384
      %386 = vmatmul.bf16.gmra.mxu0 %v201
      %v387 = vpop.f32.mrf.mxu0
      %v388 = vadd.f32 %v354, %v387
      %v389 = vpop.f32.mrf.mxu0
      %v390 = vadd.f32 %v356, %v389
      %391 = vmatmul.bf16.gmra.mxu0 %v203
      %v392 = vpop.f32.mrf.mxu0
      %v393 = vadd.f32 %v359, %v392
      %v394 = vpop.f32.mrf.mxu0
      %v395 = vadd.f32 %v361, %v394
      %396 = vmatmul.bf16.gmra.mxu0 %v205
      %v397 = vpop.f32.mrf.mxu0
      %v398 = vadd.f32 %v364, %v397
      %v399 = vpop.f32.mrf.mxu0
      %v400 = vadd.f32 %v366, %v399
      %401 = vdwg.mxu0
      %v402 = vadd.f32 %v175, %v378
      %v403 = vadd.f32 %v175, %v380
      %v404 = vadd.f32 %v175, %v383
      %v405 = vadd.f32 %v175, %v385
      %v406 = vadd.f32 %v175, %v388
      %v407 = vadd.f32 %v175, %v390
      %v408 = vadd.f32 %v175, %v393
      %v409 = vadd.f32 %v175, %v395
      %v410 = vadd.f32 %v175, %v398
      %v411 = vadd.f32 %v175, %v400
      %v412 = vld [vmem:[%s165] sm:$0xfe]
      %v413 = vld [vmem:[%s165 + $0x8] sm:$0xfe]
      %v414 = vld [vmem:[%s165 + $0x10] sm:$0xff]
      %v415 = vld [vmem:[%s165 + $0x18] sm:$0xff]
      %v416 = vld [vmem:[%s165 + $0x20] sm:$0xff]
      %v417 = vld [vmem:[%s165 + $0x28] sm:$0xff]
      %v418 = vld [vmem:[%s165 + $0x30] sm:$0xff]
      %v419 = vld [vmem:[%s165 + $0x38] sm:$0xff]
      %v420 = vld [vmem:[%s165 + $0x40] sm:$0xff]
      %v421 = vld [vmem:[%s165 + $0x48] sm:$0xff]
      %v422 = vld [vmem:[%s165 + $0x50] sm:$0xff]
      %v423 = vld [vmem:[%s165 + $0x58] sm:$0xff]
      %v424 = vld [vmem:[%s165 + $0x60] sm:$0xff]
      %v425 = vld [vmem:[%s165 + $0x68] sm:$0xff]
      %v426 = vld [vmem:[%s165 + $0x70] sm:$0xff]
      %v427 = vld [vmem:[%s165 + $0x78] sm:$0xff]
      %v428 = vld [vmem:[%s165 + $0x80] sm:$0xff]
      %v429 = vld [vmem:[%s165 + $0x88] sm:$0xff]
      %v430 = vld [vmem:[%s165 + $0x90] sm:$0xff]
      %v431 = vld [vmem:[%s165 + $0x98] sm:$0xff]
      %v432 = vld [vmem:[%s165 + $0xa0] sm:$0x1]
      %v433 = vld [vmem:[%s165 + $0xa8] sm:$0x1]
      %v434 = vpack.c.bf16 %v414, %v412
      %v435 = vpack.c.bf16 %v415, %v413
      %v436 = vpack.c.bf16 %v418, %v416
      %v437 = vpack.c.bf16 %v419, %v417
      %v438 = vpack.c.bf16 %v422, %v420
      %v439 = vpack.c.bf16 %v423, %v421
      %v440 = vpack.c.bf16 %v426, %v424
      %v441 = vpack.c.bf16 %v427, %v425
      %v442 = vpack.c.bf16 %v430, %v428
      %v443 = vpack.c.bf16 %v431, %v429
      %v444 = vpack.c.bf16 %v432, %v432
      %v445 = vpack.c.bf16 %v433, %v433
      %s446 = scalar_lea.vmem %s1, 128
      %v447 = vld [vmem:[%s446] sm:$0xf]
      %v448 = vld [vmem:[%s446 + $0x4] sm:$0xf]
      %v449 = vld [vmem:[%s446 + $0x8] sm:$0xf]
      %v450 = vld [vmem:[%s446 + $0xc] sm:$0xf]
      %v451 = vld [vmem:[%s446 + $0x10] sm:$0xf]
      %v452 = vld [vmem:[%s446 + $0x14] sm:$0xf]
      %v453 = vld [vmem:[%s446 + $0x18] sm:$0xf]
      %v454 = vld [vmem:[%s446 + $0x1c] sm:$0xf]
      %v455 = vld [vmem:[%s446 + $0x20] sm:$0xf]
      %v456 = vld [vmem:[%s446 + $0x24] sm:$0xf]
      %v457 = vld [vmem:[%s446 + $0x28] sm:$0xf]
      %v458 = vld [vmem:[%s446 + $0x2c] sm:$0xf]
      %v459 = vld [vmem:[%s446 + $0x30] sm:$0xf]
      %v460 = vld [vmem:[%s446 + $0x34] sm:$0xf]
      %v461 = vld [vmem:[%s446 + $0x38] sm:$0xf]
      %v462 = vld [vmem:[%s446 + $0x3c] sm:$0xf]
      %v463 = vld [vmem:[%s446 + $0x40] sm:$0xf]
      %v464 = vld [vmem:[%s446 + $0x44] sm:$0xf]
      %v465 = vld [vmem:[%s446 + $0x48] sm:$0xf]
      %v466 = vld [vmem:[%s446 + $0x4c] sm:$0xf]
      %v467 = vld [vmem:[%s446 + $0x50] sm:$0xf]
      %v468 = vld [vmem:[%s446 + $0x54] sm:$0xf]
      %v469 = vld [vmem:[%s446 + $0x58] sm:$0xf]
      %v470 = vld [vmem:[%s446 + $0x5c] sm:$0xf]
      %v471 = vld [vmem:[%s446 + $0x60] sm:$0xf]
      %v472 = vld [vmem:[%s446 + $0x64] sm:$0xf]
      %v473 = vld [vmem:[%s446 + $0x68] sm:$0xf]
      %v474 = vld [vmem:[%s446 + $0x6c] sm:$0xf]
      %v475 = vld [vmem:[%s446 + $0x70] sm:$0xf]
      %v476 = vld [vmem:[%s446 + $0x74] sm:$0xf]
      %v477 = vld [vmem:[%s446 + $0x78] sm:$0xf]
      %v478 = vld [vmem:[%s446 + $0x7c] sm:$0xf]
      %vm479 = vsmask.f32 7424
      %v481 = vshrl.u32 %v434, 16
      %v483 = vshll.u32 %v434, 16
      %v485 = vrot.slane %v483, 1
      %v486 = vor.u32 %v481, %v485
      %v488 = vshll.u32 %v436, 16
      %v490 = vrot.slane %v488, 1
      %v491 = vsel %vm479, %v486, %v490
      %v493 = vshrl.u32 %v435, 16
      %v495 = vshll.u32 %v435, 16
      %v497 = vrot.slane %v495, 1
      %v498 = vor.u32 %v493, %v497
      %v500 = vshll.u32 %v437, 16
      %v502 = vrot.slane %v500, 1
      %v503 = vsel %vm479, %v498, %v502
      %v504 = vshrl.u32 %v436, 16
      %v506 = vor.u32 %v504, %v490
      %v508 = vshll.u32 %v438, 16
      %v510 = vrot.slane %v508, 1
      %v511 = vsel %vm479, %v506, %v510
      %v512 = vshrl.u32 %v437, 16
      %v514 = vor.u32 %v512, %v502
      %v516 = vshll.u32 %v439, 16
      %v518 = vrot.slane %v516, 1
      %v519 = vsel %vm479, %v514, %v518
      %v520 = vshrl.u32 %v438, 16
      %v522 = vor.u32 %v520, %v510
      %v524 = vshll.u32 %v440, 16
      %v526 = vrot.slane %v524, 1
      %v527 = vsel %vm479, %v522, %v526
      %v528 = vshrl.u32 %v439, 16
      %v530 = vor.u32 %v528, %v518
      %v532 = vshll.u32 %v441, 16
      %v534 = vrot.slane %v532, 1
      %v535 = vsel %vm479, %v530, %v534
      %v536 = vshrl.u32 %v440, 16
      %v538 = vor.u32 %v536, %v526
      %v540 = vshll.u32 %v442, 16
      %v542 = vrot.slane %v540, 1
      %v543 = vsel %vm479, %v538, %v542
      %v544 = vshrl.u32 %v441, 16
      %v546 = vor.u32 %v544, %v534
      %v548 = vshll.u32 %v443, 16
      %v550 = vrot.slane %v548, 1
      %v551 = vsel %vm479, %v546, %v550
      %v552 = vshrl.u32 %v442, 16
      %v554 = vor.u32 %v552, %v542
      %v556 = vshll.u32 %v444, 16
      %v558 = vrot.slane %v556, 1
      %v559 = vsel %vm479, %v554, %v558
      %v560 = vshrl.u32 %v443, 16
      %v562 = vor.u32 %v560, %v550
      %v564 = vshll.u32 %v445, 16
      %v566 = vrot.slane %v564, 1
      %v567 = vsel %vm479, %v562, %v566
      %v610 = vunpack.c.l.b16 %v447
      %v611 = vunpack.c.l.b16 %v448
      %v612 = vunpack.c.l.b16 %v449
      %v613 = vunpack.c.l.b16 %v450
      %v614 = vunpack.c.l.b16 %v451
      %v615 = vunpack.c.l.b16 %v452
      %v616 = vunpack.c.l.b16 %v453
      %v617 = vunpack.c.l.b16 %v454
      %v618 = vunpack.c.l.b16 %v455
      %v619 = vunpack.c.l.b16 %v456
      %v620 = vunpack.c.l.b16 %v457
      %v621 = vunpack.c.l.b16 %v458
      %v622 = vunpack.c.l.b16 %v459
      %v623 = vunpack.c.l.b16 %v460
      %v624 = vunpack.c.l.b16 %v461
      %v625 = vunpack.c.l.b16 %v462
      %v626 = vunpack.c.l.b16 %v463
      %v627 = vunpack.c.l.b16 %v464
      %v628 = vunpack.c.l.b16 %v465
      %v629 = vunpack.c.l.b16 %v466
      %v630 = vunpack.c.l.b16 %v467
      %v631 = vunpack.c.l.b16 %v468
      %v632 = vunpack.c.l.b16 %v469
      %v633 = vunpack.c.l.b16 %v470
      %v634 = vunpack.c.l.b16 %v471
      %v635 = vunpack.c.l.b16 %v472
      %v636 = vunpack.c.l.b16 %v473
      %v637 = vunpack.c.l.b16 %v474
      %v638 = vunpack.c.l.b16 %v475
      %v639 = vunpack.c.l.b16 %v476
      %v640 = vunpack.c.l.b16 %v477
      %v641 = vunpack.c.l.b16 %v478
      %v642 = vpack.c.b16 %v611, %v610
      %v643 = vpack.c.b16 %v613, %v612
      %v644 = vpack.c.b16 %v615, %v614
      %v645 = vpack.c.b16 %v617, %v616
      %v646 = vpack.c.b16 %v619, %v618
      %v647 = vpack.c.b16 %v621, %v620
      %v648 = vpack.c.b16 %v623, %v622
      %v649 = vpack.c.b16 %v625, %v624
      %v650 = vpack.c.b16 %v627, %v626
      %v651 = vpack.c.b16 %v629, %v628
      %v652 = vpack.c.b16 %v631, %v630
      %v653 = vpack.c.b16 %v633, %v632
      %v654 = vpack.c.b16 %v635, %v634
      %v655 = vpack.c.b16 %v637, %v636
      %v656 = vpack.c.b16 %v639, %v638
      %v657 = vpack.c.b16 %v641, %v640
      %674 = vmatpush.bf16.msra.mxu0 %v649
      %675 = vmatpush.bf16.msra.mxu0 %v648
      %676 = vmatpush.bf16.msra.mxu0 %v647
      %677 = vmatpush.bf16.msra.mxu0 %v646
      %678 = vmatpush.bf16.msra.mxu0 %v645
      %679 = vmatpush.bf16.msra.mxu0 %v644
      %680 = vmatpush.bf16.msra.mxu0 %v643
      %681 = vmatpush.bf16.msra.mxu0 %v642
      %682 = vmatmul.bf16.gmra.mxu0 %v491
      %v683 = vpop.f32.mrf.mxu0
      %v684 = vadd.f32 0.0, %v683
      %v685 = vpop.f32.mrf.mxu0
      %v686 = vadd.f32 0.0, %v685
      %687 = vmatmul.bf16.gmra.mxu0 %v511
      %v688 = vpop.f32.mrf.mxu0
      %v689 = vadd.f32 0.0, %v688
      %v690 = vpop.f32.mrf.mxu0
      %v691 = vadd.f32 0.0, %v690
      %692 = vmatmul.bf16.gmra.mxu0 %v527
      %v693 = vpop.f32.mrf.mxu0
      %v694 = vadd.f32 0.0, %v693
      %v695 = vpop.f32.mrf.mxu0
      %v696 = vadd.f32 0.0, %v695
      %697 = vmatmul.bf16.gmra.mxu0 %v543
      %v698 = vpop.f32.mrf.mxu0
      %v699 = vadd.f32 0.0, %v698
      %v700 = vpop.f32.mrf.mxu0
      %v701 = vadd.f32 0.0, %v700
      %702 = vmatmul.bf16.gmra.mxu0 %v559
      %v703 = vpop.f32.mrf.mxu0
      %v704 = vadd.f32 0.0, %v703
      %v705 = vpop.f32.mrf.mxu0
      %v706 = vadd.f32 0.0, %v705
      %707 = vdwg.mxu0
      %708 = vmatpush.bf16.msra.mxu0 %v657
      %709 = vmatpush.bf16.msra.mxu0 %v656
      %710 = vmatpush.bf16.msra.mxu0 %v655
      %711 = vmatpush.bf16.msra.mxu0 %v654
      %712 = vmatpush.bf16.msra.mxu0 %v653
      %713 = vmatpush.bf16.msra.mxu0 %v652
      %714 = vmatpush.bf16.msra.mxu0 %v651
      %715 = vmatpush.bf16.msra.mxu0 %v650
      %716 = vmatmul.bf16.gmra.mxu0 %v503
      %v717 = vpop.f32.mrf.mxu0
      %v718 = vadd.f32 %v684, %v717
      %v719 = vpop.f32.mrf.mxu0
      %v720 = vadd.f32 %v686, %v719
      %721 = vmatmul.bf16.gmra.mxu0 %v519
      %v722 = vpop.f32.mrf.mxu0
      %v723 = vadd.f32 %v689, %v722
      %v724 = vpop.f32.mrf.mxu0
      %v725 = vadd.f32 %v691, %v724
      %726 = vmatmul.bf16.gmra.mxu0 %v535
      %v727 = vpop.f32.mrf.mxu0
      %v728 = vadd.f32 %v694, %v727
      %v729 = vpop.f32.mrf.mxu0
      %v730 = vadd.f32 %v696, %v729
      %731 = vmatmul.bf16.gmra.mxu0 %v551
      %v732 = vpop.f32.mrf.mxu0
      %v733 = vadd.f32 %v699, %v732
      %v734 = vpop.f32.mrf.mxu0
      %v735 = vadd.f32 %v701, %v734
      %736 = vmatmul.bf16.gmra.mxu0 %v567
      %v737 = vpop.f32.mrf.mxu0
      %v738 = vadd.f32 %v704, %v737
      %v739 = vpop.f32.mrf.mxu0
      %v740 = vadd.f32 %v706, %v739
      %741 = vdwg.mxu0
      %v742 = vadd.f32 %v402, %v718
      %v743 = vadd.f32 %v403, %v720
      %v744 = vadd.f32 %v404, %v723
      %v745 = vadd.f32 %v405, %v725
      %v746 = vadd.f32 %v406, %v728
      %v747 = vadd.f32 %v407, %v730
      %v748 = vadd.f32 %v408, %v733
      %v749 = vadd.f32 %v409, %v735
      %v750 = vadd.f32 %v410, %v738
      %v751 = vadd.f32 %v411, %v740
      %v752 = vld [vmem:[%s165] sm:$0xfc]
      %v753 = vld [vmem:[%s165 + $0x8] sm:$0xfc]
      %v754 = vld [vmem:[%s165 + $0xa0] sm:$0x3]
      %v755 = vld [vmem:[%s165 + $0xa8] sm:$0x3]
      %v756 = vpack.c.bf16 %v414, %v752
      %v757 = vpack.c.bf16 %v415, %v753
      %v758 = vpack.c.bf16 %v754, %v754
      %v759 = vpack.c.bf16 %v755, %v755
      %s760 = scalar_lea.vmem %s1, 256
      %v761 = vld [vmem:[%s760] sm:$0xf]
      %v762 = vld [vmem:[%s760 + $0x4] sm:$0xf]
      %v763 = vld [vmem:[%s760 + $0x8] sm:$0xf]
      %v764 = vld [vmem:[%s760 + $0xc] sm:$0xf]
      %v765 = vld [vmem:[%s760 + $0x10] sm:$0xf]
      %v766 = vld [vmem:[%s760 + $0x14] sm:$0xf]
      %v767 = vld [vmem:[%s760 + $0x18] sm:$0xf]
      %v768 = vld [vmem:[%s760 + $0x1c] sm:$0xf]
      %v769 = vld [vmem:[%s760 + $0x20] sm:$0xf]
      %v770 = vld [vmem:[%s760 + $0x24] sm:$0xf]
      %v771 = vld [vmem:[%s760 + $0x28] sm:$0xf]
      %v772 = vld [vmem:[%s760 + $0x2c] sm:$0xf]
      %v773 = vld [vmem:[%s760 + $0x30] sm:$0xf]
      %v774 = vld [vmem:[%s760 + $0x34] sm:$0xf]
      %v775 = vld [vmem:[%s760 + $0x38] sm:$0xf]
      %v776 = vld [vmem:[%s760 + $0x3c] sm:$0xf]
      %v777 = vld [vmem:[%s760 + $0x40] sm:$0xf]
      %v778 = vld [vmem:[%s760 + $0x44] sm:$0xf]
      %v779 = vld [vmem:[%s760 + $0x48] sm:$0xf]
      %v780 = vld [vmem:[%s760 + $0x4c] sm:$0xf]
      %v781 = vld [vmem:[%s760 + $0x50] sm:$0xf]
      %v782 = vld [vmem:[%s760 + $0x54] sm:$0xf]
      %v783 = vld [vmem:[%s760 + $0x58] sm:$0xf]
      %v784 = vld [vmem:[%s760 + $0x5c] sm:$0xf]
      %v785 = vld [vmem:[%s760 + $0x60] sm:$0xf]
      %v786 = vld [vmem:[%s760 + $0x64] sm:$0xf]
      %v787 = vld [vmem:[%s760 + $0x68] sm:$0xf]
      %v788 = vld [vmem:[%s760 + $0x6c] sm:$0xf]
      %v789 = vld [vmem:[%s760 + $0x70] sm:$0xf]
      %v790 = vld [vmem:[%s760 + $0x74] sm:$0xf]
      %v791 = vld [vmem:[%s760 + $0x78] sm:$0xf]
      %v792 = vld [vmem:[%s760 + $0x7c] sm:$0xf]
      %vm805 = vcmask 1046528
      %v806 = vrot.slane %v756, 1
      %v807 = vrot.slane %v436, 1
      %v808 = vsel %vm805, %v806, %v807
      %v809 = vrot.slane %v757, 1
      %v810 = vrot.slane %v437, 1
      %v811 = vsel %vm805, %v809, %v810
      %v812 = vrot.slane %v438, 1
      %v813 = vsel %vm805, %v807, %v812
      %v814 = vrot.slane %v439, 1
      %v815 = vsel %vm805, %v810, %v814
      %v816 = vrot.slane %v440, 1
      %v817 = vsel %vm805, %v812, %v816
      %v818 = vrot.slane %v441, 1
      %v819 = vsel %vm805, %v814, %v818
      %v820 = vrot.slane %v442, 1
      %v821 = vsel %vm805, %v816, %v820
      %v822 = vrot.slane %v443, 1
      %v823 = vsel %vm805, %v818, %v822
      %v824 = vrot.slane %v758, 1
      %v825 = vsel %vm805, %v820, %v824
      %v826 = vrot.slane %v759, 1
      %v827 = vsel %vm805, %v822, %v826
      %v870 = vunpack.c.l.b16 %v761
      %v871 = vunpack.c.l.b16 %v762
      %v872 = vunpack.c.l.b16 %v763
      %v873 = vunpack.c.l.b16 %v764
      %v874 = vunpack.c.l.b16 %v765
      %v875 = vunpack.c.l.b16 %v766
      %v876 = vunpack.c.l.b16 %v767
      %v877 = vunpack.c.l.b16 %v768
      %v878 = vunpack.c.l.b16 %v769
      %v879 = vunpack.c.l.b16 %v770
      %v880 = vunpack.c.l.b16 %v771
      %v881 = vunpack.c.l.b16 %v772
      %v882 = vunpack.c.l.b16 %v773
      %v883 = vunpack.c.l.b16 %v774
      %v884 = vunpack.c.l.b16 %v775
      %v885 = vunpack.c.l.b16 %v776
      %v886 = vunpack.c.l.b16 %v777
      %v887 = vunpack.c.l.b16 %v778
      %v888 = vunpack.c.l.b16 %v779
      %v889 = vunpack.c.l.b16 %v780
      %v890 = vunpack.c.l.b16 %v781
      %v891 = vunpack.c.l.b16 %v782
      %v892 = vunpack.c.l.b16 %v783
      %v893 = vunpack.c.l.b16 %v784
      %v894 = vunpack.c.l.b16 %v785
      %v895 = vunpack.c.l.b16 %v786
      %v896 = vunpack.c.l.b16 %v787
      %v897 = vunpack.c.l.b16 %v788
      %v898 = vunpack.c.l.b16 %v789
      %v899 = vunpack.c.l.b16 %v790
      %v900 = vunpack.c.l.b16 %v791
      %v901 = vunpack.c.l.b16 %v792
      %v902 = vpack.c.b16 %v871, %v870
      %v903 = vpack.c.b16 %v873, %v872
      %v904 = vpack.c.b16 %v875, %v874
      %v905 = vpack.c.b16 %v877, %v876
      %v906 = vpack.c.b16 %v879, %v878
      %v907 = vpack.c.b16 %v881, %v880
      %v908 = vpack.c.b16 %v883, %v882
      %v909 = vpack.c.b16 %v885, %v884
      %v910 = vpack.c.b16 %v887, %v886
      %v911 = vpack.c.b16 %v889, %v888
      %v912 = vpack.c.b16 %v891, %v890
      %v913 = vpack.c.b16 %v893, %v892
      %v914 = vpack.c.b16 %v895, %v894
      %v915 = vpack.c.b16 %v897, %v896
      %v916 = vpack.c.b16 %v899, %v898
      %v917 = vpack.c.b16 %v901, %v900
      %934 = vmatpush.bf16.msra.mxu0 %v909
      %935 = vmatpush.bf16.msra.mxu0 %v908
      %936 = vmatpush.bf16.msra.mxu0 %v907
      %937 = vmatpush.bf16.msra.mxu0 %v906
      %938 = vmatpush.bf16.msra.mxu0 %v905
      %939 = vmatpush.bf16.msra.mxu0 %v904
      %940 = vmatpush.bf16.msra.mxu0 %v903
      %941 = vmatpush.bf16.msra.mxu0 %v902
      %942 = vmatmul.bf16.gmra.mxu0 %v808
      %v943 = vpop.f32.mrf.mxu0
      %v944 = vadd.f32 0.0, %v943
      %v945 = vpop.f32.mrf.mxu0
      %v946 = vadd.f32 0.0, %v945
      %947 = vmatmul.bf16.gmra.mxu0 %v813
      %v948 = vpop.f32.mrf.mxu0
      %v949 = vadd.f32 0.0, %v948
      %v950 = vpop.f32.mrf.mxu0
      %v951 = vadd.f32 0.0, %v950
      %952 = vmatmul.bf16.gmra.mxu0 %v817
      %v953 = vpop.f32.mrf.mxu0
      %v954 = vadd.f32 0.0, %v953
      %v955 = vpop.f32.mrf.mxu0
      %v956 = vadd.f32 0.0, %v955
      %957 = vmatmul.bf16.gmra.mxu0 %v821
      %v958 = vpop.f32.mrf.mxu0
      %v959 = vadd.f32 0.0, %v958
      %v960 = vpop.f32.mrf.mxu0
      %v961 = vadd.f32 0.0, %v960
      %962 = vmatmul.bf16.gmra.mxu0 %v825
      %v963 = vpop.f32.mrf.mxu0
      %v964 = vadd.f32 0.0, %v963
      %v965 = vpop.f32.mrf.mxu0
      %v966 = vadd.f32 0.0, %v965
      %967 = vdwg.mxu0
      %968 = vmatpush.bf16.msra.mxu0 %v917
      %969 = vmatpush.bf16.msra.mxu0 %v916
      %970 = vmatpush.bf16.msra.mxu0 %v915
      %971 = vmatpush.bf16.msra.mxu0 %v914
      %972 = vmatpush.bf16.msra.mxu0 %v913
      %973 = vmatpush.bf16.msra.mxu0 %v912
      %974 = vmatpush.bf16.msra.mxu0 %v911
      %975 = vmatpush.bf16.msra.mxu0 %v910
      %976 = vmatmul.bf16.gmra.mxu0 %v811
      %v977 = vpop.f32.mrf.mxu0
      %v978 = vadd.f32 %v944, %v977
      %v979 = vpop.f32.mrf.mxu0
      %v980 = vadd.f32 %v946, %v979
      %981 = vmatmul.bf16.gmra.mxu0 %v815
      %v982 = vpop.f32.mrf.mxu0
      %v983 = vadd.f32 %v949, %v982
      %v984 = vpop.f32.mrf.mxu0
      %v985 = vadd.f32 %v951, %v984
      %986 = vmatmul.bf16.gmra.mxu0 %v819
      %v987 = vpop.f32.mrf.mxu0
      %v988 = vadd.f32 %v954, %v987
      %v989 = vpop.f32.mrf.mxu0
      %v990 = vadd.f32 %v956, %v989
      %991 = vmatmul.bf16.gmra.mxu0 %v823
      %v992 = vpop.f32.mrf.mxu0
      %v993 = vadd.f32 %v959, %v992
      %v994 = vpop.f32.mrf.mxu0
      %v995 = vadd.f32 %v961, %v994
      %996 = vmatmul.bf16.gmra.mxu0 %v827
      %v997 = vpop.f32.mrf.mxu0
      %v998 = vadd.f32 %v964, %v997
      %v999 = vpop.f32.mrf.mxu0
      %v1000 = vadd.f32 %v966, %v999
      %1001 = vdwg.mxu0
      %v1002 = vadd.f32 %v742, %v978
      %v1003 = vadd.f32 %v743, %v980
      %v1004 = vadd.f32 %v744, %v983
      %v1005 = vadd.f32 %v745, %v985
      %v1006 = vadd.f32 %v746, %v988
      %v1007 = vadd.f32 %v747, %v990
      %v1008 = vadd.f32 %v748, %v993
      %v1009 = vadd.f32 %v749, %v995
      %v1010 = vadd.f32 %v750, %v998
      %v1011 = vadd.f32 %v751, %v1000
      %v1012 = vld [vmem:[%s165 + $0x10] sm:$0xfc]
      %v1013 = vld [vmem:[%s165 + $0x18] sm:$0xfc]
      %v1014 = vld [vmem:[%s165 + $0x20] sm:$0xff]
      %v1015 = vld [vmem:[%s165 + $0x28] sm:$0xff]
      %v1016 = vld [vmem:[%s165 + $0x30] sm:$0xff]
      %v1017 = vld [vmem:[%s165 + $0x38] sm:$0xff]
      %v1018 = vld [vmem:[%s165 + $0x40] sm:$0xff]
      %v1019 = vld [vmem:[%s165 + $0x48] sm:$0xff]
      %v1020 = vld [vmem:[%s165 + $0x50] sm:$0xff]
      %v1021 = vld [vmem:[%s165 + $0x58] sm:$0xff]
      %v1022 = vld [vmem:[%s165 + $0x60] sm:$0xff]
      %v1023 = vld [vmem:[%s165 + $0x68] sm:$0xff]
      %v1024 = vld [vmem:[%s165 + $0x70] sm:$0xff]
      %v1025 = vld [vmem:[%s165 + $0x78] sm:$0xff]
      %v1026 = vld [vmem:[%s165 + $0x80] sm:$0xff]
      %v1027 = vld [vmem:[%s165 + $0x88] sm:$0xff]
      %v1028 = vld [vmem:[%s165 + $0x90] sm:$0xff]
      %v1029 = vld [vmem:[%s165 + $0x98] sm:$0xff]
      %v1030 = vld [vmem:[%s165 + $0xa0] sm:$0xff]
      %v1031 = vld [vmem:[%s165 + $0xa8] sm:$0xff]
      %v1032 = vld [vmem:[%s165 + $0xb0] sm:$0x3]
      %v1033 = vld [vmem:[%s165 + $0xb8] sm:$0x3]
      %v1034 = vpack.c.bf16 %v1014, %v1012
      %v1035 = vpack.c.bf16 %v1015, %v1013
      %v1036 = vpack.c.bf16 %v1018, %v1016
      %v1037 = vpack.c.bf16 %v1019, %v1017
      %v1038 = vpack.c.bf16 %v1022, %v1020
      %v1039 = vpack.c.bf16 %v1023, %v1021
      %v1040 = vpack.c.bf16 %v1026, %v1024
      %v1041 = vpack.c.bf16 %v1027, %v1025
      %v1042 = vpack.c.bf16 %v1030, %v1028
      %v1043 = vpack.c.bf16 %v1031, %v1029
      %v1044 = vpack.c.bf16 %v1032, %v1032
      %v1045 = vpack.c.bf16 %v1033, %v1033
      %s1046 = scalar_lea.vmem %s1, 384
      %v1047 = vld [vmem:[%s1046] sm:$0xf]
      %v1048 = vld [vmem:[%s1046 + $0x4] sm:$0xf]
      %v1049 = vld [vmem:[%s1046 + $0x8] sm:$0xf]
      %v1050 = vld [vmem:[%s1046 + $0xc] sm:$0xf]
      %v1051 = vld [vmem:[%s1046 + $0x10] sm:$0xf]
      %v1052 = vld [vmem:[%s1046 + $0x14] sm:$0xf]
      %v1053 = vld [vmem:[%s1046 + $0x18] sm:$0xf]
      %v1054 = vld [vmem:[%s1046 + $0x1c] sm:$0xf]
      %v1055 = vld [vmem:[%s1046 + $0x20] sm:$0xf]
      %v1056 = vld [vmem:[%s1046 + $0x24] sm:$0xf]
      %v1057 = vld [vmem:[%s1046 + $0x28] sm:$0xf]
      %v1058 = vld [vmem:[%s1046 + $0x2c] sm:$0xf]
      %v1059 = vld [vmem:[%s1046 + $0x30] sm:$0xf]
      %v1060 = vld [vmem:[%s1046 + $0x34] sm:$0xf]
      %v1061 = vld [vmem:[%s1046 + $0x38] sm:$0xf]
      %v1062 = vld [vmem:[%s1046 + $0x3c] sm:$0xf]
      %v1063 = vld [vmem:[%s1046 + $0x40] sm:$0xf]
      %v1064 = vld [vmem:[%s1046 + $0x44] sm:$0xf]
      %v1065 = vld [vmem:[%s1046 + $0x48] sm:$0xf]
      %v1066 = vld [vmem:[%s1046 + $0x4c] sm:$0xf]
      %v1067 = vld [vmem:[%s1046 + $0x50] sm:$0xf]
      %v1068 = vld [vmem:[%s1046 + $0x54] sm:$0xf]
      %v1069 = vld [vmem:[%s1046 + $0x58] sm:$0xf]
      %v1070 = vld [vmem:[%s1046 + $0x5c] sm:$0xf]
      %v1071 = vld [vmem:[%s1046 + $0x60] sm:$0xf]
      %v1072 = vld [vmem:[%s1046 + $0x64] sm:$0xf]
      %v1073 = vld [vmem:[%s1046 + $0x68] sm:$0xf]
      %v1074 = vld [vmem:[%s1046 + $0x6c] sm:$0xf]
      %v1075 = vld [vmem:[%s1046 + $0x70] sm:$0xf]
      %v1076 = vld [vmem:[%s1046 + $0x74] sm:$0xf]
      %v1077 = vld [vmem:[%s1046 + $0x78] sm:$0xf]
      %v1078 = vld [vmem:[%s1046 + $0x7c] sm:$0xf]
      %v1091 = vrot.slane %v1034, 1
      %v1092 = vrot.slane %v1036, 1
      %v1093 = vsel %vm805, %v1091, %v1092
      %v1094 = vrot.slane %v1035, 1
      %v1095 = vrot.slane %v1037, 1
      %v1096 = vsel %vm805, %v1094, %v1095
      %v1097 = vrot.slane %v1038, 1
      %v1098 = vsel %vm805, %v1092, %v1097
      %v1099 = vrot.slane %v1039, 1
      %v1100 = vsel %vm805, %v1095, %v1099
      %v1101 = vrot.slane %v1040, 1
      %v1102 = vsel %vm805, %v1097, %v1101
      %v1103 = vrot.slane %v1041, 1
      %v1104 = vsel %vm805, %v1099, %v1103
      %v1105 = vrot.slane %v1042, 1
      %v1106 = vsel %vm805, %v1101, %v1105
      %v1107 = vrot.slane %v1043, 1
      %v1108 = vsel %vm805, %v1103, %v1107
      %v1109 = vrot.slane %v1044, 1
      %v1110 = vsel %vm805, %v1105, %v1109
      %v1111 = vrot.slane %v1045, 1
      %v1112 = vsel %vm805, %v1107, %v1111
      %v1155 = vunpack.c.l.b16 %v1047
      %v1156 = vunpack.c.l.b16 %v1048
      %v1157 = vunpack.c.l.b16 %v1049
      %v1158 = vunpack.c.l.b16 %v1050
      %v1159 = vunpack.c.l.b16 %v1051
      %v1160 = vunpack.c.l.b16 %v1052
      %v1161 = vunpack.c.l.b16 %v1053
      %v1162 = vunpack.c.l.b16 %v1054
      %v1163 = vunpack.c.l.b16 %v1055
      %v1164 = vunpack.c.l.b16 %v1056
      %v1165 = vunpack.c.l.b16 %v1057
      %v1166 = vunpack.c.l.b16 %v1058
      %v1167 = vunpack.c.l.b16 %v1059
      %v1168 = vunpack.c.l.b16 %v1060
      %v1169 = vunpack.c.l.b16 %v1061
      %v1170 = vunpack.c.l.b16 %v1062
      %v1171 = vunpack.c.l.b16 %v1063
      %v1172 = vunpack.c.l.b16 %v1064
      %v1173 = vunpack.c.l.b16 %v1065
      %v1174 = vunpack.c.l.b16 %v1066
      %v1175 = vunpack.c.l.b16 %v1067
      %v1176 = vunpack.c.l.b16 %v1068
      %v1177 = vunpack.c.l.b16 %v1069
      %v1178 = vunpack.c.l.b16 %v1070
      %v1179 = vunpack.c.l.b16 %v1071
      %v1180 = vunpack.c.l.b16 %v1072
      %v1181 = vunpack.c.l.b16 %v1073
      %v1182 = vunpack.c.l.b16 %v1074
      %v1183 = vunpack.c.l.b16 %v1075
      %v1184 = vunpack.c.l.b16 %v1076
      %v1185 = vunpack.c.l.b16 %v1077
      %v1186 = vunpack.c.l.b16 %v1078
      %v1187 = vpack.c.b16 %v1156, %v1155
      %v1188 = vpack.c.b16 %v1158, %v1157
      %v1189 = vpack.c.b16 %v1160, %v1159
      %v1190 = vpack.c.b16 %v1162, %v1161
      %v1191 = vpack.c.b16 %v1164, %v1163
      %v1192 = vpack.c.b16 %v1166, %v1165
      %v1193 = vpack.c.b16 %v1168, %v1167
      %v1194 = vpack.c.b16 %v1170, %v1169
      %v1195 = vpack.c.b16 %v1172, %v1171
      %v1196 = vpack.c.b16 %v1174, %v1173
      %v1197 = vpack.c.b16 %v1176, %v1175
      %v1198 = vpack.c.b16 %v1178, %v1177
      %v1199 = vpack.c.b16 %v1180, %v1179
      %v1200 = vpack.c.b16 %v1182, %v1181
      %v1201 = vpack.c.b16 %v1184, %v1183
      %v1202 = vpack.c.b16 %v1186, %v1185
      %1219 = vmatpush.bf16.msra.mxu0 %v1194
      %1220 = vmatpush.bf16.msra.mxu0 %v1193
      %1221 = vmatpush.bf16.msra.mxu0 %v1192
      %1222 = vmatpush.bf16.msra.mxu0 %v1191
      %1223 = vmatpush.bf16.msra.mxu0 %v1190
      %1224 = vmatpush.bf16.msra.mxu0 %v1189
      %1225 = vmatpush.bf16.msra.mxu0 %v1188
      %1226 = vmatpush.bf16.msra.mxu0 %v1187
      %1227 = vmatmul.bf16.gmra.mxu0 %v1093
      %v1228 = vpop.f32.mrf.mxu0
      %v1229 = vadd.f32 0.0, %v1228
      %v1230 = vpop.f32.mrf.mxu0
      %v1231 = vadd.f32 0.0, %v1230
      %1232 = vmatmul.bf16.gmra.mxu0 %v1098
      %v1233 = vpop.f32.mrf.mxu0
      %v1234 = vadd.f32 0.0, %v1233
      %v1235 = vpop.f32.mrf.mxu0
      %v1236 = vadd.f32 0.0, %v1235
      %1237 = vmatmul.bf16.gmra.mxu0 %v1102
      %v1238 = vpop.f32.mrf.mxu0
      %v1239 = vadd.f32 0.0, %v1238
      %v1240 = vpop.f32.mrf.mxu0
      %v1241 = vadd.f32 0.0, %v1240
      %1242 = vmatmul.bf16.gmra.mxu0 %v1106
      %v1243 = vpop.f32.mrf.mxu0
      %v1244 = vadd.f32 0.0, %v1243
      %v1245 = vpop.f32.mrf.mxu0
      %v1246 = vadd.f32 0.0, %v1245
      %1247 = vmatmul.bf16.gmra.mxu0 %v1110
      %v1248 = vpop.f32.mrf.mxu0
      %v1249 = vadd.f32 0.0, %v1248
      %v1250 = vpop.f32.mrf.mxu0
      %v1251 = vadd.f32 0.0, %v1250
      %1252 = vdwg.mxu0
      %1253 = vmatpush.bf16.msra.mxu0 %v1202
      %1254 = vmatpush.bf16.msra.mxu0 %v1201
      %1255 = vmatpush.bf16.msra.mxu0 %v1200
      %1256 = vmatpush.bf16.msra.mxu0 %v1199
      %1257 = vmatpush.bf16.msra.mxu0 %v1198
      %1258 = vmatpush.bf16.msra.mxu0 %v1197
      %1259 = vmatpush.bf16.msra.mxu0 %v1196
      %1260 = vmatpush.bf16.msra.mxu0 %v1195
      %1261 = vmatmul.bf16.gmra.mxu0 %v1096
      %v1262 = vpop.f32.mrf.mxu0
      %v1263 = vadd.f32 %v1229, %v1262
      %v1264 = vpop.f32.mrf.mxu0
      %v1265 = vadd.f32 %v1231, %v1264
      %1266 = vmatmul.bf16.gmra.mxu0 %v1100
      %v1267 = vpop.f32.mrf.mxu0
      %v1268 = vadd.f32 %v1234, %v1267
      %v1269 = vpop.f32.mrf.mxu0
      %v1270 = vadd.f32 %v1236, %v1269
      %1271 = vmatmul.bf16.gmra.mxu0 %v1104
      %v1272 = vpop.f32.mrf.mxu0
      %v1273 = vadd.f32 %v1239, %v1272
      %v1274 = vpop.f32.mrf.mxu0
      %v1275 = vadd.f32 %v1241, %v1274
      %1276 = vmatmul.bf16.gmra.mxu0 %v1108
      %v1277 = vpop.f32.mrf.mxu0
      %v1278 = vadd.f32 %v1244, %v1277
      %v1279 = vpop.f32.mrf.mxu0
      %v1280 = vadd.f32 %v1246, %v1279
      %1281 = vmatmul.bf16.gmra.mxu0 %v1112
      %v1282 = vpop.f32.mrf.mxu0
      %v1283 = vadd.f32 %v1249, %v1282
      %v1284 = vpop.f32.mrf.mxu0
      %v1285 = vadd.f32 %v1251, %v1284
      %1286 = vdwg.mxu0
      %v1287 = vadd.f32 %v1002, %v1263
      %v1288 = vadd.f32 %v1003, %v1265
      %v1289 = vadd.f32 %v1004, %v1268
      %v1290 = vadd.f32 %v1005, %v1270
      %v1291 = vadd.f32 %v1006, %v1273
      %v1292 = vadd.f32 %v1007, %v1275
      %v1293 = vadd.f32 %v1008, %v1278
      %v1294 = vadd.f32 %v1009, %v1280
      %v1295 = vadd.f32 %v1010, %v1283
      %v1296 = vadd.f32 %v1011, %v1285
      %v1297 = vld [vmem:[%s165 + $0x10] sm:$0xf8]
      %v1298 = vld [vmem:[%s165 + $0x18] sm:$0xf8]
      %v1299 = vld [vmem:[%s165 + $0xb0] sm:$0x7]
      %v1300 = vld [vmem:[%s165 + $0xb8] sm:$0x7]
      %v1301 = vpack.c.bf16 %v1014, %v1297
      %v1302 = vpack.c.bf16 %v1015, %v1298
      %v1303 = vpack.c.bf16 %v1299, %v1299
      %v1304 = vpack.c.bf16 %v1300, %v1300
      %s1305 = scalar_lea.vmem %s1, 512
      %v1306 = vld [vmem:[%s1305] sm:$0xf]
      %v1307 = vld [vmem:[%s1305 + $0x4] sm:$0xf]
      %v1308 = vld [vmem:[%s1305 + $0x8] sm:$0xf]
      %v1309 = vld [vmem:[%s1305 + $0xc] sm:$0xf]
      %v1310 = vld [vmem:[%s1305 + $0x10] sm:$0xf]
      %v1311 = vld [vmem:[%s1305 + $0x14] sm:$0xf]
      %v1312 = vld [vmem:[%s1305 + $0x18] sm:$0xf]
      %v1313 = vld [vmem:[%s1305 + $0x1c] sm:$0xf]
      %v1314 = vld [vmem:[%s1305 + $0x20] sm:$0xf]
      %v1315 = vld [vmem:[%s1305 + $0x24] sm:$0xf]
      %v1316 = vld [vmem:[%s1305 + $0x28] sm:$0xf]
      %v1317 = vld [vmem:[%s1305 + $0x2c] sm:$0xf]
      %v1318 = vld [vmem:[%s1305 + $0x30] sm:$0xf]
      %v1319 = vld [vmem:[%s1305 + $0x34] sm:$0xf]
      %v1320 = vld [vmem:[%s1305 + $0x38] sm:$0xf]
      %v1321 = vld [vmem:[%s1305 + $0x3c] sm:$0xf]
      %v1322 = vld [vmem:[%s1305 + $0x40] sm:$0xf]
      %v1323 = vld [vmem:[%s1305 + $0x44] sm:$0xf]
      %v1324 = vld [vmem:[%s1305 + $0x48] sm:$0xf]
      %v1325 = vld [vmem:[%s1305 + $0x4c] sm:$0xf]
      %v1326 = vld [vmem:[%s1305 + $0x50] sm:$0xf]
      %v1327 = vld [vmem:[%s1305 + $0x54] sm:$0xf]
      %v1328 = vld [vmem:[%s1305 + $0x58] sm:$0xf]
      %v1329 = vld [vmem:[%s1305 + $0x5c] sm:$0xf]
      %v1330 = vld [vmem:[%s1305 + $0x60] sm:$0xf]
      %v1331 = vld [vmem:[%s1305 + $0x64] sm:$0xf]
      %v1332 = vld [vmem:[%s1305 + $0x68] sm:$0xf]
      %v1333 = vld [vmem:[%s1305 + $0x6c] sm:$0xf]
      %v1334 = vld [vmem:[%s1305 + $0x70] sm:$0xf]
      %v1335 = vld [vmem:[%s1305 + $0x74] sm:$0xf]
      %v1336 = vld [vmem:[%s1305 + $0x78] sm:$0xf]
      %v1337 = vld [vmem:[%s1305 + $0x7c] sm:$0xf]
      %vm1338 = vsmask.f32 6400
      %v1340 = vshrl.u32 %v1301, 16
      %v1342 = vrot.slane %v1340, 1
      %v1343 = vshll.u32 %v1301, 16
      %v1345 = vrot.slane %v1343, 2
      %v1346 = vor.u32 %v1342, %v1345
      %v1348 = vshrl.u32 %v1036, 16
      %v1350 = vrot.slane %v1348, 1
      %v1351 = vshll.u32 %v1036, 16
      %v1353 = vrot.slane %v1351, 2
      %v1354 = vor.u32 %v1350, %v1353
      %v1355 = vsel %vm1338, %v1346, %v1354
      %v1357 = vshrl.u32 %v1302, 16
      %v1359 = vrot.slane %v1357, 1
      %v1360 = vshll.u32 %v1302, 16
      %v1362 = vrot.slane %v1360, 2
      %v1363 = vor.u32 %v1359, %v1362
      %v1365 = vshrl.u32 %v1037, 16
      %v1367 = vrot.slane %v1365, 1
      %v1368 = vshll.u32 %v1037, 16
      %v1370 = vrot.slane %v1368, 2
      %v1371 = vor.u32 %v1367, %v1370
      %v1372 = vsel %vm1338, %v1363, %v1371
      %v1374 = vshrl.u32 %v1038, 16
      %v1376 = vrot.slane %v1374, 1
      %v1377 = vshll.u32 %v1038, 16
      %v1379 = vrot.slane %v1377, 2
      %v1380 = vor.u32 %v1376, %v1379
      %v1381 = vsel %vm1338, %v1354, %v1380
      %v1383 = vshrl.u32 %v1039, 16
      %v1385 = vrot.slane %v1383, 1
      %v1386 = vshll.u32 %v1039, 16
      %v1388 = vrot.slane %v1386, 2
      %v1389 = vor.u32 %v1385, %v1388
      %v1390 = vsel %vm1338, %v1371, %v1389
      %v1392 = vshrl.u32 %v1040, 16
      %v1394 = vrot.slane %v1392, 1
      %v1395 = vshll.u32 %v1040, 16
      %v1397 = vrot.slane %v1395, 2
      %v1398 = vor.u32 %v1394, %v1397
      %v1399 = vsel %vm1338, %v1380, %v1398
      %v1401 = vshrl.u32 %v1041, 16
      %v1403 = vrot.slane %v1401, 1
      %v1404 = vshll.u32 %v1041, 16
      %v1406 = vrot.slane %v1404, 2
      %v1407 = vor.u32 %v1403, %v1406
      %v1408 = vsel %vm1338, %v1389, %v1407
      %v1410 = vshrl.u32 %v1042, 16
      %v1412 = vrot.slane %v1410, 1
      %v1413 = vshll.u32 %v1042, 16
      %v1415 = vrot.slane %v1413, 2
      %v1416 = vor.u32 %v1412, %v1415
      %v1417 = vsel %vm1338, %v1398, %v1416
      %v1419 = vshrl.u32 %v1043, 16
      %v1421 = vrot.slane %v1419, 1
      %v1422 = vshll.u32 %v1043, 16
      %v1424 = vrot.slane %v1422, 2
      %v1425 = vor.u32 %v1421, %v1424
      %v1426 = vsel %vm1338, %v1407, %v1425
      %v1428 = vshrl.u32 %v1303, 16
      %v1430 = vrot.slane %v1428, 1
      %v1431 = vshll.u32 %v1303, 16
      %v1433 = vrot.slane %v1431, 2
      %v1434 = vor.u32 %v1430, %v1433
      %v1435 = vsel %vm1338, %v1416, %v1434
      %v1437 = vshrl.u32 %v1304, 16
      %v1439 = vrot.slane %v1437, 1
      %v1440 = vshll.u32 %v1304, 16
      %v1442 = vrot.slane %v1440, 2
      %v1443 = vor.u32 %v1439, %v1442
      %v1444 = vsel %vm1338, %v1425, %v1443
      %v1487 = vunpack.c.l.b16 %v1306
      %v1488 = vunpack.c.l.b16 %v1307
      %v1489 = vunpack.c.l.b16 %v1308
      %v1490 = vunpack.c.l.b16 %v1309
      %v1491 = vunpack.c.l.b16 %v1310
      %v1492 = vunpack.c.l.b16 %v1311
      %v1493 = vunpack.c.l.b16 %v1312
      %v1494 = vunpack.c.l.b16 %v1313
      %v1495 = vunpack.c.l.b16 %v1314
      %v1496 = vunpack.c.l.b16 %v1315
      %v1497 = vunpack.c.l.b16 %v1316
      %v1498 = vunpack.c.l.b16 %v1317
      %v1499 = vunpack.c.l.b16 %v1318
      %v1500 = vunpack.c.l.b16 %v1319
      %v1501 = vunpack.c.l.b16 %v1320
      %v1502 = vunpack.c.l.b16 %v1321
      %v1503 = vunpack.c.l.b16 %v1322
      %v1504 = vunpack.c.l.b16 %v1323
      %v1505 = vunpack.c.l.b16 %v1324
      %v1506 = vunpack.c.l.b16 %v1325
      %v1507 = vunpack.c.l.b16 %v1326
      %v1508 = vunpack.c.l.b16 %v1327
      %v1509 = vunpack.c.l.b16 %v1328
      %v1510 = vunpack.c.l.b16 %v1329
      %v1511 = vunpack.c.l.b16 %v1330
      %v1512 = vunpack.c.l.b16 %v1331
      %v1513 = vunpack.c.l.b16 %v1332
      %v1514 = vunpack.c.l.b16 %v1333
      %v1515 = vunpack.c.l.b16 %v1334
      %v1516 = vunpack.c.l.b16 %v1335
      %v1517 = vunpack.c.l.b16 %v1336
      %v1518 = vunpack.c.l.b16 %v1337
      %v1519 = vpack.c.b16 %v1488, %v1487
      %v1520 = vpack.c.b16 %v1490, %v1489
      %v1521 = vpack.c.b16 %v1492, %v1491
      %v1522 = vpack.c.b16 %v1494, %v1493
      %v1523 = vpack.c.b16 %v1496, %v1495
      %v1524 = vpack.c.b16 %v1498, %v1497
      %v1525 = vpack.c.b16 %v1500, %v1499
      %v1526 = vpack.c.b16 %v1502, %v1501
      %v1527 = vpack.c.b16 %v1504, %v1503
      %v1528 = vpack.c.b16 %v1506, %v1505
      %v1529 = vpack.c.b16 %v1508, %v1507
      %v1530 = vpack.c.b16 %v1510, %v1509
      %v1531 = vpack.c.b16 %v1512, %v1511
      %v1532 = vpack.c.b16 %v1514, %v1513
      %v1533 = vpack.c.b16 %v1516, %v1515
      %v1534 = vpack.c.b16 %v1518, %v1517
      %1551 = vmatpush.bf16.msra.mxu0 %v1526
      %1552 = vmatpush.bf16.msra.mxu0 %v1525
      %1553 = vmatpush.bf16.msra.mxu0 %v1524
      %1554 = vmatpush.bf16.msra.mxu0 %v1523
      %1555 = vmatpush.bf16.msra.mxu0 %v1522
      %1556 = vmatpush.bf16.msra.mxu0 %v1521
      %1557 = vmatpush.bf16.msra.mxu0 %v1520
      %1558 = vmatpush.bf16.msra.mxu0 %v1519
      %1559 = vmatmul.bf16.gmra.mxu0 %v1355
      %v1560 = vpop.f32.mrf.mxu0
      %v1561 = vadd.f32 0.0, %v1560
      %v1562 = vpop.f32.mrf.mxu0
      %v1563 = vadd.f32 0.0, %v1562
      %1564 = vmatmul.bf16.gmra.mxu0 %v1381
      %v1565 = vpop.f32.mrf.mxu0
      %v1566 = vadd.f32 0.0, %v1565
      %v1567 = vpop.f32.mrf.mxu0
      %v1568 = vadd.f32 0.0, %v1567
      %1569 = vmatmul.bf16.gmra.mxu0 %v1399
      %v1570 = vpop.f32.mrf.mxu0
      %v1571 = vadd.f32 0.0, %v1570
      %v1572 = vpop.f32.mrf.mxu0
      %v1573 = vadd.f32 0.0, %v1572
      %1574 = vmatmul.bf16.gmra.mxu0 %v1417
      %v1575 = vpop.f32.mrf.mxu0
      %v1576 = vadd.f32 0.0, %v1575
      %v1577 = vpop.f32.mrf.mxu0
      %v1578 = vadd.f32 0.0, %v1577
      %1579 = vmatmul.bf16.gmra.mxu0 %v1435
      %v1580 = vpop.f32.mrf.mxu0
      %v1581 = vadd.f32 0.0, %v1580
      %v1582 = vpop.f32.mrf.mxu0
      %v1583 = vadd.f32 0.0, %v1582
      %1584 = vdwg.mxu0
      %1585 = vmatpush.bf16.msra.mxu0 %v1534
      %1586 = vmatpush.bf16.msra.mxu0 %v1533
      %1587 = vmatpush.bf16.msra.mxu0 %v1532
      %1588 = vmatpush.bf16.msra.mxu0 %v1531
      %1589 = vmatpush.bf16.msra.mxu0 %v1530
      %1590 = vmatpush.bf16.msra.mxu0 %v1529
      %1591 = vmatpush.bf16.msra.mxu0 %v1528
      %1592 = vmatpush.bf16.msra.mxu0 %v1527
      %1593 = vmatmul.bf16.gmra.mxu0 %v1372
      %v1594 = vpop.f32.mrf.mxu0
      %v1595 = vadd.f32 %v1561, %v1594
      %v1596 = vpop.f32.mrf.mxu0
      %v1597 = vadd.f32 %v1563, %v1596
      %1598 = vmatmul.bf16.gmra.mxu0 %v1390
      %v1599 = vpop.f32.mrf.mxu0
      %v1600 = vadd.f32 %v1566, %v1599
      %v1601 = vpop.f32.mrf.mxu0
      %v1602 = vadd.f32 %v1568, %v1601
      %1603 = vmatmul.bf16.gmra.mxu0 %v1408
      %v1604 = vpop.f32.mrf.mxu0
      %v1605 = vadd.f32 %v1571, %v1604
      %v1606 = vpop.f32.mrf.mxu0
      %v1607 = vadd.f32 %v1573, %v1606
      %1608 = vmatmul.bf16.gmra.mxu0 %v1426
      %v1609 = vpop.f32.mrf.mxu0
      %v1610 = vadd.f32 %v1576, %v1609
      %v1611 = vpop.f32.mrf.mxu0
      %v1612 = vadd.f32 %v1578, %v1611
      %1613 = vmatmul.bf16.gmra.mxu0 %v1444
      %v1614 = vpop.f32.mrf.mxu0
      %v1615 = vadd.f32 %v1581, %v1614
      %v1616 = vpop.f32.mrf.mxu0
      %v1617 = vadd.f32 %v1583, %v1616
      %1618 = vdwg.mxu0
      %v1619 = vadd.f32 %v1287, %v1595
      %v1620 = vadd.f32 %v1288, %v1597
      %v1621 = vadd.f32 %v1289, %v1600
      %v1622 = vadd.f32 %v1290, %v1602
      %v1623 = vadd.f32 %v1291, %v1605
      %v1624 = vadd.f32 %v1292, %v1607
      %v1625 = vadd.f32 %v1293, %v1610
      %v1626 = vadd.f32 %v1294, %v1612
      %v1627 = vadd.f32 %v1295, %v1615
      %v1628 = vadd.f32 %v1296, %v1617
      %v1629 = vld [vmem:[%s165 + $0x10] sm:$0xf0]
      %v1630 = vld [vmem:[%s165 + $0x18] sm:$0xf0]
      %v1631 = vld [vmem:[%s165 + $0xb0] sm:$0xf]
      %v1632 = vld [vmem:[%s165 + $0xb8] sm:$0xf]
      %v1633 = vpack.c.bf16 %v1014, %v1629
      %v1634 = vpack.c.bf16 %v1015, %v1630
      %v1635 = vpack.c.bf16 %v1631, %v1631
      %v1636 = vpack.c.bf16 %v1632, %v1632
      %s1637 = scalar_lea.vmem %s1, 640
      %v1638 = vld [vmem:[%s1637] sm:$0xf]
      %v1639 = vld [vmem:[%s1637 + $0x4] sm:$0xf]
      %v1640 = vld [vmem:[%s1637 + $0x8] sm:$0xf]
      %v1641 = vld [vmem:[%s1637 + $0xc] sm:$0xf]
      %v1642 = vld [vmem:[%s1637 + $0x10] sm:$0xf]
      %v1643 = vld [vmem:[%s1637 + $0x14] sm:$0xf]
      %v1644 = vld [vmem:[%s1637 + $0x18] sm:$0xf]
      %v1645 = vld [vmem:[%s1637 + $0x1c] sm:$0xf]
      %v1646 = vld [vmem:[%s1637 + $0x20] sm:$0xf]
      %v1647 = vld [vmem:[%s1637 + $0x24] sm:$0xf]
      %v1648 = vld [vmem:[%s1637 + $0x28] sm:$0xf]
      %v1649 = vld [vmem:[%s1637 + $0x2c] sm:$0xf]
      %v1650 = vld [vmem:[%s1637 + $0x30] sm:$0xf]
      %v1651 = vld [vmem:[%s1637 + $0x34] sm:$0xf]
      %v1652 = vld [vmem:[%s1637 + $0x38] sm:$0xf]
      %v1653 = vld [vmem:[%s1637 + $0x3c] sm:$0xf]
      %v1654 = vld [vmem:[%s1637 + $0x40] sm:$0xf]
      %v1655 = vld [vmem:[%s1637 + $0x44] sm:$0xf]
      %v1656 = vld [vmem:[%s1637 + $0x48] sm:$0xf]
      %v1657 = vld [vmem:[%s1637 + $0x4c] sm:$0xf]
      %v1658 = vld [vmem:[%s1637 + $0x50] sm:$0xf]
      %v1659 = vld [vmem:[%s1637 + $0x54] sm:$0xf]
      %v1660 = vld [vmem:[%s1637 + $0x58] sm:$0xf]
      %v1661 = vld [vmem:[%s1637 + $0x5c] sm:$0xf]
      %v1662 = vld [vmem:[%s1637 + $0x60] sm:$0xf]
      %v1663 = vld [vmem:[%s1637 + $0x64] sm:$0xf]
      %v1664 = vld [vmem:[%s1637 + $0x68] sm:$0xf]
      %v1665 = vld [vmem:[%s1637 + $0x6c] sm:$0xf]
      %v1666 = vld [vmem:[%s1637 + $0x70] sm:$0xf]
      %v1667 = vld [vmem:[%s1637 + $0x74] sm:$0xf]
      %v1668 = vld [vmem:[%s1637 + $0x78] sm:$0xf]
      %v1669 = vld [vmem:[%s1637 + $0x7c] sm:$0xf]
      %vm1674 = vcmask 1045504
      %v1675 = vrot.slane %v1633, 2
      %v1676 = vrot.slane %v1036, 2
      %v1677 = vsel %vm1674, %v1675, %v1676
      %v1678 = vrot.slane %v1634, 2
      %v1679 = vrot.slane %v1037, 2
      %v1680 = vsel %vm1674, %v1678, %v1679
      %v1681 = vrot.slane %v1038, 2
      %v1682 = vsel %vm1674, %v1676, %v1681
      %v1683 = vrot.slane %v1039, 2
      %v1684 = vsel %vm1674, %v1679, %v1683
      %v1685 = vrot.slane %v1040, 2
      %v1686 = vsel %vm1674, %v1681, %v1685
      %v1687 = vrot.slane %v1041, 2
      %v1688 = vsel %vm1674, %v1683, %v1687
      %v1689 = vrot.slane %v1042, 2
      %v1690 = vsel %vm1674, %v1685, %v1689
      %v1691 = vrot.slane %v1043, 2
      %v1692 = vsel %vm1674, %v1687, %v1691
      %v1693 = vrot.slane %v1635, 2
      %v1694 = vsel %vm1674, %v1689, %v1693
      %v1695 = vrot.slane %v1636, 2
      %v1696 = vsel %vm1674, %v1691, %v1695
      %v1739 = vunpack.c.l.b16 %v1638
      %v1740 = vunpack.c.l.b16 %v1639
      %v1741 = vunpack.c.l.b16 %v1640
      %v1742 = vunpack.c.l.b16 %v1641
      %v1743 = vunpack.c.l.b16 %v1642
      %v1744 = vunpack.c.l.b16 %v1643
      %v1745 = vunpack.c.l.b16 %v1644
      %v1746 = vunpack.c.l.b16 %v1645
      %v1747 = vunpack.c.l.b16 %v1646
      %v1748 = vunpack.c.l.b16 %v1647
      %v1749 = vunpack.c.l.b16 %v1648
      %v1750 = vunpack.c.l.b16 %v1649
      %v1751 = vunpack.c.l.b16 %v1650
      %v1752 = vunpack.c.l.b16 %v1651
      %v1753 = vunpack.c.l.b16 %v1652
      %v1754 = vunpack.c.l.b16 %v1653
      %v1755 = vunpack.c.l.b16 %v1654
      %v1756 = vunpack.c.l.b16 %v1655
      %v1757 = vunpack.c.l.b16 %v1656
      %v1758 = vunpack.c.l.b16 %v1657
      %v1759 = vunpack.c.l.b16 %v1658
      %v1760 = vunpack.c.l.b16 %v1659
      %v1761 = vunpack.c.l.b16 %v1660
      %v1762 = vunpack.c.l.b16 %v1661
      %v1763 = vunpack.c.l.b16 %v1662
      %v1764 = vunpack.c.l.b16 %v1663
      %v1765 = vunpack.c.l.b16 %v1664
      %v1766 = vunpack.c.l.b16 %v1665
      %v1767 = vunpack.c.l.b16 %v1666
      %v1768 = vunpack.c.l.b16 %v1667
      %v1769 = vunpack.c.l.b16 %v1668
      %v1770 = vunpack.c.l.b16 %v1669
      %v1771 = vpack.c.b16 %v1740, %v1739
      %v1772 = vpack.c.b16 %v1742, %v1741
      %v1773 = vpack.c.b16 %v1744, %v1743
      %v1774 = vpack.c.b16 %v1746, %v1745
      %v1775 = vpack.c.b16 %v1748, %v1747
      %v1776 = vpack.c.b16 %v1750, %v1749
      %v1777 = vpack.c.b16 %v1752, %v1751
      %v1778 = vpack.c.b16 %v1754, %v1753
      %v1779 = vpack.c.b16 %v1756, %v1755
      %v1780 = vpack.c.b16 %v1758, %v1757
      %v1781 = vpack.c.b16 %v1760, %v1759
      %v1782 = vpack.c.b16 %v1762, %v1761
      %v1783 = vpack.c.b16 %v1764, %v1763
      %v1784 = vpack.c.b16 %v1766, %v1765
      %v1785 = vpack.c.b16 %v1768, %v1767
      %v1786 = vpack.c.b16 %v1770, %v1769
      %1803 = vmatpush.bf16.msra.mxu0 %v1778
      %1804 = vmatpush.bf16.msra.mxu0 %v1777
      %1805 = vmatpush.bf16.msra.mxu0 %v1776
      %1806 = vmatpush.bf16.msra.mxu0 %v1775
      %1807 = vmatpush.bf16.msra.mxu0 %v1774
      %1808 = vmatpush.bf16.msra.mxu0 %v1773
      %1809 = vmatpush.bf16.msra.mxu0 %v1772
      %1810 = vmatpush.bf16.msra.mxu0 %v1771
      %1811 = vmatmul.bf16.gmra.mxu0 %v1677
      %v1812 = vpop.f32.mrf.mxu0
      %v1813 = vadd.f32 0.0, %v1812
      %v1814 = vpop.f32.mrf.mxu0
      %v1815 = vadd.f32 0.0, %v1814
      %1816 = vmatmul.bf16.gmra.mxu0 %v1682
      %v1817 = vpop.f32.mrf.mxu0
      %v1818 = vadd.f32 0.0, %v1817
      %v1819 = vpop.f32.mrf.mxu0
      %v1820 = vadd.f32 0.0, %v1819
      %1821 = vmatmul.bf16.gmra.mxu0 %v1686
      %v1822 = vpop.f32.mrf.mxu0
      %v1823 = vadd.f32 0.0, %v1822
      %v1824 = vpop.f32.mrf.mxu0
      %v1825 = vadd.f32 0.0, %v1824
      %1826 = vmatmul.bf16.gmra.mxu0 %v1690
      %v1827 = vpop.f32.mrf.mxu0
      %v1828 = vadd.f32 0.0, %v1827
      %v1829 = vpop.f32.mrf.mxu0
      %v1830 = vadd.f32 0.0, %v1829
      %1831 = vmatmul.bf16.gmra.mxu0 %v1694
      %v1832 = vpop.f32.mrf.mxu0
      %v1833 = vadd.f32 0.0, %v1832
      %v1834 = vpop.f32.mrf.mxu0
      %v1835 = vadd.f32 0.0, %v1834
      %1836 = vdwg.mxu0
      %1837 = vmatpush.bf16.msra.mxu0 %v1786
      %1838 = vmatpush.bf16.msra.mxu0 %v1785
      %1839 = vmatpush.bf16.msra.mxu0 %v1784
      %1840 = vmatpush.bf16.msra.mxu0 %v1783
      %1841 = vmatpush.bf16.msra.mxu0 %v1782
      %1842 = vmatpush.bf16.msra.mxu0 %v1781
      %1843 = vmatpush.bf16.msra.mxu0 %v1780
      %1844 = vmatpush.bf16.msra.mxu0 %v1779
      %1845 = vmatmul.bf16.gmra.mxu0 %v1680
      %v1846 = vpop.f32.mrf.mxu0
      %v1847 = vadd.f32 %v1813, %v1846
      %v1848 = vpop.f32.mrf.mxu0
      %v1849 = vadd.f32 %v1815, %v1848
      %1850 = vmatmul.bf16.gmra.mxu0 %v1684
      %v1851 = vpop.f32.mrf.mxu0
      %v1852 = vadd.f32 %v1818, %v1851
      %v1853 = vpop.f32.mrf.mxu0
      %v1854 = vadd.f32 %v1820, %v1853
      %1855 = vmatmul.bf16.gmra.mxu0 %v1688
      %v1856 = vpop.f32.mrf.mxu0
      %v1857 = vadd.f32 %v1823, %v1856
      %v1858 = vpop.f32.mrf.mxu0
      %v1859 = vadd.f32 %v1825, %v1858
      %1860 = vmatmul.bf16.gmra.mxu0 %v1692
      %v1861 = vpop.f32.mrf.mxu0
      %v1862 = vadd.f32 %v1828, %v1861
      %v1863 = vpop.f32.mrf.mxu0
      %v1864 = vadd.f32 %v1830, %v1863
      %1865 = vmatmul.bf16.gmra.mxu0 %v1696
      %v1866 = vpop.f32.mrf.mxu0
      %v1867 = vadd.f32 %v1833, %v1866
      %v1868 = vpop.f32.mrf.mxu0
      %v1869 = vadd.f32 %v1835, %v1868
      %1870 = vdwg.mxu0
      %v1871 = vadd.f32 %v1619, %v1847
      %v1872 = vadd.f32 %v1620, %v1849
      %v1873 = vadd.f32 %v1621, %v1852
      %v1874 = vadd.f32 %v1622, %v1854
      %v1875 = vadd.f32 %v1623, %v1857
      %v1876 = vadd.f32 %v1624, %v1859
      %v1877 = vadd.f32 %v1625, %v1862
      %v1878 = vadd.f32 %v1626, %v1864
      %v1879 = vadd.f32 %v1627, %v1867
      %v1880 = vadd.f32 %v1628, %v1869
      %v1881 = vld [vmem:[%s165 + $0x20] sm:$0xf0]
      %v1882 = vld [vmem:[%s165 + $0x28] sm:$0xf0]
      %v1883 = vld [vmem:[%s165 + $0x30] sm:$0xff]
      %v1884 = vld [vmem:[%s165 + $0x38] sm:$0xff]
      %v1885 = vld [vmem:[%s165 + $0x40] sm:$0xff]
      %v1886 = vld [vmem:[%s165 + $0x48] sm:$0xff]
      %v1887 = vld [vmem:[%s165 + $0x50] sm:$0xff]
      %v1888 = vld [vmem:[%s165 + $0x58] sm:$0xff]
      %v1889 = vld [vmem:[%s165 + $0x60] sm:$0xff]
      %v1890 = vld [vmem:[%s165 + $0x68] sm:$0xff]
      %v1891 = vld [vmem:[%s165 + $0x70] sm:$0xff]
      %v1892 = vld [vmem:[%s165 + $0x78] sm:$0xff]
      %v1893 = vld [vmem:[%s165 + $0x80] sm:$0xff]
      %v1894 = vld [vmem:[%s165 + $0x88] sm:$0xff]
      %v1895 = vld [vmem:[%s165 + $0x90] sm:$0xff]
      %v1896 = vld [vmem:[%s165 + $0x98] sm:$0xff]
      %v1897 = vld [vmem:[%s165 + $0xa0] sm:$0xff]
      %v1898 = vld [vmem:[%s165 + $0xa8] sm:$0xff]
      %v1899 = vld [vmem:[%s165 + $0xb0] sm:$0xff]
      %v1900 = vld [vmem:[%s165 + $0xb8] sm:$0xff]
      %v1901 = vld [vmem:[%s165 + $0xc0] sm:$0xf]
      %v1902 = vld [vmem:[%s165 + $0xc8] sm:$0xf]
      %v1903 = vpack.c.bf16 %v1883, %v1881
      %v1904 = vpack.c.bf16 %v1884, %v1882
      %v1905 = vpack.c.bf16 %v1887, %v1885
      %v1906 = vpack.c.bf16 %v1888, %v1886
      %v1907 = vpack.c.bf16 %v1891, %v1889
      %v1908 = vpack.c.bf16 %v1892, %v1890
      %v1909 = vpack.c.bf16 %v1895, %v1893
      %v1910 = vpack.c.bf16 %v1896, %v1894
      %v1911 = vpack.c.bf16 %v1899, %v1897
      %v1912 = vpack.c.bf16 %v1900, %v1898
      %v1913 = vpack.c.bf16 %v1901, %v1901
      %v1914 = vpack.c.bf16 %v1902, %v1902
      %s1915 = scalar_lea.vmem %s1, 768
      %v1916 = vld [vmem:[%s1915] sm:$0xf]
      %v1917 = vld [vmem:[%s1915 + $0x4] sm:$0xf]
      %v1918 = vld [vmem:[%s1915 + $0x8] sm:$0xf]
      %v1919 = vld [vmem:[%s1915 + $0xc] sm:$0xf]
      %v1920 = vld [vmem:[%s1915 + $0x10] sm:$0xf]
      %v1921 = vld [vmem:[%s1915 + $0x14] sm:$0xf]
      %v1922 = vld [vmem:[%s1915 + $0x18] sm:$0xf]
      %v1923 = vld [vmem:[%s1915 + $0x1c] sm:$0xf]
      %v1924 = vld [vmem:[%s1915 + $0x20] sm:$0xf]
      %v1925 = vld [vmem:[%s1915 + $0x24] sm:$0xf]
      %v1926 = vld [vmem:[%s1915 + $0x28] sm:$0xf]
      %v1927 = vld [vmem:[%s1915 + $0x2c] sm:$0xf]
      %v1928 = vld [vmem:[%s1915 + $0x30] sm:$0xf]
      %v1929 = vld [vmem:[%s1915 + $0x34] sm:$0xf]
      %v1930 = vld [vmem:[%s1915 + $0x38] sm:$0xf]
      %v1931 = vld [vmem:[%s1915 + $0x3c] sm:$0xf]
      %v1932 = vld [vmem:[%s1915 + $0x40] sm:$0xf]
      %v1933 = vld [vmem:[%s1915 + $0x44] sm:$0xf]
      %v1934 = vld [vmem:[%s1915 + $0x48] sm:$0xf]
      %v1935 = vld [vmem:[%s1915 + $0x4c] sm:$0xf]
      %v1936 = vld [vmem:[%s1915 + $0x50] sm:$0xf]
      %v1937 = vld [vmem:[%s1915 + $0x54] sm:$0xf]
      %v1938 = vld [vmem:[%s1915 + $0x58] sm:$0xf]
      %v1939 = vld [vmem:[%s1915 + $0x5c] sm:$0xf]
      %v1940 = vld [vmem:[%s1915 + $0x60] sm:$0xf]
      %v1941 = vld [vmem:[%s1915 + $0x64] sm:$0xf]
      %v1942 = vld [vmem:[%s1915 + $0x68] sm:$0xf]
      %v1943 = vld [vmem:[%s1915 + $0x6c] sm:$0xf]
      %v1944 = vld [vmem:[%s1915 + $0x70] sm:$0xf]
      %v1945 = vld [vmem:[%s1915 + $0x74] sm:$0xf]
      %v1946 = vld [vmem:[%s1915 + $0x78] sm:$0xf]
      %v1947 = vld [vmem:[%s1915 + $0x7c] sm:$0xf]
      %v1960 = vrot.slane %v1903, 2
      %v1961 = vrot.slane %v1905, 2
      %v1962 = vsel %vm1674, %v1960, %v1961
      %v1963 = vrot.slane %v1904, 2
      %v1964 = vrot.slane %v1906, 2
      %v1965 = vsel %vm1674, %v1963, %v1964
      %v1966 = vrot.slane %v1907, 2
      %v1967 = vsel %vm1674, %v1961, %v1966
      %v1968 = vrot.slane %v1908, 2
      %v1969 = vsel %vm1674, %v1964, %v1968
      %v1970 = vrot.slane %v1909, 2
      %v1971 = vsel %vm1674, %v1966, %v1970
      %v1972 = vrot.slane %v1910, 2
      %v1973 = vsel %vm1674, %v1968, %v1972
      %v1974 = vrot.slane %v1911, 2
      %v1975 = vsel %vm1674, %v1970, %v1974
      %v1976 = vrot.slane %v1912, 2
      %v1977 = vsel %vm1674, %v1972, %v1976
      %v1978 = vrot.slane %v1913, 2
      %v1979 = vsel %vm1674, %v1974, %v1978
      %v1980 = vrot.slane %v1914, 2
      %v1981 = vsel %vm1674, %v1976, %v1980
      %v2024 = vunpack.c.l.b16 %v1916
      %v2025 = vunpack.c.l.b16 %v1917
      %v2026 = vunpack.c.l.b16 %v1918
      %v2027 = vunpack.c.l.b16 %v1919
      %v2028 = vunpack.c.l.b16 %v1920
      %v2029 = vunpack.c.l.b16 %v1921
      %v2030 = vunpack.c.l.b16 %v1922
      %v2031 = vunpack.c.l.b16 %v1923
      %v2032 = vunpack.c.l.b16 %v1924
      %v2033 = vunpack.c.l.b16 %v1925
      %v2034 = vunpack.c.l.b16 %v1926
      %v2035 = vunpack.c.l.b16 %v1927
      %v2036 = vunpack.c.l.b16 %v1928
      %v2037 = vunpack.c.l.b16 %v1929
      %v2038 = vunpack.c.l.b16 %v1930
      %v2039 = vunpack.c.l.b16 %v1931
      %v2040 = vunpack.c.l.b16 %v1932
      %v2041 = vunpack.c.l.b16 %v1933
      %v2042 = vunpack.c.l.b16 %v1934
      %v2043 = vunpack.c.l.b16 %v1935
      %v2044 = vunpack.c.l.b16 %v1936
      %v2045 = vunpack.c.l.b16 %v1937
      %v2046 = vunpack.c.l.b16 %v1938
      %v2047 = vunpack.c.l.b16 %v1939
      %v2048 = vunpack.c.l.b16 %v1940
      %v2049 = vunpack.c.l.b16 %v1941
      %v2050 = vunpack.c.l.b16 %v1942
      %v2051 = vunpack.c.l.b16 %v1943
      %v2052 = vunpack.c.l.b16 %v1944
      %v2053 = vunpack.c.l.b16 %v1945
      %v2054 = vunpack.c.l.b16 %v1946
      %v2055 = vunpack.c.l.b16 %v1947
      %v2056 = vpack.c.b16 %v2025, %v2024
      %v2057 = vpack.c.b16 %v2027, %v2026
      %v2058 = vpack.c.b16 %v2029, %v2028
      %v2059 = vpack.c.b16 %v2031, %v2030
      %v2060 = vpack.c.b16 %v2033, %v2032
      %v2061 = vpack.c.b16 %v2035, %v2034
      %v2062 = vpack.c.b16 %v2037, %v2036
      %v2063 = vpack.c.b16 %v2039, %v2038
      %v2064 = vpack.c.b16 %v2041, %v2040
      %v2065 = vpack.c.b16 %v2043, %v2042
      %v2066 = vpack.c.b16 %v2045, %v2044
      %v2067 = vpack.c.b16 %v2047, %v2046
      %v2068 = vpack.c.b16 %v2049, %v2048
      %v2069 = vpack.c.b16 %v2051, %v2050
      %v2070 = vpack.c.b16 %v2053, %v2052
      %v2071 = vpack.c.b16 %v2055, %v2054
      %2088 = vmatpush.bf16.msra.mxu0 %v2063
      %2089 = vmatpush.bf16.msra.mxu0 %v2062
      %2090 = vmatpush.bf16.msra.mxu0 %v2061
      %2091 = vmatpush.bf16.msra.mxu0 %v2060
      %2092 = vmatpush.bf16.msra.mxu0 %v2059
      %2093 = vmatpush.bf16.msra.mxu0 %v2058
      %2094 = vmatpush.bf16.msra.mxu0 %v2057
      %2095 = vmatpush.bf16.msra.mxu0 %v2056
      %2096 = vmatmul.bf16.gmra.mxu0 %v1962
      %v2097 = vpop.f32.mrf.mxu0
      %v2098 = vadd.f32 0.0, %v2097
      %v2099 = vpop.f32.mrf.mxu0
      %v2100 = vadd.f32 0.0, %v2099
      %2101 = vmatmul.bf16.gmra.mxu0 %v1967
      %v2102 = vpop.f32.mrf.mxu0
      %v2103 = vadd.f32 0.0, %v2102
      %v2104 = vpop.f32.mrf.mxu0
      %v2105 = vadd.f32 0.0, %v2104
      %2106 = vmatmul.bf16.gmra.mxu0 %v1971
      %v2107 = vpop.f32.mrf.mxu0
      %v2108 = vadd.f32 0.0, %v2107
      %v2109 = vpop.f32.mrf.mxu0
      %v2110 = vadd.f32 0.0, %v2109
      %2111 = vmatmul.bf16.gmra.mxu0 %v1975
      %v2112 = vpop.f32.mrf.mxu0
      %v2113 = vadd.f32 0.0, %v2112
      %v2114 = vpop.f32.mrf.mxu0
      %v2115 = vadd.f32 0.0, %v2114
      %2116 = vmatmul.bf16.gmra.mxu0 %v1979
      %v2117 = vpop.f32.mrf.mxu0
      %v2118 = vadd.f32 0.0, %v2117
      %v2119 = vpop.f32.mrf.mxu0
      %v2120 = vadd.f32 0.0, %v2119
      %2121 = vdwg.mxu0
      %2122 = vmatpush.bf16.msra.mxu0 %v2071
      %2123 = vmatpush.bf16.msra.mxu0 %v2070
      %2124 = vmatpush.bf16.msra.mxu0 %v2069
      %2125 = vmatpush.bf16.msra.mxu0 %v2068
      %2126 = vmatpush.bf16.msra.mxu0 %v2067
      %2127 = vmatpush.bf16.msra.mxu0 %v2066
      %2128 = vmatpush.bf16.msra.mxu0 %v2065
      %2129 = vmatpush.bf16.msra.mxu0 %v2064
      %2130 = vmatmul.bf16.gmra.mxu0 %v1965
      %v2131 = vpop.f32.mrf.mxu0
      %v2132 = vadd.f32 %v2098, %v2131
      %v2133 = vpop.f32.mrf.mxu0
      %v2134 = vadd.f32 %v2100, %v2133
      %2135 = vmatmul.bf16.gmra.mxu0 %v1969
      %v2136 = vpop.f32.mrf.mxu0
      %v2137 = vadd.f32 %v2103, %v2136
      %v2138 = vpop.f32.mrf.mxu0
      %v2139 = vadd.f32 %v2105, %v2138
      %2140 = vmatmul.bf16.gmra.mxu0 %v1973
      %v2141 = vpop.f32.mrf.mxu0
      %v2142 = vadd.f32 %v2108, %v2141
      %v2143 = vpop.f32.mrf.mxu0
      %v2144 = vadd.f32 %v2110, %v2143
      %2145 = vmatmul.bf16.gmra.mxu0 %v1977
      %v2146 = vpop.f32.mrf.mxu0
      %v2147 = vadd.f32 %v2113, %v2146
      %v2148 = vpop.f32.mrf.mxu0
      %v2149 = vadd.f32 %v2115, %v2148
      %2150 = vmatmul.bf16.gmra.mxu0 %v1981
      %v2151 = vpop.f32.mrf.mxu0
      %v2152 = vadd.f32 %v2118, %v2151
      %v2153 = vpop.f32.mrf.mxu0
      %v2154 = vadd.f32 %v2120, %v2153
      %2155 = vdwg.mxu0
      %v2156 = vadd.f32 %v1871, %v2132
      %v2157 = vadd.f32 %v1872, %v2134
      %v2158 = vadd.f32 %v1873, %v2137
      %v2159 = vadd.f32 %v1874, %v2139
      %v2160 = vadd.f32 %v1875, %v2142
      %v2161 = vadd.f32 %v1876, %v2144
      %v2162 = vadd.f32 %v1877, %v2147
      %v2163 = vadd.f32 %v1878, %v2149
      %v2164 = vadd.f32 %v1879, %v2152
      %v2165 = vadd.f32 %v1880, %v2154
      %v2166 = vld [vmem:[%s165 + $0x20] sm:$0xe0]
      %v2167 = vld [vmem:[%s165 + $0x28] sm:$0xe0]
      %v2168 = vld [vmem:[%s165 + $0xc0] sm:$0x1f]
      %v2169 = vld [vmem:[%s165 + $0xc8] sm:$0x1f]
      %v2170 = vpack.c.bf16 %v1883, %v2166
      %v2171 = vpack.c.bf16 %v1884, %v2167
      %v2172 = vpack.c.bf16 %v2168, %v2168
      %v2173 = vpack.c.bf16 %v2169, %v2169
      %s2174 = scalar_lea.vmem %s1, 896
      %v2175 = vld [vmem:[%s2174] sm:$0xf]
      %v2176 = vld [vmem:[%s2174 + $0x4] sm:$0xf]
      %v2177 = vld [vmem:[%s2174 + $0x8] sm:$0xf]
      %v2178 = vld [vmem:[%s2174 + $0xc] sm:$0xf]
      %v2179 = vld [vmem:[%s2174 + $0x10] sm:$0xf]
      %v2180 = vld [vmem:[%s2174 + $0x14] sm:$0xf]
      %v2181 = vld [vmem:[%s2174 + $0x18] sm:$0xf]
      %v2182 = vld [vmem:[%s2174 + $0x1c] sm:$0xf]
      %v2183 = vld [vmem:[%s2174 + $0x20] sm:$0xf]
      %v2184 = vld [vmem:[%s2174 + $0x24] sm:$0xf]
      %v2185 = vld [vmem:[%s2174 + $0x28] sm:$0xf]
      %v2186 = vld [vmem:[%s2174 + $0x2c] sm:$0xf]
      %v2187 = vld [vmem:[%s2174 + $0x30] sm:$0xf]
      %v2188 = vld [vmem:[%s2174 + $0x34] sm:$0xf]
      %v2189 = vld [vmem:[%s2174 + $0x38] sm:$0xf]
      %v2190 = vld [vmem:[%s2174 + $0x3c] sm:$0xf]
      %v2191 = vld [vmem:[%s2174 + $0x40] sm:$0xf]
      %v2192 = vld [vmem:[%s2174 + $0x44] sm:$0xf]
      %v2193 = vld [vmem:[%s2174 + $0x48] sm:$0xf]
      %v2194 = vld [vmem:[%s2174 + $0x4c] sm:$0xf]
      %v2195 = vld [vmem:[%s2174 + $0x50] sm:$0xf]
      %v2196 = vld [vmem:[%s2174 + $0x54] sm:$0xf]
      %v2197 = vld [vmem:[%s2174 + $0x58] sm:$0xf]
      %v2198 = vld [vmem:[%s2174 + $0x5c] sm:$0xf]
      %v2199 = vld [vmem:[%s2174 + $0x60] sm:$0xf]
      %v2200 = vld [vmem:[%s2174 + $0x64] sm:$0xf]
      %v2201 = vld [vmem:[%s2174 + $0x68] sm:$0xf]
      %v2202 = vld [vmem:[%s2174 + $0x6c] sm:$0xf]
      %v2203 = vld [vmem:[%s2174 + $0x70] sm:$0xf]
      %v2204 = vld [vmem:[%s2174 + $0x74] sm:$0xf]
      %v2205 = vld [vmem:[%s2174 + $0x78] sm:$0xf]
      %v2206 = vld [vmem:[%s2174 + $0x7c] sm:$0xf]
      %vm2207 = vsmask.f32 5376
      %v2209 = vshrl.u32 %v2170, 16
      %v2211 = vrot.slane %v2209, 2
      %v2212 = vshll.u32 %v2170, 16
      %v2214 = vrot.slane %v2212, 3
      %v2215 = vor.u32 %v2211, %v2214
      %v2217 = vshrl.u32 %v1905, 16
      %v2219 = vrot.slane %v2217, 2
      %v2220 = vshll.u32 %v1905, 16
      %v2222 = vrot.slane %v2220, 3
      %v2223 = vor.u32 %v2219, %v2222
      %v2224 = vsel %vm2207, %v2215, %v2223
      %v2226 = vshrl.u32 %v2171, 16
      %v2228 = vrot.slane %v2226, 2
      %v2229 = vshll.u32 %v2171, 16
      %v2231 = vrot.slane %v2229, 3
      %v2232 = vor.u32 %v2228, %v2231
      %v2234 = vshrl.u32 %v1906, 16
      %v2236 = vrot.slane %v2234, 2
      %v2237 = vshll.u32 %v1906, 16
      %v2239 = vrot.slane %v2237, 3
      %v2240 = vor.u32 %v2236, %v2239
      %v2241 = vsel %vm2207, %v2232, %v2240
      %v2243 = vshrl.u32 %v1907, 16
      %v2245 = vrot.slane %v2243, 2
      %v2246 = vshll.u32 %v1907, 16
      %v2248 = vrot.slane %v2246, 3
      %v2249 = vor.u32 %v2245, %v2248
      %v2250 = vsel %vm2207, %v2223, %v2249
      %v2252 = vshrl.u32 %v1908, 16
      %v2254 = vrot.slane %v2252, 2
      %v2255 = vshll.u32 %v1908, 16
      %v2257 = vrot.slane %v2255, 3
      %v2258 = vor.u32 %v2254, %v2257
      %v2259 = vsel %vm2207, %v2240, %v2258
      %v2261 = vshrl.u32 %v1909, 16
      %v2263 = vrot.slane %v2261, 2
      %v2264 = vshll.u32 %v1909, 16
      %v2266 = vrot.slane %v2264, 3
      %v2267 = vor.u32 %v2263, %v2266
      %v2268 = vsel %vm2207, %v2249, %v2267
      %v2270 = vshrl.u32 %v1910, 16
      %v2272 = vrot.slane %v2270, 2
      %v2273 = vshll.u32 %v1910, 16
      %v2275 = vrot.slane %v2273, 3
      %v2276 = vor.u32 %v2272, %v2275
      %v2277 = vsel %vm2207, %v2258, %v2276
      %v2279 = vshrl.u32 %v1911, 16
      %v2281 = vrot.slane %v2279, 2
      %v2282 = vshll.u32 %v1911, 16
      %v2284 = vrot.slane %v2282, 3
      %v2285 = vor.u32 %v2281, %v2284
      %v2286 = vsel %vm2207, %v2267, %v2285
      %v2288 = vshrl.u32 %v1912, 16
      %v2290 = vrot.slane %v2288, 2
      %v2291 = vshll.u32 %v1912, 16
      %v2293 = vrot.slane %v2291, 3
      %v2294 = vor.u32 %v2290, %v2293
      %v2295 = vsel %vm2207, %v2276, %v2294
      %v2297 = vshrl.u32 %v2172, 16
      %v2299 = vrot.slane %v2297, 2
      %v2300 = vshll.u32 %v2172, 16
      %v2302 = vrot.slane %v2300, 3
      %v2303 = vor.u32 %v2299, %v2302
      %v2304 = vsel %vm2207, %v2285, %v2303
      %v2306 = vshrl.u32 %v2173, 16
      %v2308 = vrot.slane %v2306, 2
      %v2309 = vshll.u32 %v2173, 16
      %v2311 = vrot.slane %v2309, 3
      %v2312 = vor.u32 %v2308, %v2311
      %v2313 = vsel %vm2207, %v2294, %v2312
      %v2356 = vunpack.c.l.b16 %v2175
      %v2357 = vunpack.c.l.b16 %v2176
      %v2358 = vunpack.c.l.b16 %v2177
      %v2359 = vunpack.c.l.b16 %v2178
      %v2360 = vunpack.c.l.b16 %v2179
      %v2361 = vunpack.c.l.b16 %v2180
      %v2362 = vunpack.c.l.b16 %v2181
      %v2363 = vunpack.c.l.b16 %v2182
      %v2364 = vunpack.c.l.b16 %v2183
      %v2365 = vunpack.c.l.b16 %v2184
      %v2366 = vunpack.c.l.b16 %v2185
      %v2367 = vunpack.c.l.b16 %v2186
      %v2368 = vunpack.c.l.b16 %v2187
      %v2369 = vunpack.c.l.b16 %v2188
      %v2370 = vunpack.c.l.b16 %v2189
      %v2371 = vunpack.c.l.b16 %v2190
      %v2372 = vunpack.c.l.b16 %v2191
      %v2373 = vunpack.c.l.b16 %v2192
      %v2374 = vunpack.c.l.b16 %v2193
      %v2375 = vunpack.c.l.b16 %v2194
      %v2376 = vunpack.c.l.b16 %v2195
      %v2377 = vunpack.c.l.b16 %v2196
      %v2378 = vunpack.c.l.b16 %v2197
      %v2379 = vunpack.c.l.b16 %v2198
      %v2380 = vunpack.c.l.b16 %v2199
      %v2381 = vunpack.c.l.b16 %v2200
      %v2382 = vunpack.c.l.b16 %v2201
      %v2383 = vunpack.c.l.b16 %v2202
      %v2384 = vunpack.c.l.b16 %v2203
      %v2385 = vunpack.c.l.b16 %v2204
      %v2386 = vunpack.c.l.b16 %v2205
      %v2387 = vunpack.c.l.b16 %v2206
      %v2388 = vpack.c.b16 %v2357, %v2356
      %v2389 = vpack.c.b16 %v2359, %v2358
      %v2390 = vpack.c.b16 %v2361, %v2360
      %v2391 = vpack.c.b16 %v2363, %v2362
      %v2392 = vpack.c.b16 %v2365, %v2364
      %v2393 = vpack.c.b16 %v2367, %v2366
      %v2394 = vpack.c.b16 %v2369, %v2368
      %v2395 = vpack.c.b16 %v2371, %v2370
      %v2396 = vpack.c.b16 %v2373, %v2372
      %v2397 = vpack.c.b16 %v2375, %v2374
      %v2398 = vpack.c.b16 %v2377, %v2376
      %v2399 = vpack.c.b16 %v2379, %v2378
      %v2400 = vpack.c.b16 %v2381, %v2380
      %v2401 = vpack.c.b16 %v2383, %v2382
      %v2402 = vpack.c.b16 %v2385, %v2384
      %v2403 = vpack.c.b16 %v2387, %v2386
      %2420 = vmatpush.bf16.msra.mxu0 %v2395
      %2421 = vmatpush.bf16.msra.mxu0 %v2394
      %2422 = vmatpush.bf16.msra.mxu0 %v2393
      %2423 = vmatpush.bf16.msra.mxu0 %v2392
      %2424 = vmatpush.bf16.msra.mxu0 %v2391
      %2425 = vmatpush.bf16.msra.mxu0 %v2390
      %2426 = vmatpush.bf16.msra.mxu0 %v2389
      %2427 = vmatpush.bf16.msra.mxu0 %v2388
      %2428 = vmatmul.bf16.gmra.mxu0 %v2224
      %v2429 = vpop.f32.mrf.mxu0
      %v2430 = vadd.f32 0.0, %v2429
      %v2431 = vpop.f32.mrf.mxu0
      %v2432 = vadd.f32 0.0, %v2431
      %2433 = vmatmul.bf16.gmra.mxu0 %v2250
      %v2434 = vpop.f32.mrf.mxu0
      %v2435 = vadd.f32 0.0, %v2434
      %v2436 = vpop.f32.mrf.mxu0
      %v2437 = vadd.f32 0.0, %v2436
      %2438 = vmatmul.bf16.gmra.mxu0 %v2268
      %v2439 = vpop.f32.mrf.mxu0
      %v2440 = vadd.f32 0.0, %v2439
      %v2441 = vpop.f32.mrf.mxu0
      %v2442 = vadd.f32 0.0, %v2441
      %2443 = vmatmul.bf16.gmra.mxu0 %v2286
      %v2444 = vpop.f32.mrf.mxu0
      %v2445 = vadd.f32 0.0, %v2444
      %v2446 = vpop.f32.mrf.mxu0
      %v2447 = vadd.f32 0.0, %v2446
      %2448 = vmatmul.bf16.gmra.mxu0 %v2304
      %v2449 = vpop.f32.mrf.mxu0
      %v2450 = vadd.f32 0.0, %v2449
      %v2451 = vpop.f32.mrf.mxu0
      %v2452 = vadd.f32 0.0, %v2451
      %2453 = vdwg.mxu0
      %2454 = vmatpush.bf16.msra.mxu0 %v2403
      %2455 = vmatpush.bf16.msra.mxu0 %v2402
      %2456 = vmatpush.bf16.msra.mxu0 %v2401
      %2457 = vmatpush.bf16.msra.mxu0 %v2400
      %2458 = vmatpush.bf16.msra.mxu0 %v2399
      %2459 = vmatpush.bf16.msra.mxu0 %v2398
      %2460 = vmatpush.bf16.msra.mxu0 %v2397
      %2461 = vmatpush.bf16.msra.mxu0 %v2396
      %2462 = vmatmul.bf16.gmra.mxu0 %v2241
      %v2463 = vpop.f32.mrf.mxu0
      %v2464 = vadd.f32 %v2430, %v2463
      %v2465 = vpop.f32.mrf.mxu0
      %v2466 = vadd.f32 %v2432, %v2465
      %2467 = vmatmul.bf16.gmra.mxu0 %v2259
      %v2468 = vpop.f32.mrf.mxu0
      %v2469 = vadd.f32 %v2435, %v2468
      %v2470 = vpop.f32.mrf.mxu0
      %v2471 = vadd.f32 %v2437, %v2470
      %2472 = vmatmul.bf16.gmra.mxu0 %v2277
      %v2473 = vpop.f32.mrf.mxu0
      %v2474 = vadd.f32 %v2440, %v2473
      %v2475 = vpop.f32.mrf.mxu0
      %v2476 = vadd.f32 %v2442, %v2475
      %2477 = vmatmul.bf16.gmra.mxu0 %v2295
      %v2478 = vpop.f32.mrf.mxu0
      %v2479 = vadd.f32 %v2445, %v2478
      %v2480 = vpop.f32.mrf.mxu0
      %v2481 = vadd.f32 %v2447, %v2480
      %2482 = vmatmul.bf16.gmra.mxu0 %v2313
      %v2483 = vpop.f32.mrf.mxu0
      %v2484 = vadd.f32 %v2450, %v2483
      %v2485 = vpop.f32.mrf.mxu0
      %v2486 = vadd.f32 %v2452, %v2485
      %2487 = vdwg.mxu0
      %v2488 = vadd.f32 %v2156, %v2464
      %v2489 = vadd.f32 %v2157, %v2466
      %v2490 = vadd.f32 %v2158, %v2469
      %v2491 = vadd.f32 %v2159, %v2471
      %v2492 = vadd.f32 %v2160, %v2474
      %v2493 = vadd.f32 %v2161, %v2476
      %v2494 = vadd.f32 %v2162, %v2479
      %v2495 = vadd.f32 %v2163, %v2481
      %v2496 = vadd.f32 %v2164, %v2484
      %v2497 = vadd.f32 %v2165, %v2486
      %v2498 = vld [vmem:[%s165 + $0x20] sm:$0xc0]
      %v2499 = vld [vmem:[%s165 + $0x28] sm:$0xc0]
      %v2500 = vld [vmem:[%s165 + $0xc0] sm:$0x3f]
      %v2501 = vld [vmem:[%s165 + $0xc8] sm:$0x3f]
      %v2502 = vpack.c.bf16 %v1883, %v2498
      %v2503 = vpack.c.bf16 %v1884, %v2499
      %v2504 = vpack.c.bf16 %v2500, %v2500
      %v2505 = vpack.c.bf16 %v2501, %v2501
      %s2506 = scalar_lea.vmem %s1, 1024
      %v2507 = vld [vmem:[%s2506] sm:$0xf]
      %v2508 = vld [vmem:[%s2506 + $0x4] sm:$0xf]
      %v2509 = vld [vmem:[%s2506 + $0x8] sm:$0xf]
      %v2510 = vld [vmem:[%s2506 + $0xc] sm:$0xf]
      %v2511 = vld [vmem:[%s2506 + $0x10] sm:$0xf]
      %v2512 = vld [vmem:[%s2506 + $0x14] sm:$0xf]
      %v2513 = vld [vmem:[%s2506 + $0x18] sm:$0xf]
      %v2514 = vld [vmem:[%s2506 + $0x1c] sm:$0xf]
      %v2515 = vld [vmem:[%s2506 + $0x20] sm:$0xf]
      %v2516 = vld [vmem:[%s2506 + $0x24] sm:$0xf]
      %v2517 = vld [vmem:[%s2506 + $0x28] sm:$0xf]
      %v2518 = vld [vmem:[%s2506 + $0x2c] sm:$0xf]
      %v2519 = vld [vmem:[%s2506 + $0x30] sm:$0xf]
      %v2520 = vld [vmem:[%s2506 + $0x34] sm:$0xf]
      %v2521 = vld [vmem:[%s2506 + $0x38] sm:$0xf]
      %v2522 = vld [vmem:[%s2506 + $0x3c] sm:$0xf]
      %v2523 = vld [vmem:[%s2506 + $0x40] sm:$0xf]
      %v2524 = vld [vmem:[%s2506 + $0x44] sm:$0xf]
      %v2525 = vld [vmem:[%s2506 + $0x48] sm:$0xf]
      %v2526 = vld [vmem:[%s2506 + $0x4c] sm:$0xf]
      %v2527 = vld [vmem:[%s2506 + $0x50] sm:$0xf]
      %v2528 = vld [vmem:[%s2506 + $0x54] sm:$0xf]
      %v2529 = vld [vmem:[%s2506 + $0x58] sm:$0xf]
      %v2530 = vld [vmem:[%s2506 + $0x5c] sm:$0xf]
      %v2531 = vld [vmem:[%s2506 + $0x60] sm:$0xf]
      %v2532 = vld [vmem:[%s2506 + $0x64] sm:$0xf]
      %v2533 = vld [vmem:[%s2506 + $0x68] sm:$0xf]
      %v2534 = vld [vmem:[%s2506 + $0x6c] sm:$0xf]
      %v2535 = vld [vmem:[%s2506 + $0x70] sm:$0xf]
      %v2536 = vld [vmem:[%s2506 + $0x74] sm:$0xf]
      %v2537 = vld [vmem:[%s2506 + $0x78] sm:$0xf]
      %v2538 = vld [vmem:[%s2506 + $0x7c] sm:$0xf]
      %vm2543 = vcmask 1044480
      %v2544 = vrot.slane %v2502, 3
      %v2545 = vrot.slane %v1905, 3
      %v2546 = vsel %vm2543, %v2544, %v2545
      %v2547 = vrot.slane %v2503, 3
      %v2548 = vrot.slane %v1906, 3
      %v2549 = vsel %vm2543, %v2547, %v2548
      %v2550 = vrot.slane %v1907, 3
      %v2551 = vsel %vm2543, %v2545, %v2550
      %v2552 = vrot.slane %v1908, 3
      %v2553 = vsel %vm2543, %v2548, %v2552
      %v2554 = vrot.slane %v1909, 3
      %v2555 = vsel %vm2543, %v2550, %v2554
      %v2556 = vrot.slane %v1910, 3
      %v2557 = vsel %vm2543, %v2552, %v2556
      %v2558 = vrot.slane %v1911, 3
      %v2559 = vsel %vm2543, %v2554, %v2558
      %v2560 = vrot.slane %v1912, 3
      %v2561 = vsel %vm2543, %v2556, %v2560
      %v2562 = vrot.slane %v2504, 3
      %v2563 = vsel %vm2543, %v2558, %v2562
      %v2564 = vrot.slane %v2505, 3
      %v2565 = vsel %vm2543, %v2560, %v2564
      %v2608 = vunpack.c.l.b16 %v2507
      %v2609 = vunpack.c.l.b16 %v2508
      %v2610 = vunpack.c.l.b16 %v2509
      %v2611 = vunpack.c.l.b16 %v2510
      %v2612 = vunpack.c.l.b16 %v2511
      %v2613 = vunpack.c.l.b16 %v2512
      %v2614 = vunpack.c.l.b16 %v2513
      %v2615 = vunpack.c.l.b16 %v2514
      %v2616 = vunpack.c.l.b16 %v2515
      %v2617 = vunpack.c.l.b16 %v2516
      %v2618 = vunpack.c.l.b16 %v2517
      %v2619 = vunpack.c.l.b16 %v2518
      %v2620 = vunpack.c.l.b16 %v2519
      %v2621 = vunpack.c.l.b16 %v2520
      %v2622 = vunpack.c.l.b16 %v2521
      %v2623 = vunpack.c.l.b16 %v2522
      %v2624 = vunpack.c.l.b16 %v2523
      %v2625 = vunpack.c.l.b16 %v2524
      %v2626 = vunpack.c.l.b16 %v2525
      %v2627 = vunpack.c.l.b16 %v2526
      %v2628 = vunpack.c.l.b16 %v2527
      %v2629 = vunpack.c.l.b16 %v2528
      %v2630 = vunpack.c.l.b16 %v2529
      %v2631 = vunpack.c.l.b16 %v2530
      %v2632 = vunpack.c.l.b16 %v2531
      %v2633 = vunpack.c.l.b16 %v2532
      %v2634 = vunpack.c.l.b16 %v2533
      %v2635 = vunpack.c.l.b16 %v2534
      %v2636 = vunpack.c.l.b16 %v2535
      %v2637 = vunpack.c.l.b16 %v2536
      %v2638 = vunpack.c.l.b16 %v2537
      %v2639 = vunpack.c.l.b16 %v2538
      %v2640 = vpack.c.b16 %v2609, %v2608
      %v2641 = vpack.c.b16 %v2611, %v2610
      %v2642 = vpack.c.b16 %v2613, %v2612
      %v2643 = vpack.c.b16 %v2615, %v2614
      %v2644 = vpack.c.b16 %v2617, %v2616
      %v2645 = vpack.c.b16 %v2619, %v2618
      %v2646 = vpack.c.b16 %v2621, %v2620
      %v2647 = vpack.c.b16 %v2623, %v2622
      %v2648 = vpack.c.b16 %v2625, %v2624
      %v2649 = vpack.c.b16 %v2627, %v2626
      %v2650 = vpack.c.b16 %v2629, %v2628
      %v2651 = vpack.c.b16 %v2631, %v2630
      %v2652 = vpack.c.b16 %v2633, %v2632
      %v2653 = vpack.c.b16 %v2635, %v2634
      %v2654 = vpack.c.b16 %v2637, %v2636
      %v2655 = vpack.c.b16 %v2639, %v2638
      %2672 = vmatpush.bf16.msra.mxu0 %v2647
      %2673 = vmatpush.bf16.msra.mxu0 %v2646
      %2674 = vmatpush.bf16.msra.mxu0 %v2645
      %2675 = vmatpush.bf16.msra.mxu0 %v2644
      %2676 = vmatpush.bf16.msra.mxu0 %v2643
      %2677 = vmatpush.bf16.msra.mxu0 %v2642
      %2678 = vmatpush.bf16.msra.mxu0 %v2641
      %2679 = vmatpush.bf16.msra.mxu0 %v2640
      %2680 = vmatmul.bf16.gmra.mxu0 %v2546
      %v2681 = vpop.f32.mrf.mxu0
      %v2682 = vadd.f32 0.0, %v2681
      %v2683 = vpop.f32.mrf.mxu0
      %v2684 = vadd.f32 0.0, %v2683
      %2685 = vmatmul.bf16.gmra.mxu0 %v2551
      %v2686 = vpop.f32.mrf.mxu0
      %v2687 = vadd.f32 0.0, %v2686
      %v2688 = vpop.f32.mrf.mxu0
      %v2689 = vadd.f32 0.0, %v2688
      %2690 = vmatmul.bf16.gmra.mxu0 %v2555
      %v2691 = vpop.f32.mrf.mxu0
      %v2692 = vadd.f32 0.0, %v2691
      %v2693 = vpop.f32.mrf.mxu0
      %v2694 = vadd.f32 0.0, %v2693
      %2695 = vmatmul.bf16.gmra.mxu0 %v2559
      %v2696 = vpop.f32.mrf.mxu0
      %v2697 = vadd.f32 0.0, %v2696
      %v2698 = vpop.f32.mrf.mxu0
      %v2699 = vadd.f32 0.0, %v2698
      %2700 = vmatmul.bf16.gmra.mxu0 %v2563
      %v2701 = vpop.f32.mrf.mxu0
      %v2702 = vadd.f32 0.0, %v2701
      %v2703 = vpop.f32.mrf.mxu0
      %v2704 = vadd.f32 0.0, %v2703
      %2705 = vdwg.mxu0
      %2706 = vmatpush.bf16.msra.mxu0 %v2655
      %2707 = vmatpush.bf16.msra.mxu0 %v2654
      %2708 = vmatpush.bf16.msra.mxu0 %v2653
      %2709 = vmatpush.bf16.msra.mxu0 %v2652
      %2710 = vmatpush.bf16.msra.mxu0 %v2651
      %2711 = vmatpush.bf16.msra.mxu0 %v2650
      %2712 = vmatpush.bf16.msra.mxu0 %v2649
      %2713 = vmatpush.bf16.msra.mxu0 %v2648
      %2714 = vmatmul.bf16.gmra.mxu0 %v2549
      %v2715 = vpop.f32.mrf.mxu0
      %v2716 = vadd.f32 %v2682, %v2715
      %v2717 = vpop.f32.mrf.mxu0
      %v2718 = vadd.f32 %v2684, %v2717
      %2719 = vmatmul.bf16.gmra.mxu0 %v2553
      %v2720 = vpop.f32.mrf.mxu0
      %v2721 = vadd.f32 %v2687, %v2720
      %v2722 = vpop.f32.mrf.mxu0
      %v2723 = vadd.f32 %v2689, %v2722
      %2724 = vmatmul.bf16.gmra.mxu0 %v2557
      %v2725 = vpop.f32.mrf.mxu0
      %v2726 = vadd.f32 %v2692, %v2725
      %v2727 = vpop.f32.mrf.mxu0
      %v2728 = vadd.f32 %v2694, %v2727
      %2729 = vmatmul.bf16.gmra.mxu0 %v2561
      %v2730 = vpop.f32.mrf.mxu0
      %v2731 = vadd.f32 %v2697, %v2730
      %v2732 = vpop.f32.mrf.mxu0
      %v2733 = vadd.f32 %v2699, %v2732
      %2734 = vmatmul.bf16.gmra.mxu0 %v2565
      %v2735 = vpop.f32.mrf.mxu0
      %v2736 = vadd.f32 %v2702, %v2735
      %v2737 = vpop.f32.mrf.mxu0
      %v2738 = vadd.f32 %v2704, %v2737
      %2739 = vdwg.mxu0
      %v2740 = vadd.f32 %v2488, %v2716
      %v2741 = vadd.f32 %v2489, %v2718
      %v2742 = vadd.f32 %v2490, %v2721
      %v2743 = vadd.f32 %v2491, %v2723
      %v2744 = vadd.f32 %v2492, %v2726
      %v2745 = vadd.f32 %v2493, %v2728
      %v2746 = vadd.f32 %v2494, %v2731
      %v2747 = vadd.f32 %v2495, %v2733
      %v2748 = vadd.f32 %v2496, %v2736
      %v2749 = vadd.f32 %v2497, %v2738
      %v2750 = vmax.f32 %v2740, 0.0
      %v2751 = vmax.f32 %v2741, 0.0
      %v2752 = vmax.f32 %v2742, 0.0
      %v2753 = vmax.f32 %v2743, 0.0
      %v2754 = vmax.f32 %v2744, 0.0
      %v2755 = vmax.f32 %v2745, 0.0
      %v2756 = vmax.f32 %v2746, 0.0
      %v2757 = vmax.f32 %v2747, 0.0
      %v2758 = vmax.f32 %v2748, 0.0
      %v2759 = vmax.f32 %v2749, 0.0
      %2760 = vst [vmem:[%s170] sm:$0xff] %v2750
      %2761 = vst [vmem:[%s170 + $0x8] sm:$0xff] %v2751
      %2762 = vst [vmem:[%s170 + $0x10] sm:$0xff] %v2752
      %2763 = vst [vmem:[%s170 + $0x18] sm:$0xff] %v2753
      %2764 = vst [vmem:[%s170 + $0x20] sm:$0xff] %v2754
      %2765 = vst [vmem:[%s170 + $0x28] sm:$0xff] %v2755
      %2766 = vst [vmem:[%s170 + $0x30] sm:$0xff] %v2756
      %2767 = vst [vmem:[%s170 + $0x38] sm:$0xff] %v2757
      %2768 = vst [vmem:[%s170 + $0x40] sm:$0xff] %v2758
      %2769 = vst [vmem:[%s170 + $0x48] sm:$0xff] %v2759
      %p2770 = scmp.lt.s32.totalorder %s14, 2
      %s2771 = scalar_select %p2770, %s14, 2
      %s2772 = smul.addr %s2771, 10
      %s2773 = smul.addr %s2772, 8
      %s2774 = scalar_lea.vmem %s3, %s2773
      // Predicated region
      $region33: #{repnet_forward.7} parent=31 // pred_check
        %p2775 = pneg %p100
      $region34: #{repnet_forward.7} parent=31 // pred_check_branch
        %2777 = sbr.rel (%p2775) target = $region36
      $region35: #{repnet_forward.7} parent=31 // pred_region
        _
      $region36: #{repnet_forward.7} parent=31 // pred_fallthru
        _
    $region32: #{repnet_forward.7} parent=5 // pred_fallthru
      _
    %p2778 = scmp.le.s32.totalorder 2, %s9
    // Predicated region
    $region37: #{repnet_forward.7} parent=5 // pred_check
      %p2779 = pneg %p2778
    $region38: #{repnet_forward.7} parent=5 // pred_check_branch
      %2781 = sbr.rel (%p2779) target = $region40
    $region39: #{repnet_forward.7} parent=5 // pred_region
      %s2782 = ssub.s32 %s9, 2
      // Predicated region
      $region41: #{repnet_forward.7} parent=39 // pred_check
        %p2783 = pneg %p106
      $region42: #{repnet_forward.7} parent=39 // pred_check_branch
        %2785 = sbr.rel (%p2783) target = $region44
      $region43: #{repnet_forward.7} parent=39 // pred_region
        %p2786 = scmp.lt.s32.totalorder %s15, 2
        %s2787 = scalar_select %p2786, %s15, 2
        %s2788 = smul.addr %s2787, 10
        %s2789 = smul.addr %s2788, 8
        %s2790 = scalar_lea.vmem %s3, %s2789
      $region44: #{repnet_forward.7} parent=39 // pred_fallthru
        _
    $region40: #{repnet_forward.7} parent=5 // pred_fallthru
      _
  $region6: #{repnet_forward.7} parent=0 // loop_footer
    %s13 = sadd.s32 1, %s9
  $region7: #{repnet_forward.7} parent=0 // loop_footer_branch
    %8 = sbr.rel target = $region3
  $region8: #{repnet_forward.7} parent=0 // loop_exit
    _

// kernel: repnet_forward.10
$region0: #{repnet_forward.10}
  #allocation0 [shape = 'u32[]', space=smem, size = 0x4, offset = 0x4, fixed_abs, tag = 'smem constant byte address 0x4 - core index']
  #allocation1 [shape = 'u32[72,128]{1,0:T(1,128)}', space=vmem, size = 0x9000, scoped, tag = 'internal scratch']
  %s0 = inlined_call_operand.vmem [shape: f32[3,42,128], index: 0, kind: input, shape index: {}]
  %s1 = inlined_call_operand.vmem [shape: bf16[9,128,256], index: 1, kind: input, shape index: {}]
  %s2 = inlined_call_operand.vmem [shape: f32[1,256], index: 2, kind: input, shape index: {}]
  %s3 = inlined_call_operand.vmem [shape: f32[3,24,256], index: 3, kind: output, shape index: {}]
  %s4 = sld [smem:[#allocation0]]
  $region45: #{repnet_forward.10} parent=0
    _
  %s6 = ssub.s32 1, %s4
  %s7 = scalar_select 0, %s6, %s4
  loop: start=0, step=1, limit=5
  $region2: #{repnet_forward.10} parent=0 // loop_pre_header
    _
  $region3: #{repnet_forward.10} parent=0 // loop_header
    %s9 = sphi 0, %s13
    %p10 = scmp.ge.s32.totalorder %s9, 5
    %s19 = sphi 0, %s21
    %s22 = sphi 0, %s19
    %s23 = sphi 0, %s22
    %s39 = sphi 0, %s23
    %s43 = sphi 0, %s43
    %s45 = sphi 0, %s43
    %s46 = sphi 0, %s45
    %s60 = sphi 0, %s46
    %s64 = sphi 0, %s64
    %s66 = sphi 0, %s64
    %s67 = sphi 0, %s66
    %s81 = sphi 0, %s67
    %s87 = sphi 0, %s89
    %s90 = sphi 0, %s87
    %s91 = sphi 0, %s90
    %s107 = sphi 0, %s91
  $region4: #{repnet_forward.10} parent=0 // loop_header_branch
    %12 = sbr.rel (%p10) target = $region8
  $region5: #{repnet_forward.10} parent=0 // loop_body
    %s14 = ssub.s32 %s9, 1
    %s15 = ssub.s32 %s9, 2
    %s16 = sadd.s32 %s9, 1
    %s17 = ssub.s32 %s9, %s16
    %p18 = scmp.eq.s32.totalorder %s17, 0
    %s20 = sadd.s32 %s19, 1
    %s21 = scalar_select %p18, %s19, %s20
    %p24 = pneg %p18
    %p25 = scmp.eq.s32.totalorder %s9, 2
    %p26 = por %p24, %p25
    %p27 = scmp.ne.s32.totalorder %s19, %s22
    %p28 = scmp.eq.s32.totalorder %s9, 0
    %p29 = por %p27, %p28
    %p30 = scmp.ne.s32.totalorder %s19, %s22
    %p31 = scmp.eq.s32.totalorder %s14, 2
    %p32 = por %p30, %p31
    %p33 = scmp.ne.s32.totalorder %s22, %s23
    %p34 = scmp.eq.s32.totalorder %s14, 0
    %p35 = por %p33, %p34
    %p36 = scmp.ne.s32.totalorder %s22, %s23
    %p37 = scmp.eq.s32.totalorder %s15, 2
    %p38 = por %p36, %p37
    %p40 = scmp.ne.s32.totalorder %s23, %s39
    %p41 = scmp.eq.s32.totalorder %s15, 0
    %p42 = por %p40, %p41
    %s44 = sadd.s32 %s43, 1
    %p47 = scmp.eq.s32.totalorder %s9, 2
    %p48 = scmp.ne.s32.totalorder %s43, %s45
    %p49 = scmp.eq.s32.totalorder %s9, 0
    %p50 = por %p48, %p49
    %p51 = scmp.ne.s32.totalorder %s43, %s45
    %p52 = scmp.eq.s32.totalorder %s14, 2
    %p53 = por %p51, %p52
    %p54 = scmp.ne.s32.totalorder %s45, %s46
    %p55 = scmp.eq.s32.totalorder %s14, 0
    %p56 = por %p54, %p55
    %p57 = scmp.ne.s32.totalorder %s45, %s46
    %p58 = scmp.eq.s32.totalorder %s15, 2
    %p59 = por %p57, %p58
    %p61 = scmp.ne.s32.totalorder %s46, %s60
    %p62 = scmp.eq.s32.totalorder %s15, 0
    %p63 = por %p61, %p62
    %s65 = sadd.s32 %s64, 1
    %p68 = scmp.eq.s32.totalorder %s9, 2
    %p69 = scmp.ne.s32.totalorder %s64, %s66
    %p70 = scmp.eq.s32.totalorder %s9, 0
    %p71 = por %p69, %p70
    %p72 = scmp.ne.s32.totalorder %s64, %s66
    %p73 = scmp.eq.s32.totalorder %s14, 2
    %p74 = por %p72, %p73
    %p75 = scmp.ne.s32.totalorder %s66, %s67
    %p76 = scmp.eq.s32.totalorder %s14, 0
    %p77 = por %p75, %p76
    %p78 = scmp.ne.s32.totalorder %s66, %s67
    %p79 = scmp.eq.s32.totalorder %s15, 2
    %p80 = por %p78, %p79
    %p82 = scmp.ne.s32.totalorder %s67, %s81
    %p83 = scmp.eq.s32.totalorder %s15, 0
    %p84 = por %p82, %p83
    %s85 = ssub.s32 %s9, %s16
    %p86 = scmp.eq.s32.totalorder %s85, 0
    %s88 = sadd.s32 %s87, 1
    %s89 = scalar_select %p86, %s87, %s88
    %p92 = pneg %p86
    %p93 = scmp.eq.s32.totalorder %s9, 2
    %p94 = por %p92, %p93
    %p95 = scmp.ne.s32.totalorder %s87, %s90
    %p96 = scmp.eq.s32.totalorder %s9, 0
    %p97 = por %p95, %p96
    %p98 = scmp.ne.s32.totalorder %s87, %s90
    %p99 = scmp.eq.s32.totalorder %s14, 2
    %p100 = por %p98, %p99
    %p101 = scmp.ne.s32.totalorder %s90, %s91
    %p102 = scmp.eq.s32.totalorder %s14, 0
    %p103 = por %p101, %p102
    %p104 = scmp.ne.s32.totalorder %s90, %s91
    %p105 = scmp.eq.s32.totalorder %s15, 2
    %p106 = por %p104, %p105
    %p108 = scmp.ne.s32.totalorder %s91, %s107
    %p109 = scmp.eq.s32.totalorder %s15, 0
    %p110 = por %p108, %p109
    %p111 = scmp.le.s32.totalorder 1, %s9
    %p112 = scmp.lt.s32.totalorder %s9, 4
    %p113 = pnand %p111, %p112
    %p114 = pneg %p113
    // Predicated region
    $region9: #{repnet_forward.10} parent=5 // pred_check
      _
    $region10: #{repnet_forward.10} parent=5 // pred_check_branch
      %116 = sbr.rel (%p113) target = $region12
    $region11: #{repnet_forward.10} parent=5 // pred_region
      %s117 = ssub.s32 %s9, 1
      // Predicated region
      $region13: #{repnet_forward.10} parent=11 // pred_check
        %p118 = pneg %p56
      $region14: #{repnet_forward.10} parent=11 // pred_check_branch
        %120 = sbr.rel (%p118) target = $region16
      $region15: #{repnet_forward.10} parent=11 // pred_region
        _
      $region16: #{repnet_forward.10} parent=11 // pred_fallthru
        _
      // Predicated region
      $region17: #{repnet_forward.10} parent=11 // pred_check
        %p121 = pneg %p77
      $region18: #{repnet_forward.10} parent=11 // pred_check_branch
        %123 = sbr.rel (%p121) target = $region20
      $region19: #{repnet_forward.10} parent=11 // pred_region
        _
      $region20: #{repnet_forward.10} parent=11 // pred_fallthru
        _
    $region12: #{repnet_forward.10} parent=5 // pred_fallthru
      _
    %p124 = scmp.lt.s32.totalorder %s9, 3
    // Predicated region
    $region21: #{repnet_forward.10} parent=5 // pred_check
      %p125 = pneg %p124
    $region22: #{repnet_forward.10} parent=5 // pred_check_branch
      %127 = sbr.rel (%p125) target = $region24
    $region23: #{repnet_forward.10} parent=5 // pred_region
      // Predicated region
      $region25: #{repnet_forward.10} parent=23 // pred_check
        %p128 = pneg %p29
      $region26: #{repnet_forward.10} parent=23 // pred_check_branch
        %130 = sbr.rel (%p128) target = $region28
      $region27: #{repnet_forward.10} parent=23 // pred_region
        %p131 = scmp.lt.s32.totalorder %s9, 2
        %s132 = scalar_select %p131, %s9, 2
        %s133 = smul.addr %s132, 6
        %s134 = smul.addr %s133, 8
        %s135 = scalar_lea.vmem %s0, %s134
      $region28: #{repnet_forward.10} parent=23 // pred_fallthru
        _
    $region24: #{repnet_forward.10} parent=5 // pred_fallthru
      _
    %p136 = scmp.le.s32.totalorder 1, %s9
    %p137 = scmp.lt.s32.totalorder %s9, 4
    %p138 = pnand %p136, %p137
    %p139 = pneg %p138
    // Predicated region
    $region29: #{repnet_forward.10} parent=5 // pred_check
      _
    $region30: #{repnet_forward.10} parent=5 // pred_check_branch
      %141 = sbr.rel (%p138) target = $region32
    $region31: #{repnet_forward.10} parent=5 // pred_region
      %s142 = ssub.s32 %s9, 1
      %p143 = scmp.lt.s32.totalorder %s14, 2
      %s144 = scalar_select %p143, %s14, 2
      %s145 = smul.addr %s144, 6
      %s146 = smul.addr %s145, 8
      %s147 = scalar_lea.vmem %s0, %s146
      %p148 = pneg %p35
      %p149 = pneg %p32
      %p150 = pneg %p56
      %p151 = pneg %p53
      %p152 = pneg %p77
      %p153 = pneg %p74
      %p154 = pneg %p103
      %p155 = pneg %p100
      %p156 = scmp.lt.s32.totalorder %s14, 2
      %s157 = scalar_select %p156, %s14, 2
      %s158 = smul.addr %s157, 6
      %s159 = smul.addr %s158, 8
      %s160 = scalar_lea.vmem %s3, %s159
      %p161 = scmp.lt.s32.totalorder %s14, 2
      %s162 = scalar_select %p161, %s14, 2
      %s163 = smul.addr %s162, 6
      %s164 = smul.addr %s163, 8
      %s165 = scalar_lea.vmem %s0, %s164
      %p166 = scmp.lt.s32.totalorder %s14, 2
      %s167 = scalar_select %p166, %s14, 2
      %s168 = smul.addr %s167, 6
      %s169 = smul.addr %s168, 8
      %s170 = scalar_lea.vmem %s3, %s169
      %v171 = vld [vmem:[%s2] sm:$0x3]
      %v173 = vperm.slane %v171, 0
      %v174 = vperm.slane %v171, 1
      %v177 = vadd.f32 %v173, 0.0
      %v178 = vadd.f32 %v174, 0.0
      %v179 = vld [vmem:[%s165] sm:$0xff]
      %v180 = vld [vmem:[%s165 + $0x8] sm:$0xff]
      %v181 = vld [vmem:[%s165 + $0x10] sm:$0xff]
      %v182 = vpack.c.bf16 %v180, %v179
      %v183 = vpack.c.bf16 %v181, %v181
      %v184 = vld [vmem:[%s1] sm:$0xff]
      %v185 = vld [vmem:[%s1 + $0x8] sm:$0xff]
      %v186 = vld [vmem:[%s1 + $0x10] sm:$0xff]
      %v187 = vld [vmem:[%s1 + $0x18] sm:$0xff]
      %v188 = vld [vmem:[%s1 + $0x20] sm:$0xff]
      %v189 = vld [vmem:[%s1 + $0x28] sm:$0xff]
      %v190 = vld [vmem:[%s1 + $0x30] sm:$0xff]
      %v191 = vld [vmem:[%s1 + $0x38] sm:$0xff]
      %v192 = vld [vmem:[%s1 + $0x40] sm:$0xff]
      %v193 = vld [vmem:[%s1 + $0x48] sm:$0xff]
      %v194 = vld [vmem:[%s1 + $0x50] sm:$0xff]
      %v195 = vld [vmem:[%s1 + $0x58] sm:$0xff]
      %v196 = vld [vmem:[%s1 + $0x60] sm:$0xff]
      %v197 = vld [vmem:[%s1 + $0x68] sm:$0xff]
      %v198 = vld [vmem:[%s1 + $0x70] sm:$0xff]
      %v199 = vld [vmem:[%s1 + $0x78] sm:$0xff]
      %v216 = vunpack.c.l.b16 %v184
      %v217 = vunpack.c.h.b16 %v184
      %v218 = vunpack.c.l.b16 %v185
      %v219 = vunpack.c.h.b16 %v185
      %v220 = vunpack.c.l.b16 %v186
      %v221 = vunpack.c.h.b16 %v186
      %v222 = vunpack.c.l.b16 %v187
      %v223 = vunpack.c.h.b16 %v187
      %v224 = vunpack.c.l.b16 %v188
      %v225 = vunpack.c.h.b16 %v188
      %v226 = vunpack.c.l.b16 %v189
      %v227 = vunpack.c.h.b16 %v189
      %v228 = vunpack.c.l.b16 %v190
      %v229 = vunpack.c.h.b16 %v190
      %v230 = vunpack.c.l.b16 %v191
      %v231 = vunpack.c.h.b16 %v191
      %v232 = vunpack.c.l.b16 %v192
      %v233 = vunpack.c.h.b16 %v192
      %v234 = vunpack.c.l.b16 %v193
      %v235 = vunpack.c.h.b16 %v193
      %v236 = vunpack.c.l.b16 %v194
      %v237 = vunpack.c.h.b16 %v194
      %v238 = vunpack.c.l.b16 %v195
      %v239 = vunpack.c.h.b16 %v195
      %v240 = vunpack.c.l.b16 %v196
      %v241 = vunpack.c.h.b16 %v196
      %v242 = vunpack.c.l.b16 %v197
      %v243 = vunpack.c.h.b16 %v197
      %v244 = vunpack.c.l.b16 %v198
      %v245 = vunpack.c.h.b16 %v198
      %v246 = vunpack.c.l.b16 %v199
      %v247 = vunpack.c.h.b16 %v199
      %v248 = vpack.c.b16 %v218, %v216
      %v249 = vpack.c.b16 %v219, %v217
      %v250 = vpack.c.b16 %v222, %v220
      %v251 = vpack.c.b16 %v223, %v221
      %v252 = vpack.c.b16 %v226, %v224
      %v253 = vpack.c.b16 %v227, %v225
      %v254 = vpack.c.b16 %v230, %v228
      %v255 = vpack.c.b16 %v231, %v229
      %v256 = vpack.c.b16 %v234, %v232
      %v257 = vpack.c.b16 %v235, %v233
      %v258 = vpack.c.b16 %v238, %v236
      %v259 = vpack.c.b16 %v239, %v237
      %v260 = vpack.c.b16 %v242, %v240
      %v261 = vpack.c.b16 %v243, %v241
      %v262 = vpack.c.b16 %v246, %v244
      %v263 = vpack.c.b16 %v247, %v245
      %280 = vmatpush.bf16.msra.mxu0 %v262
      %281 = vmatpush.bf16.msra.mxu0 %v260
      %282 = vmatpush.bf16.msra.mxu0 %v258
      %283 = vmatpush.bf16.msra.mxu0 %v256
      %284 = vmatpush.bf16.msra.mxu0 %v254
      %285 = vmatpush.bf16.msra.mxu0 %v252
      %286 = vmatpush.bf16.msra.mxu0 %v250
      %287 = vmatpush.bf16.msra.mxu0 %v248
      %288 = vmatmul.bf16.gmra.mxu0 %v182
      %v289 = vpop.f32.mrf.mxu0
      %v290 = vadd.f32 0.0, %v289
      %v291 = vpop.f32.mrf.mxu0
      %v292 = vadd.f32 0.0, %v291
      %293 = vmatmul.bf16.gmra.mxu0 %v183
      %v294 = vpop.f32.mrf.mxu0
      %v295 = vadd.f32 0.0, %v294
      %v296 = vpop.f32.mrf.mxu0
      %297 = vdwg.mxu0
      %298 = vmatpush.bf16.msra.mxu0 %v263
      %299 = vmatpush.bf16.msra.mxu0 %v261
      %300 = vmatpush.bf16.msra.mxu0 %v259
      %301 = vmatpush.bf16.msra.mxu0 %v257
      %302 = vmatpush.bf16.msra.mxu0 %v255
      %303 = vmatpush.bf16.msra.mxu0 %v253
      %304 = vmatpush.bf16.msra.mxu0 %v251
      %305 = vmatpush.bf16.msra.mxu0 %v249
      %306 = vmatmul.bf16.gmra.mxu0 %v182
      %v307 = vpop.f32.mrf.mxu0
      %v308 = vadd.f32 0.0, %v307
      %v309 = vpop.f32.mrf.mxu0
      %v310 = vadd.f32 0.0, %v309
      %311 = vmatmul.bf16.gmra.mxu0 %v183
      %v312 = vpop.f32.mrf.mxu0
      %v313 = vadd.f32 0.0, %v312
      %v314 = vpop.f32.mrf.mxu0
      %315 = vdwg.mxu0
      %v316 = vadd.f32 %v177, %v290
      %v317 = vadd.f32 %v178, %v308
      %v318 = vadd.f32 %v177, %v292
      %v319 = vadd.f32 %v178, %v310
      %v320 = vadd.f32 %v177, %v295
      %v321 = vadd.f32 %v178, %v313
      %v322 = vld [vmem:[%s165 + $0x1] sm:$0xff]
      %v323 = vld [vmem:[%s165 + $0x9] sm:$0xff]
      %v324 = vld [vmem:[%s165 + $0x11] sm:$0xff]
      %v325 = vpack.c.bf16 %v323, %v322
      %v326 = vpack.c.bf16 %v324, %v324
      %s327 = scalar_lea.vmem %s1, 128
      %v328 = vld [vmem:[%s327] sm:$0xff]
      %v329 = vld [vmem:[%s327 + $0x8] sm:$0xff]
      %v330 = vld [vmem:[%s327 + $0x10] sm:$0xff]
      %v331 = vld [vmem:[%s327 + $0x18] sm:$0xff]
      %v332 = vld [vmem:[%s327 + $0x20] sm:$0xff]
      %v333 = vld [vmem:[%s327 + $0x28] sm:$0xff]
      %v334 = vld [vmem:[%s327 + $0x30] sm:$0xff]
      %v335 = vld [vmem:[%s327 + $0x38] sm:$0xff]
      %v336 = vld [vmem:[%s327 + $0x40] sm:$0xff]
      %v337 = vld [vmem:[%s327 + $0x48] sm:$0xff]
      %v338 = vld [vmem:[%s327 + $0x50] sm:$0xff]
      %v339 = vld [vmem:[%s327 + $0x58] sm:$0xff]
      %v340 = vld [vmem:[%s327 + $0x60] sm:$0xff]
      %v341 = vld [vmem:[%s327 + $0x68] sm:$0xff]
      %v342 = vld [vmem:[%s327 + $0x70] sm:$0xff]
      %v343 = vld [vmem:[%s327 + $0x78] sm:$0xff]
      %v360 = vunpack.c.l.b16 %v328
      %v361 = vunpack.c.h.b16 %v328
      %v362 = vunpack.c.l.b16 %v329
      %v363 = vunpack.c.h.b16 %v329
      %v364 = vunpack.c.l.b16 %v330
      %v365 = vunpack.c.h.b16 %v330
      %v366 = vunpack.c.l.b16 %v331
      %v367 = vunpack.c.h.b16 %v331
      %v368 = vunpack.c.l.b16 %v332
      %v369 = vunpack.c.h.b16 %v332
      %v370 = vunpack.c.l.b16 %v333
      %v371 = vunpack.c.h.b16 %v333
      %v372 = vunpack.c.l.b16 %v334
      %v373 = vunpack.c.h.b16 %v334
      %v374 = vunpack.c.l.b16 %v335
      %v375 = vunpack.c.h.b16 %v335
      %v376 = vunpack.c.l.b16 %v336
      %v377 = vunpack.c.h.b16 %v336
      %v378 = vunpack.c.l.b16 %v337
      %v379 = vunpack.c.h.b16 %v337
      %v380 = vunpack.c.l.b16 %v338
      %v381 = vunpack.c.h.b16 %v338
      %v382 = vunpack.c.l.b16 %v339
      %v383 = vunpack.c.h.b16 %v339
      %v384 = vunpack.c.l.b16 %v340
      %v385 = vunpack.c.h.b16 %v340
      %v386 = vunpack.c.l.b16 %v341
      %v387 = vunpack.c.h.b16 %v341
      %v388 = vunpack.c.l.b16 %v342
      %v389 = vunpack.c.h.b16 %v342
      %v390 = vunpack.c.l.b16 %v343
      %v391 = vunpack.c.h.b16 %v343
      %v392 = vpack.c.b16 %v362, %v360
      %v393 = vpack.c.b16 %v363, %v361
      %v394 = vpack.c.b16 %v366, %v364
      %v395 = vpack.c.b16 %v367, %v365
      %v396 = vpack.c.b16 %v370, %v368
      %v397 = vpack.c.b16 %v371, %v369
      %v398 = vpack.c.b16 %v374, %v372
      %v399 = vpack.c.b16 %v375, %v373
      %v400 = vpack.c.b16 %v378, %v376
      %v401 = vpack.c.b16 %v379, %v377
      %v402 = vpack.c.b16 %v382, %v380
      %v403 = vpack.c.b16 %v383, %v381
      %v404 = vpack.c.b16 %v386, %v384
      %v405 = vpack.c.b16 %v387, %v385
      %v406 = vpack.c.b16 %v390, %v388
      %v407 = vpack.c.b16 %v391, %v389
      %424 = vmatpush.bf16.msra.mxu0 %v406
      %425 = vmatpush.bf16.msra.mxu0 %v404
      %426 = vmatpush.bf16.msra.mxu0 %v402
      %427 = vmatpush.bf16.msra.mxu0 %v400
      %428 = vmatpush.bf16.msra.mxu0 %v398
      %429 = vmatpush.bf16.msra.mxu0 %v396
      %430 = vmatpush.bf16.msra.mxu0 %v394
      %431 = vmatpush.bf16.msra.mxu0 %v392
      %432 = vmatmul.bf16.gmra.mxu0 %v325
      %v433 = vpop.f32.mrf.mxu0
      %v434 = vadd.f32 0.0, %v433
      %v435 = vpop.f32.mrf.mxu0
      %v436 = vadd.f32 0.0, %v435
      %437 = vmatmul.bf16.gmra.mxu0 %v326
      %v438 = vpop.f32.mrf.mxu0
      %v439 = vadd.f32 0.0, %v438
      %v440 = vpop.f32.mrf.mxu0
      %441 = vdwg.mxu0
      %442 = vmatpush.bf16.msra.mxu0 %v407
      %443 = vmatpush.bf16.msra.mxu0 %v405
      %444 = vmatpush.bf16.msra.mxu0 %v403
      %445 = vmatpush.bf16.msra.mxu0 %v401
      %446 = vmatpush.bf16.msra.mxu0 %v399
      %447 = vmatpush.bf16.msra.mxu0 %v397
      %448 = vmatpush.bf16.msra.mxu0 %v395
      %449 = vmatpush.bf16.msra.mxu0 %v393
      %450 = vmatmul.bf16.gmra.mxu0 %v325
      %v451 = vpop.f32.mrf.mxu0
      %v452 = vadd.f32 0.0, %v451
      %v453 = vpop.f32.mrf.mxu0
      %v454 = vadd.f32 0.0, %v453
      %455 = vmatmul.bf16.gmra.mxu0 %v326
      %v456 = vpop.f32.mrf.mxu0
      %v457 = vadd.f32 0.0, %v456
      %v458 = vpop.f32.mrf.mxu0
      %459 = vdwg.mxu0
      %v460 = vadd.f32 %v316, %v434
      %v461 = vadd.f32 %v317, %v452
      %v462 = vadd.f32 %v318, %v436
      %v463 = vadd.f32 %v319, %v454
      %v464 = vadd.f32 %v320, %v439
      %v465 = vadd.f32 %v321, %v457
      %v466 = vld [vmem:[%s165 + $0x2] sm:$0xff]
      %v467 = vld [vmem:[%s165 + $0xa] sm:$0xff]
      %v468 = vld [vmem:[%s165 + $0x12] sm:$0xff]
      %v469 = vpack.c.bf16 %v467, %v466
      %v470 = vpack.c.bf16 %v468, %v468
      %s471 = scalar_lea.vmem %s1, 256
      %v472 = vld [vmem:[%s471] sm:$0xff]
      %v473 = vld [vmem:[%s471 + $0x8] sm:$0xff]
      %v474 = vld [vmem:[%s471 + $0x10] sm:$0xff]
      %v475 = vld [vmem:[%s471 + $0x18] sm:$0xff]
      %v476 = vld [vmem:[%s471 + $0x20] sm:$0xff]
      %v477 = vld [vmem:[%s471 + $0x28] sm:$0xff]
      %v478 = vld [vmem:[%s471 + $0x30] sm:$0xff]
      %v479 = vld [vmem:[%s471 + $0x38] sm:$0xff]
      %v480 = vld [vmem:[%s471 + $0x40] sm:$0xff]
      %v481 = vld [vmem:[%s471 + $0x48] sm:$0xff]
      %v482 = vld [vmem:[%s471 + $0x50] sm:$0xff]
      %v483 = vld [vmem:[%s471 + $0x58] sm:$0xff]
      %v484 = vld [vmem:[%s471 + $0x60] sm:$0xff]
      %v485 = vld [vmem:[%s471 + $0x68] sm:$0xff]
      %v486 = vld [vmem:[%s471 + $0x70] sm:$0xff]
      %v487 = vld [vmem:[%s471 + $0x78] sm:$0xff]
      %v504 = vunpack.c.l.b16 %v472
      %v505 = vunpack.c.h.b16 %v472
      %v506 = vunpack.c.l.b16 %v473
      %v507 = vunpack.c.h.b16 %v473
      %v508 = vunpack.c.l.b16 %v474
      %v509 = vunpack.c.h.b16 %v474
      %v510 = vunpack.c.l.b16 %v475
      %v511 = vunpack.c.h.b16 %v475
      %v512 = vunpack.c.l.b16 %v476
      %v513 = vunpack.c.h.b16 %v476
      %v514 = vunpack.c.l.b16 %v477
      %v515 = vunpack.c.h.b16 %v477
      %v516 = vunpack.c.l.b16 %v478
      %v517 = vunpack.c.h.b16 %v478
      %v518 = vunpack.c.l.b16 %v479
      %v519 = vunpack.c.h.b16 %v479
      %v520 = vunpack.c.l.b16 %v480
      %v521 = vunpack.c.h.b16 %v480
      %v522 = vunpack.c.l.b16 %v481
      %v523 = vunpack.c.h.b16 %v481
      %v524 = vunpack.c.l.b16 %v482
      %v525 = vunpack.c.h.b16 %v482
      %v526 = vunpack.c.l.b16 %v483
      %v527 = vunpack.c.h.b16 %v483
      %v528 = vunpack.c.l.b16 %v484
      %v529 = vunpack.c.h.b16 %v484
      %v530 = vunpack.c.l.b16 %v485
      %v531 = vunpack.c.h.b16 %v485
      %v532 = vunpack.c.l.b16 %v486
      %v533 = vunpack.c.h.b16 %v486
      %v534 = vunpack.c.l.b16 %v487
      %v535 = vunpack.c.h.b16 %v487
      %v536 = vpack.c.b16 %v506, %v504
      %v537 = vpack.c.b16 %v507, %v505
      %v538 = vpack.c.b16 %v510, %v508
      %v539 = vpack.c.b16 %v511, %v509
      %v540 = vpack.c.b16 %v514, %v512
      %v541 = vpack.c.b16 %v515, %v513
      %v542 = vpack.c.b16 %v518, %v516
      %v543 = vpack.c.b16 %v519, %v517
      %v544 = vpack.c.b16 %v522, %v520
      %v545 = vpack.c.b16 %v523, %v521
      %v546 = vpack.c.b16 %v526, %v524
      %v547 = vpack.c.b16 %v527, %v525
      %v548 = vpack.c.b16 %v530, %v528
      %v549 = vpack.c.b16 %v531, %v529
      %v550 = vpack.c.b16 %v534, %v532
      %v551 = vpack.c.b16 %v535, %v533
      %568 = vmatpush.bf16.msra.mxu0 %v550
      %569 = vmatpush.bf16.msra.mxu0 %v548
      %570 = vmatpush.bf16.msra.mxu0 %v546
      %571 = vmatpush.bf16.msra.mxu0 %v544
      %572 = vmatpush.bf16.msra.mxu0 %v542
      %573 = vmatpush.bf16.msra.mxu0 %v540
      %574 = vmatpush.bf16.msra.mxu0 %v538
      %575 = vmatpush.bf16.msra.mxu0 %v536
      %576 = vmatmul.bf16.gmra.mxu0 %v469
      %v577 = vpop.f32.mrf.mxu0
      %v578 = vadd.f32 0.0, %v577
      %v579 = vpop.f32.mrf.mxu0
      %v580 = vadd.f32 0.0, %v579
      %581 = vmatmul.bf16.gmra.mxu0 %v470
      %v582 = vpop.f32.mrf.mxu0
      %v583 = vadd.f32 0.0, %v582
      %v584 = vpop.f32.mrf.mxu0
      %585 = vdwg.mxu0
      %586 = vmatpush.bf16.msra.mxu0 %v551
      %587 = vmatpush.bf16.msra.mxu0 %v549
      %588 = vmatpush.bf16.msra.mxu0 %v547
      %589 = vmatpush.bf16.msra.mxu0 %v545
      %590 = vmatpush.bf16.msra.mxu0 %v543
      %591 = vmatpush.bf16.msra.mxu0 %v541
      %592 = vmatpush.bf16.msra.mxu0 %v539
      %593 = vmatpush.bf16.msra.mxu0 %v537
      %594 = vmatmul.bf16.gmra.mxu0 %v469
      %v595 = vpop.f32.mrf.mxu0
      %v596 = vadd.f32 0.0, %v595
      %v597 = vpop.f32.mrf.mxu0
      %v598 = vadd.f32 0.0, %v597
      %599 = vmatmul.bf16.gmra.mxu0 %v470
      %v600 = vpop.f32.mrf.mxu0
      %v601 = vadd.f32 0.0, %v600
      %v602 = vpop.f32.mrf.mxu0
      %603 = vdwg.mxu0
      %v604 = vadd.f32 %v460, %v578
      %v605 = vadd.f32 %v461, %v596
      %v606 = vadd.f32 %v462, %v580
      %v607 = vadd.f32 %v463, %v598
      %v608 = vadd.f32 %v464, %v583
      %v609 = vadd.f32 %v465, %v601
      %v610 = vld [vmem:[%s165 + $0x6] sm:$0xff]
      %v611 = vld [vmem:[%s165 + $0xe] sm:$0xff]
      %v612 = vld [vmem:[%s165 + $0x16] sm:$0xff]
      %v613 = vpack.c.bf16 %v611, %v610
      %v614 = vpack.c.bf16 %v612, %v612
      %s615 = scalar_lea.vmem %s1, 384
      %v616 = vld [vmem:[%s615] sm:$0xff]
      %v617 = vld [vmem:[%s615 + $0x8] sm:$0xff]
      %v618 = vld [vmem:[%s615 + $0x10] sm:$0xff]
      %v619 = vld [vmem:[%s615 + $0x18] sm:$0xff]
      %v620 = vld [vmem:[%s615 + $0x20] sm:$0xff]
      %v621 = vld [vmem:[%s615 + $0x28] sm:$0xff]
      %v622 = vld [vmem:[%s615 + $0x30] sm:$0xff]
      %v623 = vld [vmem:[%s615 + $0x38] sm:$0xff]
      %v624 = vld [vmem:[%s615 + $0x40] sm:$0xff]
      %v625 = vld [vmem:[%s615 + $0x48] sm:$0xff]
      %v626 = vld [vmem:[%s615 + $0x50] sm:$0xff]
      %v627 = vld [vmem:[%s615 + $0x58] sm:$0xff]
      %v628 = vld [vmem:[%s615 + $0x60] sm:$0xff]
      %v629 = vld [vmem:[%s615 + $0x68] sm:$0xff]
      %v630 = vld [vmem:[%s615 + $0x70] sm:$0xff]
      %v631 = vld [vmem:[%s615 + $0x78] sm:$0xff]
      %v648 = vunpack.c.l.b16 %v616
      %v649 = vunpack.c.h.b16 %v616
      %v650 = vunpack.c.l.b16 %v617
      %v651 = vunpack.c.h.b16 %v617
      %v652 = vunpack.c.l.b16 %v618
      %v653 = vunpack.c.h.b16 %v618
      %v654 = vunpack.c.l.b16 %v619
      %v655 = vunpack.c.h.b16 %v619
      %v656 = vunpack.c.l.b16 %v620
      %v657 = vunpack.c.h.b16 %v620
      %v658 = vunpack.c.l.b16 %v621
      %v659 = vunpack.c.h.b16 %v621
      %v660 = vunpack.c.l.b16 %v622
      %v661 = vunpack.c.h.b16 %v622
      %v662 = vunpack.c.l.b16 %v623
      %v663 = vunpack.c.h.b16 %v623
      %v664 = vunpack.c.l.b16 %v624
      %v665 = vunpack.c.h.b16 %v624
      %v666 = vunpack.c.l.b16 %v625
      %v667 = vunpack.c.h.b16 %v625
      %v668 = vunpack.c.l.b16 %v626
      %v669 = vunpack.c.h.b16 %v626
      %v670 = vunpack.c.l.b16 %v627
      %v671 = vunpack.c.h.b16 %v627
      %v672 = vunpack.c.l.b16 %v628
      %v673 = vunpack.c.h.b16 %v628
      %v674 = vunpack.c.l.b16 %v629
      %v675 = vunpack.c.h.b16 %v629
      %v676 = vunpack.c.l.b16 %v630
      %v677 = vunpack.c.h.b16 %v630
      %v678 = vunpack.c.l.b16 %v631
      %v679 = vunpack.c.h.b16 %v631
      %v680 = vpack.c.b16 %v650, %v648
      %v681 = vpack.c.b16 %v651, %v649
      %v682 = vpack.c.b16 %v654, %v652
      %v683 = vpack.c.b16 %v655, %v653
      %v684 = vpack.c.b16 %v658, %v656
      %v685 = vpack.c.b16 %v659, %v657
      %v686 = vpack.c.b16 %v662, %v660
      %v687 = vpack.c.b16 %v663, %v661
      %v688 = vpack.c.b16 %v666, %v664
      %v689 = vpack.c.b16 %v667, %v665
      %v690 = vpack.c.b16 %v670, %v668
      %v691 = vpack.c.b16 %v671, %v669
      %v692 = vpack.c.b16 %v674, %v672
      %v693 = vpack.c.b16 %v675, %v673
      %v694 = vpack.c.b16 %v678, %v676
      %v695 = vpack.c.b16 %v679, %v677
      %712 = vmatpush.bf16.msra.mxu0 %v694
      %713 = vmatpush.bf16.msra.mxu0 %v692
      %714 = vmatpush.bf16.msra.mxu0 %v690
      %715 = vmatpush.bf16.msra.mxu0 %v688
      %716 = vmatpush.bf16.msra.mxu0 %v686
      %717 = vmatpush.bf16.msra.mxu0 %v684
      %718 = vmatpush.bf16.msra.mxu0 %v682
      %719 = vmatpush.bf16.msra.mxu0 %v680
      %720 = vmatmul.bf16.gmra.mxu0 %v613
      %v721 = vpop.f32.mrf.mxu0
      %v722 = vadd.f32 0.0, %v721
      %v723 = vpop.f32.mrf.mxu0
      %v724 = vadd.f32 0.0, %v723
      %725 = vmatmul.bf16.gmra.mxu0 %v614
      %v726 = vpop.f32.mrf.mxu0
      %v727 = vadd.f32 0.0, %v726
      %v728 = vpop.f32.mrf.mxu0
      %729 = vdwg.mxu0
      %730 = vmatpush.bf16.msra.mxu0 %v695
      %731 = vmatpush.bf16.msra.mxu0 %v693
      %732 = vmatpush.bf16.msra.mxu0 %v691
      %733 = vmatpush.bf16.msra.mxu0 %v689
      %734 = vmatpush.bf16.msra.mxu0 %v687
      %735 = vmatpush.bf16.msra.mxu0 %v685
      %736 = vmatpush.bf16.msra.mxu0 %v683
      %737 = vmatpush.bf16.msra.mxu0 %v681
      %738 = vmatmul.bf16.gmra.mxu0 %v613
      %v739 = vpop.f32.mrf.mxu0
      %v740 = vadd.f32 0.0, %v739
      %v741 = vpop.f32.mrf.mxu0
      %v742 = vadd.f32 0.0, %v741
      %743 = vmatmul.bf16.gmra.mxu0 %v614
      %v744 = vpop.f32.mrf.mxu0
      %v745 = vadd.f32 0.0, %v744
      %v746 = vpop.f32.mrf.mxu0
      %747 = vdwg.mxu0
      %v748 = vadd.f32 %v604, %v722
      %v749 = vadd.f32 %v605, %v740
      %v750 = vadd.f32 %v606, %v724
      %v751 = vadd.f32 %v607, %v742
      %v752 = vadd.f32 %v608, %v727
      %v753 = vadd.f32 %v609, %v745
      %v754 = vld [vmem:[%s165 + $0x7] sm:$0xff]
      %v755 = vld [vmem:[%s165 + $0xf] sm:$0xff]
      %v756 = vld [vmem:[%s165 + $0x17] sm:$0xff]
      %v757 = vpack.c.bf16 %v755, %v754
      %v758 = vpack.c.bf16 %v756, %v756
      %s759 = scalar_lea.vmem %s1, 512
      %v760 = vld [vmem:[%s759] sm:$0xff]
      %v761 = vld [vmem:[%s759 + $0x8] sm:$0xff]
      %v762 = vld [vmem:[%s759 + $0x10] sm:$0xff]
      %v763 = vld [vmem:[%s759 + $0x18] sm:$0xff]
      %v764 = vld [vmem:[%s759 + $0x20] sm:$0xff]
      %v765 = vld [vmem:[%s759 + $0x28] sm:$0xff]
      %v766 = vld [vmem:[%s759 + $0x30] sm:$0xff]
      %v767 = vld [vmem:[%s759 + $0x38] sm:$0xff]
      %v768 = vld [vmem:[%s759 + $0x40] sm:$0xff]
      %v769 = vld [vmem:[%s759 + $0x48] sm:$0xff]
      %v770 = vld [vmem:[%s759 + $0x50] sm:$0xff]
      %v771 = vld [vmem:[%s759 + $0x58] sm:$0xff]
      %v772 = vld [vmem:[%s759 + $0x60] sm:$0xff]
      %v773 = vld [vmem:[%s759 + $0x68] sm:$0xff]
      %v774 = vld [vmem:[%s759 + $0x70] sm:$0xff]
      %v775 = vld [vmem:[%s759 + $0x78] sm:$0xff]
      %v792 = vunpack.c.l.b16 %v760
      %v793 = vunpack.c.h.b16 %v760
      %v794 = vunpack.c.l.b16 %v761
      %v795 = vunpack.c.h.b16 %v761
      %v796 = vunpack.c.l.b16 %v762
      %v797 = vunpack.c.h.b16 %v762
      %v798 = vunpack.c.l.b16 %v763
      %v799 = vunpack.c.h.b16 %v763
      %v800 = vunpack.c.l.b16 %v764
      %v801 = vunpack.c.h.b16 %v764
      %v802 = vunpack.c.l.b16 %v765
      %v803 = vunpack.c.h.b16 %v765
      %v804 = vunpack.c.l.b16 %v766
      %v805 = vunpack.c.h.b16 %v766
      %v806 = vunpack.c.l.b16 %v767
      %v807 = vunpack.c.h.b16 %v767
      %v808 = vunpack.c.l.b16 %v768
      %v809 = vunpack.c.h.b16 %v768
      %v810 = vunpack.c.l.b16 %v769
      %v811 = vunpack.c.h.b16 %v769
      %v812 = vunpack.c.l.b16 %v770
      %v813 = vunpack.c.h.b16 %v770
      %v814 = vunpack.c.l.b16 %v771
      %v815 = vunpack.c.h.b16 %v771
      %v816 = vunpack.c.l.b16 %v772
      %v817 = vunpack.c.h.b16 %v772
      %v818 = vunpack.c.l.b16 %v773
      %v819 = vunpack.c.h.b16 %v773
      %v820 = vunpack.c.l.b16 %v774
      %v821 = vunpack.c.h.b16 %v774
      %v822 = vunpack.c.l.b16 %v775
      %v823 = vunpack.c.h.b16 %v775
      %v824 = vpack.c.b16 %v794, %v792
      %v825 = vpack.c.b16 %v795, %v793
      %v826 = vpack.c.b16 %v798, %v796
      %v827 = vpack.c.b16 %v799, %v797
      %v828 = vpack.c.b16 %v802, %v800
      %v829 = vpack.c.b16 %v803, %v801
      %v830 = vpack.c.b16 %v806, %v804
      %v831 = vpack.c.b16 %v807, %v805
      %v832 = vpack.c.b16 %v810, %v808
      %v833 = vpack.c.b16 %v811, %v809
      %v834 = vpack.c.b16 %v814, %v812
      %v835 = vpack.c.b16 %v815, %v813
      %v836 = vpack.c.b16 %v818, %v816
      %v837 = vpack.c.b16 %v819, %v817
      %v838 = vpack.c.b16 %v822, %v820
      %v839 = vpack.c.b16 %v823, %v821
      %856 = vmatpush.bf16.msra.mxu0 %v838
      %857 = vmatpush.bf16.msra.mxu0 %v836
      %858 = vmatpush.bf16.msra.mxu0 %v834
      %859 = vmatpush.bf16.msra.mxu0 %v832
      %860 = vmatpush.bf16.msra.mxu0 %v830
      %861 = vmatpush.bf16.msra.mxu0 %v828
      %862 = vmatpush.bf16.msra.mxu0 %v826
      %863 = vmatpush.bf16.msra.mxu0 %v824
      %864 = vmatmul.bf16.gmra.mxu0 %v757
      %v865 = vpop.f32.mrf.mxu0
      %v866 = vadd.f32 0.0, %v865
      %v867 = vpop.f32.mrf.mxu0
      %v868 = vadd.f32 0.0, %v867
      %869 = vmatmul.bf16.gmra.mxu0 %v758
      %v870 = vpop.f32.mrf.mxu0
      %v871 = vadd.f32 0.0, %v870
      %v872 = vpop.f32.mrf.mxu0
      %873 = vdwg.mxu0
      %874 = vmatpush.bf16.msra.mxu0 %v839
      %875 = vmatpush.bf16.msra.mxu0 %v837
      %876 = vmatpush.bf16.msra.mxu0 %v835
      %877 = vmatpush.bf16.msra.mxu0 %v833
      %878 = vmatpush.bf16.msra.mxu0 %v831
      %879 = vmatpush.bf16.msra.mxu0 %v829
      %880 = vmatpush.bf16.msra.mxu0 %v827
      %881 = vmatpush.bf16.msra.mxu0 %v825
      %882 = vmatmul.bf16.gmra.mxu0 %v757
      %v883 = vpop.f32.mrf.mxu0
      %v884 = vadd.f32 0.0, %v883
      %v885 = vpop.f32.mrf.mxu0
      %v886 = vadd.f32 0.0, %v885
      %887 = vmatmul.bf16.gmra.mxu0 %v758
      %v888 = vpop.f32.mrf.mxu0
      %v889 = vadd.f32 0.0, %v888
      %v890 = vpop.f32.mrf.mxu0
      %891 = vdwg.mxu0
      %v892 = vadd.f32 %v748, %v866
      %v893 = vadd.f32 %v749, %v884
      %v894 = vadd.f32 %v750, %v868
      %v895 = vadd.f32 %v751, %v886
      %v896 = vadd.f32 %v752, %v871
      %v897 = vadd.f32 %v753, %v889
      %v898 = vld [vmem:[%s165 + $0x8] sm:$0xff]
      %v899 = vld [vmem:[%s165 + $0x10] sm:$0xff]
      %v900 = vld [vmem:[%s165 + $0x18] sm:$0xff]
      %v901 = vpack.c.bf16 %v899, %v898
      %v902 = vpack.c.bf16 %v900, %v900
      %s903 = scalar_lea.vmem %s1, 640
      %v904 = vld [vmem:[%s903] sm:$0xff]
      %v905 = vld [vmem:[%s903 + $0x8] sm:$0xff]
      %v906 = vld [vmem:[%s903 + $0x10] sm:$0xff]
      %v907 = vld [vmem:[%s903 + $0x18] sm:$0xff]
      %v908 = vld [vmem:[%s903 + $0x20] sm:$0xff]
      %v909 = vld [vmem:[%s903 + $0x28] sm:$0xff]
      %v910 = vld [vmem:[%s903 + $0x30] sm:$0xff]
      %v911 = vld [vmem:[%s903 + $0x38] sm:$0xff]
      %v912 = vld [vmem:[%s903 + $0x40] sm:$0xff]
      %v913 = vld [vmem:[%s903 + $0x48] sm:$0xff]
      %v914 = vld [vmem:[%s903 + $0x50] sm:$0xff]
      %v915 = vld [vmem:[%s903 + $0x58] sm:$0xff]
      %v916 = vld [vmem:[%s903 + $0x60] sm:$0xff]
      %v917 = vld [vmem:[%s903 + $0x68] sm:$0xff]
      %v918 = vld [vmem:[%s903 + $0x70] sm:$0xff]
      %v919 = vld [vmem:[%s903 + $0x78] sm:$0xff]
      %v936 = vunpack.c.l.b16 %v904
      %v937 = vunpack.c.h.b16 %v904
      %v938 = vunpack.c.l.b16 %v905
      %v939 = vunpack.c.h.b16 %v905
      %v940 = vunpack.c.l.b16 %v906
      %v941 = vunpack.c.h.b16 %v906
      %v942 = vunpack.c.l.b16 %v907
      %v943 = vunpack.c.h.b16 %v907
      %v944 = vunpack.c.l.b16 %v908
      %v945 = vunpack.c.h.b16 %v908
      %v946 = vunpack.c.l.b16 %v909
      %v947 = vunpack.c.h.b16 %v909
      %v948 = vunpack.c.l.b16 %v910
      %v949 = vunpack.c.h.b16 %v910
      %v950 = vunpack.c.l.b16 %v911
      %v951 = vunpack.c.h.b16 %v911
      %v952 = vunpack.c.l.b16 %v912
      %v953 = vunpack.c.h.b16 %v912
      %v954 = vunpack.c.l.b16 %v913
      %v955 = vunpack.c.h.b16 %v913
      %v956 = vunpack.c.l.b16 %v914
      %v957 = vunpack.c.h.b16 %v914
      %v958 = vunpack.c.l.b16 %v915
      %v959 = vunpack.c.h.b16 %v915
      %v960 = vunpack.c.l.b16 %v916
      %v961 = vunpack.c.h.b16 %v916
      %v962 = vunpack.c.l.b16 %v917
      %v963 = vunpack.c.h.b16 %v917
      %v964 = vunpack.c.l.b16 %v918
      %v965 = vunpack.c.h.b16 %v918
      %v966 = vunpack.c.l.b16 %v919
      %v967 = vunpack.c.h.b16 %v919
      %v968 = vpack.c.b16 %v938, %v936
      %v969 = vpack.c.b16 %v939, %v937
      %v970 = vpack.c.b16 %v942, %v940
      %v971 = vpack.c.b16 %v943, %v941
      %v972 = vpack.c.b16 %v946, %v944
      %v973 = vpack.c.b16 %v947, %v945
      %v974 = vpack.c.b16 %v950, %v948
      %v975 = vpack.c.b16 %v951, %v949
      %v976 = vpack.c.b16 %v954, %v952
      %v977 = vpack.c.b16 %v955, %v953
      %v978 = vpack.c.b16 %v958, %v956
      %v979 = vpack.c.b16 %v959, %v957
      %v980 = vpack.c.b16 %v962, %v960
      %v981 = vpack.c.b16 %v963, %v961
      %v982 = vpack.c.b16 %v966, %v964
      %v983 = vpack.c.b16 %v967, %v965
      %1000 = vmatpush.bf16.msra.mxu0 %v982
      %1001 = vmatpush.bf16.msra.mxu0 %v980
      %1002 = vmatpush.bf16.msra.mxu0 %v978
      %1003 = vmatpush.bf16.msra.mxu0 %v976
      %1004 = vmatpush.bf16.msra.mxu0 %v974
      %1005 = vmatpush.bf16.msra.mxu0 %v972
      %1006 = vmatpush.bf16.msra.mxu0 %v970
      %1007 = vmatpush.bf16.msra.mxu0 %v968
      %1008 = vmatmul.bf16.gmra.mxu0 %v901
      %v1009 = vpop.f32.mrf.mxu0
      %v1010 = vadd.f32 0.0, %v1009
      %v1011 = vpop.f32.mrf.mxu0
      %v1012 = vadd.f32 0.0, %v1011
      %1013 = vmatmul.bf16.gmra.mxu0 %v902
      %v1014 = vpop.f32.mrf.mxu0
      %v1015 = vadd.f32 0.0, %v1014
      %v1016 = vpop.f32.mrf.mxu0
      %1017 = vdwg.mxu0
      %1018 = vmatpush.bf16.msra.mxu0 %v983
      %1019 = vmatpush.bf16.msra.mxu0 %v981
      %1020 = vmatpush.bf16.msra.mxu0 %v979
      %1021 = vmatpush.bf16.msra.mxu0 %v977
      %1022 = vmatpush.bf16.msra.mxu0 %v975
      %1023 = vmatpush.bf16.msra.mxu0 %v973
      %1024 = vmatpush.bf16.msra.mxu0 %v971
      %1025 = vmatpush.bf16.msra.mxu0 %v969
      %1026 = vmatmul.bf16.gmra.mxu0 %v901
      %v1027 = vpop.f32.mrf.mxu0
      %v1028 = vadd.f32 0.0, %v1027
      %v1029 = vpop.f32.mrf.mxu0
      %v1030 = vadd.f32 0.0, %v1029
      %1031 = vmatmul.bf16.gmra.mxu0 %v902
      %v1032 = vpop.f32.mrf.mxu0
      %v1033 = vadd.f32 0.0, %v1032
      %v1034 = vpop.f32.mrf.mxu0
      %1035 = vdwg.mxu0
      %v1036 = vadd.f32 %v892, %v1010
      %v1037 = vadd.f32 %v893, %v1028
      %v1038 = vadd.f32 %v894, %v1012
      %v1039 = vadd.f32 %v895, %v1030
      %v1040 = vadd.f32 %v896, %v1015
      %v1041 = vadd.f32 %v897, %v1033
      %v1042 = vld [vmem:[%s165 + $0xc] sm:$0xff]
      %v1043 = vld [vmem:[%s165 + $0x14] sm:$0xff]
      %v1044 = vld [vmem:[%s165 + $0x1c] sm:$0xff]
      %v1045 = vpack.c.bf16 %v1043, %v1042
      %v1046 = vpack.c.bf16 %v1044, %v1044
      %s1047 = scalar_lea.vmem %s1, 768
      %v1048 = vld [vmem:[%s1047] sm:$0xff]
      %v1049 = vld [vmem:[%s1047 + $0x8] sm:$0xff]
      %v1050 = vld [vmem:[%s1047 + $0x10] sm:$0xff]
      %v1051 = vld [vmem:[%s1047 + $0x18] sm:$0xff]
      %v1052 = vld [vmem:[%s1047 + $0x20] sm:$0xff]
      %v1053 = vld [vmem:[%s1047 + $0x28] sm:$0xff]
      %v1054 = vld [vmem:[%s1047 + $0x30] sm:$0xff]
      %v1055 = vld [vmem:[%s1047 + $0x38] sm:$0xff]
      %v1056 = vld [vmem:[%s1047 + $0x40] sm:$0xff]
      %v1057 = vld [vmem:[%s1047 + $0x48] sm:$0xff]
      %v1058 = vld [vmem:[%s1047 + $0x50] sm:$0xff]
      %v1059 = vld [vmem:[%s1047 + $0x58] sm:$0xff]
      %v1060 = vld [vmem:[%s1047 + $0x60] sm:$0xff]
      %v1061 = vld [vmem:[%s1047 + $0x68] sm:$0xff]
      %v1062 = vld [vmem:[%s1047 + $0x70] sm:$0xff]
      %v1063 = vld [vmem:[%s1047 + $0x78] sm:$0xff]
      %v1080 = vunpack.c.l.b16 %v1048
      %v1081 = vunpack.c.h.b16 %v1048
      %v1082 = vunpack.c.l.b16 %v1049
      %v1083 = vunpack.c.h.b16 %v1049
      %v1084 = vunpack.c.l.b16 %v1050
      %v1085 = vunpack.c.h.b16 %v1050
      %v1086 = vunpack.c.l.b16 %v1051
      %v1087 = vunpack.c.h.b16 %v1051
      %v1088 = vunpack.c.l.b16 %v1052
      %v1089 = vunpack.c.h.b16 %v1052
      %v1090 = vunpack.c.l.b16 %v1053
      %v1091 = vunpack.c.h.b16 %v1053
      %v1092 = vunpack.c.l.b16 %v1054
      %v1093 = vunpack.c.h.b16 %v1054
      %v1094 = vunpack.c.l.b16 %v1055
      %v1095 = vunpack.c.h.b16 %v1055
      %v1096 = vunpack.c.l.b16 %v1056
      %v1097 = vunpack.c.h.b16 %v1056
      %v1098 = vunpack.c.l.b16 %v1057
      %v1099 = vunpack.c.h.b16 %v1057
      %v1100 = vunpack.c.l.b16 %v1058
      %v1101 = vunpack.c.h.b16 %v1058
      %v1102 = vunpack.c.l.b16 %v1059
      %v1103 = vunpack.c.h.b16 %v1059
      %v1104 = vunpack.c.l.b16 %v1060
      %v1105 = vunpack.c.h.b16 %v1060
      %v1106 = vunpack.c.l.b16 %v1061
      %v1107 = vunpack.c.h.b16 %v1061
      %v1108 = vunpack.c.l.b16 %v1062
      %v1109 = vunpack.c.h.b16 %v1062
      %v1110 = vunpack.c.l.b16 %v1063
      %v1111 = vunpack.c.h.b16 %v1063
      %v1112 = vpack.c.b16 %v1082, %v1080
      %v1113 = vpack.c.b16 %v1083, %v1081
      %v1114 = vpack.c.b16 %v1086, %v1084
      %v1115 = vpack.c.b16 %v1087, %v1085
      %v1116 = vpack.c.b16 %v1090, %v1088
      %v1117 = vpack.c.b16 %v1091, %v1089
      %v1118 = vpack.c.b16 %v1094, %v1092
      %v1119 = vpack.c.b16 %v1095, %v1093
      %v1120 = vpack.c.b16 %v1098, %v1096
      %v1121 = vpack.c.b16 %v1099, %v1097
      %v1122 = vpack.c.b16 %v1102, %v1100
      %v1123 = vpack.c.b16 %v1103, %v1101
      %v1124 = vpack.c.b16 %v1106, %v1104
      %v1125 = vpack.c.b16 %v1107, %v1105
      %v1126 = vpack.c.b16 %v1110, %v1108
      %v1127 = vpack.c.b16 %v1111, %v1109
      %1144 = vmatpush.bf16.msra.mxu0 %v1126
      %1145 = vmatpush.bf16.msra.mxu0 %v1124
      %1146 = vmatpush.bf16.msra.mxu0 %v1122
      %1147 = vmatpush.bf16.msra.mxu0 %v1120
      %1148 = vmatpush.bf16.msra.mxu0 %v1118
      %1149 = vmatpush.bf16.msra.mxu0 %v1116
      %1150 = vmatpush.bf16.msra.mxu0 %v1114
      %1151 = vmatpush.bf16.msra.mxu0 %v1112
      %1152 = vmatmul.bf16.gmra.mxu0 %v1045
      %v1153 = vpop.f32.mrf.mxu0
      %v1154 = vadd.f32 0.0, %v1153
      %v1155 = vpop.f32.mrf.mxu0
      %v1156 = vadd.f32 0.0, %v1155
      %1157 = vmatmul.bf16.gmra.mxu0 %v1046
      %v1158 = vpop.f32.mrf.mxu0
      %v1159 = vadd.f32 0.0, %v1158
      %v1160 = vpop.f32.mrf.mxu0
      %1161 = vdwg.mxu0
      %1162 = vmatpush.bf16.msra.mxu0 %v1127
      %1163 = vmatpush.bf16.msra.mxu0 %v1125
      %1164 = vmatpush.bf16.msra.mxu0 %v1123
      %1165 = vmatpush.bf16.msra.mxu0 %v1121
      %1166 = vmatpush.bf16.msra.mxu0 %v1119
      %1167 = vmatpush.bf16.msra.mxu0 %v1117
      %1168 = vmatpush.bf16.msra.mxu0 %v1115
      %1169 = vmatpush.bf16.msra.mxu0 %v1113
      %1170 = vmatmul.bf16.gmra.mxu0 %v1045
      %v1171 = vpop.f32.mrf.mxu0
      %v1172 = vadd.f32 0.0, %v1171
      %v1173 = vpop.f32.mrf.mxu0
      %v1174 = vadd.f32 0.0, %v1173
      %1175 = vmatmul.bf16.gmra.mxu0 %v1046
      %v1176 = vpop.f32.mrf.mxu0
      %v1177 = vadd.f32 0.0, %v1176
      %v1178 = vpop.f32.mrf.mxu0
      %1179 = vdwg.mxu0
      %v1180 = vadd.f32 %v1036, %v1154
      %v1181 = vadd.f32 %v1037, %v1172
      %v1182 = vadd.f32 %v1038, %v1156
      %v1183 = vadd.f32 %v1039, %v1174
      %v1184 = vadd.f32 %v1040, %v1159
      %v1185 = vadd.f32 %v1041, %v1177
      %v1186 = vld [vmem:[%s165 + $0xd] sm:$0xff]
      %v1187 = vld [vmem:[%s165 + $0x15] sm:$0xff]
      %v1188 = vld [vmem:[%s165 + $0x1d] sm:$0xff]
      %v1189 = vpack.c.bf16 %v1187, %v1186
      %v1190 = vpack.c.bf16 %v1188, %v1188
      %s1191 = scalar_lea.vmem %s1, 896
      %v1192 = vld [vmem:[%s1191] sm:$0xff]
      %v1193 = vld [vmem:[%s1191 + $0x8] sm:$0xff]
      %v1194 = vld [vmem:[%s1191 + $0x10] sm:$0xff]
      %v1195 = vld [vmem:[%s1191 + $0x18] sm:$0xff]
      %v1196 = vld [vmem:[%s1191 + $0x20] sm:$0xff]
      %v1197 = vld [vmem:[%s1191 + $0x28] sm:$0xff]
      %v1198 = vld [vmem:[%s1191 + $0x30] sm:$0xff]
      %v1199 = vld [vmem:[%s1191 + $0x38] sm:$0xff]
      %v1200 = vld [vmem:[%s1191 + $0x40] sm:$0xff]
      %v1201 = vld [vmem:[%s1191 + $0x48] sm:$0xff]
      %v1202 = vld [vmem:[%s1191 + $0x50] sm:$0xff]
      %v1203 = vld [vmem:[%s1191 + $0x58] sm:$0xff]
      %v1204 = vld [vmem:[%s1191 + $0x60] sm:$0xff]
      %v1205 = vld [vmem:[%s1191 + $0x68] sm:$0xff]
      %v1206 = vld [vmem:[%s1191 + $0x70] sm:$0xff]
      %v1207 = vld [vmem:[%s1191 + $0x78] sm:$0xff]
      %v1224 = vunpack.c.l.b16 %v1192
      %v1225 = vunpack.c.h.b16 %v1192
      %v1226 = vunpack.c.l.b16 %v1193
      %v1227 = vunpack.c.h.b16 %v1193
      %v1228 = vunpack.c.l.b16 %v1194
      %v1229 = vunpack.c.h.b16 %v1194
      %v1230 = vunpack.c.l.b16 %v1195
      %v1231 = vunpack.c.h.b16 %v1195
      %v1232 = vunpack.c.l.b16 %v1196
      %v1233 = vunpack.c.h.b16 %v1196
      %v1234 = vunpack.c.l.b16 %v1197
      %v1235 = vunpack.c.h.b16 %v1197
      %v1236 = vunpack.c.l.b16 %v1198
      %v1237 = vunpack.c.h.b16 %v1198
      %v1238 = vunpack.c.l.b16 %v1199
      %v1239 = vunpack.c.h.b16 %v1199
      %v1240 = vunpack.c.l.b16 %v1200
      %v1241 = vunpack.c.h.b16 %v1200
      %v1242 = vunpack.c.l.b16 %v1201
      %v1243 = vunpack.c.h.b16 %v1201
      %v1244 = vunpack.c.l.b16 %v1202
      %v1245 = vunpack.c.h.b16 %v1202
      %v1246 = vunpack.c.l.b16 %v1203
      %v1247 = vunpack.c.h.b16 %v1203
      %v1248 = vunpack.c.l.b16 %v1204
      %v1249 = vunpack.c.h.b16 %v1204
      %v1250 = vunpack.c.l.b16 %v1205
      %v1251 = vunpack.c.h.b16 %v1205
      %v1252 = vunpack.c.l.b16 %v1206
      %v1253 = vunpack.c.h.b16 %v1206
      %v1254 = vunpack.c.l.b16 %v1207
      %v1255 = vunpack.c.h.b16 %v1207
      %v1256 = vpack.c.b16 %v1226, %v1224
      %v1257 = vpack.c.b16 %v1227, %v1225
      %v1258 = vpack.c.b16 %v1230, %v1228
      %v1259 = vpack.c.b16 %v1231, %v1229
      %v1260 = vpack.c.b16 %v1234, %v1232
      %v1261 = vpack.c.b16 %v1235, %v1233
      %v1262 = vpack.c.b16 %v1238, %v1236
      %v1263 = vpack.c.b16 %v1239, %v1237
      %v1264 = vpack.c.b16 %v1242, %v1240
      %v1265 = vpack.c.b16 %v1243, %v1241
      %v1266 = vpack.c.b16 %v1246, %v1244
      %v1267 = vpack.c.b16 %v1247, %v1245
      %v1268 = vpack.c.b16 %v1250, %v1248
      %v1269 = vpack.c.b16 %v1251, %v1249
      %v1270 = vpack.c.b16 %v1254, %v1252
      %v1271 = vpack.c.b16 %v1255, %v1253
      %1288 = vmatpush.bf16.msra.mxu0 %v1270
      %1289 = vmatpush.bf16.msra.mxu0 %v1268
      %1290 = vmatpush.bf16.msra.mxu0 %v1266
      %1291 = vmatpush.bf16.msra.mxu0 %v1264
      %1292 = vmatpush.bf16.msra.mxu0 %v1262
      %1293 = vmatpush.bf16.msra.mxu0 %v1260
      %1294 = vmatpush.bf16.msra.mxu0 %v1258
      %1295 = vmatpush.bf16.msra.mxu0 %v1256
      %1296 = vmatmul.bf16.gmra.mxu0 %v1189
      %v1297 = vpop.f32.mrf.mxu0
      %v1298 = vadd.f32 0.0, %v1297
      %v1299 = vpop.f32.mrf.mxu0
      %v1300 = vadd.f32 0.0, %v1299
      %1301 = vmatmul.bf16.gmra.mxu0 %v1190
      %v1302 = vpop.f32.mrf.mxu0
      %v1303 = vadd.f32 0.0, %v1302
      %v1304 = vpop.f32.mrf.mxu0
      %1305 = vdwg.mxu0
      %1306 = vmatpush.bf16.msra.mxu0 %v1271
      %1307 = vmatpush.bf16.msra.mxu0 %v1269
      %1308 = vmatpush.bf16.msra.mxu0 %v1267
      %1309 = vmatpush.bf16.msra.mxu0 %v1265
      %1310 = vmatpush.bf16.msra.mxu0 %v1263
      %1311 = vmatpush.bf16.msra.mxu0 %v1261
      %1312 = vmatpush.bf16.msra.mxu0 %v1259
      %1313 = vmatpush.bf16.msra.mxu0 %v1257
      %1314 = vmatmul.bf16.gmra.mxu0 %v1189
      %v1315 = vpop.f32.mrf.mxu0
      %v1316 = vadd.f32 0.0, %v1315
      %v1317 = vpop.f32.mrf.mxu0
      %v1318 = vadd.f32 0.0, %v1317
      %1319 = vmatmul.bf16.gmra.mxu0 %v1190
      %v1320 = vpop.f32.mrf.mxu0
      %v1321 = vadd.f32 0.0, %v1320
      %v1322 = vpop.f32.mrf.mxu0
      %1323 = vdwg.mxu0
      %v1324 = vadd.f32 %v1180, %v1298
      %v1325 = vadd.f32 %v1181, %v1316
      %v1326 = vadd.f32 %v1182, %v1300
      %v1327 = vadd.f32 %v1183, %v1318
      %v1328 = vadd.f32 %v1184, %v1303
      %v1329 = vadd.f32 %v1185, %v1321
      %v1330 = vld [vmem:[%s165 + $0xe] sm:$0xff]
      %v1331 = vld [vmem:[%s165 + $0x16] sm:$0xff]
      %v1332 = vld [vmem:[%s165 + $0x1e] sm:$0xff]
      %v1333 = vpack.c.bf16 %v1331, %v1330
      %v1334 = vpack.c.bf16 %v1332, %v1332
      %s1335 = scalar_lea.vmem %s1, 1024
      %v1336 = vld [vmem:[%s1335] sm:$0xff]
      %v1337 = vld [vmem:[%s1335 + $0x8] sm:$0xff]
      %v1338 = vld [vmem:[%s1335 + $0x10] sm:$0xff]
      %v1339 = vld [vmem:[%s1335 + $0x18] sm:$0xff]
      %v1340 = vld [vmem:[%s1335 + $0x20] sm:$0xff]
      %v1341 = vld [vmem:[%s1335 + $0x28] sm:$0xff]
      %v1342 = vld [vmem:[%s1335 + $0x30] sm:$0xff]
      %v1343 = vld [vmem:[%s1335 + $0x38] sm:$0xff]
      %v1344 = vld [vmem:[%s1335 + $0x40] sm:$0xff]
      %v1345 = vld [vmem:[%s1335 + $0x48] sm:$0xff]
      %v1346 = vld [vmem:[%s1335 + $0x50] sm:$0xff]
      %v1347 = vld [vmem:[%s1335 + $0x58] sm:$0xff]
      %v1348 = vld [vmem:[%s1335 + $0x60] sm:$0xff]
      %v1349 = vld [vmem:[%s1335 + $0x68] sm:$0xff]
      %v1350 = vld [vmem:[%s1335 + $0x70] sm:$0xff]
      %v1351 = vld [vmem:[%s1335 + $0x78] sm:$0xff]
      %v1368 = vunpack.c.l.b16 %v1336
      %v1369 = vunpack.c.h.b16 %v1336
      %v1370 = vunpack.c.l.b16 %v1337
      %v1371 = vunpack.c.h.b16 %v1337
      %v1372 = vunpack.c.l.b16 %v1338
      %v1373 = vunpack.c.h.b16 %v1338
      %v1374 = vunpack.c.l.b16 %v1339
      %v1375 = vunpack.c.h.b16 %v1339
      %v1376 = vunpack.c.l.b16 %v1340
      %v1377 = vunpack.c.h.b16 %v1340
      %v1378 = vunpack.c.l.b16 %v1341
      %v1379 = vunpack.c.h.b16 %v1341
      %v1380 = vunpack.c.l.b16 %v1342
      %v1381 = vunpack.c.h.b16 %v1342
      %v1382 = vunpack.c.l.b16 %v1343
      %v1383 = vunpack.c.h.b16 %v1343
      %v1384 = vunpack.c.l.b16 %v1344
      %v1385 = vunpack.c.h.b16 %v1344
      %v1386 = vunpack.c.l.b16 %v1345
      %v1387 = vunpack.c.h.b16 %v1345
      %v1388 = vunpack.c.l.b16 %v1346
      %v1389 = vunpack.c.h.b16 %v1346
      %v1390 = vunpack.c.l.b16 %v1347
      %v1391 = vunpack.c.h.b16 %v1347
      %v1392 = vunpack.c.l.b16 %v1348
      %v1393 = vunpack.c.h.b16 %v1348
      %v1394 = vunpack.c.l.b16 %v1349
      %v1395 = vunpack.c.h.b16 %v1349
      %v1396 = vunpack.c.l.b16 %v1350
      %v1397 = vunpack.c.h.b16 %v1350
      %v1398 = vunpack.c.l.b16 %v1351
      %v1399 = vunpack.c.h.b16 %v1351
      %v1400 = vpack.c.b16 %v1370, %v1368
      %v1401 = vpack.c.b16 %v1371, %v1369
      %v1402 = vpack.c.b16 %v1374, %v1372
      %v1403 = vpack.c.b16 %v1375, %v1373
      %v1404 = vpack.c.b16 %v1378, %v1376
      %v1405 = vpack.c.b16 %v1379, %v1377
      %v1406 = vpack.c.b16 %v1382, %v1380
      %v1407 = vpack.c.b16 %v1383, %v1381
      %v1408 = vpack.c.b16 %v1386, %v1384
      %v1409 = vpack.c.b16 %v1387, %v1385
      %v1410 = vpack.c.b16 %v1390, %v1388
      %v1411 = vpack.c.b16 %v1391, %v1389
      %v1412 = vpack.c.b16 %v1394, %v1392
      %v1413 = vpack.c.b16 %v1395, %v1393
      %v1414 = vpack.c.b16 %v1398, %v1396
      %v1415 = vpack.c.b16 %v1399, %v1397
      %1432 = vmatpush.bf16.msra.mxu0 %v1414
      %1433 = vmatpush.bf16.msra.mxu0 %v1412
      %1434 = vmatpush.bf16.msra.mxu0 %v1410
      %1435 = vmatpush.bf16.msra.mxu0 %v1408
      %1436 = vmatpush.bf16.msra.mxu0 %v1406
      %1437 = vmatpush.bf16.msra.mxu0 %v1404
      %1438 = vmatpush.bf16.msra.mxu0 %v1402
      %1439 = vmatpush.bf16.msra.mxu0 %v1400
      %1440 = vmatmul.bf16.gmra.mxu0 %v1333
      %v1441 = vpop.f32.mrf.mxu0
      %v1442 = vadd.f32 0.0, %v1441
      %v1443 = vpop.f32.mrf.mxu0
      %v1444 = vadd.f32 0.0, %v1443
      %1445 = vmatmul.bf16.gmra.mxu0 %v1334
      %v1446 = vpop.f32.mrf.mxu0
      %v1447 = vadd.f32 0.0, %v1446
      %v1448 = vpop.f32.mrf.mxu0
      %1449 = vdwg.mxu0
      %1450 = vmatpush.bf16.msra.mxu0 %v1415
      %1451 = vmatpush.bf16.msra.mxu0 %v1413
      %1452 = vmatpush.bf16.msra.mxu0 %v1411
      %1453 = vmatpush.bf16.msra.mxu0 %v1409
      %1454 = vmatpush.bf16.msra.mxu0 %v1407
      %1455 = vmatpush.bf16.msra.mxu0 %v1405
      %1456 = vmatpush.bf16.msra.mxu0 %v1403
      %1457 = vmatpush.bf16.msra.mxu0 %v1401
      %1458 = vmatmul.bf16.gmra.mxu0 %v1333
      %v1459 = vpop.f32.mrf.mxu0
      %v1460 = vadd.f32 0.0, %v1459
      %v1461 = vpop.f32.mrf.mxu0
      %v1462 = vadd.f32 0.0, %v1461
      %1463 = vmatmul.bf16.gmra.mxu0 %v1334
      %v1464 = vpop.f32.mrf.mxu0
      %v1465 = vadd.f32 0.0, %v1464
      %v1466 = vpop.f32.mrf.mxu0
      %1467 = vdwg.mxu0
      %v1468 = vadd.f32 %v1324, %v1442
      %v1469 = vadd.f32 %v1325, %v1460
      %v1470 = vadd.f32 %v1326, %v1444
      %v1471 = vadd.f32 %v1327, %v1462
      %v1472 = vadd.f32 %v1328, %v1447
      %v1473 = vadd.f32 %v1329, %v1465
      %v1474 = vmax.f32 %v1468, 0.0
      %v1475 = vmax.f32 %v1469, 0.0
      %v1476 = vmax.f32 %v1470, 0.0
      %v1477 = vmax.f32 %v1471, 0.0
      %v1478 = vmax.f32 %v1472, 0.0
      %v1479 = vmax.f32 %v1473, 0.0
      %1480 = vst [vmem:[%s170] sm:$0xff] %v1474
      %1481 = vst [vmem:[%s170 + $0x8] sm:$0xff] %v1475
      %1482 = vst [vmem:[%s170 + $0x10] sm:$0xff] %v1476
      %1483 = vst [vmem:[%s170 + $0x18] sm:$0xff] %v1477
      %1484 = vst [vmem:[%s170 + $0x20] sm:$0xff] %v1478
      %1485 = vst [vmem:[%s170 + $0x28] sm:$0xff] %v1479
      %p1486 = scmp.lt.s32.totalorder %s14, 2
      %s1487 = scalar_select %p1486, %s14, 2
      %s1488 = smul.addr %s1487, 6
      %s1489 = smul.addr %s1488, 8
      %s1490 = scalar_lea.vmem %s3, %s1489
      // Predicated region
      $region33: #{repnet_forward.10} parent=31 // pred_check
        %p1491 = pneg %p100
      $region34: #{repnet_forward.10} parent=31 // pred_check_branch
        %1493 = sbr.rel (%p1491) target = $region36
      $region35: #{repnet_forward.10} parent=31 // pred_region
        _
      $region36: #{repnet_forward.10} parent=31 // pred_fallthru
        _
    $region32: #{repnet_forward.10} parent=5 // pred_fallthru
      _
    %p1494 = scmp.le.s32.totalorder 2, %s9
    // Predicated region
    $region37: #{repnet_forward.10} parent=5 // pred_check
      %p1495 = pneg %p1494
    $region38: #{repnet_forward.10} parent=5 // pred_check_branch
      %1497 = sbr.rel (%p1495) target = $region40
    $region39: #{repnet_forward.10} parent=5 // pred_region
      %s1498 = ssub.s32 %s9, 2
      // Predicated region
      $region41: #{repnet_forward.10} parent=39 // pred_check
        %p1499 = pneg %p106
      $region42: #{repnet_forward.10} parent=39 // pred_check_branch
        %1501 = sbr.rel (%p1499) target = $region44
      $region43: #{repnet_forward.10} parent=39 // pred_region
        %p1502 = scmp.lt.s32.totalorder %s15, 2
        %s1503 = scalar_select %p1502, %s15, 2
        %s1504 = smul.addr %s1503, 6
        %s1505 = smul.addr %s1504, 8
        %s1506 = scalar_lea.vmem %s3, %s1505
      $region44: #{repnet_forward.10} parent=39 // pred_fallthru
        _
    $region40: #{repnet_forward.10} parent=5 // pred_fallthru
      _
  $region6: #{repnet_forward.10} parent=0 // loop_footer
    %s13 = sadd.s32 1, %s9
  $region7: #{repnet_forward.10} parent=0 // loop_footer_branch
    %8 = sbr.rel target = $region3
  $region8: #{repnet_forward.10} parent=0 // loop_exit
    _

// kernel: repnet_forward.9
$region0: #{repnet_forward.9}
  #allocation0 [shape = 'u32[]', space=smem, size = 0x4, offset = 0x4, fixed_abs, tag = 'smem constant byte address 0x4 - core index']
  #allocation1 [shape = 'u32[72,128]{1,0:T(1,128)}', space=vmem, size = 0x9000, scoped, tag = 'internal scratch']
  %s0 = inlined_call_operand.vmem [shape: f32[3,42,256], index: 0, kind: input, shape index: {}]
  %s1 = inlined_call_operand.vmem [shape: bf16[9,256,128], index: 1, kind: input, shape index: {}]
  %s2 = inlined_call_operand.vmem [shape: f32[1,128], index: 2, kind: input, shape index: {}]
  %s3 = inlined_call_operand.vmem [shape: f32[3,24,128], index: 3, kind: input, shape index: {}]
  %s4 = inlined_call_operand.vmem [shape: f32[3,24,128], index: 4, kind: output, shape index: {}]
  %s5 = sld [smem:[#allocation0]]
  $region49: #{repnet_forward.9} parent=0
    _
  %s7 = ssub.s32 1, %s5
  %s8 = scalar_select 0, %s7, %s5
  loop: start=0, step=1, limit=5
  $region2: #{repnet_forward.9} parent=0 // loop_pre_header
    _
  $region3: #{repnet_forward.9} parent=0 // loop_header
    %s10 = sphi 0, %s14
    %p11 = scmp.ge.s32.totalorder %s10, 5
    %s20 = sphi 0, %s22
    %s23 = sphi 0, %s20
    %s24 = sphi 0, %s23
    %s40 = sphi 0, %s24
    %s44 = sphi 0, %s44
    %s46 = sphi 0, %s44
    %s47 = sphi 0, %s46
    %s61 = sphi 0, %s47
    %s65 = sphi 0, %s65
    %s67 = sphi 0, %s65
    %s68 = sphi 0, %s67
    %s82 = sphi 0, %s68
    %s88 = sphi 0, %s90
    %s91 = sphi 0, %s88
    %s92 = sphi 0, %s91
    %s108 = sphi 0, %s92
    %s114 = sphi 0, %s116
    %s117 = sphi 0, %s114
    %s118 = sphi 0, %s117
    %s134 = sphi 0, %s118
  $region4: #{repnet_forward.9} parent=0 // loop_header_branch
    %13 = sbr.rel (%p11) target = $region8
  $region5: #{repnet_forward.9} parent=0 // loop_body
    %s15 = ssub.s32 %s10, 1
    %s16 = ssub.s32 %s10, 2
    %s17 = sadd.s32 %s10, 1
    %s18 = ssub.s32 %s10, %s17
    %p19 = scmp.eq.s32.totalorder %s18, 0
    %s21 = sadd.s32 %s20, 1
    %s22 = scalar_select %p19, %s20, %s21
    %p25 = pneg %p19
    %p26 = scmp.eq.s32.totalorder %s10, 2
    %p27 = por %p25, %p26
    %p28 = scmp.ne.s32.totalorder %s20, %s23
    %p29 = scmp.eq.s32.totalorder %s10, 0
    %p30 = por %p28, %p29
    %p31 = scmp.ne.s32.totalorder %s20, %s23
    %p32 = scmp.eq.s32.totalorder %s15, 2
    %p33 = por %p31, %p32
    %p34 = scmp.ne.s32.totalorder %s23, %s24
    %p35 = scmp.eq.s32.totalorder %s15, 0
    %p36 = por %p34, %p35
    %p37 = scmp.ne.s32.totalorder %s23, %s24
    %p38 = scmp.eq.s32.totalorder %s16, 2
    %p39 = por %p37, %p38
    %p41 = scmp.ne.s32.totalorder %s24, %s40
    %p42 = scmp.eq.s32.totalorder %s16, 0
    %p43 = por %p41, %p42
    %s45 = sadd.s32 %s44, 1
    %p48 = scmp.eq.s32.totalorder %s10, 2
    %p49 = scmp.ne.s32.totalorder %s44, %s46
    %p50 = scmp.eq.s32.totalorder %s10, 0
    %p51 = por %p49, %p50
    %p52 = scmp.ne.s32.totalorder %s44, %s46
    %p53 = scmp.eq.s32.totalorder %s15, 2
    %p54 = por %p52, %p53
    %p55 = scmp.ne.s32.totalorder %s46, %s47
    %p56 = scmp.eq.s32.totalorder %s15, 0
    %p57 = por %p55, %p56
    %p58 = scmp.ne.s32.totalorder %s46, %s47
    %p59 = scmp.eq.s32.totalorder %s16, 2
    %p60 = por %p58, %p59
    %p62 = scmp.ne.s32.totalorder %s47, %s61
    %p63 = scmp.eq.s32.totalorder %s16, 0
    %p64 = por %p62, %p63
    %s66 = sadd.s32 %s65, 1
    %p69 = scmp.eq.s32.totalorder %s10, 2
    %p70 = scmp.ne.s32.totalorder %s65, %s67
    %p71 = scmp.eq.s32.totalorder %s10, 0
    %p72 = por %p70, %p71
    %p73 = scmp.ne.s32.totalorder %s65, %s67
    %p74 = scmp.eq.s32.totalorder %s15, 2
    %p75 = por %p73, %p74
    %p76 = scmp.ne.s32.totalorder %s67, %s68
    %p77 = scmp.eq.s32.totalorder %s15, 0
    %p78 = por %p76, %p77
    %p79 = scmp.ne.s32.totalorder %s67, %s68
    %p80 = scmp.eq.s32.totalorder %s16, 2
    %p81 = por %p79, %p80
    %p83 = scmp.ne.s32.totalorder %s68, %s82
    %p84 = scmp.eq.s32.totalorder %s16, 0
    %p85 = por %p83, %p84
    %s86 = ssub.s32 %s10, %s17
    %p87 = scmp.eq.s32.totalorder %s86, 0
    %s89 = sadd.s32 %s88, 1
    %s90 = scalar_select %p87, %s88, %s89
    %p93 = pneg %p87
    %p94 = scmp.eq.s32.totalorder %s10, 2
    %p95 = por %p93, %p94
    %p96 = scmp.ne.s32.totalorder %s88, %s91
    %p97 = scmp.eq.s32.totalorder %s10, 0
    %p98 = por %p96, %p97
    %p99 = scmp.ne.s32.totalorder %s88, %s91
    %p100 = scmp.eq.s32.totalorder %s15, 2
    %p101 = por %p99, %p100
    %p102 = scmp.ne.s32.totalorder %s91, %s92
    %p103 = scmp.eq.s32.totalorder %s15, 0
    %p104 = por %p102, %p103
    %p105 = scmp.ne.s32.totalorder %s91, %s92
    %p106 = scmp.eq.s32.totalorder %s16, 2
    %p107 = por %p105, %p106
    %p109 = scmp.ne.s32.totalorder %s92, %s108
    %p110 = scmp.eq.s32.totalorder %s16, 0
    %p111 = por %p109, %p110
    %s112 = ssub.s32 %s10, %s17
    %p113 = scmp.eq.s32.totalorder %s112, 0
    %s115 = sadd.s32 %s114, 1
    %s116 = scalar_select %p113, %s114, %s115
    %p119 = pneg %p113
    %p120 = scmp.eq.s32.totalorder %s10, 2
    %p121 = por %p119, %p120
    %p122 = scmp.ne.s32.totalorder %s114, %s117
    %p123 = scmp.eq.s32.totalorder %s10, 0
    %p124 = por %p122, %p123
    %p125 = scmp.ne.s32.totalorder %s114, %s117
    %p126 = scmp.eq.s32.totalorder %s15, 2
    %p127 = por %p125, %p126
    %p128 = scmp.ne.s32.totalorder %s117, %s118
    %p129 = scmp.eq.s32.totalorder %s15, 0
    %p130 = por %p128, %p129
    %p131 = scmp.ne.s32.totalorder %s117, %s118
    %p132 = scmp.eq.s32.totalorder %s16, 2
    %p133 = por %p131, %p132
    %p135 = scmp.ne.s32.totalorder %s118, %s134
    %p136 = scmp.eq.s32.totalorder %s16, 0
    %p137 = por %p135, %p136
    %p138 = scmp.le.s32.totalorder 1, %s10
    %p139 = scmp.lt.s32.totalorder %s10, 4
    %p140 = pnand %p138, %p139
    %p141 = pneg %p140
    // Predicated region
    $region9: #{repnet_forward.9} parent=5 // pred_check
      _
    $region10: #{repnet_forward.9} parent=5 // pred_check_branch
      %143 = sbr.rel (%p140) target = $region12
    $region11: #{repnet_forward.9} parent=5 // pred_region
      %s144 = ssub.s32 %s10, 1
      // Predicated region
      $region13: #{repnet_forward.9} parent=11 // pred_check
        %p145 = pneg %p57
      $region14: #{repnet_forward.9} parent=11 // pred_check_branch
        %147 = sbr.rel (%p145) target = $region16
      $region15: #{repnet_forward.9} parent=11 // pred_region
        _
      $region16: #{repnet_forward.9} parent=11 // pred_fallthru
        _
      // Predicated region
      $region17: #{repnet_forward.9} parent=11 // pred_check
        %p148 = pneg %p78
      $region18: #{repnet_forward.9} parent=11 // pred_check_branch
        %150 = sbr.rel (%p148) target = $region20
      $region19: #{repnet_forward.9} parent=11 // pred_region
        _
      $region20: #{repnet_forward.9} parent=11 // pred_fallthru
        _
    $region12: #{repnet_forward.9} parent=5 // pred_fallthru
      _
    %p151 = scmp.lt.s32.totalorder %s10, 3
    // Predicated region
    $region21: #{repnet_forward.9} parent=5 // pred_check
      %p152 = pneg %p151
    $region22: #{repnet_forward.9} parent=5 // pred_check_branch
      %154 = sbr.rel (%p152) target = $region24
    $region23: #{repnet_forward.9} parent=5 // pred_region
      // Predicated region
      $region25: #{repnet_forward.9} parent=23 // pred_check
        %p155 = pneg %p30
      $region26: #{repnet_forward.9} parent=23 // pred_check_branch
        %157 = sbr.rel (%p155) target = $region28
      $region27: #{repnet_forward.9} parent=23 // pred_region
        %p158 = scmp.lt.s32.totalorder %s10, 2
        %s159 = scalar_select %p158, %s10, 2
        %s160 = smul.addr %s159, 12
        %s161 = smul.addr %s160, 8
        %s162 = scalar_lea.vmem %s0, %s161
      $region28: #{repnet_forward.9} parent=23 // pred_fallthru
        _
      // Predicated region
      $region29: #{repnet_forward.9} parent=23 // pred_check
        %p163 = pneg %p98
      $region30: #{repnet_forward.9} parent=23 // pred_check_branch
        %165 = sbr.rel (%p163) target = $region32
      $region31: #{repnet_forward.9} parent=23 // pred_region
        %p166 = scmp.lt.s32.totalorder %s10, 2
        %s167 = scalar_select %p166, %s10, 2
        %s168 = smul.addr %s167, 3
        %s169 = smul.addr %s168, 8
        %s170 = scalar_lea.vmem %s3, %s169
      $region32: #{repnet_forward.9} parent=23 // pred_fallthru
        _
    $region24: #{repnet_forward.9} parent=5 // pred_fallthru
      _
    %p171 = scmp.le.s32.totalorder 1, %s10
    %p172 = scmp.lt.s32.totalorder %s10, 4
    %p173 = pnand %p171, %p172
    %p174 = pneg %p173
    // Predicated region
    $region33: #{repnet_forward.9} parent=5 // pred_check
      _
    $region34: #{repnet_forward.9} parent=5 // pred_check_branch
      %176 = sbr.rel (%p173) target = $region36
    $region35: #{repnet_forward.9} parent=5 // pred_region
      %s177 = ssub.s32 %s10, 1
      %p178 = scmp.lt.s32.totalorder %s15, 2
      %s179 = scalar_select %p178, %s15, 2
      %s180 = smul.addr %s179, 12
      %s181 = smul.addr %s180, 8
      %s182 = scalar_lea.vmem %s0, %s181
      %p183 = pneg %p36
      %p184 = pneg %p33
      %p185 = pneg %p57
      %p186 = pneg %p54
      %p187 = pneg %p78
      %p188 = pneg %p75
      %p189 = scmp.lt.s32.totalorder %s15, 2
      %s190 = scalar_select %p189, %s15, 2
      %s191 = smul.addr %s190, 3
      %s192 = smul.addr %s191, 8
      %s193 = scalar_lea.vmem %s3, %s192
      %p194 = pneg %p104
      %p195 = pneg %p101
      %p196 = pneg %p130
      %p197 = pneg %p127
      %p198 = scmp.lt.s32.totalorder %s15, 2
      %s199 = scalar_select %p198, %s15, 2
      %s200 = smul.addr %s199, 3
      %s201 = smul.addr %s200, 8
      %s202 = scalar_lea.vmem %s4, %s201
      %p203 = scmp.lt.s32.totalorder %s15, 2
      %s204 = scalar_select %p203, %s15, 2
      %s205 = smul.addr %s204, 12
      %s206 = smul.addr %s205, 8
      %s207 = scalar_lea.vmem %s0, %s206
      %p208 = scmp.lt.s32.totalorder %s15, 2
      %s209 = scalar_select %p208, %s15, 2
      %s210 = smul.addr %s209, 3
      %s211 = smul.addr %s210, 8
      %s212 = scalar_lea.vmem %s3, %s211
      %p213 = scmp.lt.s32.totalorder %s15, 2
      %s214 = scalar_select %p213, %s15, 2
      %s215 = smul.addr %s214, 3
      %s216 = smul.addr %s215, 8
      %s217 = scalar_lea.vmem %s4, %s216
      %v218 = vld [vmem:[%s2] sm:$0x1]
      %v220 = vperm.slane %v218, 0
      %v222 = vadd.f32 %v220, 0.0
      %v223 = vld [vmem:[%s207] sm:$0xff]
      %v224 = vld [vmem:[%s207 + $0x8] sm:$0xff]
      %v225 = vld [vmem:[%s207 + $0x10] sm:$0xff]
      %v226 = vld [vmem:[%s207 + $0x18] sm:$0xff]
      %v227 = vld [vmem:[%s207 + $0x20] sm:$0xff]
      %v228 = vld [vmem:[%s207 + $0x28] sm:$0xff]
      %v229 = vpack.c.bf16 %v225, %v223
      %v230 = vpack.c.bf16 %v226, %v224
      %v231 = vpack.c.bf16 %v227, %v227
      %v232 = vpack.c.bf16 %v228, %v228
      %v233 = vld [vmem:[%s1] sm:$0xf]
      %v234 = vld [vmem:[%s1 + $0x4] sm:$0xf]
      %v235 = vld [vmem:[%s1 + $0x8] sm:$0xf]
      %v236 = vld [vmem:[%s1 + $0xc] sm:$0xf]
      %v237 = vld [vmem:[%s1 + $0x10] sm:$0xf]
      %v238 = vld [vmem:[%s1 + $0x14] sm:$0xf]
      %v239 = vld [vmem:[%s1 + $0x18] sm:$0xf]
      %v240 = vld [vmem:[%s1 + $0x1c] sm:$0xf]
      %v241 = vld [vmem:[%s1 + $0x20] sm:$0xf]
      %v242 = vld [vmem:[%s1 + $0x24] sm:$0xf]
      %v243 = vld [vmem:[%s1 + $0x28] sm:$0xf]
      %v244 = vld [vmem:[%s1 + $0x2c] sm:$0xf]
      %v245 = vld [vmem:[%s1 + $0x30] sm:$0xf]
      %v246 = vld [vmem:[%s1 + $0x34] sm:$0xf]
      %v247 = vld [vmem:[%s1 + $0x38] sm:$0xf]
      %v248 = vld [vmem:[%s1 + $0x3c] sm:$0xf]
      %v249 = vld [vmem:[%s1 + $0x40] sm:$0xf]
      %v250 = vld [vmem:[%s1 + $0x44] sm:$0xf]
      %v251 = vld [vmem:[%s1 + $0x48] sm:$0xf]
      %v252 = vld [vmem:[%s1 + $0x4c] sm:$0xf]
      %v253 = vld [vmem:[%s1 + $0x50] sm:$0xf]
      %v254 = vld [vmem:[%s1 + $0x54] sm:$0xf]
      %v255 = vld [vmem:[%s1 + $0x58] sm:$0xf]
      %v256 = vld [vmem:[%s1 + $0x5c] sm:$0xf]
      %v257 = vld [vmem:[%s1 + $0x60] sm:$0xf]
      %v258 = vld [vmem:[%s1 + $0x64] sm:$0xf]
      %v259 = vld [vmem:[%s1 + $0x68] sm:$0xf]
      %v260 = vld [vmem:[%s1 + $0x6c] sm:$0xf]
      %v261 = vld [vmem:[%s1 + $0x70] sm:$0xf]
      %v262 = vld [vmem:[%s1 + $0x74] sm:$0xf]
      %v263 = vld [vmem:[%s1 + $0x78] sm:$0xf]
      %v264 = vld [vmem:[%s1 + $0x7c] sm:$0xf]
      %v297 = vunpack.c.l.b16 %v233
      %v298 = vunpack.c.l.b16 %v234
      %v299 = vunpack.c.l.b16 %v235
      %v300 = vunpack.c.l.b16 %v236
      %v301 = vunpack.c.l.b16 %v237
      %v302 = vunpack.c.l.b16 %v238
      %v303 = vunpack.c.l.b16 %v239
      %v304 = vunpack.c.l.b16 %v240
      %v305 = vunpack.c.l.b16 %v241
      %v306 = vunpack.c.l.b16 %v242
      %v307 = vunpack.c.l.b16 %v243
      %v308 = vunpack.c.l.b16 %v244
      %v309 = vunpack.c.l.b16 %v245
      %v310 = vunpack.c.l.b16 %v246
      %v311 = vunpack.c.l.b16 %v247
      %v312 = vunpack.c.l.b16 %v248
      %v313 = vunpack.c.l.b16 %v249
      %v314 = vunpack.c.l.b16 %v250
      %v315 = vunpack.c.l.b16 %v251
      %v316 = vunpack.c.l.b16 %v252
      %v317 = vunpack.c.l.b16 %v253
      %v318 = vunpack.c.l.b16 %v254
      %v319 = vunpack.c.l.b16 %v255
      %v320 = vunpack.c.l.b16 %v256
      %v321 = vunpack.c.l.b16 %v257
      %v322 = vunpack.c.l.b16 %v258
      %v323 = vunpack.c.l.b16 %v259
      %v324 = vunpack.c.l.b16 %v260
      %v325 = vunpack.c.l.b16 %v261
      %v326 = vunpack.c.l.b16 %v262
      %v327 = vunpack.c.l.b16 %v263
      %v328 = vunpack.c.l.b16 %v264
      %v329 = vpack.c.b16 %v298, %v297
      %v330 = vpack.c.b16 %v300, %v299
      %v331 = vpack.c.b16 %v302, %v301
      %v332 = vpack.c.b16 %v304, %v303
      %v333 = vpack.c.b16 %v306, %v305
      %v334 = vpack.c.b16 %v308, %v307
      %v335 = vpack.c.b16 %v310, %v309
      %v336 = vpack.c.b16 %v312, %v311
      %v337 = vpack.c.b16 %v314, %v313
      %v338 = vpack.c.b16 %v316, %v315
      %v339 = vpack.c.b16 %v318, %v317
      %v340 = vpack.c.b16 %v320, %v319
      %v341 = vpack.c.b16 %v322, %v321
      %v342 = vpack.c.b16 %v324, %v323
      %v343 = vpack.c.b16 %v326, %v325
      %v344 = vpack.c.b16 %v328, %v327
      %361 = vmatpush.bf16.msra.mxu0 %v336
      %362 = vmatpush.bf16.msra.mxu0 %v335
      %363 = vmatpush.bf16.msra.mxu0 %v334
      %364 = vmatpush.bf16.msra.mxu0 %v333
      %365 = vmatpush.bf16.msra.mxu0 %v332
      %366 = vmatpush.bf16.msra.mxu0 %v331
      %367 = vmatpush.bf16.msra.mxu0 %v330
      %368 = vmatpush.bf16.msra.mxu0 %v329
      %369 = vmatmul.bf16.gmra.mxu0 %v229
      %v370 = vpop.f32.mrf.mxu0
      %v371 = vadd.f32 0.0, %v370
      %v372 = vpop.f32.mrf.mxu0
      %v373 = vadd.f32 0.0, %v372
      %374 = vmatmul.bf16.gmra.mxu0 %v231
      %v375 = vpop.f32.mrf.mxu0
      %v376 = vadd.f32 0.0, %v375
      %v377 = vpop.f32.mrf.mxu0
      %378 = vdwg.mxu0
      %379 = vmatpush.bf16.msra.mxu0 %v344
      %380 = vmatpush.bf16.msra.mxu0 %v343
      %381 = vmatpush.bf16.msra.mxu0 %v342
      %382 = vmatpush.bf16.msra.mxu0 %v341
      %383 = vmatpush.bf16.msra.mxu0 %v340
      %384 = vmatpush.bf16.msra.mxu0 %v339
      %385 = vmatpush.bf16.msra.mxu0 %v338
      %386 = vmatpush.bf16.msra.mxu0 %v337
      %387 = vmatmul.bf16.gmra.mxu0 %v230
      %v388 = vpop.f32.mrf.mxu0
      %v389 = vadd.f32 %v371, %v388
      %v390 = vpop.f32.mrf.mxu0
      %v391 = vadd.f32 %v373, %v390
      %392 = vmatmul.bf16.gmra.mxu0 %v232
      %v393 = vpop.f32.mrf.mxu0
      %v394 = vadd.f32 %v376, %v393
      %v395 = vpop.f32.mrf.mxu0
      %396 = vdwg.mxu0
      %v397 = vadd.f32 %v222, %v389
      %v398 = vadd.f32 %v222, %v391
      %v399 = vadd.f32 %v222, %v394
      %v400 = vld [vmem:[%s207] sm:$0xfe]
      %v401 = vld [vmem:[%s207 + $0x8] sm:$0xfe]
      %v402 = vld [vmem:[%s207 + $0x10] sm:$0xff]
      %v403 = vld [vmem:[%s207 + $0x18] sm:$0xff]
      %v404 = vld [vmem:[%s207 + $0x20] sm:$0xff]
      %v405 = vld [vmem:[%s207 + $0x28] sm:$0xff]
      %v406 = vld [vmem:[%s207 + $0x30] sm:$0x1]
      %v407 = vld [vmem:[%s207 + $0x38] sm:$0x1]
      %v408 = vpack.c.bf16 %v402, %v400
      %v409 = vpack.c.bf16 %v403, %v401
      %v410 = vpack.c.bf16 %v406, %v404
      %v411 = vpack.c.bf16 %v407, %v405
      %s412 = scalar_lea.vmem %s1, 128
      %v413 = vld [vmem:[%s412] sm:$0xf]
      %v414 = vld [vmem:[%s412 + $0x4] sm:$0xf]
      %v415 = vld [vmem:[%s412 + $0x8] sm:$0xf]
      %v416 = vld [vmem:[%s412 + $0xc] sm:$0xf]
      %v417 = vld [vmem:[%s412 + $0x10] sm:$0xf]
      %v418 = vld [vmem:[%s412 + $0x14] sm:$0xf]
      %v419 = vld [vmem:[%s412 + $0x18] sm:$0xf]
      %v420 = vld [vmem:[%s412 + $0x1c] sm:$0xf]
      %v421 = vld [vmem:[%s412 + $0x20] sm:$0xf]
      %v422 = vld [vmem:[%s412 + $0x24] sm:$0xf]
      %v423 = vld [vmem:[%s412 + $0x28] sm:$0xf]
      %v424 = vld [vmem:[%s412 + $0x2c] sm:$0xf]
      %v425 = vld [vmem:[%s412 + $0x30] sm:$0xf]
      %v426 = vld [vmem:[%s412 + $0x34] sm:$0xf]
      %v427 = vld [vmem:[%s412 + $0x38] sm:$0xf]
      %v428 = vld [vmem:[%s412 + $0x3c] sm:$0xf]
      %v429 = vld [vmem:[%s412 + $0x40] sm:$0xf]
      %v430 = vld [vmem:[%s412 + $0x44] sm:$0xf]
      %v431 = vld [vmem:[%s412 + $0x48] sm:$0xf]
      %v432 = vld [vmem:[%s412 + $0x4c] sm:$0xf]
      %v433 = vld [vmem:[%s412 + $0x50] sm:$0xf]
      %v434 = vld [vmem:[%s412 + $0x54] sm:$0xf]
      %v435 = vld [vmem:[%s412 + $0x58] sm:$0xf]
      %v436 = vld [vmem:[%s412 + $0x5c] sm:$0xf]
      %v437 = vld [vmem:[%s412 + $0x60] sm:$0xf]
      %v438 = vld [vmem:[%s412 + $0x64] sm:$0xf]
      %v439 = vld [vmem:[%s412 + $0x68] sm:$0xf]
      %v440 = vld [vmem:[%s412 + $0x6c] sm:$0xf]
      %v441 = vld [vmem:[%s412 + $0x70] sm:$0xf]
      %v442 = vld [vmem:[%s412 + $0x74] sm:$0xf]
      %v443 = vld [vmem:[%s412 + $0x78] sm:$0xf]
      %v444 = vld [vmem:[%s412 + $0x7c] sm:$0xf]
      %vm445 = vsmask.f32 7424
      %v447 = vshrl.u32 %v408, 16
      %v449 = vshll.u32 %v408, 16
      %v451 = vrot.slane %v449, 1
      %v452 = vor.u32 %v447, %v451
      %v454 = vshll.u32 %v410, 16
      %v456 = vrot.slane %v454, 1
      %v457 = vsel %vm445, %v452, %v456
      %v459 = vshrl.u32 %v409, 16
      %v461 = vshll.u32 %v409, 16
      %v463 = vrot.slane %v461, 1
      %v464 = vor.u32 %v459, %v463
      %v466 = vshll.u32 %v411, 16
      %v468 = vrot.slane %v466, 1
      %v469 = vsel %vm445, %v464, %v468
      %v470 = vshrl.u32 %v410, 16
      %v472 = vor.u32 %v470, %v456
      %v473 = vshrl.u32 %v411, 16
      %v475 = vor.u32 %v473, %v468
      %v512 = vunpack.c.l.b16 %v413
      %v513 = vunpack.c.l.b16 %v414
      %v514 = vunpack.c.l.b16 %v415
      %v515 = vunpack.c.l.b16 %v416
      %v516 = vunpack.c.l.b16 %v417
      %v517 = vunpack.c.l.b16 %v418
      %v518 = vunpack.c.l.b16 %v419
      %v519 = vunpack.c.l.b16 %v420
      %v520 = vunpack.c.l.b16 %v421
      %v521 = vunpack.c.l.b16 %v422
      %v522 = vunpack.c.l.b16 %v423
      %v523 = vunpack.c.l.b16 %v424
      %v524 = vunpack.c.l.b16 %v425
      %v525 = vunpack.c.l.b16 %v426
      %v526 = vunpack.c.l.b16 %v427
      %v527 = vunpack.c.l.b16 %v428
      %v528 = vunpack.c.l.b16 %v429
      %v529 = vunpack.c.l.b16 %v430
      %v530 = vunpack.c.l.b16 %v431
      %v531 = vunpack.c.l.b16 %v432
      %v532 = vunpack.c.l.b16 %v433
      %v533 = vunpack.c.l.b16 %v434
      %v534 = vunpack.c.l.b16 %v435
      %v535 = vunpack.c.l.b16 %v436
      %v536 = vunpack.c.l.b16 %v437
      %v537 = vunpack.c.l.b16 %v438
      %v538 = vunpack.c.l.b16 %v439
      %v539 = vunpack.c.l.b16 %v440
      %v540 = vunpack.c.l.b16 %v441
      %v541 = vunpack.c.l.b16 %v442
      %v542 = vunpack.c.l.b16 %v443
      %v543 = vunpack.c.l.b16 %v444
      %v544 = vpack.c.b16 %v513, %v512
      %v545 = vpack.c.b16 %v515, %v514
      %v546 = vpack.c.b16 %v517, %v516
      %v547 = vpack.c.b16 %v519, %v518
      %v548 = vpack.c.b16 %v521, %v520
      %v549 = vpack.c.b16 %v523, %v522
      %v550 = vpack.c.b16 %v525, %v524
      %v551 = vpack.c.b16 %v527, %v526
      %v552 = vpack.c.b16 %v529, %v528
      %v553 = vpack.c.b16 %v531, %v530
      %v554 = vpack.c.b16 %v533, %v532
      %v555 = vpack.c.b16 %v535, %v534
      %v556 = vpack.c.b16 %v537, %v536
      %v557 = vpack.c.b16 %v539, %v538
      %v558 = vpack.c.b16 %v541, %v540
      %v559 = vpack.c.b16 %v543, %v542
      %576 = vmatpush.bf16.msra.mxu0 %v551
      %577 = vmatpush.bf16.msra.mxu0 %v550
      %578 = vmatpush.bf16.msra.mxu0 %v549
      %579 = vmatpush.bf16.msra.mxu0 %v548
      %580 = vmatpush.bf16.msra.mxu0 %v547
      %581 = vmatpush.bf16.msra.mxu0 %v546
      %582 = vmatpush.bf16.msra.mxu0 %v545
      %583 = vmatpush.bf16.msra.mxu0 %v544
      %584 = vmatmul.bf16.gmra.mxu0 %v457
      %v585 = vpop.f32.mrf.mxu0
      %v586 = vadd.f32 0.0, %v585
      %v587 = vpop.f32.mrf.mxu0
      %v588 = vadd.f32 0.0, %v587
      %589 = vmatmul.bf16.gmra.mxu0 %v472
      %v590 = vpop.f32.mrf.mxu0
      %v591 = vadd.f32 0.0, %v590
      %v592 = vpop.f32.mrf.mxu0
      %593 = vdwg.mxu0
      %594 = vmatpush.bf16.msra.mxu0 %v559
      %595 = vmatpush.bf16.msra.mxu0 %v558
      %596 = vmatpush.bf16.msra.mxu0 %v557
      %597 = vmatpush.bf16.msra.mxu0 %v556
      %598 = vmatpush.bf16.msra.mxu0 %v555
      %599 = vmatpush.bf16.msra.mxu0 %v554
      %600 = vmatpush.bf16.msra.mxu0 %v553
      %601 = vmatpush.bf16.msra.mxu0 %v552
      %602 = vmatmul.bf16.gmra.mxu0 %v469
      %v603 = vpop.f32.mrf.mxu0
      %v604 = vadd.f32 %v586, %v603
      %v605 = vpop.f32.mrf.mxu0
      %v606 = vadd.f32 %v588, %v605
      %607 = vmatmul.bf16.gmra.mxu0 %v475
      %v608 = vpop.f32.mrf.mxu0
      %v609 = vadd.f32 %v591, %v608
      %v610 = vpop.f32.mrf.mxu0
      %611 = vdwg.mxu0
      %v612 = vadd.f32 %v397, %v604
      %v613 = vadd.f32 %v398, %v606
      %v614 = vadd.f32 %v399, %v609
      %v615 = vld [vmem:[%s207] sm:$0xfc]
      %v616 = vld [vmem:[%s207 + $0x8] sm:$0xfc]
      %v617 = vld [vmem:[%s207 + $0x30] sm:$0x3]
      %v618 = vld [vmem:[%s207 + $0x38] sm:$0x3]
      %v619 = vpack.c.bf16 %v402, %v615
      %v620 = vpack.c.bf16 %v403, %v616
      %v621 = vpack.c.bf16 %v617, %v404
      %v622 = vpack.c.bf16 %v618, %v405
      %s623 = scalar_lea.vmem %s1, 256
      %v624 = vld [vmem:[%s623] sm:$0xf]
      %v625 = vld [vmem:[%s623 + $0x4] sm:$0xf]
      %v626 = vld [vmem:[%s623 + $0x8] sm:$0xf]
      %v627 = vld [vmem:[%s623 + $0xc] sm:$0xf]
      %v628 = vld [vmem:[%s623 + $0x10] sm:$0xf]
      %v629 = vld [vmem:[%s623 + $0x14] sm:$0xf]
      %v630 = vld [vmem:[%s623 + $0x18] sm:$0xf]
      %v631 = vld [vmem:[%s623 + $0x1c] sm:$0xf]
      %v632 = vld [vmem:[%s623 + $0x20] sm:$0xf]
      %v633 = vld [vmem:[%s623 + $0x24] sm:$0xf]
      %v634 = vld [vmem:[%s623 + $0x28] sm:$0xf]
      %v635 = vld [vmem:[%s623 + $0x2c] sm:$0xf]
      %v636 = vld [vmem:[%s623 + $0x30] sm:$0xf]
      %v637 = vld [vmem:[%s623 + $0x34] sm:$0xf]
      %v638 = vld [vmem:[%s623 + $0x38] sm:$0xf]
      %v639 = vld [vmem:[%s623 + $0x3c] sm:$0xf]
      %v640 = vld [vmem:[%s623 + $0x40] sm:$0xf]
      %v641 = vld [vmem:[%s623 + $0x44] sm:$0xf]
      %v642 = vld [vmem:[%s623 + $0x48] sm:$0xf]
      %v643 = vld [vmem:[%s623 + $0x4c] sm:$0xf]
      %v644 = vld [vmem:[%s623 + $0x50] sm:$0xf]
      %v645 = vld [vmem:[%s623 + $0x54] sm:$0xf]
      %v646 = vld [vmem:[%s623 + $0x58] sm:$0xf]
      %v647 = vld [vmem:[%s623 + $0x5c] sm:$0xf]
      %v648 = vld [vmem:[%s623 + $0x60] sm:$0xf]
      %v649 = vld [vmem:[%s623 + $0x64] sm:$0xf]
      %v650 = vld [vmem:[%s623 + $0x68] sm:$0xf]
      %v651 = vld [vmem:[%s623 + $0x6c] sm:$0xf]
      %v652 = vld [vmem:[%s623 + $0x70] sm:$0xf]
      %v653 = vld [vmem:[%s623 + $0x74] sm:$0xf]
      %v654 = vld [vmem:[%s623 + $0x78] sm:$0xf]
      %v655 = vld [vmem:[%s623 + $0x7c] sm:$0xf]
      %vm660 = vcmask 1046528
      %v661 = vrot.slane %v619, 1
      %v662 = vrot.slane %v621, 1
      %v663 = vsel %vm660, %v661, %v662
      %v664 = vrot.slane %v620, 1
      %v665 = vrot.slane %v622, 1
      %v666 = vsel %vm660, %v664, %v665
      %v703 = vunpack.c.l.b16 %v624
      %v704 = vunpack.c.l.b16 %v625
      %v705 = vunpack.c.l.b16 %v626
      %v706 = vunpack.c.l.b16 %v627
      %v707 = vunpack.c.l.b16 %v628
      %v708 = vunpack.c.l.b16 %v629
      %v709 = vunpack.c.l.b16 %v630
      %v710 = vunpack.c.l.b16 %v631
      %v711 = vunpack.c.l.b16 %v632
      %v712 = vunpack.c.l.b16 %v633
      %v713 = vunpack.c.l.b16 %v634
      %v714 = vunpack.c.l.b16 %v635
      %v715 = vunpack.c.l.b16 %v636
      %v716 = vunpack.c.l.b16 %v637
      %v717 = vunpack.c.l.b16 %v638
      %v718 = vunpack.c.l.b16 %v639
      %v719 = vunpack.c.l.b16 %v640
      %v720 = vunpack.c.l.b16 %v641
      %v721 = vunpack.c.l.b16 %v642
      %v722 = vunpack.c.l.b16 %v643
      %v723 = vunpack.c.l.b16 %v644
      %v724 = vunpack.c.l.b16 %v645
      %v725 = vunpack.c.l.b16 %v646
      %v726 = vunpack.c.l.b16 %v647
      %v727 = vunpack.c.l.b16 %v648
      %v728 = vunpack.c.l.b16 %v649
      %v729 = vunpack.c.l.b16 %v650
      %v730 = vunpack.c.l.b16 %v651
      %v731 = vunpack.c.l.b16 %v652
      %v732 = vunpack.c.l.b16 %v653
      %v733 = vunpack.c.l.b16 %v654
      %v734 = vunpack.c.l.b16 %v655
      %v735 = vpack.c.b16 %v704, %v703
      %v736 = vpack.c.b16 %v706, %v705
      %v737 = vpack.c.b16 %v708, %v707
      %v738 = vpack.c.b16 %v710, %v709
      %v739 = vpack.c.b16 %v712, %v711
      %v740 = vpack.c.b16 %v714, %v713
      %v741 = vpack.c.b16 %v716, %v715
      %v742 = vpack.c.b16 %v718, %v717
      %v743 = vpack.c.b16 %v720, %v719
      %v744 = vpack.c.b16 %v722, %v721
      %v745 = vpack.c.b16 %v724, %v723
      %v746 = vpack.c.b16 %v726, %v725
      %v747 = vpack.c.b16 %v728, %v727
      %v748 = vpack.c.b16 %v730, %v729
      %v749 = vpack.c.b16 %v732, %v731
      %v750 = vpack.c.b16 %v734, %v733
      %767 = vmatpush.bf16.msra.mxu0 %v742
      %768 = vmatpush.bf16.msra.mxu0 %v741
      %769 = vmatpush.bf16.msra.mxu0 %v740
      %770 = vmatpush.bf16.msra.mxu0 %v739
      %771 = vmatpush.bf16.msra.mxu0 %v738
      %772 = vmatpush.bf16.msra.mxu0 %v737
      %773 = vmatpush.bf16.msra.mxu0 %v736
      %774 = vmatpush.bf16.msra.mxu0 %v735
      %775 = vmatmul.bf16.gmra.mxu0 %v663
      %v776 = vpop.f32.mrf.mxu0
      %v777 = vadd.f32 0.0, %v776
      %v778 = vpop.f32.mrf.mxu0
      %v779 = vadd.f32 0.0, %v778
      %780 = vmatmul.bf16.gmra.mxu0 %v662
      %v781 = vpop.f32.mrf.mxu0
      %v782 = vadd.f32 0.0, %v781
      %v783 = vpop.f32.mrf.mxu0
      %784 = vdwg.mxu0
      %785 = vmatpush.bf16.msra.mxu0 %v750
      %786 = vmatpush.bf16.msra.mxu0 %v749
      %787 = vmatpush.bf16.msra.mxu0 %v748
      %788 = vmatpush.bf16.msra.mxu0 %v747
      %789 = vmatpush.bf16.msra.mxu0 %v746
      %790 = vmatpush.bf16.msra.mxu0 %v745
      %791 = vmatpush.bf16.msra.mxu0 %v744
      %792 = vmatpush.bf16.msra.mxu0 %v743
      %793 = vmatmul.bf16.gmra.mxu0 %v666
      %v794 = vpop.f32.mrf.mxu0
      %v795 = vadd.f32 %v777, %v794
      %v796 = vpop.f32.mrf.mxu0
      %v797 = vadd.f32 %v779, %v796
      %798 = vmatmul.bf16.gmra.mxu0 %v665
      %v799 = vpop.f32.mrf.mxu0
      %v800 = vadd.f32 %v782, %v799
      %v801 = vpop.f32.mrf.mxu0
      %802 = vdwg.mxu0
      %v803 = vadd.f32 %v612, %v795
      %v804 = vadd.f32 %v613, %v797
      %v805 = vadd.f32 %v614, %v800
      %v806 = vld [vmem:[%s207] sm:$0xc0]
      %v807 = vld [vmem:[%s207 + $0x8] sm:$0xc0]
      %v808 = vld [vmem:[%s207 + $0x30] sm:$0x3f]
      %v809 = vld [vmem:[%s207 + $0x38] sm:$0x3f]
      %v810 = vpack.c.bf16 %v402, %v806
      %v811 = vpack.c.bf16 %v403, %v807
      %v812 = vpack.c.bf16 %v808, %v404
      %v813 = vpack.c.bf16 %v809, %v405
      %s814 = scalar_lea.vmem %s1, 384
      %v815 = vld [vmem:[%s814] sm:$0xf]
      %v816 = vld [vmem:[%s814 + $0x4] sm:$0xf]
      %v817 = vld [vmem:[%s814 + $0x8] sm:$0xf]
      %v818 = vld [vmem:[%s814 + $0xc] sm:$0xf]
      %v819 = vld [vmem:[%s814 + $0x10] sm:$0xf]
      %v820 = vld [vmem:[%s814 + $0x14] sm:$0xf]
      %v821 = vld [vmem:[%s814 + $0x18] sm:$0xf]
      %v822 = vld [vmem:[%s814 + $0x1c] sm:$0xf]
      %v823 = vld [vmem:[%s814 + $0x20] sm:$0xf]
      %v824 = vld [vmem:[%s814 + $0x24] sm:$0xf]
      %v825 = vld [vmem:[%s814 + $0x28] sm:$0xf]
      %v826 = vld [vmem:[%s814 + $0x2c] sm:$0xf]
      %v827 = vld [vmem:[%s814 + $0x30] sm:$0xf]
      %v828 = vld [vmem:[%s814 + $0x34] sm:$0xf]
      %v829 = vld [vmem:[%s814 + $0x38] sm:$0xf]
      %v830 = vld [vmem:[%s814 + $0x3c] sm:$0xf]
      %v831 = vld [vmem:[%s814 + $0x40] sm:$0xf]
      %v832 = vld [vmem:[%s814 + $0x44] sm:$0xf]
      %v833 = vld [vmem:[%s814 + $0x48] sm:$0xf]
      %v834 = vld [vmem:[%s814 + $0x4c] sm:$0xf]
      %v835 = vld [vmem:[%s814 + $0x50] sm:$0xf]
      %v836 = vld [vmem:[%s814 + $0x54] sm:$0xf]
      %v837 = vld [vmem:[%s814 + $0x58] sm:$0xf]
      %v838 = vld [vmem:[%s814 + $0x5c] sm:$0xf]
      %v839 = vld [vmem:[%s814 + $0x60] sm:$0xf]
      %v840 = vld [vmem:[%s814 + $0x64] sm:$0xf]
      %v841 = vld [vmem:[%s814 + $0x68] sm:$0xf]
      %v842 = vld [vmem:[%s814 + $0x6c] sm:$0xf]
      %v843 = vld [vmem:[%s814 + $0x70] sm:$0xf]
      %v844 = vld [vmem:[%s814 + $0x74] sm:$0xf]
      %v845 = vld [vmem:[%s814 + $0x78] sm:$0xf]
      %v846 = vld [vmem:[%s814 + $0x7c] sm:$0xf]
      %vm851 = vcmask 1044480
      %v852 = vrot.slane %v810, 3
      %v853 = vrot.slane %v812, 3
      %v854 = vsel %vm851, %v852, %v853
      %v855 = vrot.slane %v811, 3
      %v856 = vrot.slane %v813, 3
      %v857 = vsel %vm851, %v855, %v856
      %v894 = vunpack.c.l.b16 %v815
      %v895 = vunpack.c.l.b16 %v816
      %v896 = vunpack.c.l.b16 %v817
      %v897 = vunpack.c.l.b16 %v818
      %v898 = vunpack.c.l.b16 %v819
      %v899 = vunpack.c.l.b16 %v820
      %v900 = vunpack.c.l.b16 %v821
      %v901 = vunpack.c.l.b16 %v822
      %v902 = vunpack.c.l.b16 %v823
      %v903 = vunpack.c.l.b16 %v824
      %v904 = vunpack.c.l.b16 %v825
      %v905 = vunpack.c.l.b16 %v826
      %v906 = vunpack.c.l.b16 %v827
      %v907 = vunpack.c.l.b16 %v828
      %v908 = vunpack.c.l.b16 %v829
      %v909 = vunpack.c.l.b16 %v830
      %v910 = vunpack.c.l.b16 %v831
      %v911 = vunpack.c.l.b16 %v832
      %v912 = vunpack.c.l.b16 %v833
      %v913 = vunpack.c.l.b16 %v834
      %v914 = vunpack.c.l.b16 %v835
      %v915 = vunpack.c.l.b16 %v836
      %v916 = vunpack.c.l.b16 %v837
      %v917 = vunpack.c.l.b16 %v838
      %v918 = vunpack.c.l.b16 %v839
      %v919 = vunpack.c.l.b16 %v840
      %v920 = vunpack.c.l.b16 %v841
      %v921 = vunpack.c.l.b16 %v842
      %v922 = vunpack.c.l.b16 %v843
      %v923 = vunpack.c.l.b16 %v844
      %v924 = vunpack.c.l.b16 %v845
      %v925 = vunpack.c.l.b16 %v846
      %v926 = vpack.c.b16 %v895, %v894
      %v927 = vpack.c.b16 %v897, %v896
      %v928 = vpack.c.b16 %v899, %v898
      %v929 = vpack.c.b16 %v901, %v900
      %v930 = vpack.c.b16 %v903, %v902
      %v931 = vpack.c.b16 %v905, %v904
      %v932 = vpack.c.b16 %v907, %v906
      %v933 = vpack.c.b16 %v909, %v908
      %v934 = vpack.c.b16 %v911, %v910
      %v935 = vpack.c.b16 %v913, %v912
      %v936 = vpack.c.b16 %v915, %v914
      %v937 = vpack.c.b16 %v917, %v916
      %v938 = vpack.c.b16 %v919, %v918
      %v939 = vpack.c.b16 %v921, %v920
      %v940 = vpack.c.b16 %v923, %v922
      %v941 = vpack.c.b16 %v925, %v924
      %958 = vmatpush.bf16.msra.mxu0 %v933
      %959 = vmatpush.bf16.msra.mxu0 %v932
      %960 = vmatpush.bf16.msra.mxu0 %v931
      %961 = vmatpush.bf16.msra.mxu0 %v930
      %962 = vmatpush.bf16.msra.mxu0 %v929
      %963 = vmatpush.bf16.msra.mxu0 %v928
      %964 = vmatpush.bf16.msra.mxu0 %v927
      %965 = vmatpush.bf16.msra.mxu0 %v926
      %966 = vmatmul.bf16.gmra.mxu0 %v854
      %v967 = vpop.f32.mrf.mxu0
      %v968 = vadd.f32 0.0, %v967
      %v969 = vpop.f32.mrf.mxu0
      %v970 = vadd.f32 0.0, %v969
      %971 = vmatmul.bf16.gmra.mxu0 %v853
      %v972 = vpop.f32.mrf.mxu0
      %v973 = vadd.f32 0.0, %v972
      %v974 = vpop.f32.mrf.mxu0
      %975 = vdwg.mxu0
      %976 = vmatpush.bf16.msra.mxu0 %v941
      %977 = vmatpush.bf16.msra.mxu0 %v940
      %978 = vmatpush.bf16.msra.mxu0 %v939
      %979 = vmatpush.bf16.msra.mxu0 %v938
      %980 = vmatpush.bf16.msra.mxu0 %v937
      %981 = vmatpush.bf16.msra.mxu0 %v936
      %982 = vmatpush.bf16.msra.mxu0 %v935
      %983 = vmatpush.bf16.msra.mxu0 %v934
      %984 = vmatmul.bf16.gmra.mxu0 %v857
      %v985 = vpop.f32.mrf.mxu0
      %v986 = vadd.f32 %v968, %v985
      %v987 = vpop.f32.mrf.mxu0
      %v988 = vadd.f32 %v970, %v987
      %989 = vmatmul.bf16.gmra.mxu0 %v856
      %v990 = vpop.f32.mrf.mxu0
      %v991 = vadd.f32 %v973, %v990
      %v992 = vpop.f32.mrf.mxu0
      %993 = vdwg.mxu0
      %v994 = vadd.f32 %v803, %v986
      %v995 = vadd.f32 %v804, %v988
      %v996 = vadd.f32 %v805, %v991
      %v997 = vld [vmem:[%s207] sm:$0x80]
      %v998 = vld [vmem:[%s207 + $0x8] sm:$0x80]
      %v999 = vld [vmem:[%s207 + $0x30] sm:$0x7f]
      %v1000 = vld [vmem:[%s207 + $0x38] sm:$0x7f]
      %v1001 = vpack.c.bf16 %v402, %v997
      %v1002 = vpack.c.bf16 %v403, %v998
      %v1003 = vpack.c.bf16 %v999, %v404
      %v1004 = vpack.c.bf16 %v1000, %v405
      %s1005 = scalar_lea.vmem %s1, 512
      %v1006 = vld [vmem:[%s1005] sm:$0xf]
      %v1007 = vld [vmem:[%s1005 + $0x4] sm:$0xf]
      %v1008 = vld [vmem:[%s1005 + $0x8] sm:$0xf]
      %v1009 = vld [vmem:[%s1005 + $0xc] sm:$0xf]
      %v1010 = vld [vmem:[%s1005 + $0x10] sm:$0xf]
      %v1011 = vld [vmem:[%s1005 + $0x14] sm:$0xf]
      %v1012 = vld [vmem:[%s1005 + $0x18] sm:$0xf]
      %v1013 = vld [vmem:[%s1005 + $0x1c] sm:$0xf]
      %v1014 = vld [vmem:[%s1005 + $0x20] sm:$0xf]
      %v1015 = vld [vmem:[%s1005 + $0x24] sm:$0xf]
      %v1016 = vld [vmem:[%s1005 + $0x28] sm:$0xf]
      %v1017 = vld [vmem:[%s1005 + $0x2c] sm:$0xf]
      %v1018 = vld [vmem:[%s1005 + $0x30] sm:$0xf]
      %v1019 = vld [vmem:[%s1005 + $0x34] sm:$0xf]
      %v1020 = vld [vmem:[%s1005 + $0x38] sm:$0xf]
      %v1021 = vld [vmem:[%s1005 + $0x3c] sm:$0xf]
      %v1022 = vld [vmem:[%s1005 + $0x40] sm:$0xf]
      %v1023 = vld [vmem:[%s1005 + $0x44] sm:$0xf]
      %v1024 = vld [vmem:[%s1005 + $0x48] sm:$0xf]
      %v1025 = vld [vmem:[%s1005 + $0x4c] sm:$0xf]
      %v1026 = vld [vmem:[%s1005 + $0x50] sm:$0xf]
      %v1027 = vld [vmem:[%s1005 + $0x54] sm:$0xf]
      %v1028 = vld [vmem:[%s1005 + $0x58] sm:$0xf]
      %v1029 = vld [vmem:[%s1005 + $0x5c] sm:$0xf]
      %v1030 = vld [vmem:[%s1005 + $0x60] sm:$0xf]
      %v1031 = vld [vmem:[%s1005 + $0x64] sm:$0xf]
      %v1032 = vld [vmem:[%s1005 + $0x68] sm:$0xf]
      %v1033 = vld [vmem:[%s1005 + $0x6c] sm:$0xf]
      %v1034 = vld [vmem:[%s1005 + $0x70] sm:$0xf]
      %v1035 = vld [vmem:[%s1005 + $0x74] sm:$0xf]
      %v1036 = vld [vmem:[%s1005 + $0x78] sm:$0xf]
      %v1037 = vld [vmem:[%s1005 + $0x7c] sm:$0xf]
      %vm1038 = vsmask.f32 4352
      %v1040 = vshrl.u32 %v1001, 16
      %v1042 = vrot.slane %v1040, 3
      %v1043 = vshll.u32 %v1001, 16
      %v1045 = vrot.slane %v1043, 4
      %v1046 = vor.u32 %v1042, %v1045
      %v1048 = vshrl.u32 %v1003, 16
      %v1050 = vrot.slane %v1048, 3
      %v1051 = vshll.u32 %v1003, 16
      %v1053 = vrot.slane %v1051, 4
      %v1054 = vor.u32 %v1050, %v1053
      %v1055 = vsel %vm1038, %v1046, %v1054
      %v1057 = vshrl.u32 %v1002, 16
      %v1059 = vrot.slane %v1057, 3
      %v1060 = vshll.u32 %v1002, 16
      %v1062 = vrot.slane %v1060, 4
      %v1063 = vor.u32 %v1059, %v1062
      %v1065 = vshrl.u32 %v1004, 16
      %v1067 = vrot.slane %v1065, 3
      %v1068 = vshll.u32 %v1004, 16
      %v1070 = vrot.slane %v1068, 4
      %v1071 = vor.u32 %v1067, %v1070
      %v1072 = vsel %vm1038, %v1063, %v1071
      %v1109 = vunpack.c.l.b16 %v1006
      %v1110 = vunpack.c.l.b16 %v1007
      %v1111 = vunpack.c.l.b16 %v1008
      %v1112 = vunpack.c.l.b16 %v1009
      %v1113 = vunpack.c.l.b16 %v1010
      %v1114 = vunpack.c.l.b16 %v1011
      %v1115 = vunpack.c.l.b16 %v1012
      %v1116 = vunpack.c.l.b16 %v1013
      %v1117 = vunpack.c.l.b16 %v1014
      %v1118 = vunpack.c.l.b16 %v1015
      %v1119 = vunpack.c.l.b16 %v1016
      %v1120 = vunpack.c.l.b16 %v1017
      %v1121 = vunpack.c.l.b16 %v1018
      %v1122 = vunpack.c.l.b16 %v1019
      %v1123 = vunpack.c.l.b16 %v1020
      %v1124 = vunpack.c.l.b16 %v1021
      %v1125 = vunpack.c.l.b16 %v1022
      %v1126 = vunpack.c.l.b16 %v1023
      %v1127 = vunpack.c.l.b16 %v1024
      %v1128 = vunpack.c.l.b16 %v1025
      %v1129 = vunpack.c.l.b16 %v1026
      %v1130 = vunpack.c.l.b16 %v1027
      %v1131 = vunpack.c.l.b16 %v1028
      %v1132 = vunpack.c.l.b16 %v1029
      %v1133 = vunpack.c.l.b16 %v1030
      %v1134 = vunpack.c.l.b16 %v1031
      %v1135 = vunpack.c.l.b16 %v1032
      %v1136 = vunpack.c.l.b16 %v1033
      %v1137 = vunpack.c.l.b16 %v1034
      %v1138 = vunpack.c.l.b16 %v1035
      %v1139 = vunpack.c.l.b16 %v1036
      %v1140 = vunpack.c.l.b16 %v1037
      %v1141 = vpack.c.b16 %v1110, %v1109
      %v1142 = vpack.c.b16 %v1112, %v1111
      %v1143 = vpack.c.b16 %v1114, %v1113
      %v1144 = vpack.c.b16 %v1116, %v1115
      %v1145 = vpack.c.b16 %v1118, %v1117
      %v1146 = vpack.c.b16 %v1120, %v1119
      %v1147 = vpack.c.b16 %v1122, %v1121
      %v1148 = vpack.c.b16 %v1124, %v1123
      %v1149 = vpack.c.b16 %v1126, %v1125
      %v1150 = vpack.c.b16 %v1128, %v1127
      %v1151 = vpack.c.b16 %v1130, %v1129
      %v1152 = vpack.c.b16 %v1132, %v1131
      %v1153 = vpack.c.b16 %v1134, %v1133
      %v1154 = vpack.c.b16 %v1136, %v1135
      %v1155 = vpack.c.b16 %v1138, %v1137
      %v1156 = vpack.c.b16 %v1140, %v1139
      %1173 = vmatpush.bf16.msra.mxu0 %v1148
      %1174 = vmatpush.bf16.msra.mxu0 %v1147
      %1175 = vmatpush.bf16.msra.mxu0 %v1146
      %1176 = vmatpush.bf16.msra.mxu0 %v1145
      %1177 = vmatpush.bf16.msra.mxu0 %v1144
      %1178 = vmatpush.bf16.msra.mxu0 %v1143
      %1179 = vmatpush.bf16.msra.mxu0 %v1142
      %1180 = vmatpush.bf16.msra.mxu0 %v1141
      %1181 = vmatmul.bf16.gmra.mxu0 %v1055
      %v1182 = vpop.f32.mrf.mxu0
      %v1183 = vadd.f32 0.0, %v1182
      %v1184 = vpop.f32.mrf.mxu0
      %v1185 = vadd.f32 0.0, %v1184
      %1186 = vmatmul.bf16.gmra.mxu0 %v1054
      %v1187 = vpop.f32.mrf.mxu0
      %v1188 = vadd.f32 0.0, %v1187
      %v1189 = vpop.f32.mrf.mxu0
      %1190 = vdwg.mxu0
      %1191 = vmatpush.bf16.msra.mxu0 %v1156
      %1192 = vmatpush.bf16.msra.mxu0 %v1155
      %1193 = vmatpush.bf16.msra.mxu0 %v1154
      %1194 = vmatpush.bf16.msra.mxu0 %v1153
      %1195 = vmatpush.bf16.msra.mxu0 %v1152
      %1196 = vmatpush.bf16.msra.mxu0 %v1151
      %1197 = vmatpush.bf16.msra.mxu0 %v1150
      %1198 = vmatpush.bf16.msra.mxu0 %v1149
      %1199 = vmatmul.bf16.gmra.mxu0 %v1072
      %v1200 = vpop.f32.mrf.mxu0
      %v1201 = vadd.f32 %v1183, %v1200
      %v1202 = vpop.f32.mrf.mxu0
      %v1203 = vadd.f32 %v1185, %v1202
      %1204 = vmatmul.bf16.gmra.mxu0 %v1071
      %v1205 = vpop.f32.mrf.mxu0
      %v1206 = vadd.f32 %v1188, %v1205
      %v1207 = vpop.f32.mrf.mxu0
      %1208 = vdwg.mxu0
      %v1209 = vadd.f32 %v994, %v1201
      %v1210 = vadd.f32 %v995, %v1203
      %v1211 = vadd.f32 %v996, %v1206
      %v1212 = vld [vmem:[%s207 + $0x30] sm:$0xff]
      %v1213 = vld [vmem:[%s207 + $0x38] sm:$0xff]
      %v1214 = vpack.c.bf16 %v404, %v402
      %v1215 = vpack.c.bf16 %v405, %v403
      %v1216 = vpack.c.bf16 %v1212, %v1212
      %v1217 = vpack.c.bf16 %v1213, %v1213
      %s1218 = scalar_lea.vmem %s1, 640
      %v1219 = vld [vmem:[%s1218] sm:$0xf]
      %v1220 = vld [vmem:[%s1218 + $0x4] sm:$0xf]
      %v1221 = vld [vmem:[%s1218 + $0x8] sm:$0xf]
      %v1222 = vld [vmem:[%s1218 + $0xc] sm:$0xf]
      %v1223 = vld [vmem:[%s1218 + $0x10] sm:$0xf]
      %v1224 = vld [vmem:[%s1218 + $0x14] sm:$0xf]
      %v1225 = vld [vmem:[%s1218 + $0x18] sm:$0xf]
      %v1226 = vld [vmem:[%s1218 + $0x1c] sm:$0xf]
      %v1227 = vld [vmem:[%s1218 + $0x20] sm:$0xf]
      %v1228 = vld [vmem:[%s1218 + $0x24] sm:$0xf]
      %v1229 = vld [vmem:[%s1218 + $0x28] sm:$0xf]
      %v1230 = vld [vmem:[%s1218 + $0x2c] sm:$0xf]
      %v1231 = vld [vmem:[%s1218 + $0x30] sm:$0xf]
      %v1232 = vld [vmem:[%s1218 + $0x34] sm:$0xf]
      %v1233 = vld [vmem:[%s1218 + $0x38] sm:$0xf]
      %v1234 = vld [vmem:[%s1218 + $0x3c] sm:$0xf]
      %v1235 = vld [vmem:[%s1218 + $0x40] sm:$0xf]
      %v1236 = vld [vmem:[%s1218 + $0x44] sm:$0xf]
      %v1237 = vld [vmem:[%s1218 + $0x48] sm:$0xf]
      %v1238 = vld [vmem:[%s1218 + $0x4c] sm:$0xf]
      %v1239 = vld [vmem:[%s1218 + $0x50] sm:$0xf]
      %v1240 = vld [vmem:[%s1218 + $0x54] sm:$0xf]
      %v1241 = vld [vmem:[%s1218 + $0x58] sm:$0xf]
      %v1242 = vld [vmem:[%s1218 + $0x5c] sm:$0xf]
      %v1243 = vld [vmem:[%s1218 + $0x60] sm:$0xf]
      %v1244 = vld [vmem:[%s1218 + $0x64] sm:$0xf]
      %v1245 = vld [vmem:[%s1218 + $0x68] sm:$0xf]
      %v1246 = vld [vmem:[%s1218 + $0x6c] sm:$0xf]
      %v1247 = vld [vmem:[%s1218 + $0x70] sm:$0xf]
      %v1248 = vld [vmem:[%s1218 + $0x74] sm:$0xf]
      %v1249 = vld [vmem:[%s1218 + $0x78] sm:$0xf]
      %v1250 = vld [vmem:[%s1218 + $0x7c] sm:$0xf]
      %v1283 = vunpack.c.l.b16 %v1219
      %v1284 = vunpack.c.l.b16 %v1220
      %v1285 = vunpack.c.l.b16 %v1221
      %v1286 = vunpack.c.l.b16 %v1222
      %v1287 = vunpack.c.l.b16 %v1223
      %v1288 = vunpack.c.l.b16 %v1224
      %v1289 = vunpack.c.l.b16 %v1225
      %v1290 = vunpack.c.l.b16 %v1226
      %v1291 = vunpack.c.l.b16 %v1227
      %v1292 = vunpack.c.l.b16 %v1228
      %v1293 = vunpack.c.l.b16 %v1229
      %v1294 = vunpack.c.l.b16 %v1230
      %v1295 = vunpack.c.l.b16 %v1231
      %v1296 = vunpack.c.l.b16 %v1232
      %v1297 = vunpack.c.l.b16 %v1233
      %v1298 = vunpack.c.l.b16 %v1234
      %v1299 = vunpack.c.l.b16 %v1235
      %v1300 = vunpack.c.l.b16 %v1236
      %v1301 = vunpack.c.l.b16 %v1237
      %v1302 = vunpack.c.l.b16 %v1238
      %v1303 = vunpack.c.l.b16 %v1239
      %v1304 = vunpack.c.l.b16 %v1240
      %v1305 = vunpack.c.l.b16 %v1241
      %v1306 = vunpack.c.l.b16 %v1242
      %v1307 = vunpack.c.l.b16 %v1243
      %v1308 = vunpack.c.l.b16 %v1244
      %v1309 = vunpack.c.l.b16 %v1245
      %v1310 = vunpack.c.l.b16 %v1246
      %v1311 = vunpack.c.l.b16 %v1247
      %v1312 = vunpack.c.l.b16 %v1248
      %v1313 = vunpack.c.l.b16 %v1249
      %v1314 = vunpack.c.l.b16 %v1250
      %v1315 = vpack.c.b16 %v1284, %v1283
      %v1316 = vpack.c.b16 %v1286, %v1285
      %v1317 = vpack.c.b16 %v1288, %v1287
      %v1318 = vpack.c.b16 %v1290, %v1289
      %v1319 = vpack.c.b16 %v1292, %v1291
      %v1320 = vpack.c.b16 %v1294, %v1293
      %v1321 = vpack.c.b16 %v1296, %v1295
      %v1322 = vpack.c.b16 %v1298, %v1297
      %v1323 = vpack.c.b16 %v1300, %v1299
      %v1324 = vpack.c.b16 %v1302, %v1301
      %v1325 = vpack.c.b16 %v1304, %v1303
      %v1326 = vpack.c.b16 %v1306, %v1305
      %v1327 = vpack.c.b16 %v1308, %v1307
      %v1328 = vpack.c.b16 %v1310, %v1309
      %v1329 = vpack.c.b16 %v1312, %v1311
      %v1330 = vpack.c.b16 %v1314, %v1313
      %1347 = vmatpush.bf16.msra.mxu0 %v1322
      %1348 = vmatpush.bf16.msra.mxu0 %v1321
      %1349 = vmatpush.bf16.msra.mxu0 %v1320
      %1350 = vmatpush.bf16.msra.mxu0 %v1319
      %1351 = vmatpush.bf16.msra.mxu0 %v1318
      %1352 = vmatpush.bf16.msra.mxu0 %v1317
      %1353 = vmatpush.bf16.msra.mxu0 %v1316
      %1354 = vmatpush.bf16.msra.mxu0 %v1315
      %1355 = vmatmul.bf16.gmra.mxu0 %v1214
      %v1356 = vpop.f32.mrf.mxu0
      %v1357 = vadd.f32 0.0, %v1356
      %v1358 = vpop.f32.mrf.mxu0
      %v1359 = vadd.f32 0.0, %v1358
      %1360 = vmatmul.bf16.gmra.mxu0 %v1216
      %v1361 = vpop.f32.mrf.mxu0
      %v1362 = vadd.f32 0.0, %v1361
      %v1363 = vpop.f32.mrf.mxu0
      %1364 = vdwg.mxu0
      %1365 = vmatpush.bf16.msra.mxu0 %v1330
      %1366 = vmatpush.bf16.msra.mxu0 %v1329
      %1367 = vmatpush.bf16.msra.mxu0 %v1328
      %1368 = vmatpush.bf16.msra.mxu0 %v1327
      %1369 = vmatpush.bf16.msra.mxu0 %v1326
      %1370 = vmatpush.bf16.msra.mxu0 %v1325
      %1371 = vmatpush.bf16.msra.mxu0 %v1324
      %1372 = vmatpush.bf16.msra.mxu0 %v1323
      %1373 = vmatmul.bf16.gmra.mxu0 %v1215
      %v1374 = vpop.f32.mrf.mxu0
      %v1375 = vadd.f32 %v1357, %v1374
      %v1376 = vpop.f32.mrf.mxu0
      %v1377 = vadd.f32 %v1359, %v1376
      %1378 = vmatmul.bf16.gmra.mxu0 %v1217
      %v1379 = vpop.f32.mrf.mxu0
      %v1380 = vadd.f32 %v1362, %v1379
      %v1381 = vpop.f32.mrf.mxu0
      %1382 = vdwg.mxu0
      %v1383 = vadd.f32 %v1209, %v1375
      %v1384 = vadd.f32 %v1210, %v1377
      %v1385 = vadd.f32 %v1211, %v1380
      %v1386 = vld [vmem:[%s207 + $0x10] sm:$0xf0]
      %v1387 = vld [vmem:[%s207 + $0x18] sm:$0xf0]
      %v1388 = vld [vmem:[%s207 + $0x20] sm:$0xff]
      %v1389 = vld [vmem:[%s207 + $0x28] sm:$0xff]
      %v1390 = vld [vmem:[%s207 + $0x30] sm:$0xff]
      %v1391 = vld [vmem:[%s207 + $0x38] sm:$0xff]
      %v1392 = vld [vmem:[%s207 + $0x40] sm:$0xf]
      %v1393 = vld [vmem:[%s207 + $0x48] sm:$0xf]
      %v1394 = vpack.c.bf16 %v1388, %v1386
      %v1395 = vpack.c.bf16 %v1389, %v1387
      %v1396 = vpack.c.bf16 %v1392, %v1390
      %v1397 = vpack.c.bf16 %v1393, %v1391
      %s1398 = scalar_lea.vmem %s1, 768
      %v1399 = vld [vmem:[%s1398] sm:$0xf]
      %v1400 = vld [vmem:[%s1398 + $0x4] sm:$0xf]
      %v1401 = vld [vmem:[%s1398 + $0x8] sm:$0xf]
      %v1402 = vld [vmem:[%s1398 + $0xc] sm:$0xf]
      %v1403 = vld [vmem:[%s1398 + $0x10] sm:$0xf]
      %v1404 = vld [vmem:[%s1398 + $0x14] sm:$0xf]
      %v1405 = vld [vmem:[%s1398 + $0x18] sm:$0xf]
      %v1406 = vld [vmem:[%s1398 + $0x1c] sm:$0xf]
      %v1407 = vld [vmem:[%s1398 + $0x20] sm:$0xf]
      %v1408 = vld [vmem:[%s1398 + $0x24] sm:$0xf]
      %v1409 = vld [vmem:[%s1398 + $0x28] sm:$0xf]
      %v1410 = vld [vmem:[%s1398 + $0x2c] sm:$0xf]
      %v1411 = vld [vmem:[%s1398 + $0x30] sm:$0xf]
      %v1412 = vld [vmem:[%s1398 + $0x34] sm:$0xf]
      %v1413 = vld [vmem:[%s1398 + $0x38] sm:$0xf]
      %v1414 = vld [vmem:[%s1398 + $0x3c] sm:$0xf]
      %v1415 = vld [vmem:[%s1398 + $0x40] sm:$0xf]
      %v1416 = vld [vmem:[%s1398 + $0x44] sm:$0xf]
      %v1417 = vld [vmem:[%s1398 + $0x48] sm:$0xf]
      %v1418 = vld [vmem:[%s1398 + $0x4c] sm:$0xf]
      %v1419 = vld [vmem:[%s1398 + $0x50] sm:$0xf]
      %v1420 = vld [vmem:[%s1398 + $0x54] sm:$0xf]
      %v1421 = vld [vmem:[%s1398 + $0x58] sm:$0xf]
      %v1422 = vld [vmem:[%s1398 + $0x5c] sm:$0xf]
      %v1423 = vld [vmem:[%s1398 + $0x60] sm:$0xf]
      %v1424 = vld [vmem:[%s1398 + $0x64] sm:$0xf]
      %v1425 = vld [vmem:[%s1398 + $0x68] sm:$0xf]
      %v1426 = vld [vmem:[%s1398 + $0x6c] sm:$0xf]
      %v1427 = vld [vmem:[%s1398 + $0x70] sm:$0xf]
      %v1428 = vld [vmem:[%s1398 + $0x74] sm:$0xf]
      %v1429 = vld [vmem:[%s1398 + $0x78] sm:$0xf]
      %v1430 = vld [vmem:[%s1398 + $0x7c] sm:$0xf]
      %vm1435 = vcmask 1045504
      %v1436 = vrot.slane %v1394, 2
      %v1437 = vrot.slane %v1396, 2
      %v1438 = vsel %vm1435, %v1436, %v1437
      %v1439 = vrot.slane %v1395, 2
      %v1440 = vrot.slane %v1397, 2
      %v1441 = vsel %vm1435, %v1439, %v1440
      %v1478 = vunpack.c.l.b16 %v1399
      %v1479 = vunpack.c.l.b16 %v1400
      %v1480 = vunpack.c.l.b16 %v1401
      %v1481 = vunpack.c.l.b16 %v1402
      %v1482 = vunpack.c.l.b16 %v1403
      %v1483 = vunpack.c.l.b16 %v1404
      %v1484 = vunpack.c.l.b16 %v1405
      %v1485 = vunpack.c.l.b16 %v1406
      %v1486 = vunpack.c.l.b16 %v1407
      %v1487 = vunpack.c.l.b16 %v1408
      %v1488 = vunpack.c.l.b16 %v1409
      %v1489 = vunpack.c.l.b16 %v1410
      %v1490 = vunpack.c.l.b16 %v1411
      %v1491 = vunpack.c.l.b16 %v1412
      %v1492 = vunpack.c.l.b16 %v1413
      %v1493 = vunpack.c.l.b16 %v1414
      %v1494 = vunpack.c.l.b16 %v1415
      %v1495 = vunpack.c.l.b16 %v1416
      %v1496 = vunpack.c.l.b16 %v1417
      %v1497 = vunpack.c.l.b16 %v1418
      %v1498 = vunpack.c.l.b16 %v1419
      %v1499 = vunpack.c.l.b16 %v1420
      %v1500 = vunpack.c.l.b16 %v1421
      %v1501 = vunpack.c.l.b16 %v1422
      %v1502 = vunpack.c.l.b16 %v1423
      %v1503 = vunpack.c.l.b16 %v1424
      %v1504 = vunpack.c.l.b16 %v1425
      %v1505 = vunpack.c.l.b16 %v1426
      %v1506 = vunpack.c.l.b16 %v1427
      %v1507 = vunpack.c.l.b16 %v1428
      %v1508 = vunpack.c.l.b16 %v1429
      %v1509 = vunpack.c.l.b16 %v1430
      %v1510 = vpack.c.b16 %v1479, %v1478
      %v1511 = vpack.c.b16 %v1481, %v1480
      %v1512 = vpack.c.b16 %v1483, %v1482
      %v1513 = vpack.c.b16 %v1485, %v1484
      %v1514 = vpack.c.b16 %v1487, %v1486
      %v1515 = vpack.c.b16 %v1489, %v1488
      %v1516 = vpack.c.b16 %v1491, %v1490
      %v1517 = vpack.c.b16 %v1493, %v1492
      %v1518 = vpack.c.b16 %v1495, %v1494
      %v1519 = vpack.c.b16 %v1497, %v1496
      %v1520 = vpack.c.b16 %v1499, %v1498
      %v1521 = vpack.c.b16 %v1501, %v1500
      %v1522 = vpack.c.b16 %v1503, %v1502
      %v1523 = vpack.c.b16 %v1505, %v1504
      %v1524 = vpack.c.b16 %v1507, %v1506
      %v1525 = vpack.c.b16 %v1509, %v1508
      %1542 = vmatpush.bf16.msra.mxu0 %v1517
      %1543 = vmatpush.bf16.msra.mxu0 %v1516
      %1544 = vmatpush.bf16.msra.mxu0 %v1515
      %1545 = vmatpush.bf16.msra.mxu0 %v1514
      %1546 = vmatpush.bf16.msra.mxu0 %v1513
      %1547 = vmatpush.bf16.msra.mxu0 %v1512
      %1548 = vmatpush.bf16.msra.mxu0 %v1511
      %1549 = vmatpush.bf16.msra.mxu0 %v1510
      %1550 = vmatmul.bf16.gmra.mxu0 %v1438
      %v1551 = vpop.f32.mrf.mxu0
      %v1552 = vadd.f32 0.0, %v1551
      %v1553 = vpop.f32.mrf.mxu0
      %v1554 = vadd.f32 0.0, %v1553
      %1555 = vmatmul.bf16.gmra.mxu0 %v1437
      %v1556 = vpop.f32.mrf.mxu0
      %v1557 = vadd.f32 0.0, %v1556
      %v1558 = vpop.f32.mrf.mxu0
      %1559 = vdwg.mxu0
      %1560 = vmatpush.bf16.msra.mxu0 %v1525
      %1561 = vmatpush.bf16.msra.mxu0 %v1524
      %1562 = vmatpush.bf16.msra.mxu0 %v1523
      %1563 = vmatpush.bf16.msra.mxu0 %v1522
      %1564 = vmatpush.bf16.msra.mxu0 %v1521
      %1565 = vmatpush.bf16.msra.mxu0 %v1520
      %1566 = vmatpush.bf16.msra.mxu0 %v1519
      %1567 = vmatpush.bf16.msra.mxu0 %v1518
      %1568 = vmatmul.bf16.gmra.mxu0 %v1441
      %v1569 = vpop.f32.mrf.mxu0
      %v1570 = vadd.f32 %v1552, %v1569
      %v1571 = vpop.f32.mrf.mxu0
      %v1572 = vadd.f32 %v1554, %v1571
      %1573 = vmatmul.bf16.gmra.mxu0 %v1440
      %v1574 = vpop.f32.mrf.mxu0
      %v1575 = vadd.f32 %v1557, %v1574
      %v1576 = vpop.f32.mrf.mxu0
      %1577 = vdwg.mxu0
      %v1578 = vadd.f32 %v1383, %v1570
      %v1579 = vadd.f32 %v1384, %v1572
      %v1580 = vadd.f32 %v1385, %v1575
      %v1581 = vld [vmem:[%s207 + $0x10] sm:$0xe0]
      %v1582 = vld [vmem:[%s207 + $0x18] sm:$0xe0]
      %v1583 = vld [vmem:[%s207 + $0x40] sm:$0x1f]
      %v1584 = vld [vmem:[%s207 + $0x48] sm:$0x1f]
      %v1585 = vpack.c.bf16 %v1388, %v1581
      %v1586 = vpack.c.bf16 %v1389, %v1582
      %v1587 = vpack.c.bf16 %v1583, %v1390
      %v1588 = vpack.c.bf16 %v1584, %v1391
      %s1589 = scalar_lea.vmem %s1, 896
      %v1590 = vld [vmem:[%s1589] sm:$0xf]
      %v1591 = vld [vmem:[%s1589 + $0x4] sm:$0xf]
      %v1592 = vld [vmem:[%s1589 + $0x8] sm:$0xf]
      %v1593 = vld [vmem:[%s1589 + $0xc] sm:$0xf]
      %v1594 = vld [vmem:[%s1589 + $0x10] sm:$0xf]
      %v1595 = vld [vmem:[%s1589 + $0x14] sm:$0xf]
      %v1596 = vld [vmem:[%s1589 + $0x18] sm:$0xf]
      %v1597 = vld [vmem:[%s1589 + $0x1c] sm:$0xf]
      %v1598 = vld [vmem:[%s1589 + $0x20] sm:$0xf]
      %v1599 = vld [vmem:[%s1589 + $0x24] sm:$0xf]
      %v1600 = vld [vmem:[%s1589 + $0x28] sm:$0xf]
      %v1601 = vld [vmem:[%s1589 + $0x2c] sm:$0xf]
      %v1602 = vld [vmem:[%s1589 + $0x30] sm:$0xf]
      %v1603 = vld [vmem:[%s1589 + $0x34] sm:$0xf]
      %v1604 = vld [vmem:[%s1589 + $0x38] sm:$0xf]
      %v1605 = vld [vmem:[%s1589 + $0x3c] sm:$0xf]
      %v1606 = vld [vmem:[%s1589 + $0x40] sm:$0xf]
      %v1607 = vld [vmem:[%s1589 + $0x44] sm:$0xf]
      %v1608 = vld [vmem:[%s1589 + $0x48] sm:$0xf]
      %v1609 = vld [vmem:[%s1589 + $0x4c] sm:$0xf]
      %v1610 = vld [vmem:[%s1589 + $0x50] sm:$0xf]
      %v1611 = vld [vmem:[%s1589 + $0x54] sm:$0xf]
      %v1612 = vld [vmem:[%s1589 + $0x58] sm:$0xf]
      %v1613 = vld [vmem:[%s1589 + $0x5c] sm:$0xf]
      %v1614 = vld [vmem:[%s1589 + $0x60] sm:$0xf]
      %v1615 = vld [vmem:[%s1589 + $0x64] sm:$0xf]
      %v1616 = vld [vmem:[%s1589 + $0x68] sm:$0xf]
      %v1617 = vld [vmem:[%s1589 + $0x6c] sm:$0xf]
      %v1618 = vld [vmem:[%s1589 + $0x70] sm:$0xf]
      %v1619 = vld [vmem:[%s1589 + $0x74] sm:$0xf]
      %v1620 = vld [vmem:[%s1589 + $0x78] sm:$0xf]
      %v1621 = vld [vmem:[%s1589 + $0x7c] sm:$0xf]
      %vm1622 = vsmask.f32 5376
      %v1624 = vshrl.u32 %v1585, 16
      %v1626 = vrot.slane %v1624, 2
      %v1627 = vshll.u32 %v1585, 16
      %v1629 = vrot.slane %v1627, 3
      %v1630 = vor.u32 %v1626, %v1629
      %v1632 = vshrl.u32 %v1587, 16
      %v1634 = vrot.slane %v1632, 2
      %v1635 = vshll.u32 %v1587, 16
      %v1637 = vrot.slane %v1635, 3
      %v1638 = vor.u32 %v1634, %v1637
      %v1639 = vsel %vm1622, %v1630, %v1638
      %v1641 = vshrl.u32 %v1586, 16
      %v1643 = vrot.slane %v1641, 2
      %v1644 = vshll.u32 %v1586, 16
      %v1646 = vrot.slane %v1644, 3
      %v1647 = vor.u32 %v1643, %v1646
      %v1649 = vshrl.u32 %v1588, 16
      %v1651 = vrot.slane %v1649, 2
      %v1652 = vshll.u32 %v1588, 16
      %v1654 = vrot.slane %v1652, 3
      %v1655 = vor.u32 %v1651, %v1654
      %v1656 = vsel %vm1622, %v1647, %v1655
      %v1693 = vunpack.c.l.b16 %v1590
      %v1694 = vunpack.c.l.b16 %v1591
      %v1695 = vunpack.c.l.b16 %v1592
      %v1696 = vunpack.c.l.b16 %v1593
      %v1697 = vunpack.c.l.b16 %v1594
      %v1698 = vunpack.c.l.b16 %v1595
      %v1699 = vunpack.c.l.b16 %v1596
      %v1700 = vunpack.c.l.b16 %v1597
      %v1701 = vunpack.c.l.b16 %v1598
      %v1702 = vunpack.c.l.b16 %v1599
      %v1703 = vunpack.c.l.b16 %v1600
      %v1704 = vunpack.c.l.b16 %v1601
      %v1705 = vunpack.c.l.b16 %v1602
      %v1706 = vunpack.c.l.b16 %v1603
      %v1707 = vunpack.c.l.b16 %v1604
      %v1708 = vunpack.c.l.b16 %v1605
      %v1709 = vunpack.c.l.b16 %v1606
      %v1710 = vunpack.c.l.b16 %v1607
      %v1711 = vunpack.c.l.b16 %v1608
      %v1712 = vunpack.c.l.b16 %v1609
      %v1713 = vunpack.c.l.b16 %v1610
      %v1714 = vunpack.c.l.b16 %v1611
      %v1715 = vunpack.c.l.b16 %v1612
      %v1716 = vunpack.c.l.b16 %v1613
      %v1717 = vunpack.c.l.b16 %v1614
      %v1718 = vunpack.c.l.b16 %v1615
      %v1719 = vunpack.c.l.b16 %v1616
      %v1720 = vunpack.c.l.b16 %v1617
      %v1721 = vunpack.c.l.b16 %v1618
      %v1722 = vunpack.c.l.b16 %v1619
      %v1723 = vunpack.c.l.b16 %v1620
      %v1724 = vunpack.c.l.b16 %v1621
      %v1725 = vpack.c.b16 %v1694, %v1693
      %v1726 = vpack.c.b16 %v1696, %v1695
      %v1727 = vpack.c.b16 %v1698, %v1697
      %v1728 = vpack.c.b16 %v1700, %v1699
      %v1729 = vpack.c.b16 %v1702, %v1701
      %v1730 = vpack.c.b16 %v1704, %v1703
      %v1731 = vpack.c.b16 %v1706, %v1705
      %v1732 = vpack.c.b16 %v1708, %v1707
      %v1733 = vpack.c.b16 %v1710, %v1709
      %v1734 = vpack.c.b16 %v1712, %v1711
      %v1735 = vpack.c.b16 %v1714, %v1713
      %v1736 = vpack.c.b16 %v1716, %v1715
      %v1737 = vpack.c.b16 %v1718, %v1717
      %v1738 = vpack.c.b16 %v1720, %v1719
      %v1739 = vpack.c.b16 %v1722, %v1721
      %v1740 = vpack.c.b16 %v1724, %v1723
      %1757 = vmatpush.bf16.msra.mxu0 %v1732
      %1758 = vmatpush.bf16.msra.mxu0 %v1731
      %1759 = vmatpush.bf16.msra.mxu0 %v1730
      %1760 = vmatpush.bf16.msra.mxu0 %v1729
      %1761 = vmatpush.bf16.msra.mxu0 %v1728
      %1762 = vmatpush.bf16.msra.mxu0 %v1727
      %1763 = vmatpush.bf16.msra.mxu0 %v1726
      %1764 = vmatpush.bf16.msra.mxu0 %v1725
      %1765 = vmatmul.bf16.gmra.mxu0 %v1639
      %v1766 = vpop.f32.mrf.mxu0
      %v1767 = vadd.f32 0.0, %v1766
      %v1768 = vpop.f32.mrf.mxu0
      %v1769 = vadd.f32 0.0, %v1768
      %1770 = vmatmul.bf16.gmra.mxu0 %v1638
      %v1771 = vpop.f32.mrf.mxu0
      %v1772 = vadd.f32 0.0, %v1771
      %v1773 = vpop.f32.mrf.mxu0
      %1774 = vdwg.mxu0
      %1775 = vmatpush.bf16.msra.mxu0 %v1740
      %1776 = vmatpush.bf16.msra.mxu0 %v1739
      %1777 = vmatpush.bf16.msra.mxu0 %v1738
      %1778 = vmatpush.bf16.msra.mxu0 %v1737
      %1779 = vmatpush.bf16.msra.mxu0 %v1736
      %1780 = vmatpush.bf16.msra.mxu0 %v1735
      %1781 = vmatpush.bf16.msra.mxu0 %v1734
      %1782 = vmatpush.bf16.msra.mxu0 %v1733
      %1783 = vmatmul.bf16.gmra.mxu0 %v1656
      %v1784 = vpop.f32.mrf.mxu0
      %v1785 = vadd.f32 %v1767, %v1784
      %v1786 = vpop.f32.mrf.mxu0
      %v1787 = vadd.f32 %v1769, %v1786
      %1788 = vmatmul.bf16.gmra.mxu0 %v1655
      %v1789 = vpop.f32.mrf.mxu0
      %v1790 = vadd.f32 %v1772, %v1789
      %v1791 = vpop.f32.mrf.mxu0
      %1792 = vdwg.mxu0
      %v1793 = vadd.f32 %v1578, %v1785
      %v1794 = vadd.f32 %v1579, %v1787
      %v1795 = vadd.f32 %v1580, %v1790
      %v1796 = vld [vmem:[%s207 + $0x10] sm:$0xc0]
      %v1797 = vld [vmem:[%s207 + $0x18] sm:$0xc0]
      %v1798 = vld [vmem:[%s207 + $0x40] sm:$0x3f]
      %v1799 = vld [vmem:[%s207 + $0x48] sm:$0x3f]
      %v1800 = vpack.c.bf16 %v1388, %v1796
      %v1801 = vpack.c.bf16 %v1389, %v1797
      %v1802 = vpack.c.bf16 %v1798, %v1390
      %v1803 = vpack.c.bf16 %v1799, %v1391
      %s1804 = scalar_lea.vmem %s1, 1024
      %v1805 = vld [vmem:[%s1804] sm:$0xf]
      %v1806 = vld [vmem:[%s1804 + $0x4] sm:$0xf]
      %v1807 = vld [vmem:[%s1804 + $0x8] sm:$0xf]
      %v1808 = vld [vmem:[%s1804 + $0xc] sm:$0xf]
      %v1809 = vld [vmem:[%s1804 + $0x10] sm:$0xf]
      %v1810 = vld [vmem:[%s1804 + $0x14] sm:$0xf]
      %v1811 = vld [vmem:[%s1804 + $0x18] sm:$0xf]
      %v1812 = vld [vmem:[%s1804 + $0x1c] sm:$0xf]
      %v1813 = vld [vmem:[%s1804 + $0x20] sm:$0xf]
      %v1814 = vld [vmem:[%s1804 + $0x24] sm:$0xf]
      %v1815 = vld [vmem:[%s1804 + $0x28] sm:$0xf]
      %v1816 = vld [vmem:[%s1804 + $0x2c] sm:$0xf]
      %v1817 = vld [vmem:[%s1804 + $0x30] sm:$0xf]
      %v1818 = vld [vmem:[%s1804 + $0x34] sm:$0xf]
      %v1819 = vld [vmem:[%s1804 + $0x38] sm:$0xf]
      %v1820 = vld [vmem:[%s1804 + $0x3c] sm:$0xf]
      %v1821 = vld [vmem:[%s1804 + $0x40] sm:$0xf]
      %v1822 = vld [vmem:[%s1804 + $0x44] sm:$0xf]
      %v1823 = vld [vmem:[%s1804 + $0x48] sm:$0xf]
      %v1824 = vld [vmem:[%s1804 + $0x4c] sm:$0xf]
      %v1825 = vld [vmem:[%s1804 + $0x50] sm:$0xf]
      %v1826 = vld [vmem:[%s1804 + $0x54] sm:$0xf]
      %v1827 = vld [vmem:[%s1804 + $0x58] sm:$0xf]
      %v1828 = vld [vmem:[%s1804 + $0x5c] sm:$0xf]
      %v1829 = vld [vmem:[%s1804 + $0x60] sm:$0xf]
      %v1830 = vld [vmem:[%s1804 + $0x64] sm:$0xf]
      %v1831 = vld [vmem:[%s1804 + $0x68] sm:$0xf]
      %v1832 = vld [vmem:[%s1804 + $0x6c] sm:$0xf]
      %v1833 = vld [vmem:[%s1804 + $0x70] sm:$0xf]
      %v1834 = vld [vmem:[%s1804 + $0x74] sm:$0xf]
      %v1835 = vld [vmem:[%s1804 + $0x78] sm:$0xf]
      %v1836 = vld [vmem:[%s1804 + $0x7c] sm:$0xf]
      %v1841 = vrot.slane %v1800, 3
      %v1842 = vrot.slane %v1802, 3
      %v1843 = vsel %vm851, %v1841, %v1842
      %v1844 = vrot.slane %v1801, 3
      %v1845 = vrot.slane %v1803, 3
      %v1846 = vsel %vm851, %v1844, %v1845
      %v1883 = vunpack.c.l.b16 %v1805
      %v1884 = vunpack.c.l.b16 %v1806
      %v1885 = vunpack.c.l.b16 %v1807
      %v1886 = vunpack.c.l.b16 %v1808
      %v1887 = vunpack.c.l.b16 %v1809
      %v1888 = vunpack.c.l.b16 %v1810
      %v1889 = vunpack.c.l.b16 %v1811
      %v1890 = vunpack.c.l.b16 %v1812
      %v1891 = vunpack.c.l.b16 %v1813
      %v1892 = vunpack.c.l.b16 %v1814
      %v1893 = vunpack.c.l.b16 %v1815
      %v1894 = vunpack.c.l.b16 %v1816
      %v1895 = vunpack.c.l.b16 %v1817
      %v1896 = vunpack.c.l.b16 %v1818
      %v1897 = vunpack.c.l.b16 %v1819
      %v1898 = vunpack.c.l.b16 %v1820
      %v1899 = vunpack.c.l.b16 %v1821
      %v1900 = vunpack.c.l.b16 %v1822
      %v1901 = vunpack.c.l.b16 %v1823
      %v1902 = vunpack.c.l.b16 %v1824
      %v1903 = vunpack.c.l.b16 %v1825
      %v1904 = vunpack.c.l.b16 %v1826
      %v1905 = vunpack.c.l.b16 %v1827
      %v1906 = vunpack.c.l.b16 %v1828
      %v1907 = vunpack.c.l.b16 %v1829
      %v1908 = vunpack.c.l.b16 %v1830
      %v1909 = vunpack.c.l.b16 %v1831
      %v1910 = vunpack.c.l.b16 %v1832
      %v1911 = vunpack.c.l.b16 %v1833
      %v1912 = vunpack.c.l.b16 %v1834
      %v1913 = vunpack.c.l.b16 %v1835
      %v1914 = vunpack.c.l.b16 %v1836
      %v1915 = vpack.c.b16 %v1884, %v1883
      %v1916 = vpack.c.b16 %v1886, %v1885
      %v1917 = vpack.c.b16 %v1888, %v1887
      %v1918 = vpack.c.b16 %v1890, %v1889
      %v1919 = vpack.c.b16 %v1892, %v1891
      %v1920 = vpack.c.b16 %v1894, %v1893
      %v1921 = vpack.c.b16 %v1896, %v1895
      %v1922 = vpack.c.b16 %v1898, %v1897
      %v1923 = vpack.c.b16 %v1900, %v1899
      %v1924 = vpack.c.b16 %v1902, %v1901
      %v1925 = vpack.c.b16 %v1904, %v1903
      %v1926 = vpack.c.b16 %v1906, %v1905
      %v1927 = vpack.c.b16 %v1908, %v1907
      %v1928 = vpack.c.b16 %v1910, %v1909
      %v1929 = vpack.c.b16 %v1912, %v1911
      %v1930 = vpack.c.b16 %v1914, %v1913
      %1947 = vmatpush.bf16.msra.mxu0 %v1922
      %1948 = vmatpush.bf16.msra.mxu0 %v1921
      %1949 = vmatpush.bf16.msra.mxu0 %v1920
      %1950 = vmatpush.bf16.msra.mxu0 %v1919
      %1951 = vmatpush.bf16.msra.mxu0 %v1918
      %1952 = vmatpush.bf16.msra.mxu0 %v1917
      %1953 = vmatpush.bf16.msra.mxu0 %v1916
      %1954 = vmatpush.bf16.msra.mxu0 %v1915
      %1955 = vmatmul.bf16.gmra.mxu0 %v1843
      %v1956 = vpop.f32.mrf.mxu0
      %v1957 = vadd.f32 0.0, %v1956
      %v1958 = vpop.f32.mrf.mxu0
      %v1959 = vadd.f32 0.0, %v1958
      %1960 = vmatmul.bf16.gmra.mxu0 %v1842
      %v1961 = vpop.f32.mrf.mxu0
      %v1962 = vadd.f32 0.0, %v1961
      %v1963 = vpop.f32.mrf.mxu0
      %1964 = vdwg.mxu0
      %1965 = vmatpush.bf16.msra.mxu0 %v1930
      %1966 = vmatpush.bf16.msra.mxu0 %v1929
      %1967 = vmatpush.bf16.msra.mxu0 %v1928
      %1968 = vmatpush.bf16.msra.mxu0 %v1927
      %1969 = vmatpush.bf16.msra.mxu0 %v1926
      %1970 = vmatpush.bf16.msra.mxu0 %v1925
      %1971 = vmatpush.bf16.msra.mxu0 %v1924
      %1972 = vmatpush.bf16.msra.mxu0 %v1923
      %1973 = vmatmul.bf16.gmra.mxu0 %v1846
      %v1974 = vpop.f32.mrf.mxu0
      %v1975 = vadd.f32 %v1957, %v1974
      %v1976 = vpop.f32.mrf.mxu0
      %v1977 = vadd.f32 %v1959, %v1976
      %1978 = vmatmul.bf16.gmra.mxu0 %v1845
      %v1979 = vpop.f32.mrf.mxu0
      %v1980 = vadd.f32 %v1962, %v1979
      %v1981 = vpop.f32.mrf.mxu0
      %1982 = vdwg.mxu0
      %v1983 = vadd.f32 %v1793, %v1975
      %v1984 = vadd.f32 %v1794, %v1977
      %v1985 = vadd.f32 %v1795, %v1980
      %v1986 = vld [vmem:[%s212] sm:$0xff]
      %v1987 = vld [vmem:[%s212 + $0x8] sm:$0xff]
      %v1988 = vld [vmem:[%s212 + $0x10] sm:$0xff]
      %v1989 = vadd.f32 %v1983, %v1986
      %v1990 = vadd.f32 %v1984, %v1987
      %v1991 = vadd.f32 %v1985, %v1988
      %v1992 = vmax.f32 %v1989, 0.0
      %v1993 = vmax.f32 %v1990, 0.0
      %v1994 = vmax.f32 %v1991, 0.0
      %1995 = vst [vmem:[%s217] sm:$0xff] %v1992
      %1996 = vst [vmem:[%s217 + $0x8] sm:$0xff] %v1993
      %1997 = vst [vmem:[%s217 + $0x10] sm:$0xff] %v1994
      %p1998 = scmp.lt.s32.totalorder %s15, 2
      %s1999 = scalar_select %p1998, %s15, 2
      %s2000 = smul.addr %s1999, 3
      %s2001 = smul.addr %s2000, 8
      %s2002 = scalar_lea.vmem %s4, %s2001
      // Predicated region
      $region37: #{repnet_forward.9} parent=35 // pred_check
        %p2003 = pneg %p127
      $region38: #{repnet_forward.9} parent=35 // pred_check_branch
        %2005 = sbr.rel (%p2003) target = $region40
      $region39: #{repnet_forward.9} parent=35 // pred_region
        _
      $region40: #{repnet_forward.9} parent=35 // pred_fallthru
        _
    $region36: #{repnet_forward.9} parent=5 // pred_fallthru
      _
    %p2006 = scmp.le.s32.totalorder 2, %s10
    // Predicated region
    $region41: #{repnet_forward.9} parent=5 // pred_check
      %p2007 = pneg %p2006
    $region42: #{repnet_forward.9} parent=5 // pred_check_branch
      %2009 = sbr.rel (%p2007) target = $region44
    $region43: #{repnet_forward.9} parent=5 // pred_region
      %s2010 = ssub.s32 %s10, 2
      // Predicated region
      $region45: #{repnet_forward.9} parent=43 // pred_check
        %p2011 = pneg %p133
      $region46: #{repnet_forward.9} parent=43 // pred_check_branch
        %2013 = sbr.rel (%p2011) target = $region48
      $region47: #{repnet_forward.9} parent=43 // pred_region
        %p2014 = scmp.lt.s32.totalorder %s16, 2
        %s2015 = scalar_select %p2014, %s16, 2
        %s2016 = smul.addr %s2015, 3
        %s2017 = smul.addr %s2016, 8
        %s2018 = scalar_lea.vmem %s4, %s2017
      $region48: #{repnet_forward.9} parent=43 // pred_fallthru
        _
    $region44: #{repnet_forward.9} parent=5 // pred_fallthru
      _
  $region6: #{repnet_forward.9} parent=0 // loop_footer
    %s14 = sadd.s32 1, %s10
  $region7: #{repnet_forward.9} parent=0 // loop_footer_branch
    %9 = sbr.rel target = $region3
  $region8: #{repnet_forward.9} parent=0 // loop_exit
    _

// kernel: repnet_forward.11
$region0: #{repnet_forward.11}
  #allocation0 [shape = 'u32[]', space=smem, size = 0x4, offset = 0x4, fixed_abs, tag = 'smem constant byte address 0x4 - core index']
  #allocation1 [shape = 'u32[72,128]{1,0:T(1,128)}', space=vmem, size = 0x9000, scoped, tag = 'internal scratch']
  %s0 = inlined_call_operand.vmem [shape: f32[3,42,256], index: 0, kind: input, shape index: {}]
  %s1 = inlined_call_operand.vmem [shape: bf16[9,256,256], index: 1, kind: input, shape index: {}]
  %s2 = inlined_call_operand.vmem [shape: f32[1,256], index: 2, kind: input, shape index: {}]
  %s3 = inlined_call_operand.vmem [shape: f32[3,24,256], index: 3, kind: output, shape index: {}]
  %s4 = sld [smem:[#allocation0]]
  $region45: #{repnet_forward.11} parent=0
    _
  %s6 = ssub.s32 1, %s4
  %s7 = scalar_select 0, %s6, %s4
  loop: start=0, step=1, limit=5
  $region2: #{repnet_forward.11} parent=0 // loop_pre_header
    _
  $region3: #{repnet_forward.11} parent=0 // loop_header
    %s9 = sphi 0, %s13
    %p10 = scmp.ge.s32.totalorder %s9, 5
    %s19 = sphi 0, %s21
    %s22 = sphi 0, %s19
    %s23 = sphi 0, %s22
    %s39 = sphi 0, %s23
    %s43 = sphi 0, %s43
    %s45 = sphi 0, %s43
    %s46 = sphi 0, %s45
    %s60 = sphi 0, %s46
    %s64 = sphi 0, %s64
    %s66 = sphi 0, %s64
    %s67 = sphi 0, %s66
    %s81 = sphi 0, %s67
    %s87 = sphi 0, %s89
    %s90 = sphi 0, %s87
    %s91 = sphi 0, %s90
    %s107 = sphi 0, %s91
  $region4: #{repnet_forward.11} parent=0 // loop_header_branch
    %12 = sbr.rel (%p10) target = $region8
  $region5: #{repnet_forward.11} parent=0 // loop_body
    %s14 = ssub.s32 %s9, 1
    %s15 = ssub.s32 %s9, 2
    %s16 = sadd.s32 %s9, 1
    %s17 = ssub.s32 %s9, %s16
    %p18 = scmp.eq.s32.totalorder %s17, 0
    %s20 = sadd.s32 %s19, 1
    %s21 = scalar_select %p18, %s19, %s20
    %p24 = pneg %p18
    %p25 = scmp.eq.s32.totalorder %s9, 2
    %p26 = por %p24, %p25
    %p27 = scmp.ne.s32.totalorder %s19, %s22
    %p28 = scmp.eq.s32.totalorder %s9, 0
    %p29 = por %p27, %p28
    %p30 = scmp.ne.s32.totalorder %s19, %s22
    %p31 = scmp.eq.s32.totalorder %s14, 2
    %p32 = por %p30, %p31
    %p33 = scmp.ne.s32.totalorder %s22, %s23
    %p34 = scmp.eq.s32.totalorder %s14, 0
    %p35 = por %p33, %p34
    %p36 = scmp.ne.s32.totalorder %s22, %s23
    %p37 = scmp.eq.s32.totalorder %s15, 2
    %p38 = por %p36, %p37
    %p40 = scmp.ne.s32.totalorder %s23, %s39
    %p41 = scmp.eq.s32.totalorder %s15, 0
    %p42 = por %p40, %p41
    %s44 = sadd.s32 %s43, 1
    %p47 = scmp.eq.s32.totalorder %s9, 2
    %p48 = scmp.ne.s32.totalorder %s43, %s45
    %p49 = scmp.eq.s32.totalorder %s9, 0
    %p50 = por %p48, %p49
    %p51 = scmp.ne.s32.totalorder %s43, %s45
    %p52 = scmp.eq.s32.totalorder %s14, 2
    %p53 = por %p51, %p52
    %p54 = scmp.ne.s32.totalorder %s45, %s46
    %p55 = scmp.eq.s32.totalorder %s14, 0
    %p56 = por %p54, %p55
    %p57 = scmp.ne.s32.totalorder %s45, %s46
    %p58 = scmp.eq.s32.totalorder %s15, 2
    %p59 = por %p57, %p58
    %p61 = scmp.ne.s32.totalorder %s46, %s60
    %p62 = scmp.eq.s32.totalorder %s15, 0
    %p63 = por %p61, %p62
    %s65 = sadd.s32 %s64, 1
    %p68 = scmp.eq.s32.totalorder %s9, 2
    %p69 = scmp.ne.s32.totalorder %s64, %s66
    %p70 = scmp.eq.s32.totalorder %s9, 0
    %p71 = por %p69, %p70
    %p72 = scmp.ne.s32.totalorder %s64, %s66
    %p73 = scmp.eq.s32.totalorder %s14, 2
    %p74 = por %p72, %p73
    %p75 = scmp.ne.s32.totalorder %s66, %s67
    %p76 = scmp.eq.s32.totalorder %s14, 0
    %p77 = por %p75, %p76
    %p78 = scmp.ne.s32.totalorder %s66, %s67
    %p79 = scmp.eq.s32.totalorder %s15, 2
    %p80 = por %p78, %p79
    %p82 = scmp.ne.s32.totalorder %s67, %s81
    %p83 = scmp.eq.s32.totalorder %s15, 0
    %p84 = por %p82, %p83
    %s85 = ssub.s32 %s9, %s16
    %p86 = scmp.eq.s32.totalorder %s85, 0
    %s88 = sadd.s32 %s87, 1
    %s89 = scalar_select %p86, %s87, %s88
    %p92 = pneg %p86
    %p93 = scmp.eq.s32.totalorder %s9, 2
    %p94 = por %p92, %p93
    %p95 = scmp.ne.s32.totalorder %s87, %s90
    %p96 = scmp.eq.s32.totalorder %s9, 0
    %p97 = por %p95, %p96
    %p98 = scmp.ne.s32.totalorder %s87, %s90
    %p99 = scmp.eq.s32.totalorder %s14, 2
    %p100 = por %p98, %p99
    %p101 = scmp.ne.s32.totalorder %s90, %s91
    %p102 = scmp.eq.s32.totalorder %s14, 0
    %p103 = por %p101, %p102
    %p104 = scmp.ne.s32.totalorder %s90, %s91
    %p105 = scmp.eq.s32.totalorder %s15, 2
    %p106 = por %p104, %p105
    %p108 = scmp.ne.s32.totalorder %s91, %s107
    %p109 = scmp.eq.s32.totalorder %s15, 0
    %p110 = por %p108, %p109
    %p111 = scmp.le.s32.totalorder 1, %s9
    %p112 = scmp.lt.s32.totalorder %s9, 4
    %p113 = pnand %p111, %p112
    %p114 = pneg %p113
    // Predicated region
    $region9: #{repnet_forward.11} parent=5 // pred_check
      _
    $region10: #{repnet_forward.11} parent=5 // pred_check_branch
      %116 = sbr.rel (%p113) target = $region12
    $region11: #{repnet_forward.11} parent=5 // pred_region
      %s117 = ssub.s32 %s9, 1
      // Predicated region
      $region13: #{repnet_forward.11} parent=11 // pred_check
        %p118 = pneg %p56
      $region14: #{repnet_forward.11} parent=11 // pred_check_branch
        %120 = sbr.rel (%p118) target = $region16
      $region15: #{repnet_forward.11} parent=11 // pred_region
        _
      $region16: #{repnet_forward.11} parent=11 // pred_fallthru
        _
      // Predicated region
      $region17: #{repnet_forward.11} parent=11 // pred_check
        %p121 = pneg %p77
      $region18: #{repnet_forward.11} parent=11 // pred_check_branch
        %123 = sbr.rel (%p121) target = $region20
      $region19: #{repnet_forward.11} parent=11 // pred_region
        _
      $region20: #{repnet_forward.11} parent=11 // pred_fallthru
        _
    $region12: #{repnet_forward.11} parent=5 // pred_fallthru
      _
    %p124 = scmp.lt.s32.totalorder %s9, 3
    // Predicated region
    $region21: #{repnet_forward.11} parent=5 // pred_check
      %p125 = pneg %p124
    $region22: #{repnet_forward.11} parent=5 // pred_check_branch
      %127 = sbr.rel (%p125) target = $region24
    $region23: #{repnet_forward.11} parent=5 // pred_region
      // Predicated region
      $region25: #{repnet_forward.11} parent=23 // pred_check
        %p128 = pneg %p29
      $region26: #{repnet_forward.11} parent=23 // pred_check_branch
        %130 = sbr.rel (%p128) target = $region28
      $region27: #{repnet_forward.11} parent=23 // pred_region
        %p131 = scmp.lt.s32.totalorder %s9, 2
        %s132 = scalar_select %p131, %s9, 2
        %s133 = smul.addr %s132, 12
        %s134 = smul.addr %s133, 8
        %s135 = scalar_lea.vmem %s0, %s134
      $region28: #{repnet_forward.11} parent=23 // pred_fallthru
        _
    $region24: #{repnet_forward.11} parent=5 // pred_fallthru
      _
    %p136 = scmp.le.s32.totalorder 1, %s9
    %p137 = scmp.lt.s32.totalorder %s9, 4
    %p138 = pnand %p136, %p137
    %p139 = pneg %p138
    // Predicated region
    $region29: #{repnet_forward.11} parent=5 // pred_check
      _
    $region30: #{repnet_forward.11} parent=5 // pred_check_branch
      %141 = sbr.rel (%p138) target = $region32
    $region31: #{repnet_forward.11} parent=5 // pred_region
      %s142 = ssub.s32 %s9, 1
      %p143 = scmp.lt.s32.totalorder %s14, 2
      %s144 = scalar_select %p143, %s14, 2
      %s145 = smul.addr %s144, 12
      %s146 = smul.addr %s145, 8
      %s147 = scalar_lea.vmem %s0, %s146
      %p148 = pneg %p35
      %p149 = pneg %p32
      %p150 = pneg %p56
      %p151 = pneg %p53
      %p152 = pneg %p77
      %p153 = pneg %p74
      %p154 = pneg %p103
      %p155 = pneg %p100
      %p156 = scmp.lt.s32.totalorder %s14, 2
      %s157 = scalar_select %p156, %s14, 2
      %s158 = smul.addr %s157, 6
      %s159 = smul.addr %s158, 8
      %s160 = scalar_lea.vmem %s3, %s159
      %p161 = scmp.lt.s32.totalorder %s14, 2
      %s162 = scalar_select %p161, %s14, 2
      %s163 = smul.addr %s162, 12
      %s164 = smul.addr %s163, 8
      %s165 = scalar_lea.vmem %s0, %s164
      %p166 = scmp.lt.s32.totalorder %s14, 2
      %s167 = scalar_select %p166, %s14, 2
      %s168 = smul.addr %s167, 6
      %s169 = smul.addr %s168, 8
      %s170 = scalar_lea.vmem %s3, %s169
      %v171 = vld [vmem:[%s2] sm:$0x3]
      %v173 = vperm.slane %v171, 0
      %v174 = vperm.slane %v171, 1
      %v177 = vadd.f32 %v173, 0.0
      %v178 = vadd.f32 %v174, 0.0
      %v179 = vld [vmem:[%s165] sm:$0xff]
      %v180 = vld [vmem:[%s165 + $0x8] sm:$0xff]
      %v181 = vld [vmem:[%s165 + $0x10] sm:$0xff]
      %v182 = vld [vmem:[%s165 + $0x18] sm:$0xff]
      %v183 = vld [vmem:[%s165 + $0x20] sm:$0xff]
      %v184 = vld [vmem:[%s165 + $0x28] sm:$0xff]
      %v185 = vpack.c.bf16 %v181, %v179
      %v186 = vpack.c.bf16 %v182, %v180
      %v187 = vpack.c.bf16 %v183, %v183
      %v188 = vpack.c.bf16 %v184, %v184
      %v189 = vld [vmem:[%s1] sm:$0xff]
      %v190 = vld [vmem:[%s1 + $0x8] sm:$0xff]
      %v191 = vld [vmem:[%s1 + $0x10] sm:$0xff]
      %v192 = vld [vmem:[%s1 + $0x18] sm:$0xff]
      %v193 = vld [vmem:[%s1 + $0x20] sm:$0xff]
      %v194 = vld [vmem:[%s1 + $0x28] sm:$0xff]
      %v195 = vld [vmem:[%s1 + $0x30] sm:$0xff]
      %v196 = vld [vmem:[%s1 + $0x38] sm:$0xff]
      %v197 = vld [vmem:[%s1 + $0x40] sm:$0xff]
      %v198 = vld [vmem:[%s1 + $0x48] sm:$0xff]
      %v199 = vld [vmem:[%s1 + $0x50] sm:$0xff]
      %v200 = vld [vmem:[%s1 + $0x58] sm:$0xff]
      %v201 = vld [vmem:[%s1 + $0x60] sm:$0xff]
      %v202 = vld [vmem:[%s1 + $0x68] sm:$0xff]
      %v203 = vld [vmem:[%s1 + $0x70] sm:$0xff]
      %v204 = vld [vmem:[%s1 + $0x78] sm:$0xff]
      %v205 = vld [vmem:[%s1 + $0x80] sm:$0xff]
      %v206 = vld [vmem:[%s1 + $0x88] sm:$0xff]
      %v207 = vld [vmem:[%s1 + $0x90] sm:$0xff]
      %v208 = vld [vmem:[%s1 + $0x98] sm:$0xff]
      %v209 = vld [vmem:[%s1 + $0xa0] sm:$0xff]
      %v210 = vld [vmem:[%s1 + $0xa8] sm:$0xff]
      %v211 = vld [vmem:[%s1 + $0xb0] sm:$0xff]
      %v212 = vld [vmem:[%s1 + $0xb8] sm:$0xff]
      %v213 = vld [vmem:[%s1 + $0xc0] sm:$0xff]
      %v214 = vld [vmem:[%s1 + $0xc8] sm:$0xff]
      %v215 = vld [vmem:[%s1 + $0xd0] sm:$0xff]
      %v216 = vld [vmem:[%s1 + $0xd8] sm:$0xff]
      %v217 = vld [vmem:[%s1 + $0xe0] sm:$0xff]
      %v218 = vld [vmem:[%s1 + $0xe8] sm:$0xff]
      %v219 = vld [vmem:[%s1 + $0xf0] sm:$0xff]
      %v220 = vld [vmem:[%s1 + $0xf8] sm:$0xff]
      %v253 = vunpack.c.l.b16 %v189
      %v254 = vunpack.c.h.b16 %v189
      %v255 = vunpack.c.l.b16 %v190
      %v256 = vunpack.c.h.b16 %v190
      %v257 = vunpack.c.l.b16 %v191
      %v258 = vunpack.c.h.b16 %v191
      %v259 = vunpack.c.l.b16 %v192
      %v260 = vunpack.c.h.b16 %v192
      %v261 = vunpack.c.l.b16 %v193
      %v262 = vunpack.c.h.b16 %v193
      %v263 = vunpack.c.l.b16 %v194
      %v264 = vunpack.c.h.b16 %v194
      %v265 = vunpack.c.l.b16 %v195
      %v266 = vunpack.c.h.b16 %v195
      %v267 = vunpack.c.l.b16 %v196
      %v268 = vunpack.c.h.b16 %v196
      %v269 = vunpack.c.l.b16 %v197
      %v270 = vunpack.c.h.b16 %v197
      %v271 = vunpack.c.l.b16 %v198
      %v272 = vunpack.c.h.b16 %v198
      %v273 = vunpack.c.l.b16 %v199
      %v274 = vunpack.c.h.b16 %v199
      %v275 = vunpack.c.l.b16 %v200
      %v276 = vunpack.c.h.b16 %v200
      %v277 = vunpack.c.l.b16 %v201
      %v278 = vunpack.c.h.b16 %v201
      %v279 = vunpack.c.l.b16 %v202
      %v280 = vunpack.c.h.b16 %v202
      %v281 = vunpack.c.l.b16 %v203
      %v282 = vunpack.c.h.b16 %v203
      %v283 = vunpack.c.l.b16 %v204
      %v284 = vunpack.c.h.b16 %v204
      %v285 = vunpack.c.l.b16 %v205
      %v286 = vunpack.c.h.b16 %v205
      %v287 = vunpack.c.l.b16 %v206
      %v288 = vunpack.c.h.b16 %v206
      %v289 = vunpack.c.l.b16 %v207
      %v290 = vunpack.c.h.b16 %v207
      %v291 = vunpack.c.l.b16 %v208
      %v292 = vunpack.c.h.b16 %v208
      %v293 = vunpack.c.l.b16 %v209
      %v294 = vunpack.c.h.b16 %v209
      %v295 = vunpack.c.l.b16 %v210
      %v296 = vunpack.c.h.b16 %v210
      %v297 = vunpack.c.l.b16 %v211
      %v298 = vunpack.c.h.b16 %v211
      %v299 = vunpack.c.l.b16 %v212
      %v300 = vunpack.c.h.b16 %v212
      %v301 = vunpack.c.l.b16 %v213
      %v302 = vunpack.c.h.b16 %v213
      %v303 = vunpack.c.l.b16 %v214
      %v304 = vunpack.c.h.b16 %v214
      %v305 = vunpack.c.l.b16 %v215
      %v306 = vunpack.c.h.b16 %v215
      %v307 = vunpack.c.l.b16 %v216
      %v308 = vunpack.c.h.b16 %v216
      %v309 = vunpack.c.l.b16 %v217
      %v310 = vunpack.c.h.b16 %v217
      %v311 = vunpack.c.l.b16 %v218
      %v312 = vunpack.c.h.b16 %v218
      %v313 = vunpack.c.l.b16 %v219
      %v314 = vunpack.c.h.b16 %v219
      %v315 = vunpack.c.l.b16 %v220
      %v316 = vunpack.c.h.b16 %v220
      %v317 = vpack.c.b16 %v255, %v253
      %v318 = vpack.c.b16 %v256, %v254
      %v319 = vpack.c.b16 %v259, %v257
      %v320 = vpack.c.b16 %v260, %v258
      %v321 = vpack.c.b16 %v263, %v261
      %v322 = vpack.c.b16 %v264, %v262
      %v323 = vpack.c.b16 %v267, %v265
      %v324 = vpack.c.b16 %v268, %v266
      %v325 = vpack.c.b16 %v271, %v269
      %v326 = vpack.c.b16 %v272, %v270
      %v327 = vpack.c.b16 %v275, %v273
      %v328 = vpack.c.b16 %v276, %v274
      %v329 = vpack.c.b16 %v279, %v277
      %v330 = vpack.c.b16 %v280, %v278
      %v331 = vpack.c.b16 %v283, %v281
      %v332 = vpack.c.b16 %v284, %v282
      %v333 = vpack.c.b16 %v287, %v285
      %v334 = vpack.c.b16 %v288, %v286
      %v335 = vpack.c.b16 %v291, %v289
      %v336 = vpack.c.b16 %v292, %v290
      %v337 = vpack.c.b16 %v295, %v293
      %v338 = vpack.c.b16 %v296, %v294
      %v339 = vpack.c.b16 %v299, %v297
      %v340 = vpack.c.b16 %v300, %v298
      %v341 = vpack.c.b16 %v303, %v301
      %v342 = vpack.c.b16 %v304, %v302
      %v343 = vpack.c.b16 %v307, %v305
      %v344 = vpack.c.b16 %v308, %v306
      %v345 = vpack.c.b16 %v311, %v309
      %v346 = vpack.c.b16 %v312, %v310
      %v347 = vpack.c.b16 %v315, %v313
      %v348 = vpack.c.b16 %v316, %v314
      %381 = vmatpush.bf16.msra.mxu0 %v331
      %382 = vmatpush.bf16.msra.mxu0 %v329
      %383 = vmatpush.bf16.msra.mxu0 %v327
      %384 = vmatpush.bf16.msra.mxu0 %v325
      %385 = vmatpush.bf16.msra.mxu0 %v323
      %386 = vmatpush.bf16.msra.mxu0 %v321
      %387 = vmatpush.bf16.msra.mxu0 %v319
      %388 = vmatpush.bf16.msra.mxu0 %v317
      %389 = vmatmul.bf16.gmra.mxu0 %v185
      %v390 = vpop.f32.mrf.mxu0
      %v391 = vadd.f32 0.0, %v390
      %v392 = vpop.f32.mrf.mxu0
      %v393 = vadd.f32 0.0, %v392
      %394 = vmatmul.bf16.gmra.mxu0 %v187
      %v395 = vpop.f32.mrf.mxu0
      %v396 = vadd.f32 0.0, %v395
      %v397 = vpop.f32.mrf.mxu0
      %398 = vdwg.mxu0
      %399 = vmatpush.bf16.msra.mxu0 %v347
      %400 = vmatpush.bf16.msra.mxu0 %v345
      %401 = vmatpush.bf16.msra.mxu0 %v343
      %402 = vmatpush.bf16.msra.mxu0 %v341
      %403 = vmatpush.bf16.msra.mxu0 %v339
      %404 = vmatpush.bf16.msra.mxu0 %v337
      %405 = vmatpush.bf16.msra.mxu0 %v335
      %406 = vmatpush.bf16.msra.mxu0 %v333
      %407 = vmatmul.bf16.gmra.mxu0 %v186
      %v408 = vpop.f32.mrf.mxu0
      %v409 = vadd.f32 %v391, %v408
      %v410 = vpop.f32.mrf.mxu0
      %v411 = vadd.f32 %v393, %v410
      %412 = vmatmul.bf16.gmra.mxu0 %v188
      %v413 = vpop.f32.mrf.mxu0
      %v414 = vadd.f32 %v396, %v413
      %v415 = vpop.f32.mrf.mxu0
      %416 = vdwg.mxu0
      %417 = vmatpush.bf16.msra.mxu0 %v332
      %418 = vmatpush.bf16.msra.mxu0 %v330
      %419 = vmatpush.bf16.msra.mxu0 %v328
      %420 = vmatpush.bf16.msra.mxu0 %v326
      %421 = vmatpush.bf16.msra.mxu0 %v324
      %422 = vmatpush.bf16.msra.mxu0 %v322
      %423 = vmatpush.bf16.msra.mxu0 %v320
      %424 = vmatpush.bf16.msra.mxu0 %v318
      %425 = vmatmul.bf16.gmra.mxu0 %v185
      %v426 = vpop.f32.mrf.mxu0
      %v427 = vadd.f32 0.0, %v426
      %v428 = vpop.f32.mrf.mxu0
      %v429 = vadd.f32 0.0, %v428
      %430 = vmatmul.bf16.gmra.mxu0 %v187
      %v431 = vpop.f32.mrf.mxu0
      %v432 = vadd.f32 0.0, %v431
      %v433 = vpop.f32.mrf.mxu0
      %434 = vdwg.mxu0
      %435 = vmatpush.bf16.msra.mxu0 %v348
      %436 = vmatpush.bf16.msra.mxu0 %v346
      %437 = vmatpush.bf16.msra.mxu0 %v344
      %438 = vmatpush.bf16.msra.mxu0 %v342
      %439 = vmatpush.bf16.msra.mxu0 %v340
      %440 = vmatpush.bf16.msra.mxu0 %v338
      %441 = vmatpush.bf16.msra.mxu0 %v336
      %442 = vmatpush.bf16.msra.mxu0 %v334
      %443 = vmatmul.bf16.gmra.mxu0 %v186
      %v444 = vpop.f32.mrf.mxu0
      %v445 = vadd.f32 %v427, %v444
      %v446 = vpop.f32.mrf.mxu0
      %v447 = vadd.f32 %v429, %v446
      %448 = vmatmul.bf16.gmra.mxu0 %v188
      %v449 = vpop.f32.mrf.mxu0
      %v450 = vadd.f32 %v432, %v449
      %v451 = vpop.f32.mrf.mxu0
      %452 = vdwg.mxu0
      %v453 = vadd.f32 %v177, %v409
      %v454 = vadd.f32 %v178, %v445
      %v455 = vadd.f32 %v177, %v411
      %v456 = vadd.f32 %v178, %v447
      %v457 = vadd.f32 %v177, %v414
      %v458 = vadd.f32 %v178, %v450
      %v459 = vld [vmem:[%s165] sm:$0xfe]
      %v460 = vld [vmem:[%s165 + $0x8] sm:$0xfe]
      %v461 = vld [vmem:[%s165 + $0x10] sm:$0xff]
      %v462 = vld [vmem:[%s165 + $0x18] sm:$0xff]
      %v463 = vld [vmem:[%s165 + $0x20] sm:$0xff]
      %v464 = vld [vmem:[%s165 + $0x28] sm:$0xff]
      %v465 = vld [vmem:[%s165 + $0x30] sm:$0x1]
      %v466 = vld [vmem:[%s165 + $0x38] sm:$0x1]
      %v467 = vpack.c.bf16 %v461, %v459
      %v468 = vpack.c.bf16 %v462, %v460
      %v469 = vpack.c.bf16 %v465, %v463
      %v470 = vpack.c.bf16 %v466, %v464
      %s471 = scalar_lea.vmem %s1, 256
      %v472 = vld [vmem:[%s471] sm:$0xff]
      %v473 = vld [vmem:[%s471 + $0x8] sm:$0xff]
      %v474 = vld [vmem:[%s471 + $0x10] sm:$0xff]
      %v475 = vld [vmem:[%s471 + $0x18] sm:$0xff]
      %v476 = vld [vmem:[%s471 + $0x20] sm:$0xff]
      %v477 = vld [vmem:[%s471 + $0x28] sm:$0xff]
      %v478 = vld [vmem:[%s471 + $0x30] sm:$0xff]
      %v479 = vld [vmem:[%s471 + $0x38] sm:$0xff]
      %v480 = vld [vmem:[%s471 + $0x40] sm:$0xff]
      %v481 = vld [vmem:[%s471 + $0x48] sm:$0xff]
      %v482 = vld [vmem:[%s471 + $0x50] sm:$0xff]
      %v483 = vld [vmem:[%s471 + $0x58] sm:$0xff]
      %v484 = vld [vmem:[%s471 + $0x60] sm:$0xff]
      %v485 = vld [vmem:[%s471 + $0x68] sm:$0xff]
      %v486 = vld [vmem:[%s471 + $0x70] sm:$0xff]
      %v487 = vld [vmem:[%s471 + $0x78] sm:$0xff]
      %v488 = vld [vmem:[%s471 + $0x80] sm:$0xff]
      %v489 = vld [vmem:[%s471 + $0x88] sm:$0xff]
      %v490 = vld [vmem:[%s471 + $0x90] sm:$0xff]
      %v491 = vld [vmem:[%s471 + $0x98] sm:$0xff]
      %v492 = vld [vmem:[%s471 + $0xa0] sm:$0xff]
      %v493 = vld [vmem:[%s471 + $0xa8] sm:$0xff]
      %v494 = vld [vmem:[%s471 + $0xb0] sm:$0xff]
      %v495 = vld [vmem:[%s471 + $0xb8] sm:$0xff]
      %v496 = vld [vmem:[%s471 + $0xc0] sm:$0xff]
      %v497 = vld [vmem:[%s471 + $0xc8] sm:$0xff]
      %v498 = vld [vmem:[%s471 + $0xd0] sm:$0xff]
      %v499 = vld [vmem:[%s471 + $0xd8] sm:$0xff]
      %v500 = vld [vmem:[%s471 + $0xe0] sm:$0xff]
      %v501 = vld [vmem:[%s471 + $0xe8] sm:$0xff]
      %v502 = vld [vmem:[%s471 + $0xf0] sm:$0xff]
      %v503 = vld [vmem:[%s471 + $0xf8] sm:$0xff]
      %vm504 = vsmask.f32 7424
      %v506 = vshrl.u32 %v467, 16
      %v508 = vshll.u32 %v467, 16
      %v510 = vrot.slane %v508, 1
      %v511 = vor.u32 %v506, %v510
      %v513 = vshll.u32 %v469, 16
      %v515 = vrot.slane %v513, 1
      %v516 = vsel %vm504, %v511, %v515
      %v518 = vshrl.u32 %v468, 16
      %v520 = vshll.u32 %v468, 16
      %v522 = vrot.slane %v520, 1
      %v523 = vor.u32 %v518, %v522
      %v525 = vshll.u32 %v470, 16
      %v527 = vrot.slane %v525, 1
      %v528 = vsel %vm504, %v523, %v527
      %v529 = vshrl.u32 %v469, 16
      %v531 = vor.u32 %v529, %v515
      %v532 = vshrl.u32 %v470, 16
      %v534 = vor.u32 %v532, %v527
      %v571 = vunpack.c.l.b16 %v472
      %v572 = vunpack.c.h.b16 %v472
      %v573 = vunpack.c.l.b16 %v473
      %v574 = vunpack.c.h.b16 %v473
      %v575 = vunpack.c.l.b16 %v474
      %v576 = vunpack.c.h.b16 %v474
      %v577 = vunpack.c.l.b16 %v475
      %v578 = vunpack.c.h.b16 %v475
      %v579 = vunpack.c.l.b16 %v476
      %v580 = vunpack.c.h.b16 %v476
      %v581 = vunpack.c.l.b16 %v477
      %v582 = vunpack.c.h.b16 %v477
      %v583 = vunpack.c.l.b16 %v478
      %v584 = vunpack.c.h.b16 %v478
      %v585 = vunpack.c.l.b16 %v479
      %v586 = vunpack.c.h.b16 %v479
      %v587 = vunpack.c.l.b16 %v480
      %v588 = vunpack.c.h.b16 %v480
      %v589 = vunpack.c.l.b16 %v481
      %v590 = vunpack.c.h.b16 %v481
      %v591 = vunpack.c.l.b16 %v482
      %v592 = vunpack.c.h.b16 %v482
      %v593 = vunpack.c.l.b16 %v483
      %v594 = vunpack.c.h.b16 %v483
      %v595 = vunpack.c.l.b16 %v484
      %v596 = vunpack.c.h.b16 %v484
      %v597 = vunpack.c.l.b16 %v485
      %v598 = vunpack.c.h.b16 %v485
      %v599 = vunpack.c.l.b16 %v486
      %v600 = vunpack.c.h.b16 %v486
      %v601 = vunpack.c.l.b16 %v487
      %v602 = vunpack.c.h.b16 %v487
      %v603 = vunpack.c.l.b16 %v488
      %v604 = vunpack.c.h.b16 %v488
      %v605 = vunpack.c.l.b16 %v489
      %v606 = vunpack.c.h.b16 %v489
      %v607 = vunpack.c.l.b16 %v490
      %v608 = vunpack.c.h.b16 %v490
      %v609 = vunpack.c.l.b16 %v491
      %v610 = vunpack.c.h.b16 %v491
      %v611 = vunpack.c.l.b16 %v492
      %v612 = vunpack.c.h.b16 %v492
      %v613 = vunpack.c.l.b16 %v493
      %v614 = vunpack.c.h.b16 %v493
      %v615 = vunpack.c.l.b16 %v494
      %v616 = vunpack.c.h.b16 %v494
      %v617 = vunpack.c.l.b16 %v495
      %v618 = vunpack.c.h.b16 %v495
      %v619 = vunpack.c.l.b16 %v496
      %v620 = vunpack.c.h.b16 %v496
      %v621 = vunpack.c.l.b16 %v497
      %v622 = vunpack.c.h.b16 %v497
      %v623 = vunpack.c.l.b16 %v498
      %v624 = vunpack.c.h.b16 %v498
      %v625 = vunpack.c.l.b16 %v499
      %v626 = vunpack.c.h.b16 %v499
      %v627 = vunpack.c.l.b16 %v500
      %v628 = vunpack.c.h.b16 %v500
      %v629 = vunpack.c.l.b16 %v501
      %v630 = vunpack.c.h.b16 %v501
      %v631 = vunpack.c.l.b16 %v502
      %v632 = vunpack.c.h.b16 %v502
      %v633 = vunpack.c.l.b16 %v503
      %v634 = vunpack.c.h.b16 %v503
      %v635 = vpack.c.b16 %v573, %v571
      %v636 = vpack.c.b16 %v574, %v572
      %v637 = vpack.c.b16 %v577, %v575
      %v638 = vpack.c.b16 %v578, %v576
      %v639 = vpack.c.b16 %v581, %v579
      %v640 = vpack.c.b16 %v582, %v580
      %v641 = vpack.c.b16 %v585, %v583
      %v642 = vpack.c.b16 %v586, %v584
      %v643 = vpack.c.b16 %v589, %v587
      %v644 = vpack.c.b16 %v590, %v588
      %v645 = vpack.c.b16 %v593, %v591
      %v646 = vpack.c.b16 %v594, %v592
      %v647 = vpack.c.b16 %v597, %v595
      %v648 = vpack.c.b16 %v598, %v596
      %v649 = vpack.c.b16 %v601, %v599
      %v650 = vpack.c.b16 %v602, %v600
      %v651 = vpack.c.b16 %v605, %v603
      %v652 = vpack.c.b16 %v606, %v604
      %v653 = vpack.c.b16 %v609, %v607
      %v654 = vpack.c.b16 %v610, %v608
      %v655 = vpack.c.b16 %v613, %v611
      %v656 = vpack.c.b16 %v614, %v612
      %v657 = vpack.c.b16 %v617, %v615
      %v658 = vpack.c.b16 %v618, %v616
      %v659 = vpack.c.b16 %v621, %v619
      %v660 = vpack.c.b16 %v622, %v620
      %v661 = vpack.c.b16 %v625, %v623
      %v662 = vpack.c.b16 %v626, %v624
      %v663 = vpack.c.b16 %v629, %v627
      %v664 = vpack.c.b16 %v630, %v628
      %v665 = vpack.c.b16 %v633, %v631
      %v666 = vpack.c.b16 %v634, %v632
      %699 = vmatpush.bf16.msra.mxu0 %v649
      %700 = vmatpush.bf16.msra.mxu0 %v647
      %701 = vmatpush.bf16.msra.mxu0 %v645
      %702 = vmatpush.bf16.msra.mxu0 %v643
      %703 = vmatpush.bf16.msra.mxu0 %v641
      %704 = vmatpush.bf16.msra.mxu0 %v639
      %705 = vmatpush.bf16.msra.mxu0 %v637
      %706 = vmatpush.bf16.msra.mxu0 %v635
      %707 = vmatmul.bf16.gmra.mxu0 %v516
      %v708 = vpop.f32.mrf.mxu0
      %v709 = vadd.f32 0.0, %v708
      %v710 = vpop.f32.mrf.mxu0
      %v711 = vadd.f32 0.0, %v710
      %712 = vmatmul.bf16.gmra.mxu0 %v531
      %v713 = vpop.f32.mrf.mxu0
      %v714 = vadd.f32 0.0, %v713
      %v715 = vpop.f32.mrf.mxu0
      %716 = vdwg.mxu0
      %717 = vmatpush.bf16.msra.mxu0 %v665
      %718 = vmatpush.bf16.msra.mxu0 %v663
      %719 = vmatpush.bf16.msra.mxu0 %v661
      %720 = vmatpush.bf16.msra.mxu0 %v659
      %721 = vmatpush.bf16.msra.mxu0 %v657
      %722 = vmatpush.bf16.msra.mxu0 %v655
      %723 = vmatpush.bf16.msra.mxu0 %v653
      %724 = vmatpush.bf16.msra.mxu0 %v651
      %725 = vmatmul.bf16.gmra.mxu0 %v528
      %v726 = vpop.f32.mrf.mxu0
      %v727 = vadd.f32 %v709, %v726
      %v728 = vpop.f32.mrf.mxu0
      %v729 = vadd.f32 %v711, %v728
      %730 = vmatmul.bf16.gmra.mxu0 %v534
      %v731 = vpop.f32.mrf.mxu0
      %v732 = vadd.f32 %v714, %v731
      %v733 = vpop.f32.mrf.mxu0
      %734 = vdwg.mxu0
      %735 = vmatpush.bf16.msra.mxu0 %v650
      %736 = vmatpush.bf16.msra.mxu0 %v648
      %737 = vmatpush.bf16.msra.mxu0 %v646
      %738 = vmatpush.bf16.msra.mxu0 %v644
      %739 = vmatpush.bf16.msra.mxu0 %v642
      %740 = vmatpush.bf16.msra.mxu0 %v640
      %741 = vmatpush.bf16.msra.mxu0 %v638
      %742 = vmatpush.bf16.msra.mxu0 %v636
      %743 = vmatmul.bf16.gmra.mxu0 %v516
      %v744 = vpop.f32.mrf.mxu0
      %v745 = vadd.f32 0.0, %v744
      %v746 = vpop.f32.mrf.mxu0
      %v747 = vadd.f32 0.0, %v746
      %748 = vmatmul.bf16.gmra.mxu0 %v531
      %v749 = vpop.f32.mrf.mxu0
      %v750 = vadd.f32 0.0, %v749
      %v751 = vpop.f32.mrf.mxu0
      %752 = vdwg.mxu0
      %753 = vmatpush.bf16.msra.mxu0 %v666
      %754 = vmatpush.bf16.msra.mxu0 %v664
      %755 = vmatpush.bf16.msra.mxu0 %v662
      %756 = vmatpush.bf16.msra.mxu0 %v660
      %757 = vmatpush.bf16.msra.mxu0 %v658
      %758 = vmatpush.bf16.msra.mxu0 %v656
      %759 = vmatpush.bf16.msra.mxu0 %v654
      %760 = vmatpush.bf16.msra.mxu0 %v652
      %761 = vmatmul.bf16.gmra.mxu0 %v528
      %v762 = vpop.f32.mrf.mxu0
      %v763 = vadd.f32 %v745, %v762
      %v764 = vpop.f32.mrf.mxu0
      %v765 = vadd.f32 %v747, %v764
      %766 = vmatmul.bf16.gmra.mxu0 %v534
      %v767 = vpop.f32.mrf.mxu0
      %v768 = vadd.f32 %v750, %v767
      %v769 = vpop.f32.mrf.mxu0
      %770 = vdwg.mxu0
      %v771 = vadd.f32 %v453, %v727
      %v772 = vadd.f32 %v454, %v763
      %v773 = vadd.f32 %v455, %v729
      %v774 = vadd.f32 %v456, %v765
      %v775 = vadd.f32 %v457, %v732
      %v776 = vadd.f32 %v458, %v768
      %v777 = vld [vmem:[%s165] sm:$0xfc]
      %v778 = vld [vmem:[%s165 + $0x8] sm:$0xfc]
      %v779 = vld [vmem:[%s165 + $0x30] sm:$0x3]
      %v780 = vld [vmem:[%s165 + $0x38] sm:$0x3]
      %v781 = vpack.c.bf16 %v461, %v777
      %v782 = vpack.c.bf16 %v462, %v778
      %v783 = vpack.c.bf16 %v779, %v463
      %v784 = vpack.c.bf16 %v780, %v464
      %s785 = scalar_lea.vmem %s1, 512
      %v786 = vld [vmem:[%s785] sm:$0xff]
      %v787 = vld [vmem:[%s785 + $0x8] sm:$0xff]
      %v788 = vld [vmem:[%s785 + $0x10] sm:$0xff]
      %v789 = vld [vmem:[%s785 + $0x18] sm:$0xff]
      %v790 = vld [vmem:[%s785 + $0x20] sm:$0xff]
      %v791 = vld [vmem:[%s785 + $0x28] sm:$0xff]
      %v792 = vld [vmem:[%s785 + $0x30] sm:$0xff]
      %v793 = vld [vmem:[%s785 + $0x38] sm:$0xff]
      %v794 = vld [vmem:[%s785 + $0x40] sm:$0xff]
      %v795 = vld [vmem:[%s785 + $0x48] sm:$0xff]
      %v796 = vld [vmem:[%s785 + $0x50] sm:$0xff]
      %v797 = vld [vmem:[%s785 + $0x58] sm:$0xff]
      %v798 = vld [vmem:[%s785 + $0x60] sm:$0xff]
      %v799 = vld [vmem:[%s785 + $0x68] sm:$0xff]
      %v800 = vld [vmem:[%s785 + $0x70] sm:$0xff]
      %v801 = vld [vmem:[%s785 + $0x78] sm:$0xff]
      %v802 = vld [vmem:[%s785 + $0x80] sm:$0xff]
      %v803 = vld [vmem:[%s785 + $0x88] sm:$0xff]
      %v804 = vld [vmem:[%s785 + $0x90] sm:$0xff]
      %v805 = vld [vmem:[%s785 + $0x98] sm:$0xff]
      %v806 = vld [vmem:[%s785 + $0xa0] sm:$0xff]
      %v807 = vld [vmem:[%s785 + $0xa8] sm:$0xff]
      %v808 = vld [vmem:[%s785 + $0xb0] sm:$0xff]
      %v809 = vld [vmem:[%s785 + $0xb8] sm:$0xff]
      %v810 = vld [vmem:[%s785 + $0xc0] sm:$0xff]
      %v811 = vld [vmem:[%s785 + $0xc8] sm:$0xff]
      %v812 = vld [vmem:[%s785 + $0xd0] sm:$0xff]
      %v813 = vld [vmem:[%s785 + $0xd8] sm:$0xff]
      %v814 = vld [vmem:[%s785 + $0xe0] sm:$0xff]
      %v815 = vld [vmem:[%s785 + $0xe8] sm:$0xff]
      %v816 = vld [vmem:[%s785 + $0xf0] sm:$0xff]
      %v817 = vld [vmem:[%s785 + $0xf8] sm:$0xff]
      %vm822 = vcmask 1046528
      %v823 = vrot.slane %v781, 1
      %v824 = vrot.slane %v783, 1
      %v825 = vsel %vm822, %v823, %v824
      %v826 = vrot.slane %v782, 1
      %v827 = vrot.slane %v784, 1
      %v828 = vsel %vm822, %v826, %v827
      %v865 = vunpack.c.l.b16 %v786
      %v866 = vunpack.c.h.b16 %v786
      %v867 = vunpack.c.l.b16 %v787
      %v868 = vunpack.c.h.b16 %v787
      %v869 = vunpack.c.l.b16 %v788
      %v870 = vunpack.c.h.b16 %v788
      %v871 = vunpack.c.l.b16 %v789
      %v872 = vunpack.c.h.b16 %v789
      %v873 = vunpack.c.l.b16 %v790
      %v874 = vunpack.c.h.b16 %v790
      %v875 = vunpack.c.l.b16 %v791
      %v876 = vunpack.c.h.b16 %v791
      %v877 = vunpack.c.l.b16 %v792
      %v878 = vunpack.c.h.b16 %v792
      %v879 = vunpack.c.l.b16 %v793
      %v880 = vunpack.c.h.b16 %v793
      %v881 = vunpack.c.l.b16 %v794
      %v882 = vunpack.c.h.b16 %v794
      %v883 = vunpack.c.l.b16 %v795
      %v884 = vunpack.c.h.b16 %v795
      %v885 = vunpack.c.l.b16 %v796
      %v886 = vunpack.c.h.b16 %v796
      %v887 = vunpack.c.l.b16 %v797
      %v888 = vunpack.c.h.b16 %v797
      %v889 = vunpack.c.l.b16 %v798
      %v890 = vunpack.c.h.b16 %v798
      %v891 = vunpack.c.l.b16 %v799
      %v892 = vunpack.c.h.b16 %v799
      %v893 = vunpack.c.l.b16 %v800
      %v894 = vunpack.c.h.b16 %v800
      %v895 = vunpack.c.l.b16 %v801
      %v896 = vunpack.c.h.b16 %v801
      %v897 = vunpack.c.l.b16 %v802
      %v898 = vunpack.c.h.b16 %v802
      %v899 = vunpack.c.l.b16 %v803
      %v900 = vunpack.c.h.b16 %v803
      %v901 = vunpack.c.l.b16 %v804
      %v902 = vunpack.c.h.b16 %v804
      %v903 = vunpack.c.l.b16 %v805
      %v904 = vunpack.c.h.b16 %v805
      %v905 = vunpack.c.l.b16 %v806
      %v906 = vunpack.c.h.b16 %v806
      %v907 = vunpack.c.l.b16 %v807
      %v908 = vunpack.c.h.b16 %v807
      %v909 = vunpack.c.l.b16 %v808
      %v910 = vunpack.c.h.b16 %v808
      %v911 = vunpack.c.l.b16 %v809
      %v912 = vunpack.c.h.b16 %v809
      %v913 = vunpack.c.l.b16 %v810
      %v914 = vunpack.c.h.b16 %v810
      %v915 = vunpack.c.l.b16 %v811
      %v916 = vunpack.c.h.b16 %v811
      %v917 = vunpack.c.l.b16 %v812
      %v918 = vunpack.c.h.b16 %v812
      %v919 = vunpack.c.l.b16 %v813
      %v920 = vunpack.c.h.b16 %v813
      %v921 = vunpack.c.l.b16 %v814
      %v922 = vunpack.c.h.b16 %v814
      %v923 = vunpack.c.l.b16 %v815
      %v924 = vunpack.c.h.b16 %v815
      %v925 = vunpack.c.l.b16 %v816
      %v926 = vunpack.c.h.b16 %v816
      %v927 = vunpack.c.l.b16 %v817
      %v928 = vunpack.c.h.b16 %v817
      %v929 = vpack.c.b16 %v867, %v865
      %v930 = vpack.c.b16 %v868, %v866
      %v931 = vpack.c.b16 %v871, %v869
      %v932 = vpack.c.b16 %v872, %v870
      %v933 = vpack.c.b16 %v875, %v873
      %v934 = vpack.c.b16 %v876, %v874
      %v935 = vpack.c.b16 %v879, %v877
      %v936 = vpack.c.b16 %v880, %v878
      %v937 = vpack.c.b16 %v883, %v881
      %v938 = vpack.c.b16 %v884, %v882
      %v939 = vpack.c.b16 %v887, %v885
      %v940 = vpack.c.b16 %v888, %v886
      %v941 = vpack.c.b16 %v891, %v889
      %v942 = vpack.c.b16 %v892, %v890
      %v943 = vpack.c.b16 %v895, %v893
      %v944 = vpack.c.b16 %v896, %v894
      %v945 = vpack.c.b16 %v899, %v897
      %v946 = vpack.c.b16 %v900, %v898
      %v947 = vpack.c.b16 %v903, %v901
      %v948 = vpack.c.b16 %v904, %v902
      %v949 = vpack.c.b16 %v907, %v905
      %v950 = vpack.c.b16 %v908, %v906
      %v951 = vpack.c.b16 %v911, %v909
      %v952 = vpack.c.b16 %v912, %v910
      %v953 = vpack.c.b16 %v915, %v913
      %v954 = vpack.c.b16 %v916, %v914
      %v955 = vpack.c.b16 %v919, %v917
      %v956 = vpack.c.b16 %v920, %v918
      %v957 = vpack.c.b16 %v923, %v921
      %v958 = vpack.c.b16 %v924, %v922
      %v959 = vpack.c.b16 %v927, %v925
      %v960 = vpack.c.b16 %v928, %v926
      %993 = vmatpush.bf16.msra.mxu0 %v943
      %994 = vmatpush.bf16.msra.mxu0 %v941
      %995 = vmatpush.bf16.msra.mxu0 %v939
      %996 = vmatpush.bf16.msra.mxu0 %v937
      %997 = vmatpush.bf16.msra.mxu0 %v935
      %998 = vmatpush.bf16.msra.mxu0 %v933
      %999 = vmatpush.bf16.msra.mxu0 %v931
      %1000 = vmatpush.bf16.msra.mxu0 %v929
      %1001 = vmatmul.bf16.gmra.mxu0 %v825
      %v1002 = vpop.f32.mrf.mxu0
      %v1003 = vadd.f32 0.0, %v1002
      %v1004 = vpop.f32.mrf.mxu0
      %v1005 = vadd.f32 0.0, %v1004
      %1006 = vmatmul.bf16.gmra.mxu0 %v824
      %v1007 = vpop.f32.mrf.mxu0
      %v1008 = vadd.f32 0.0, %v1007
      %v1009 = vpop.f32.mrf.mxu0
      %1010 = vdwg.mxu0
      %1011 = vmatpush.bf16.msra.mxu0 %v959
      %1012 = vmatpush.bf16.msra.mxu0 %v957
      %1013 = vmatpush.bf16.msra.mxu0 %v955
      %1014 = vmatpush.bf16.msra.mxu0 %v953
      %1015 = vmatpush.bf16.msra.mxu0 %v951
      %1016 = vmatpush.bf16.msra.mxu0 %v949
      %1017 = vmatpush.bf16.msra.mxu0 %v947
      %1018 = vmatpush.bf16.msra.mxu0 %v945
      %1019 = vmatmul.bf16.gmra.mxu0 %v828
      %v1020 = vpop.f32.mrf.mxu0
      %v1021 = vadd.f32 %v1003, %v1020
      %v1022 = vpop.f32.mrf.mxu0
      %v1023 = vadd.f32 %v1005, %v1022
      %1024 = vmatmul.bf16.gmra.mxu0 %v827
      %v1025 = vpop.f32.mrf.mxu0
      %v1026 = vadd.f32 %v1008, %v1025
      %v1027 = vpop.f32.mrf.mxu0
      %1028 = vdwg.mxu0
      %1029 = vmatpush.bf16.msra.mxu0 %v944
      %1030 = vmatpush.bf16.msra.mxu0 %v942
      %1031 = vmatpush.bf16.msra.mxu0 %v940
      %1032 = vmatpush.bf16.msra.mxu0 %v938
      %1033 = vmatpush.bf16.msra.mxu0 %v936
      %1034 = vmatpush.bf16.msra.mxu0 %v934
      %1035 = vmatpush.bf16.msra.mxu0 %v932
      %1036 = vmatpush.bf16.msra.mxu0 %v930
      %1037 = vmatmul.bf16.gmra.mxu0 %v825
      %v1038 = vpop.f32.mrf.mxu0
      %v1039 = vadd.f32 0.0, %v1038
      %v1040 = vpop.f32.mrf.mxu0
      %v1041 = vadd.f32 0.0, %v1040
      %1042 = vmatmul.bf16.gmra.mxu0 %v824
      %v1043 = vpop.f32.mrf.mxu0
      %v1044 = vadd.f32 0.0, %v1043
      %v1045 = vpop.f32.mrf.mxu0
      %1046 = vdwg.mxu0
      %1047 = vmatpush.bf16.msra.mxu0 %v960
      %1048 = vmatpush.bf16.msra.mxu0 %v958
      %1049 = vmatpush.bf16.msra.mxu0 %v956
      %1050 = vmatpush.bf16.msra.mxu0 %v954
      %1051 = vmatpush.bf16.msra.mxu0 %v952
      %1052 = vmatpush.bf16.msra.mxu0 %v950
      %1053 = vmatpush.bf16.msra.mxu0 %v948
      %1054 = vmatpush.bf16.msra.mxu0 %v946
      %1055 = vmatmul.bf16.gmra.mxu0 %v828
      %v1056 = vpop.f32.mrf.mxu0
      %v1057 = vadd.f32 %v1039, %v1056
      %v1058 = vpop.f32.mrf.mxu0
      %v1059 = vadd.f32 %v1041, %v1058
      %1060 = vmatmul.bf16.gmra.mxu0 %v827
      %v1061 = vpop.f32.mrf.mxu0
      %v1062 = vadd.f32 %v1044, %v1061
      %v1063 = vpop.f32.mrf.mxu0
      %1064 = vdwg.mxu0
      %v1065 = vadd.f32 %v771, %v1021
      %v1066 = vadd.f32 %v772, %v1057
      %v1067 = vadd.f32 %v773, %v1023
      %v1068 = vadd.f32 %v774, %v1059
      %v1069 = vadd.f32 %v775, %v1026
      %v1070 = vadd.f32 %v776, %v1062
      %v1071 = vld [vmem:[%s165] sm:$0xc0]
      %v1072 = vld [vmem:[%s165 + $0x8] sm:$0xc0]
      %v1073 = vld [vmem:[%s165 + $0x30] sm:$0x3f]
      %v1074 = vld [vmem:[%s165 + $0x38] sm:$0x3f]
      %v1075 = vpack.c.bf16 %v461, %v1071
      %v1076 = vpack.c.bf16 %v462, %v1072
      %v1077 = vpack.c.bf16 %v1073, %v463
      %v1078 = vpack.c.bf16 %v1074, %v464
      %s1079 = scalar_lea.vmem %s1, 768
      %v1080 = vld [vmem:[%s1079] sm:$0xff]
      %v1081 = vld [vmem:[%s1079 + $0x8] sm:$0xff]
      %v1082 = vld [vmem:[%s1079 + $0x10] sm:$0xff]
      %v1083 = vld [vmem:[%s1079 + $0x18] sm:$0xff]
      %v1084 = vld [vmem:[%s1079 + $0x20] sm:$0xff]
      %v1085 = vld [vmem:[%s1079 + $0x28] sm:$0xff]
      %v1086 = vld [vmem:[%s1079 + $0x30] sm:$0xff]
      %v1087 = vld [vmem:[%s1079 + $0x38] sm:$0xff]
      %v1088 = vld [vmem:[%s1079 + $0x40] sm:$0xff]
      %v1089 = vld [vmem:[%s1079 + $0x48] sm:$0xff]
      %v1090 = vld [vmem:[%s1079 + $0x50] sm:$0xff]
      %v1091 = vld [vmem:[%s1079 + $0x58] sm:$0xff]
      %v1092 = vld [vmem:[%s1079 + $0x60] sm:$0xff]
      %v1093 = vld [vmem:[%s1079 + $0x68] sm:$0xff]
      %v1094 = vld [vmem:[%s1079 + $0x70] sm:$0xff]
      %v1095 = vld [vmem:[%s1079 + $0x78] sm:$0xff]
      %v1096 = vld [vmem:[%s1079 + $0x80] sm:$0xff]
      %v1097 = vld [vmem:[%s1079 + $0x88] sm:$0xff]
      %v1098 = vld [vmem:[%s1079 + $0x90] sm:$0xff]
      %v1099 = vld [vmem:[%s1079 + $0x98] sm:$0xff]
      %v1100 = vld [vmem:[%s1079 + $0xa0] sm:$0xff]
      %v1101 = vld [vmem:[%s1079 + $0xa8] sm:$0xff]
      %v1102 = vld [vmem:[%s1079 + $0xb0] sm:$0xff]
      %v1103 = vld [vmem:[%s1079 + $0xb8] sm:$0xff]
      %v1104 = vld [vmem:[%s1079 + $0xc0] sm:$0xff]
      %v1105 = vld [vmem:[%s1079 + $0xc8] sm:$0xff]
      %v1106 = vld [vmem:[%s1079 + $0xd0] sm:$0xff]
      %v1107 = vld [vmem:[%s1079 + $0xd8] sm:$0xff]
      %v1108 = vld [vmem:[%s1079 + $0xe0] sm:$0xff]
      %v1109 = vld [vmem:[%s1079 + $0xe8] sm:$0xff]
      %v1110 = vld [vmem:[%s1079 + $0xf0] sm:$0xff]
      %v1111 = vld [vmem:[%s1079 + $0xf8] sm:$0xff]
      %vm1116 = vcmask 1044480
      %v1117 = vrot.slane %v1075, 3
      %v1118 = vrot.slane %v1077, 3
      %v1119 = vsel %vm1116, %v1117, %v1118
      %v1120 = vrot.slane %v1076, 3
      %v1121 = vrot.slane %v1078, 3
      %v1122 = vsel %vm1116, %v1120, %v1121
      %v1159 = vunpack.c.l.b16 %v1080
      %v1160 = vunpack.c.h.b16 %v1080
      %v1161 = vunpack.c.l.b16 %v1081
      %v1162 = vunpack.c.h.b16 %v1081
      %v1163 = vunpack.c.l.b16 %v1082
      %v1164 = vunpack.c.h.b16 %v1082
      %v1165 = vunpack.c.l.b16 %v1083
      %v1166 = vunpack.c.h.b16 %v1083
      %v1167 = vunpack.c.l.b16 %v1084
      %v1168 = vunpack.c.h.b16 %v1084
      %v1169 = vunpack.c.l.b16 %v1085
      %v1170 = vunpack.c.h.b16 %v1085
      %v1171 = vunpack.c.l.b16 %v1086
      %v1172 = vunpack.c.h.b16 %v1086
      %v1173 = vunpack.c.l.b16 %v1087
      %v1174 = vunpack.c.h.b16 %v1087
      %v1175 = vunpack.c.l.b16 %v1088
      %v1176 = vunpack.c.h.b16 %v1088
      %v1177 = vunpack.c.l.b16 %v1089
      %v1178 = vunpack.c.h.b16 %v1089
      %v1179 = vunpack.c.l.b16 %v1090
      %v1180 = vunpack.c.h.b16 %v1090
      %v1181 = vunpack.c.l.b16 %v1091
      %v1182 = vunpack.c.h.b16 %v1091
      %v1183 = vunpack.c.l.b16 %v1092
      %v1184 = vunpack.c.h.b16 %v1092
      %v1185 = vunpack.c.l.b16 %v1093
      %v1186 = vunpack.c.h.b16 %v1093
      %v1187 = vunpack.c.l.b16 %v1094
      %v1188 = vunpack.c.h.b16 %v1094
      %v1189 = vunpack.c.l.b16 %v1095
      %v1190 = vunpack.c.h.b16 %v1095
      %v1191 = vunpack.c.l.b16 %v1096
      %v1192 = vunpack.c.h.b16 %v1096
      %v1193 = vunpack.c.l.b16 %v1097
      %v1194 = vunpack.c.h.b16 %v1097
      %v1195 = vunpack.c.l.b16 %v1098
      %v1196 = vunpack.c.h.b16 %v1098
      %v1197 = vunpack.c.l.b16 %v1099
      %v1198 = vunpack.c.h.b16 %v1099
      %v1199 = vunpack.c.l.b16 %v1100
      %v1200 = vunpack.c.h.b16 %v1100
      %v1201 = vunpack.c.l.b16 %v1101
      %v1202 = vunpack.c.h.b16 %v1101
      %v1203 = vunpack.c.l.b16 %v1102
      %v1204 = vunpack.c.h.b16 %v1102
      %v1205 = vunpack.c.l.b16 %v1103
      %v1206 = vunpack.c.h.b16 %v1103
      %v1207 = vunpack.c.l.b16 %v1104
      %v1208 = vunpack.c.h.b16 %v1104
      %v1209 = vunpack.c.l.b16 %v1105
      %v1210 = vunpack.c.h.b16 %v1105
      %v1211 = vunpack.c.l.b16 %v1106
      %v1212 = vunpack.c.h.b16 %v1106
      %v1213 = vunpack.c.l.b16 %v1107
      %v1214 = vunpack.c.h.b16 %v1107
      %v1215 = vunpack.c.l.b16 %v1108
      %v1216 = vunpack.c.h.b16 %v1108
      %v1217 = vunpack.c.l.b16 %v1109
      %v1218 = vunpack.c.h.b16 %v1109
      %v1219 = vunpack.c.l.b16 %v1110
      %v1220 = vunpack.c.h.b16 %v1110
      %v1221 = vunpack.c.l.b16 %v1111
      %v1222 = vunpack.c.h.b16 %v1111
      %v1223 = vpack.c.b16 %v1161, %v1159
      %v1224 = vpack.c.b16 %v1162, %v1160
      %v1225 = vpack.c.b16 %v1165, %v1163
      %v1226 = vpack.c.b16 %v1166, %v1164
      %v1227 = vpack.c.b16 %v1169, %v1167
      %v1228 = vpack.c.b16 %v1170, %v1168
      %v1229 = vpack.c.b16 %v1173, %v1171
      %v1230 = vpack.c.b16 %v1174, %v1172
      %v1231 = vpack.c.b16 %v1177, %v1175
      %v1232 = vpack.c.b16 %v1178, %v1176
      %v1233 = vpack.c.b16 %v1181, %v1179
      %v1234 = vpack.c.b16 %v1182, %v1180
      %v1235 = vpack.c.b16 %v1185, %v1183
      %v1236 = vpack.c.b16 %v1186, %v1184
      %v1237 = vpack.c.b16 %v1189, %v1187
      %v1238 = vpack.c.b16 %v1190, %v1188
      %v1239 = vpack.c.b16 %v1193, %v1191
      %v1240 = vpack.c.b16 %v1194, %v1192
      %v1241 = vpack.c.b16 %v1197, %v1195
      %v1242 = vpack.c.b16 %v1198, %v1196
      %v1243 = vpack.c.b16 %v1201, %v1199
      %v1244 = vpack.c.b16 %v1202, %v1200
      %v1245 = vpack.c.b16 %v1205, %v1203
      %v1246 = vpack.c.b16 %v1206, %v1204
      %v1247 = vpack.c.b16 %v1209, %v1207
      %v1248 = vpack.c.b16 %v1210, %v1208
      %v1249 = vpack.c.b16 %v1213, %v1211
      %v1250 = vpack.c.b16 %v1214, %v1212
      %v1251 = vpack.c.b16 %v1217, %v1215
      %v1252 = vpack.c.b16 %v1218, %v1216
      %v1253 = vpack.c.b16 %v1221, %v1219
      %v1254 = vpack.c.b16 %v1222, %v1220
      %1287 = vmatpush.bf16.msra.mxu0 %v1237
      %1288 = vmatpush.bf16.msra.mxu0 %v1235
      %1289 = vmatpush.bf16.msra.mxu0 %v1233
      %1290 = vmatpush.bf16.msra.mxu0 %v1231
      %1291 = vmatpush.bf16.msra.mxu0 %v1229
      %1292 = vmatpush.bf16.msra.mxu0 %v1227
      %1293 = vmatpush.bf16.msra.mxu0 %v1225
      %1294 = vmatpush.bf16.msra.mxu0 %v1223
      %1295 = vmatmul.bf16.gmra.mxu0 %v1119
      %v1296 = vpop.f32.mrf.mxu0
      %v1297 = vadd.f32 0.0, %v1296
      %v1298 = vpop.f32.mrf.mxu0
      %v1299 = vadd.f32 0.0, %v1298
      %1300 = vmatmul.bf16.gmra.mxu0 %v1118
      %v1301 = vpop.f32.mrf.mxu0
      %v1302 = vadd.f32 0.0, %v1301
      %v1303 = vpop.f32.mrf.mxu0
      %1304 = vdwg.mxu0
      %1305 = vmatpush.bf16.msra.mxu0 %v1253
      %1306 = vmatpush.bf16.msra.mxu0 %v1251
      %1307 = vmatpush.bf16.msra.mxu0 %v1249
      %1308 = vmatpush.bf16.msra.mxu0 %v1247
      %1309 = vmatpush.bf16.msra.mxu0 %v1245
      %1310 = vmatpush.bf16.msra.mxu0 %v1243
      %1311 = vmatpush.bf16.msra.mxu0 %v1241
      %1312 = vmatpush.bf16.msra.mxu0 %v1239
      %1313 = vmatmul.bf16.gmra.mxu0 %v1122
      %v1314 = vpop.f32.mrf.mxu0
      %v1315 = vadd.f32 %v1297, %v1314
      %v1316 = vpop.f32.mrf.mxu0
      %v1317 = vadd.f32 %v1299, %v1316
      %1318 = vmatmul.bf16.gmra.mxu0 %v1121
      %v1319 = vpop.f32.mrf.mxu0
      %v1320 = vadd.f32 %v1302, %v1319
      %v1321 = vpop.f32.mrf.mxu0
      %1322 = vdwg.mxu0
      %1323 = vmatpush.bf16.msra.mxu0 %v1238
      %1324 = vmatpush.bf16.msra.mxu0 %v1236
      %1325 = vmatpush.bf16.msra.mxu0 %v1234
      %1326 = vmatpush.bf16.msra.mxu0 %v1232
      %1327 = vmatpush.bf16.msra.mxu0 %v1230
      %1328 = vmatpush.bf16.msra.mxu0 %v1228
      %1329 = vmatpush.bf16.msra.mxu0 %v1226
      %1330 = vmatpush.bf16.msra.mxu0 %v1224
      %1331 = vmatmul.bf16.gmra.mxu0 %v1119
      %v1332 = vpop.f32.mrf.mxu0
      %v1333 = vadd.f32 0.0, %v1332
      %v1334 = vpop.f32.mrf.mxu0
      %v1335 = vadd.f32 0.0, %v1334
      %1336 = vmatmul.bf16.gmra.mxu0 %v1118
      %v1337 = vpop.f32.mrf.mxu0
      %v1338 = vadd.f32 0.0, %v1337
      %v1339 = vpop.f32.mrf.mxu0
      %1340 = vdwg.mxu0
      %1341 = vmatpush.bf16.msra.mxu0 %v1254
      %1342 = vmatpush.bf16.msra.mxu0 %v1252
      %1343 = vmatpush.bf16.msra.mxu0 %v1250
      %1344 = vmatpush.bf16.msra.mxu0 %v1248
      %1345 = vmatpush.bf16.msra.mxu0 %v1246
      %1346 = vmatpush.bf16.msra.mxu0 %v1244
      %1347 = vmatpush.bf16.msra.mxu0 %v1242
      %1348 = vmatpush.bf16.msra.mxu0 %v1240
      %1349 = vmatmul.bf16.gmra.mxu0 %v1122
      %v1350 = vpop.f32.mrf.mxu0
      %v1351 = vadd.f32 %v1333, %v1350
      %v1352 = vpop.f32.mrf.mxu0
      %v1353 = vadd.f32 %v1335, %v1352
      %1354 = vmatmul.bf16.gmra.mxu0 %v1121
      %v1355 = vpop.f32.mrf.mxu0
      %v1356 = vadd.f32 %v1338, %v1355
      %v1357 = vpop.f32.mrf.mxu0
      %1358 = vdwg.mxu0
      %v1359 = vadd.f32 %v1065, %v1315
      %v1360 = vadd.f32 %v1066, %v1351
      %v1361 = vadd.f32 %v1067, %v1317
      %v1362 = vadd.f32 %v1068, %v1353
      %v1363 = vadd.f32 %v1069, %v1320
      %v1364 = vadd.f32 %v1070, %v1356
      %v1365 = vld [vmem:[%s165] sm:$0x80]
      %v1366 = vld [vmem:[%s165 + $0x8] sm:$0x80]
      %v1367 = vld [vmem:[%s165 + $0x30] sm:$0x7f]
      %v1368 = vld [vmem:[%s165 + $0x38] sm:$0x7f]
      %v1369 = vpack.c.bf16 %v461, %v1365
      %v1370 = vpack.c.bf16 %v462, %v1366
      %v1371 = vpack.c.bf16 %v1367, %v463
      %v1372 = vpack.c.bf16 %v1368, %v464
      %s1373 = scalar_lea.vmem %s1, 1024
      %v1374 = vld [vmem:[%s1373] sm:$0xff]
      %v1375 = vld [vmem:[%s1373 + $0x8] sm:$0xff]
      %v1376 = vld [vmem:[%s1373 + $0x10] sm:$0xff]
      %v1377 = vld [vmem:[%s1373 + $0x18] sm:$0xff]
      %v1378 = vld [vmem:[%s1373 + $0x20] sm:$0xff]
      %v1379 = vld [vmem:[%s1373 + $0x28] sm:$0xff]
      %v1380 = vld [vmem:[%s1373 + $0x30] sm:$0xff]
      %v1381 = vld [vmem:[%s1373 + $0x38] sm:$0xff]
      %v1382 = vld [vmem:[%s1373 + $0x40] sm:$0xff]
      %v1383 = vld [vmem:[%s1373 + $0x48] sm:$0xff]
      %v1384 = vld [vmem:[%s1373 + $0x50] sm:$0xff]
      %v1385 = vld [vmem:[%s1373 + $0x58] sm:$0xff]
      %v1386 = vld [vmem:[%s1373 + $0x60] sm:$0xff]
      %v1387 = vld [vmem:[%s1373 + $0x68] sm:$0xff]
      %v1388 = vld [vmem:[%s1373 + $0x70] sm:$0xff]
      %v1389 = vld [vmem:[%s1373 + $0x78] sm:$0xff]
      %v1390 = vld [vmem:[%s1373 + $0x80] sm:$0xff]
      %v1391 = vld [vmem:[%s1373 + $0x88] sm:$0xff]
      %v1392 = vld [vmem:[%s1373 + $0x90] sm:$0xff]
      %v1393 = vld [vmem:[%s1373 + $0x98] sm:$0xff]
      %v1394 = vld [vmem:[%s1373 + $0xa0] sm:$0xff]
      %v1395 = vld [vmem:[%s1373 + $0xa8] sm:$0xff]
      %v1396 = vld [vmem:[%s1373 + $0xb0] sm:$0xff]
      %v1397 = vld [vmem:[%s1373 + $0xb8] sm:$0xff]
      %v1398 = vld [vmem:[%s1373 + $0xc0] sm:$0xff]
      %v1399 = vld [vmem:[%s1373 + $0xc8] sm:$0xff]
      %v1400 = vld [vmem:[%s1373 + $0xd0] sm:$0xff]
      %v1401 = vld [vmem:[%s1373 + $0xd8] sm:$0xff]
      %v1402 = vld [vmem:[%s1373 + $0xe0] sm:$0xff]
      %v1403 = vld [vmem:[%s1373 + $0xe8] sm:$0xff]
      %v1404 = vld [vmem:[%s1373 + $0xf0] sm:$0xff]
      %v1405 = vld [vmem:[%s1373 + $0xf8] sm:$0xff]
      %vm1406 = vsmask.f32 4352
      %v1408 = vshrl.u32 %v1369, 16
      %v1410 = vrot.slane %v1408, 3
      %v1411 = vshll.u32 %v1369, 16
      %v1413 = vrot.slane %v1411, 4
      %v1414 = vor.u32 %v1410, %v1413
      %v1416 = vshrl.u32 %v1371, 16
      %v1418 = vrot.slane %v1416, 3
      %v1419 = vshll.u32 %v1371, 16
      %v1421 = vrot.slane %v1419, 4
      %v1422 = vor.u32 %v1418, %v1421
      %v1423 = vsel %vm1406, %v1414, %v1422
      %v1425 = vshrl.u32 %v1370, 16
      %v1427 = vrot.slane %v1425, 3
      %v1428 = vshll.u32 %v1370, 16
      %v1430 = vrot.slane %v1428, 4
      %v1431 = vor.u32 %v1427, %v1430
      %v1433 = vshrl.u32 %v1372, 16
      %v1435 = vrot.slane %v1433, 3
      %v1436 = vshll.u32 %v1372, 16
      %v1438 = vrot.slane %v1436, 4
      %v1439 = vor.u32 %v1435, %v1438
      %v1440 = vsel %vm1406, %v1431, %v1439
      %v1477 = vunpack.c.l.b16 %v1374
      %v1478 = vunpack.c.h.b16 %v1374
      %v1479 = vunpack.c.l.b16 %v1375
      %v1480 = vunpack.c.h.b16 %v1375
      %v1481 = vunpack.c.l.b16 %v1376
      %v1482 = vunpack.c.h.b16 %v1376
      %v1483 = vunpack.c.l.b16 %v1377
      %v1484 = vunpack.c.h.b16 %v1377
      %v1485 = vunpack.c.l.b16 %v1378
      %v1486 = vunpack.c.h.b16 %v1378
      %v1487 = vunpack.c.l.b16 %v1379
      %v1488 = vunpack.c.h.b16 %v1379
      %v1489 = vunpack.c.l.b16 %v1380
      %v1490 = vunpack.c.h.b16 %v1380
      %v1491 = vunpack.c.l.b16 %v1381
      %v1492 = vunpack.c.h.b16 %v1381
      %v1493 = vunpack.c.l.b16 %v1382
      %v1494 = vunpack.c.h.b16 %v1382
      %v1495 = vunpack.c.l.b16 %v1383
      %v1496 = vunpack.c.h.b16 %v1383
      %v1497 = vunpack.c.l.b16 %v1384
      %v1498 = vunpack.c.h.b16 %v1384
      %v1499 = vunpack.c.l.b16 %v1385
      %v1500 = vunpack.c.h.b16 %v1385
      %v1501 = vunpack.c.l.b16 %v1386
      %v1502 = vunpack.c.h.b16 %v1386
      %v1503 = vunpack.c.l.b16 %v1387
      %v1504 = vunpack.c.h.b16 %v1387
      %v1505 = vunpack.c.l.b16 %v1388
      %v1506 = vunpack.c.h.b16 %v1388
      %v1507 = vunpack.c.l.b16 %v1389
      %v1508 = vunpack.c.h.b16 %v1389
      %v1509 = vunpack.c.l.b16 %v1390
      %v1510 = vunpack.c.h.b16 %v1390
      %v1511 = vunpack.c.l.b16 %v1391
      %v1512 = vunpack.c.h.b16 %v1391
      %v1513 = vunpack.c.l.b16 %v1392
      %v1514 = vunpack.c.h.b16 %v1392
      %v1515 = vunpack.c.l.b16 %v1393
      %v1516 = vunpack.c.h.b16 %v1393
      %v1517 = vunpack.c.l.b16 %v1394
      %v1518 = vunpack.c.h.b16 %v1394
      %v1519 = vunpack.c.l.b16 %v1395
      %v1520 = vunpack.c.h.b16 %v1395
      %v1521 = vunpack.c.l.b16 %v1396
      %v1522 = vunpack.c.h.b16 %v1396
      %v1523 = vunpack.c.l.b16 %v1397
      %v1524 = vunpack.c.h.b16 %v1397
      %v1525 = vunpack.c.l.b16 %v1398
      %v1526 = vunpack.c.h.b16 %v1398
      %v1527 = vunpack.c.l.b16 %v1399
      %v1528 = vunpack.c.h.b16 %v1399
      %v1529 = vunpack.c.l.b16 %v1400
      %v1530 = vunpack.c.h.b16 %v1400
      %v1531 = vunpack.c.l.b16 %v1401
      %v1532 = vunpack.c.h.b16 %v1401
      %v1533 = vunpack.c.l.b16 %v1402
      %v1534 = vunpack.c.h.b16 %v1402
      %v1535 = vunpack.c.l.b16 %v1403
      %v1536 = vunpack.c.h.b16 %v1403
      %v1537 = vunpack.c.l.b16 %v1404
      %v1538 = vunpack.c.h.b16 %v1404
      %v1539 = vunpack.c.l.b16 %v1405
      %v1540 = vunpack.c.h.b16 %v1405
      %v1541 = vpack.c.b16 %v1479, %v1477
      %v1542 = vpack.c.b16 %v1480, %v1478
      %v1543 = vpack.c.b16 %v1483, %v1481
      %v1544 = vpack.c.b16 %v1484, %v1482
      %v1545 = vpack.c.b16 %v1487, %v1485
      %v1546 = vpack.c.b16 %v1488, %v1486
      %v1547 = vpack.c.b16 %v1491, %v1489
      %v1548 = vpack.c.b16 %v1492, %v1490
      %v1549 = vpack.c.b16 %v1495, %v1493
      %v1550 = vpack.c.b16 %v1496, %v1494
      %v1551 = vpack.c.b16 %v1499, %v1497
      %v1552 = vpack.c.b16 %v1500, %v1498
      %v1553 = vpack.c.b16 %v1503, %v1501
      %v1554 = vpack.c.b16 %v1504, %v1502
      %v1555 = vpack.c.b16 %v1507, %v1505
      %v1556 = vpack.c.b16 %v1508, %v1506
      %v1557 = vpack.c.b16 %v1511, %v1509
      %v1558 = vpack.c.b16 %v1512, %v1510
      %v1559 = vpack.c.b16 %v1515, %v1513
      %v1560 = vpack.c.b16 %v1516, %v1514
      %v1561 = vpack.c.b16 %v1519, %v1517
      %v1562 = vpack.c.b16 %v1520, %v1518
      %v1563 = vpack.c.b16 %v1523, %v1521
      %v1564 = vpack.c.b16 %v1524, %v1522
      %v1565 = vpack.c.b16 %v1527, %v1525
      %v1566 = vpack.c.b16 %v1528, %v1526
      %v1567 = vpack.c.b16 %v1531, %v1529
      %v1568 = vpack.c.b16 %v1532, %v1530
      %v1569 = vpack.c.b16 %v1535, %v1533
      %v1570 = vpack.c.b16 %v1536, %v1534
      %v1571 = vpack.c.b16 %v1539, %v1537
      %v1572 = vpack.c.b16 %v1540, %v1538
      %1605 = vmatpush.bf16.msra.mxu0 %v1555
      %1606 = vmatpush.bf16.msra.mxu0 %v1553
      %1607 = vmatpush.bf16.msra.mxu0 %v1551
      %1608 = vmatpush.bf16.msra.mxu0 %v1549
      %1609 = vmatpush.bf16.msra.mxu0 %v1547
      %1610 = vmatpush.bf16.msra.mxu0 %v1545
      %1611 = vmatpush.bf16.msra.mxu0 %v1543
      %1612 = vmatpush.bf16.msra.mxu0 %v1541
      %1613 = vmatmul.bf16.gmra.mxu0 %v1423
      %v1614 = vpop.f32.mrf.mxu0
      %v1615 = vadd.f32 0.0, %v1614
      %v1616 = vpop.f32.mrf.mxu0
      %v1617 = vadd.f32 0.0, %v1616
      %1618 = vmatmul.bf16.gmra.mxu0 %v1422
      %v1619 = vpop.f32.mrf.mxu0
      %v1620 = vadd.f32 0.0, %v1619
      %v1621 = vpop.f32.mrf.mxu0
      %1622 = vdwg.mxu0
      %1623 = vmatpush.bf16.msra.mxu0 %v1571
      %1624 = vmatpush.bf16.msra.mxu0 %v1569
      %1625 = vmatpush.bf16.msra.mxu0 %v1567
      %1626 = vmatpush.bf16.msra.mxu0 %v1565
      %1627 = vmatpush.bf16.msra.mxu0 %v1563
      %1628 = vmatpush.bf16.msra.mxu0 %v1561
      %1629 = vmatpush.bf16.msra.mxu0 %v1559
      %1630 = vmatpush.bf16.msra.mxu0 %v1557
      %1631 = vmatmul.bf16.gmra.mxu0 %v1440
      %v1632 = vpop.f32.mrf.mxu0
      %v1633 = vadd.f32 %v1615, %v1632
      %v1634 = vpop.f32.mrf.mxu0
      %v1635 = vadd.f32 %v1617, %v1634
      %1636 = vmatmul.bf16.gmra.mxu0 %v1439
      %v1637 = vpop.f32.mrf.mxu0
      %v1638 = vadd.f32 %v1620, %v1637
      %v1639 = vpop.f32.mrf.mxu0
      %1640 = vdwg.mxu0
      %1641 = vmatpush.bf16.msra.mxu0 %v1556
      %1642 = vmatpush.bf16.msra.mxu0 %v1554
      %1643 = vmatpush.bf16.msra.mxu0 %v1552
      %1644 = vmatpush.bf16.msra.mxu0 %v1550
      %1645 = vmatpush.bf16.msra.mxu0 %v1548
      %1646 = vmatpush.bf16.msra.mxu0 %v1546
      %1647 = vmatpush.bf16.msra.mxu0 %v1544
      %1648 = vmatpush.bf16.msra.mxu0 %v1542
      %1649 = vmatmul.bf16.gmra.mxu0 %v1423
      %v1650 = vpop.f32.mrf.mxu0
      %v1651 = vadd.f32 0.0, %v1650
      %v1652 = vpop.f32.mrf.mxu0
      %v1653 = vadd.f32 0.0, %v1652
      %1654 = vmatmul.bf16.gmra.mxu0 %v1422
      %v1655 = vpop.f32.mrf.mxu0
      %v1656 = vadd.f32 0.0, %v1655
      %v1657 = vpop.f32.mrf.mxu0
      %1658 = vdwg.mxu0
      %1659 = vmatpush.bf16.msra.mxu0 %v1572
      %1660 = vmatpush.bf16.msra.mxu0 %v1570
      %1661 = vmatpush.bf16.msra.mxu0 %v1568
      %1662 = vmatpush.bf16.msra.mxu0 %v1566
      %1663 = vmatpush.bf16.msra.mxu0 %v1564
      %1664 = vmatpush.bf16.msra.mxu0 %v1562
      %1665 = vmatpush.bf16.msra.mxu0 %v1560
      %1666 = vmatpush.bf16.msra.mxu0 %v1558
      %1667 = vmatmul.bf16.gmra.mxu0 %v1440
      %v1668 = vpop.f32.mrf.mxu0
      %v1669 = vadd.f32 %v1651, %v1668
      %v1670 = vpop.f32.mrf.mxu0
      %v1671 = vadd.f32 %v1653, %v1670
      %1672 = vmatmul.bf16.gmra.mxu0 %v1439
      %v1673 = vpop.f32.mrf.mxu0
      %v1674 = vadd.f32 %v1656, %v1673
      %v1675 = vpop.f32.mrf.mxu0
      %1676 = vdwg.mxu0
      %v1677 = vadd.f32 %v1359, %v1633
      %v1678 = vadd.f32 %v1360, %v1669
      %v1679 = vadd.f32 %v1361, %v1635
      %v1680 = vadd.f32 %v1362, %v1671
      %v1681 = vadd.f32 %v1363, %v1638
      %v1682 = vadd.f32 %v1364, %v1674
      %v1683 = vld [vmem:[%s165 + $0x30] sm:$0xff]
      %v1684 = vld [vmem:[%s165 + $0x38] sm:$0xff]
      %v1685 = vpack.c.bf16 %v463, %v461
      %v1686 = vpack.c.bf16 %v464, %v462
      %v1687 = vpack.c.bf16 %v1683, %v1683
      %v1688 = vpack.c.bf16 %v1684, %v1684
      %s1689 = scalar_lea.vmem %s1, 1280
      %v1690 = vld [vmem:[%s1689] sm:$0xff]
      %v1691 = vld [vmem:[%s1689 + $0x8] sm:$0xff]
      %v1692 = vld [vmem:[%s1689 + $0x10] sm:$0xff]
      %v1693 = vld [vmem:[%s1689 + $0x18] sm:$0xff]
      %v1694 = vld [vmem:[%s1689 + $0x20] sm:$0xff]
      %v1695 = vld [vmem:[%s1689 + $0x28] sm:$0xff]
      %v1696 = vld [vmem:[%s1689 + $0x30] sm:$0xff]
      %v1697 = vld [vmem:[%s1689 + $0x38] sm:$0xff]
      %v1698 = vld [vmem:[%s1689 + $0x40] sm:$0xff]
      %v1699 = vld [vmem:[%s1689 + $0x48] sm:$0xff]
      %v1700 = vld [vmem:[%s1689 + $0x50] sm:$0xff]
      %v1701 = vld [vmem:[%s1689 + $0x58] sm:$0xff]
      %v1702 = vld [vmem:[%s1689 + $0x60] sm:$0xff]
      %v1703 = vld [vmem:[%s1689 + $0x68] sm:$0xff]
      %v1704 = vld [vmem:[%s1689 + $0x70] sm:$0xff]
      %v1705 = vld [vmem:[%s1689 + $0x78] sm:$0xff]
      %v1706 = vld [vmem:[%s1689 + $0x80] sm:$0xff]
      %v1707 = vld [vmem:[%s1689 + $0x88] sm:$0xff]
      %v1708 = vld [vmem:[%s1689 + $0x90] sm:$0xff]
      %v1709 = vld [vmem:[%s1689 + $0x98] sm:$0xff]
      %v1710 = vld [vmem:[%s1689 + $0xa0] sm:$0xff]
      %v1711 = vld [vmem:[%s1689 + $0xa8] sm:$0xff]
      %v1712 = vld [vmem:[%s1689 + $0xb0] sm:$0xff]
      %v1713 = vld [vmem:[%s1689 + $0xb8] sm:$0xff]
      %v1714 = vld [vmem:[%s1689 + $0xc0] sm:$0xff]
      %v1715 = vld [vmem:[%s1689 + $0xc8] sm:$0xff]
      %v1716 = vld [vmem:[%s1689 + $0xd0] sm:$0xff]
      %v1717 = vld [vmem:[%s1689 + $0xd8] sm:$0xff]
      %v1718 = vld [vmem:[%s1689 + $0xe0] sm:$0xff]
      %v1719 = vld [vmem:[%s1689 + $0xe8] sm:$0xff]
      %v1720 = vld [vmem:[%s1689 + $0xf0] sm:$0xff]
      %v1721 = vld [vmem:[%s1689 + $0xf8] sm:$0xff]
      %v1754 = vunpack.c.l.b16 %v1690
      %v1755 = vunpack.c.h.b16 %v1690
      %v1756 = vunpack.c.l.b16 %v1691
      %v1757 = vunpack.c.h.b16 %v1691
      %v1758 = vunpack.c.l.b16 %v1692
      %v1759 = vunpack.c.h.b16 %v1692
      %v1760 = vunpack.c.l.b16 %v1693
      %v1761 = vunpack.c.h.b16 %v1693
      %v1762 = vunpack.c.l.b16 %v1694
      %v1763 = vunpack.c.h.b16 %v1694
      %v1764 = vunpack.c.l.b16 %v1695
      %v1765 = vunpack.c.h.b16 %v1695
      %v1766 = vunpack.c.l.b16 %v1696
      %v1767 = vunpack.c.h.b16 %v1696
      %v1768 = vunpack.c.l.b16 %v1697
      %v1769 = vunpack.c.h.b16 %v1697
      %v1770 = vunpack.c.l.b16 %v1698
      %v1771 = vunpack.c.h.b16 %v1698
      %v1772 = vunpack.c.l.b16 %v1699
      %v1773 = vunpack.c.h.b16 %v1699
      %v1774 = vunpack.c.l.b16 %v1700
      %v1775 = vunpack.c.h.b16 %v1700
      %v1776 = vunpack.c.l.b16 %v1701
      %v1777 = vunpack.c.h.b16 %v1701
      %v1778 = vunpack.c.l.b16 %v1702
      %v1779 = vunpack.c.h.b16 %v1702
      %v1780 = vunpack.c.l.b16 %v1703
      %v1781 = vunpack.c.h.b16 %v1703
      %v1782 = vunpack.c.l.b16 %v1704
      %v1783 = vunpack.c.h.b16 %v1704
      %v1784 = vunpack.c.l.b16 %v1705
      %v1785 = vunpack.c.h.b16 %v1705
      %v1786 = vunpack.c.l.b16 %v1706
      %v1787 = vunpack.c.h.b16 %v1706
      %v1788 = vunpack.c.l.b16 %v1707
      %v1789 = vunpack.c.h.b16 %v1707
      %v1790 = vunpack.c.l.b16 %v1708
      %v1791 = vunpack.c.h.b16 %v1708
      %v1792 = vunpack.c.l.b16 %v1709
      %v1793 = vunpack.c.h.b16 %v1709
      %v1794 = vunpack.c.l.b16 %v1710
      %v1795 = vunpack.c.h.b16 %v1710
      %v1796 = vunpack.c.l.b16 %v1711
      %v1797 = vunpack.c.h.b16 %v1711
      %v1798 = vunpack.c.l.b16 %v1712
      %v1799 = vunpack.c.h.b16 %v1712
      %v1800 = vunpack.c.l.b16 %v1713
      %v1801 = vunpack.c.h.b16 %v1713
      %v1802 = vunpack.c.l.b16 %v1714
      %v1803 = vunpack.c.h.b16 %v1714
      %v1804 = vunpack.c.l.b16 %v1715
      %v1805 = vunpack.c.h.b16 %v1715
      %v1806 = vunpack.c.l.b16 %v1716
      %v1807 = vunpack.c.h.b16 %v1716
      %v1808 = vunpack.c.l.b16 %v1717
      %v1809 = vunpack.c.h.b16 %v1717
      %v1810 = vunpack.c.l.b16 %v1718
      %v1811 = vunpack.c.h.b16 %v1718
      %v1812 = vunpack.c.l.b16 %v1719
      %v1813 = vunpack.c.h.b16 %v1719
      %v1814 = vunpack.c.l.b16 %v1720
      %v1815 = vunpack.c.h.b16 %v1720
      %v1816 = vunpack.c.l.b16 %v1721
      %v1817 = vunpack.c.h.b16 %v1721
      %v1818 = vpack.c.b16 %v1756, %v1754
      %v1819 = vpack.c.b16 %v1757, %v1755
      %v1820 = vpack.c.b16 %v1760, %v1758
      %v1821 = vpack.c.b16 %v1761, %v1759
      %v1822 = vpack.c.b16 %v1764, %v1762
      %v1823 = vpack.c.b16 %v1765, %v1763
      %v1824 = vpack.c.b16 %v1768, %v1766
      %v1825 = vpack.c.b16 %v1769, %v1767
      %v1826 = vpack.c.b16 %v1772, %v1770
      %v1827 = vpack.c.b16 %v1773, %v1771
      %v1828 = vpack.c.b16 %v1776, %v1774
      %v1829 = vpack.c.b16 %v1777, %v1775
      %v1830 = vpack.c.b16 %v1780, %v1778
      %v1831 = vpack.c.b16 %v1781, %v1779
      %v1832 = vpack.c.b16 %v1784, %v1782
      %v1833 = vpack.c.b16 %v1785, %v1783
      %v1834 = vpack.c.b16 %v1788, %v1786
      %v1835 = vpack.c.b16 %v1789, %v1787
      %v1836 = vpack.c.b16 %v1792, %v1790
      %v1837 = vpack.c.b16 %v1793, %v1791
      %v1838 = vpack.c.b16 %v1796, %v1794
      %v1839 = vpack.c.b16 %v1797, %v1795
      %v1840 = vpack.c.b16 %v1800, %v1798
      %v1841 = vpack.c.b16 %v1801, %v1799
      %v1842 = vpack.c.b16 %v1804, %v1802
      %v1843 = vpack.c.b16 %v1805, %v1803
      %v1844 = vpack.c.b16 %v1808, %v1806
      %v1845 = vpack.c.b16 %v1809, %v1807
      %v1846 = vpack.c.b16 %v1812, %v1810
      %v1847 = vpack.c.b16 %v1813, %v1811
      %v1848 = vpack.c.b16 %v1816, %v1814
      %v1849 = vpack.c.b16 %v1817, %v1815
      %1882 = vmatpush.bf16.msra.mxu0 %v1832
      %1883 = vmatpush.bf16.msra.mxu0 %v1830
      %1884 = vmatpush.bf16.msra.mxu0 %v1828
      %1885 = vmatpush.bf16.msra.mxu0 %v1826
      %1886 = vmatpush.bf16.msra.mxu0 %v1824
      %1887 = vmatpush.bf16.msra.mxu0 %v1822
      %1888 = vmatpush.bf16.msra.mxu0 %v1820
      %1889 = vmatpush.bf16.msra.mxu0 %v1818
      %1890 = vmatmul.bf16.gmra.mxu0 %v1685
      %v1891 = vpop.f32.mrf.mxu0
      %v1892 = vadd.f32 0.0, %v1891
      %v1893 = vpop.f32.mrf.mxu0
      %v1894 = vadd.f32 0.0, %v1893
      %1895 = vmatmul.bf16.gmra.mxu0 %v1687
      %v1896 = vpop.f32.mrf.mxu0
      %v1897 = vadd.f32 0.0, %v1896
      %v1898 = vpop.f32.mrf.mxu0
      %1899 = vdwg.mxu0
      %1900 = vmatpush.bf16.msra.mxu0 %v1848
      %1901 = vmatpush.bf16.msra.mxu0 %v1846
      %1902 = vmatpush.bf16.msra.mxu0 %v1844
      %1903 = vmatpush.bf16.msra.mxu0 %v1842
      %1904 = vmatpush.bf16.msra.mxu0 %v1840
      %1905 = vmatpush.bf16.msra.mxu0 %v1838
      %1906 = vmatpush.bf16.msra.mxu0 %v1836
      %1907 = vmatpush.bf16.msra.mxu0 %v1834
      %1908 = vmatmul.bf16.gmra.mxu0 %v1686
      %v1909 = vpop.f32.mrf.mxu0
      %v1910 = vadd.f32 %v1892, %v1909
      %v1911 = vpop.f32.mrf.mxu0
      %v1912 = vadd.f32 %v1894, %v1911
      %1913 = vmatmul.bf16.gmra.mxu0 %v1688
      %v1914 = vpop.f32.mrf.mxu0
      %v1915 = vadd.f32 %v1897, %v1914
      %v1916 = vpop.f32.mrf.mxu0
      %1917 = vdwg.mxu0
      %1918 = vmatpush.bf16.msra.mxu0 %v1833
      %1919 = vmatpush.bf16.msra.mxu0 %v1831
      %1920 = vmatpush.bf16.msra.mxu0 %v1829
      %1921 = vmatpush.bf16.msra.mxu0 %v1827
      %1922 = vmatpush.bf16.msra.mxu0 %v1825
      %1923 = vmatpush.bf16.msra.mxu0 %v1823
      %1924 = vmatpush.bf16.msra.mxu0 %v1821
      %1925 = vmatpush.bf16.msra.mxu0 %v1819
      %1926 = vmatmul.bf16.gmra.mxu0 %v1685
      %v1927 = vpop.f32.mrf.mxu0
      %v1928 = vadd.f32 0.0, %v1927
      %v1929 = vpop.f32.mrf.mxu0
      %v1930 = vadd.f32 0.0, %v1929
      %1931 = vmatmul.bf16.gmra.mxu0 %v1687
      %v1932 = vpop.f32.mrf.mxu0
      %v1933 = vadd.f32 0.0, %v1932
      %v1934 = vpop.f32.mrf.mxu0
      %1935 = vdwg.mxu0
      %1936 = vmatpush.bf16.msra.mxu0 %v1849
      %1937 = vmatpush.bf16.msra.mxu0 %v1847
      %1938 = vmatpush.bf16.msra.mxu0 %v1845
      %1939 = vmatpush.bf16.msra.mxu0 %v1843
      %1940 = vmatpush.bf16.msra.mxu0 %v1841
      %1941 = vmatpush.bf16.msra.mxu0 %v1839
      %1942 = vmatpush.bf16.msra.mxu0 %v1837
      %1943 = vmatpush.bf16.msra.mxu0 %v1835
      %1944 = vmatmul.bf16.gmra.mxu0 %v1686
      %v1945 = vpop.f32.mrf.mxu0
      %v1946 = vadd.f32 %v1928, %v1945
      %v1947 = vpop.f32.mrf.mxu0
      %v1948 = vadd.f32 %v1930, %v1947
      %1949 = vmatmul.bf16.gmra.mxu0 %v1688
      %v1950 = vpop.f32.mrf.mxu0
      %v1951 = vadd.f32 %v1933, %v1950
      %v1952 = vpop.f32.mrf.mxu0
      %1953 = vdwg.mxu0
      %v1954 = vadd.f32 %v1677, %v1910
      %v1955 = vadd.f32 %v1678, %v1946
      %v1956 = vadd.f32 %v1679, %v1912
      %v1957 = vadd.f32 %v1680, %v1948
      %v1958 = vadd.f32 %v1681, %v1915
      %v1959 = vadd.f32 %v1682, %v1951
      %v1960 = vld [vmem:[%s165 + $0x10] sm:$0xf0]
      %v1961 = vld [vmem:[%s165 + $0x18] sm:$0xf0]
      %v1962 = vld [vmem:[%s165 + $0x20] sm:$0xff]
      %v1963 = vld [vmem:[%s165 + $0x28] sm:$0xff]
      %v1964 = vld [vmem:[%s165 + $0x30] sm:$0xff]
      %v1965 = vld [vmem:[%s165 + $0x38] sm:$0xff]
      %v1966 = vld [vmem:[%s165 + $0x40] sm:$0xf]
      %v1967 = vld [vmem:[%s165 + $0x48] sm:$0xf]
      %v1968 = vpack.c.bf16 %v1962, %v1960
      %v1969 = vpack.c.bf16 %v1963, %v1961
      %v1970 = vpack.c.bf16 %v1966, %v1964
      %v1971 = vpack.c.bf16 %v1967, %v1965
      %s1972 = scalar_lea.vmem %s1, 1536
      %v1973 = vld [vmem:[%s1972] sm:$0xff]
      %v1974 = vld [vmem:[%s1972 + $0x8] sm:$0xff]
      %v1975 = vld [vmem:[%s1972 + $0x10] sm:$0xff]
      %v1976 = vld [vmem:[%s1972 + $0x18] sm:$0xff]
      %v1977 = vld [vmem:[%s1972 + $0x20] sm:$0xff]
      %v1978 = vld [vmem:[%s1972 + $0x28] sm:$0xff]
      %v1979 = vld [vmem:[%s1972 + $0x30] sm:$0xff]
      %v1980 = vld [vmem:[%s1972 + $0x38] sm:$0xff]
      %v1981 = vld [vmem:[%s1972 + $0x40] sm:$0xff]
      %v1982 = vld [vmem:[%s1972 + $0x48] sm:$0xff]
      %v1983 = vld [vmem:[%s1972 + $0x50] sm:$0xff]
      %v1984 = vld [vmem:[%s1972 + $0x58] sm:$0xff]
      %v1985 = vld [vmem:[%s1972 + $0x60] sm:$0xff]
      %v1986 = vld [vmem:[%s1972 + $0x68] sm:$0xff]
      %v1987 = vld [vmem:[%s1972 + $0x70] sm:$0xff]
      %v1988 = vld [vmem:[%s1972 + $0x78] sm:$0xff]
      %v1989 = vld [vmem:[%s1972 + $0x80] sm:$0xff]
      %v1990 = vld [vmem:[%s1972 + $0x88] sm:$0xff]
      %v1991 = vld [vmem:[%s1972 + $0x90] sm:$0xff]
      %v1992 = vld [vmem:[%s1972 + $0x98] sm:$0xff]
      %v1993 = vld [vmem:[%s1972 + $0xa0] sm:$0xff]
      %v1994 = vld [vmem:[%s1972 + $0xa8] sm:$0xff]
      %v1995 = vld [vmem:[%s1972 + $0xb0] sm:$0xff]
      %v1996 = vld [vmem:[%s1972 + $0xb8] sm:$0xff]
      %v1997 = vld [vmem:[%s1972 + $0xc0] sm:$0xff]
      %v1998 = vld [vmem:[%s1972 + $0xc8] sm:$0xff]
      %v1999 = vld [vmem:[%s1972 + $0xd0] sm:$0xff]
      %v2000 = vld [vmem:[%s1972 + $0xd8] sm:$0xff]
      %v2001 = vld [vmem:[%s1972 + $0xe0] sm:$0xff]
      %v2002 = vld [vmem:[%s1972 + $0xe8] sm:$0xff]
      %v2003 = vld [vmem:[%s1972 + $0xf0] sm:$0xff]
      %v2004 = vld [vmem:[%s1972 + $0xf8] sm:$0xff]
      %vm2009 = vcmask 1045504
      %v2010 = vrot.slane %v1968, 2
      %v2011 = vrot.slane %v1970, 2
      %v2012 = vsel %vm2009, %v2010, %v2011
      %v2013 = vrot.slane %v1969, 2
      %v2014 = vrot.slane %v1971, 2
      %v2015 = vsel %vm2009, %v2013, %v2014
      %v2052 = vunpack.c.l.b16 %v1973
      %v2053 = vunpack.c.h.b16 %v1973
      %v2054 = vunpack.c.l.b16 %v1974
      %v2055 = vunpack.c.h.b16 %v1974
      %v2056 = vunpack.c.l.b16 %v1975
      %v2057 = vunpack.c.h.b16 %v1975
      %v2058 = vunpack.c.l.b16 %v1976
      %v2059 = vunpack.c.h.b16 %v1976
      %v2060 = vunpack.c.l.b16 %v1977
      %v2061 = vunpack.c.h.b16 %v1977
      %v2062 = vunpack.c.l.b16 %v1978
      %v2063 = vunpack.c.h.b16 %v1978
      %v2064 = vunpack.c.l.b16 %v1979
      %v2065 = vunpack.c.h.b16 %v1979
      %v2066 = vunpack.c.l.b16 %v1980
      %v2067 = vunpack.c.h.b16 %v1980
      %v2068 = vunpack.c.l.b16 %v1981
      %v2069 = vunpack.c.h.b16 %v1981
      %v2070 = vunpack.c.l.b16 %v1982
      %v2071 = vunpack.c.h.b16 %v1982
      %v2072 = vunpack.c.l.b16 %v1983
      %v2073 = vunpack.c.h.b16 %v1983
      %v2074 = vunpack.c.l.b16 %v1984
      %v2075 = vunpack.c.h.b16 %v1984
      %v2076 = vunpack.c.l.b16 %v1985
      %v2077 = vunpack.c.h.b16 %v1985
      %v2078 = vunpack.c.l.b16 %v1986
      %v2079 = vunpack.c.h.b16 %v1986
      %v2080 = vunpack.c.l.b16 %v1987
      %v2081 = vunpack.c.h.b16 %v1987
      %v2082 = vunpack.c.l.b16 %v1988
      %v2083 = vunpack.c.h.b16 %v1988
      %v2084 = vunpack.c.l.b16 %v1989
      %v2085 = vunpack.c.h.b16 %v1989
      %v2086 = vunpack.c.l.b16 %v1990
      %v2087 = vunpack.c.h.b16 %v1990
      %v2088 = vunpack.c.l.b16 %v1991
      %v2089 = vunpack.c.h.b16 %v1991
      %v2090 = vunpack.c.l.b16 %v1992
      %v2091 = vunpack.c.h.b16 %v1992
      %v2092 = vunpack.c.l.b16 %v1993
      %v2093 = vunpack.c.h.b16 %v1993
      %v2094 = vunpack.c.l.b16 %v1994
      %v2095 = vunpack.c.h.b16 %v1994
      %v2096 = vunpack.c.l.b16 %v1995
      %v2097 = vunpack.c.h.b16 %v1995
      %v2098 = vunpack.c.l.b16 %v1996
      %v2099 = vunpack.c.h.b16 %v1996
      %v2100 = vunpack.c.l.b16 %v1997
      %v2101 = vunpack.c.h.b16 %v1997
      %v2102 = vunpack.c.l.b16 %v1998
      %v2103 = vunpack.c.h.b16 %v1998
      %v2104 = vunpack.c.l.b16 %v1999
      %v2105 = vunpack.c.h.b16 %v1999
      %v2106 = vunpack.c.l.b16 %v2000
      %v2107 = vunpack.c.h.b16 %v2000
      %v2108 = vunpack.c.l.b16 %v2001
      %v2109 = vunpack.c.h.b16 %v2001
      %v2110 = vunpack.c.l.b16 %v2002
      %v2111 = vunpack.c.h.b16 %v2002
      %v2112 = vunpack.c.l.b16 %v2003
      %v2113 = vunpack.c.h.b16 %v2003
      %v2114 = vunpack.c.l.b16 %v2004
      %v2115 = vunpack.c.h.b16 %v2004
      %v2116 = vpack.c.b16 %v2054, %v2052
      %v2117 = vpack.c.b16 %v2055, %v2053
      %v2118 = vpack.c.b16 %v2058, %v2056
      %v2119 = vpack.c.b16 %v2059, %v2057
      %v2120 = vpack.c.b16 %v2062, %v2060
      %v2121 = vpack.c.b16 %v2063, %v2061
      %v2122 = vpack.c.b16 %v2066, %v2064
      %v2123 = vpack.c.b16 %v2067, %v2065
      %v2124 = vpack.c.b16 %v2070, %v2068
      %v2125 = vpack.c.b16 %v2071, %v2069
      %v2126 = vpack.c.b16 %v2074, %v2072
      %v2127 = vpack.c.b16 %v2075, %v2073
      %v2128 = vpack.c.b16 %v2078, %v2076
      %v2129 = vpack.c.b16 %v2079, %v2077
      %v2130 = vpack.c.b16 %v2082, %v2080
      %v2131 = vpack.c.b16 %v2083, %v2081
      %v2132 = vpack.c.b16 %v2086, %v2084
      %v2133 = vpack.c.b16 %v2087, %v2085
      %v2134 = vpack.c.b16 %v2090, %v2088
      %v2135 = vpack.c.b16 %v2091, %v2089
      %v2136 = vpack.c.b16 %v2094, %v2092
      %v2137 = vpack.c.b16 %v2095, %v2093
      %v2138 = vpack.c.b16 %v2098, %v2096
      %v2139 = vpack.c.b16 %v2099, %v2097
      %v2140 = vpack.c.b16 %v2102, %v2100
      %v2141 = vpack.c.b16 %v2103, %v2101
      %v2142 = vpack.c.b16 %v2106, %v2104
      %v2143 = vpack.c.b16 %v2107, %v2105
      %v2144 = vpack.c.b16 %v2110, %v2108
      %v2145 = vpack.c.b16 %v2111, %v2109
      %v2146 = vpack.c.b16 %v2114, %v2112
      %v2147 = vpack.c.b16 %v2115, %v2113
      %2180 = vmatpush.bf16.msra.mxu0 %v2130
      %2181 = vmatpush.bf16.msra.mxu0 %v2128
      %2182 = vmatpush.bf16.msra.mxu0 %v2126
      %2183 = vmatpush.bf16.msra.mxu0 %v2124
      %2184 = vmatpush.bf16.msra.mxu0 %v2122
      %2185 = vmatpush.bf16.msra.mxu0 %v2120
      %2186 = vmatpush.bf16.msra.mxu0 %v2118
      %2187 = vmatpush.bf16.msra.mxu0 %v2116
      %2188 = vmatmul.bf16.gmra.mxu0 %v2012
      %v2189 = vpop.f32.mrf.mxu0
      %v2190 = vadd.f32 0.0, %v2189
      %v2191 = vpop.f32.mrf.mxu0
      %v2192 = vadd.f32 0.0, %v2191
      %2193 = vmatmul.bf16.gmra.mxu0 %v2011
      %v2194 = vpop.f32.mrf.mxu0
      %v2195 = vadd.f32 0.0, %v2194
      %v2196 = vpop.f32.mrf.mxu0
      %2197 = vdwg.mxu0
      %2198 = vmatpush.bf16.msra.mxu0 %v2146
      %2199 = vmatpush.bf16.msra.mxu0 %v2144
      %2200 = vmatpush.bf16.msra.mxu0 %v2142
      %2201 = vmatpush.bf16.msra.mxu0 %v2140
      %2202 = vmatpush.bf16.msra.mxu0 %v2138
      %2203 = vmatpush.bf16.msra.mxu0 %v2136
      %2204 = vmatpush.bf16.msra.mxu0 %v2134
      %2205 = vmatpush.bf16.msra.mxu0 %v2132
      %2206 = vmatmul.bf16.gmra.mxu0 %v2015
      %v2207 = vpop.f32.mrf.mxu0
      %v2208 = vadd.f32 %v2190, %v2207
      %v2209 = vpop.f32.mrf.mxu0
      %v2210 = vadd.f32 %v2192, %v2209
      %2211 = vmatmul.bf16.gmra.mxu0 %v2014
      %v2212 = vpop.f32.mrf.mxu0
      %v2213 = vadd.f32 %v2195, %v2212
      %v2214 = vpop.f32.mrf.mxu0
      %2215 = vdwg.mxu0
      %2216 = vmatpush.bf16.msra.mxu0 %v2131
      %2217 = vmatpush.bf16.msra.mxu0 %v2129
      %2218 = vmatpush.bf16.msra.mxu0 %v2127
      %2219 = vmatpush.bf16.msra.mxu0 %v2125
      %2220 = vmatpush.bf16.msra.mxu0 %v2123
      %2221 = vmatpush.bf16.msra.mxu0 %v2121
      %2222 = vmatpush.bf16.msra.mxu0 %v2119
      %2223 = vmatpush.bf16.msra.mxu0 %v2117
      %2224 = vmatmul.bf16.gmra.mxu0 %v2012
      %v2225 = vpop.f32.mrf.mxu0
      %v2226 = vadd.f32 0.0, %v2225
      %v2227 = vpop.f32.mrf.mxu0
      %v2228 = vadd.f32 0.0, %v2227
      %2229 = vmatmul.bf16.gmra.mxu0 %v2011
      %v2230 = vpop.f32.mrf.mxu0
      %v2231 = vadd.f32 0.0, %v2230
      %v2232 = vpop.f32.mrf.mxu0
      %2233 = vdwg.mxu0
      %2234 = vmatpush.bf16.msra.mxu0 %v2147
      %2235 = vmatpush.bf16.msra.mxu0 %v2145
      %2236 = vmatpush.bf16.msra.mxu0 %v2143
      %2237 = vmatpush.bf16.msra.mxu0 %v2141
      %2238 = vmatpush.bf16.msra.mxu0 %v2139
      %2239 = vmatpush.bf16.msra.mxu0 %v2137
      %2240 = vmatpush.bf16.msra.mxu0 %v2135
      %2241 = vmatpush.bf16.msra.mxu0 %v2133
      %2242 = vmatmul.bf16.gmra.mxu0 %v2015
      %v2243 = vpop.f32.mrf.mxu0
      %v2244 = vadd.f32 %v2226, %v2243
      %v2245 = vpop.f32.mrf.mxu0
      %v2246 = vadd.f32 %v2228, %v2245
      %2247 = vmatmul.bf16.gmra.mxu0 %v2014
      %v2248 = vpop.f32.mrf.mxu0
      %v2249 = vadd.f32 %v2231, %v2248
      %v2250 = vpop.f32.mrf.mxu0
      %2251 = vdwg.mxu0
      %v2252 = vadd.f32 %v1954, %v2208
      %v2253 = vadd.f32 %v1955, %v2244
      %v2254 = vadd.f32 %v1956, %v2210
      %v2255 = vadd.f32 %v1957, %v2246
      %v2256 = vadd.f32 %v1958, %v2213
      %v2257 = vadd.f32 %v1959, %v2249
      %v2258 = vld [vmem:[%s165 + $0x10] sm:$0xe0]
      %v2259 = vld [vmem:[%s165 + $0x18] sm:$0xe0]
      %v2260 = vld [vmem:[%s165 + $0x40] sm:$0x1f]
      %v2261 = vld [vmem:[%s165 + $0x48] sm:$0x1f]
      %v2262 = vpack.c.bf16 %v1962, %v2258
      %v2263 = vpack.c.bf16 %v1963, %v2259
      %v2264 = vpack.c.bf16 %v2260, %v1964
      %v2265 = vpack.c.bf16 %v2261, %v1965
      %s2266 = scalar_lea.vmem %s1, 1792
      %v2267 = vld [vmem:[%s2266] sm:$0xff]
      %v2268 = vld [vmem:[%s2266 + $0x8] sm:$0xff]
      %v2269 = vld [vmem:[%s2266 + $0x10] sm:$0xff]
      %v2270 = vld [vmem:[%s2266 + $0x18] sm:$0xff]
      %v2271 = vld [vmem:[%s2266 + $0x20] sm:$0xff]
      %v2272 = vld [vmem:[%s2266 + $0x28] sm:$0xff]
      %v2273 = vld [vmem:[%s2266 + $0x30] sm:$0xff]
      %v2274 = vld [vmem:[%s2266 + $0x38] sm:$0xff]
      %v2275 = vld [vmem:[%s2266 + $0x40] sm:$0xff]
      %v2276 = vld [vmem:[%s2266 + $0x48] sm:$0xff]
      %v2277 = vld [vmem:[%s2266 + $0x50] sm:$0xff]
      %v2278 = vld [vmem:[%s2266 + $0x58] sm:$0xff]
      %v2279 = vld [vmem:[%s2266 + $0x60] sm:$0xff]
      %v2280 = vld [vmem:[%s2266 + $0x68] sm:$0xff]
      %v2281 = vld [vmem:[%s2266 + $0x70] sm:$0xff]
      %v2282 = vld [vmem:[%s2266 + $0x78] sm:$0xff]
      %v2283 = vld [vmem:[%s2266 + $0x80] sm:$0xff]
      %v2284 = vld [vmem:[%s2266 + $0x88] sm:$0xff]
      %v2285 = vld [vmem:[%s2266 + $0x90] sm:$0xff]
      %v2286 = vld [vmem:[%s2266 + $0x98] sm:$0xff]
      %v2287 = vld [vmem:[%s2266 + $0xa0] sm:$0xff]
      %v2288 = vld [vmem:[%s2266 + $0xa8] sm:$0xff]
      %v2289 = vld [vmem:[%s2266 + $0xb0] sm:$0xff]
      %v2290 = vld [vmem:[%s2266 + $0xb8] sm:$0xff]
      %v2291 = vld [vmem:[%s2266 + $0xc0] sm:$0xff]
      %v2292 = vld [vmem:[%s2266 + $0xc8] sm:$0xff]
      %v2293 = vld [vmem:[%s2266 + $0xd0] sm:$0xff]
      %v2294 = vld [vmem:[%s2266 + $0xd8] sm:$0xff]
      %v2295 = vld [vmem:[%s2266 + $0xe0] sm:$0xff]
      %v2296 = vld [vmem:[%s2266 + $0xe8] sm:$0xff]
      %v2297 = vld [vmem:[%s2266 + $0xf0] sm:$0xff]
      %v2298 = vld [vmem:[%s2266 + $0xf8] sm:$0xff]
      %vm2299 = vsmask.f32 5376
      %v2301 = vshrl.u32 %v2262, 16
      %v2303 = vrot.slane %v2301, 2
      %v2304 = vshll.u32 %v2262, 16
      %v2306 = vrot.slane %v2304, 3
      %v2307 = vor.u32 %v2303, %v2306
      %v2309 = vshrl.u32 %v2264, 16
      %v2311 = vrot.slane %v2309, 2
      %v2312 = vshll.u32 %v2264, 16
      %v2314 = vrot.slane %v2312, 3
      %v2315 = vor.u32 %v2311, %v2314
      %v2316 = vsel %vm2299, %v2307, %v2315
      %v2318 = vshrl.u32 %v2263, 16
      %v2320 = vrot.slane %v2318, 2
      %v2321 = vshll.u32 %v2263, 16
      %v2323 = vrot.slane %v2321, 3
      %v2324 = vor.u32 %v2320, %v2323
      %v2326 = vshrl.u32 %v2265, 16
      %v2328 = vrot.slane %v2326, 2
      %v2329 = vshll.u32 %v2265, 16
      %v2331 = vrot.slane %v2329, 3
      %v2332 = vor.u32 %v2328, %v2331
      %v2333 = vsel %vm2299, %v2324, %v2332
      %v2370 = vunpack.c.l.b16 %v2267
      %v2371 = vunpack.c.h.b16 %v2267
      %v2372 = vunpack.c.l.b16 %v2268
      %v2373 = vunpack.c.h.b16 %v2268
      %v2374 = vunpack.c.l.b16 %v2269
      %v2375 = vunpack.c.h.b16 %v2269
      %v2376 = vunpack.c.l.b16 %v2270
      %v2377 = vunpack.c.h.b16 %v2270
      %v2378 = vunpack.c.l.b16 %v2271
      %v2379 = vunpack.c.h.b16 %v2271
      %v2380 = vunpack.c.l.b16 %v2272
      %v2381 = vunpack.c.h.b16 %v2272
      %v2382 = vunpack.c.l.b16 %v2273
      %v2383 = vunpack.c.h.b16 %v2273
      %v2384 = vunpack.c.l.b16 %v2274
      %v2385 = vunpack.c.h.b16 %v2274
      %v2386 = vunpack.c.l.b16 %v2275
      %v2387 = vunpack.c.h.b16 %v2275
      %v2388 = vunpack.c.l.b16 %v2276
      %v2389 = vunpack.c.h.b16 %v2276
      %v2390 = vunpack.c.l.b16 %v2277
      %v2391 = vunpack.c.h.b16 %v2277
      %v2392 = vunpack.c.l.b16 %v2278
      %v2393 = vunpack.c.h.b16 %v2278
      %v2394 = vunpack.c.l.b16 %v2279
      %v2395 = vunpack.c.h.b16 %v2279
      %v2396 = vunpack.c.l.b16 %v2280
      %v2397 = vunpack.c.h.b16 %v2280
      %v2398 = vunpack.c.l.b16 %v2281
      %v2399 = vunpack.c.h.b16 %v2281
      %v2400 = vunpack.c.l.b16 %v2282
      %v2401 = vunpack.c.h.b16 %v2282
      %v2402 = vunpack.c.l.b16 %v2283
      %v2403 = vunpack.c.h.b16 %v2283
      %v2404 = vunpack.c.l.b16 %v2284
      %v2405 = vunpack.c.h.b16 %v2284
      %v2406 = vunpack.c.l.b16 %v2285
      %v2407 = vunpack.c.h.b16 %v2285
      %v2408 = vunpack.c.l.b16 %v2286
      %v2409 = vunpack.c.h.b16 %v2286
      %v2410 = vunpack.c.l.b16 %v2287
      %v2411 = vunpack.c.h.b16 %v2287
      %v2412 = vunpack.c.l.b16 %v2288
      %v2413 = vunpack.c.h.b16 %v2288
      %v2414 = vunpack.c.l.b16 %v2289
      %v2415 = vunpack.c.h.b16 %v2289
      %v2416 = vunpack.c.l.b16 %v2290
      %v2417 = vunpack.c.h.b16 %v2290
      %v2418 = vunpack.c.l.b16 %v2291
      %v2419 = vunpack.c.h.b16 %v2291
      %v2420 = vunpack.c.l.b16 %v2292
      %v2421 = vunpack.c.h.b16 %v2292
      %v2422 = vunpack.c.l.b16 %v2293
      %v2423 = vunpack.c.h.b16 %v2293
      %v2424 = vunpack.c.l.b16 %v2294
      %v2425 = vunpack.c.h.b16 %v2294
      %v2426 = vunpack.c.l.b16 %v2295
      %v2427 = vunpack.c.h.b16 %v2295
      %v2428 = vunpack.c.l.b16 %v2296
      %v2429 = vunpack.c.h.b16 %v2296
      %v2430 = vunpack.c.l.b16 %v2297
      %v2431 = vunpack.c.h.b16 %v2297
      %v2432 = vunpack.c.l.b16 %v2298
      %v2433 = vunpack.c.h.b16 %v2298
      %v2434 = vpack.c.b16 %v2372, %v2370
      %v2435 = vpack.c.b16 %v2373, %v2371
      %v2436 = vpack.c.b16 %v2376, %v2374
      %v2437 = vpack.c.b16 %v2377, %v2375
      %v2438 = vpack.c.b16 %v2380, %v2378
      %v2439 = vpack.c.b16 %v2381, %v2379
      %v2440 = vpack.c.b16 %v2384, %v2382
      %v2441 = vpack.c.b16 %v2385, %v2383
      %v2442 = vpack.c.b16 %v2388, %v2386
      %v2443 = vpack.c.b16 %v2389, %v2387
      %v2444 = vpack.c.b16 %v2392, %v2390
      %v2445 = vpack.c.b16 %v2393, %v2391
      %v2446 = vpack.c.b16 %v2396, %v2394
      %v2447 = vpack.c.b16 %v2397, %v2395
      %v2448 = vpack.c.b16 %v2400, %v2398
      %v2449 = vpack.c.b16 %v2401, %v2399
      %v2450 = vpack.c.b16 %v2404, %v2402
      %v2451 = vpack.c.b16 %v2405, %v2403
      %v2452 = vpack.c.b16 %v2408, %v2406
      %v2453 = vpack.c.b16 %v2409, %v2407
      %v2454 = vpack.c.b16 %v2412, %v2410
      %v2455 = vpack.c.b16 %v2413, %v2411
      %v2456 = vpack.c.b16 %v2416, %v2414
      %v2457 = vpack.c.b16 %v2417, %v2415
      %v2458 = vpack.c.b16 %v2420, %v2418
      %v2459 = vpack.c.b16 %v2421, %v2419
      %v2460 = vpack.c.b16 %v2424, %v2422
      %v2461 = vpack.c.b16 %v2425, %v2423
      %v2462 = vpack.c.b16 %v2428, %v2426
      %v2463 = vpack.c.b16 %v2429, %v2427
      %v2464 = vpack.c.b16 %v2432, %v2430
      %v2465 = vpack.c.b16 %v2433, %v2431
      %2498 = vmatpush.bf16.msra.mxu0 %v2448
      %2499 = vmatpush.bf16.msra.mxu0 %v2446
      %2500 = vmatpush.bf16.msra.mxu0 %v2444
      %2501 = vmatpush.bf16.msra.mxu0 %v2442
      %2502 = vmatpush.bf16.msra.mxu0 %v2440
      %2503 = vmatpush.bf16.msra.mxu0 %v2438
      %2504 = vmatpush.bf16.msra.mxu0 %v2436
      %2505 = vmatpush.bf16.msra.mxu0 %v2434
      %2506 = vmatmul.bf16.gmra.mxu0 %v2316
      %v2507 = vpop.f32.mrf.mxu0
      %v2508 = vadd.f32 0.0, %v2507
      %v2509 = vpop.f32.mrf.mxu0
      %v2510 = vadd.f32 0.0, %v2509
      %2511 = vmatmul.bf16.gmra.mxu0 %v2315
      %v2512 = vpop.f32.mrf.mxu0
      %v2513 = vadd.f32 0.0, %v2512
      %v2514 = vpop.f32.mrf.mxu0
      %2515 = vdwg.mxu0
      %2516 = vmatpush.bf16.msra.mxu0 %v2464
      %2517 = vmatpush.bf16.msra.mxu0 %v2462
      %2518 = vmatpush.bf16.msra.mxu0 %v2460
      %2519 = vmatpush.bf16.msra.mxu0 %v2458
      %2520 = vmatpush.bf16.msra.mxu0 %v2456
      %2521 = vmatpush.bf16.msra.mxu0 %v2454
      %2522 = vmatpush.bf16.msra.mxu0 %v2452
      %2523 = vmatpush.bf16.msra.mxu0 %v2450
      %2524 = vmatmul.bf16.gmra.mxu0 %v2333
      %v2525 = vpop.f32.mrf.mxu0
      %v2526 = vadd.f32 %v2508, %v2525
      %v2527 = vpop.f32.mrf.mxu0
      %v2528 = vadd.f32 %v2510, %v2527
      %2529 = vmatmul.bf16.gmra.mxu0 %v2332
      %v2530 = vpop.f32.mrf.mxu0
      %v2531 = vadd.f32 %v2513, %v2530
      %v2532 = vpop.f32.mrf.mxu0
      %2533 = vdwg.mxu0
      %2534 = vmatpush.bf16.msra.mxu0 %v2449
      %2535 = vmatpush.bf16.msra.mxu0 %v2447
      %2536 = vmatpush.bf16.msra.mxu0 %v2445
      %2537 = vmatpush.bf16.msra.mxu0 %v2443
      %2538 = vmatpush.bf16.msra.mxu0 %v2441
      %2539 = vmatpush.bf16.msra.mxu0 %v2439
      %2540 = vmatpush.bf16.msra.mxu0 %v2437
      %2541 = vmatpush.bf16.msra.mxu0 %v2435
      %2542 = vmatmul.bf16.gmra.mxu0 %v2316
      %v2543 = vpop.f32.mrf.mxu0
      %v2544 = vadd.f32 0.0, %v2543
      %v2545 = vpop.f32.mrf.mxu0
      %v2546 = vadd.f32 0.0, %v2545
      %2547 = vmatmul.bf16.gmra.mxu0 %v2315
      %v2548 = vpop.f32.mrf.mxu0
      %v2549 = vadd.f32 0.0, %v2548
      %v2550 = vpop.f32.mrf.mxu0
      %2551 = vdwg.mxu0
      %2552 = vmatpush.bf16.msra.mxu0 %v2465
      %2553 = vmatpush.bf16.msra.mxu0 %v2463
      %2554 = vmatpush.bf16.msra.mxu0 %v2461
      %2555 = vmatpush.bf16.msra.mxu0 %v2459
      %2556 = vmatpush.bf16.msra.mxu0 %v2457
      %2557 = vmatpush.bf16.msra.mxu0 %v2455
      %2558 = vmatpush.bf16.msra.mxu0 %v2453
      %2559 = vmatpush.bf16.msra.mxu0 %v2451
      %2560 = vmatmul.bf16.gmra.mxu0 %v2333
      %v2561 = vpop.f32.mrf.mxu0
      %v2562 = vadd.f32 %v2544, %v2561
      %v2563 = vpop.f32.mrf.mxu0
      %v2564 = vadd.f32 %v2546, %v2563
      %2565 = vmatmul.bf16.gmra.mxu0 %v2332
      %v2566 = vpop.f32.mrf.mxu0
      %v2567 = vadd.f32 %v2549, %v2566
      %v2568 = vpop.f32.mrf.mxu0
      %2569 = vdwg.mxu0
      %v2570 = vadd.f32 %v2252, %v2526
      %v2571 = vadd.f32 %v2253, %v2562
      %v2572 = vadd.f32 %v2254, %v2528
      %v2573 = vadd.f32 %v2255, %v2564
      %v2574 = vadd.f32 %v2256, %v2531
      %v2575 = vadd.f32 %v2257, %v2567
      %v2576 = vld [vmem:[%s165 + $0x10] sm:$0xc0]
      %v2577 = vld [vmem:[%s165 + $0x18] sm:$0xc0]
      %v2578 = vld [vmem:[%s165 + $0x40] sm:$0x3f]
      %v2579 = vld [vmem:[%s165 + $0x48] sm:$0x3f]
      %v2580 = vpack.c.bf16 %v1962, %v2576
      %v2581 = vpack.c.bf16 %v1963, %v2577
      %v2582 = vpack.c.bf16 %v2578, %v1964
      %v2583 = vpack.c.bf16 %v2579, %v1965
      %s2584 = scalar_lea.vmem %s1, 2048
      %v2585 = vld [vmem:[%s2584] sm:$0xff]
      %v2586 = vld [vmem:[%s2584 + $0x8] sm:$0xff]
      %v2587 = vld [vmem:[%s2584 + $0x10] sm:$0xff]
      %v2588 = vld [vmem:[%s2584 + $0x18] sm:$0xff]
      %v2589 = vld [vmem:[%s2584 + $0x20] sm:$0xff]
      %v2590 = vld [vmem:[%s2584 + $0x28] sm:$0xff]
      %v2591 = vld [vmem:[%s2584 + $0x30] sm:$0xff]
      %v2592 = vld [vmem:[%s2584 + $0x38] sm:$0xff]
      %v2593 = vld [vmem:[%s2584 + $0x40] sm:$0xff]
      %v2594 = vld [vmem:[%s2584 + $0x48] sm:$0xff]
      %v2595 = vld [vmem:[%s2584 + $0x50] sm:$0xff]
      %v2596 = vld [vmem:[%s2584 + $0x58] sm:$0xff]
      %v2597 = vld [vmem:[%s2584 + $0x60] sm:$0xff]
      %v2598 = vld [vmem:[%s2584 + $0x68] sm:$0xff]
      %v2599 = vld [vmem:[%s2584 + $0x70] sm:$0xff]
      %v2600 = vld [vmem:[%s2584 + $0x78] sm:$0xff]
      %v2601 = vld [vmem:[%s2584 + $0x80] sm:$0xff]
      %v2602 = vld [vmem:[%s2584 + $0x88] sm:$0xff]
      %v2603 = vld [vmem:[%s2584 + $0x90] sm:$0xff]
      %v2604 = vld [vmem:[%s2584 + $0x98] sm:$0xff]
      %v2605 = vld [vmem:[%s2584 + $0xa0] sm:$0xff]
      %v2606 = vld [vmem:[%s2584 + $0xa8] sm:$0xff]
      %v2607 = vld [vmem:[%s2584 + $0xb0] sm:$0xff]
      %v2608 = vld [vmem:[%s2584 + $0xb8] sm:$0xff]
      %v2609 = vld [vmem:[%s2584 + $0xc0] sm:$0xff]
      %v2610 = vld [vmem:[%s2584 + $0xc8] sm:$0xff]
      %v2611 = vld [vmem:[%s2584 + $0xd0] sm:$0xff]
      %v2612 = vld [vmem:[%s2584 + $0xd8] sm:$0xff]
      %v2613 = vld [vmem:[%s2584 + $0xe0] sm:$0xff]
      %v2614 = vld [vmem:[%s2584 + $0xe8] sm:$0xff]
      %v2615 = vld [vmem:[%s2584 + $0xf0] sm:$0xff]
      %v2616 = vld [vmem:[%s2584 + $0xf8] sm:$0xff]
      %v2621 = vrot.slane %v2580, 3
      %v2622 = vrot.slane %v2582, 3
      %v2623 = vsel %vm1116, %v2621, %v2622
      %v2624 = vrot.slane %v2581, 3
      %v2625 = vrot.slane %v2583, 3
      %v2626 = vsel %vm1116, %v2624, %v2625
      %v2663 = vunpack.c.l.b16 %v2585
      %v2664 = vunpack.c.h.b16 %v2585
      %v2665 = vunpack.c.l.b16 %v2586
      %v2666 = vunpack.c.h.b16 %v2586
      %v2667 = vunpack.c.l.b16 %v2587
      %v2668 = vunpack.c.h.b16 %v2587
      %v2669 = vunpack.c.l.b16 %v2588
      %v2670 = vunpack.c.h.b16 %v2588
      %v2671 = vunpack.c.l.b16 %v2589
      %v2672 = vunpack.c.h.b16 %v2589
      %v2673 = vunpack.c.l.b16 %v2590
      %v2674 = vunpack.c.h.b16 %v2590
      %v2675 = vunpack.c.l.b16 %v2591
      %v2676 = vunpack.c.h.b16 %v2591
      %v2677 = vunpack.c.l.b16 %v2592
      %v2678 = vunpack.c.h.b16 %v2592
      %v2679 = vunpack.c.l.b16 %v2593
      %v2680 = vunpack.c.h.b16 %v2593
      %v2681 = vunpack.c.l.b16 %v2594
      %v2682 = vunpack.c.h.b16 %v2594
      %v2683 = vunpack.c.l.b16 %v2595
      %v2684 = vunpack.c.h.b16 %v2595
      %v2685 = vunpack.c.l.b16 %v2596
      %v2686 = vunpack.c.h.b16 %v2596
      %v2687 = vunpack.c.l.b16 %v2597
      %v2688 = vunpack.c.h.b16 %v2597
      %v2689 = vunpack.c.l.b16 %v2598
      %v2690 = vunpack.c.h.b16 %v2598
      %v2691 = vunpack.c.l.b16 %v2599
      %v2692 = vunpack.c.h.b16 %v2599
      %v2693 = vunpack.c.l.b16 %v2600
      %v2694 = vunpack.c.h.b16 %v2600
      %v2695 = vunpack.c.l.b16 %v2601
      %v2696 = vunpack.c.h.b16 %v2601
      %v2697 = vunpack.c.l.b16 %v2602
      %v2698 = vunpack.c.h.b16 %v2602
      %v2699 = vunpack.c.l.b16 %v2603
      %v2700 = vunpack.c.h.b16 %v2603
      %v2701 = vunpack.c.l.b16 %v2604
      %v2702 = vunpack.c.h.b16 %v2604
      %v2703 = vunpack.c.l.b16 %v2605
      %v2704 = vunpack.c.h.b16 %v2605
      %v2705 = vunpack.c.l.b16 %v2606
      %v2706 = vunpack.c.h.b16 %v2606
      %v2707 = vunpack.c.l.b16 %v2607
      %v2708 = vunpack.c.h.b16 %v2607
      %v2709 = vunpack.c.l.b16 %v2608
      %v2710 = vunpack.c.h.b16 %v2608
      %v2711 = vunpack.c.l.b16 %v2609
      %v2712 = vunpack.c.h.b16 %v2609
      %v2713 = vunpack.c.l.b16 %v2610
      %v2714 = vunpack.c.h.b16 %v2610
      %v2715 = vunpack.c.l.b16 %v2611
      %v2716 = vunpack.c.h.b16 %v2611
      %v2717 = vunpack.c.l.b16 %v2612
      %v2718 = vunpack.c.h.b16 %v2612
      %v2719 = vunpack.c.l.b16 %v2613
      %v2720 = vunpack.c.h.b16 %v2613
      %v2721 = vunpack.c.l.b16 %v2614
      %v2722 = vunpack.c.h.b16 %v2614
      %v2723 = vunpack.c.l.b16 %v2615
      %v2724 = vunpack.c.h.b16 %v2615
      %v2725 = vunpack.c.l.b16 %v2616
      %v2726 = vunpack.c.h.b16 %v2616
      %v2727 = vpack.c.b16 %v2665, %v2663
      %v2728 = vpack.c.b16 %v2666, %v2664
      %v2729 = vpack.c.b16 %v2669, %v2667
      %v2730 = vpack.c.b16 %v2670, %v2668
      %v2731 = vpack.c.b16 %v2673, %v2671
      %v2732 = vpack.c.b16 %v2674, %v2672
      %v2733 = vpack.c.b16 %v2677, %v2675
      %v2734 = vpack.c.b16 %v2678, %v2676
      %v2735 = vpack.c.b16 %v2681, %v2679
      %v2736 = vpack.c.b16 %v2682, %v2680
      %v2737 = vpack.c.b16 %v2685, %v2683
      %v2738 = vpack.c.b16 %v2686, %v2684
      %v2739 = vpack.c.b16 %v2689, %v2687
      %v2740 = vpack.c.b16 %v2690, %v2688
      %v2741 = vpack.c.b16 %v2693, %v2691
      %v2742 = vpack.c.b16 %v2694, %v2692
      %v2743 = vpack.c.b16 %v2697, %v2695
      %v2744 = vpack.c.b16 %v2698, %v2696
      %v2745 = vpack.c.b16 %v2701, %v2699
      %v2746 = vpack.c.b16 %v2702, %v2700
      %v2747 = vpack.c.b16 %v2705, %v2703
      %v2748 = vpack.c.b16 %v2706, %v2704
      %v2749 = vpack.c.b16 %v2709, %v2707
      %v2750 = vpack.c.b16 %v2710, %v2708
      %v2751 = vpack.c.b16 %v2713, %v2711
      %v2752 = vpack.c.b16 %v2714, %v2712
      %v2753 = vpack.c.b16 %v2717, %v2715
      %v2754 = vpack.c.b16 %v2718, %v2716
      %v2755 = vpack.c.b16 %v2721, %v2719
      %v2756 = vpack.c.b16 %v2722, %v2720
      %v2757 = vpack.c.b16 %v2725, %v2723
      %v2758 = vpack.c.b16 %v2726, %v2724
      %2791 = vmatpush.bf16.msra.mxu0 %v2741
      %2792 = vmatpush.bf16.msra.mxu0 %v2739
      %2793 = vmatpush.bf16.msra.mxu0 %v2737
      %2794 = vmatpush.bf16.msra.mxu0 %v2735
      %2795 = vmatpush.bf16.msra.mxu0 %v2733
      %2796 = vmatpush.bf16.msra.mxu0 %v2731
      %2797 = vmatpush.bf16.msra.mxu0 %v2729
      %2798 = vmatpush.bf16.msra.mxu0 %v2727
      %2799 = vmatmul.bf16.gmra.mxu0 %v2623
      %v2800 = vpop.f32.mrf.mxu0
      %v2801 = vadd.f32 0.0, %v2800
      %v2802 = vpop.f32.mrf.mxu0
      %v2803 = vadd.f32 0.0, %v2802
      %2804 = vmatmul.bf16.gmra.mxu0 %v2622
      %v2805 = vpop.f32.mrf.mxu0
      %v2806 = vadd.f32 0.0, %v2805
      %v2807 = vpop.f32.mrf.mxu0
      %2808 = vdwg.mxu0
      %2809 = vmatpush.bf16.msra.mxu0 %v2757
      %2810 = vmatpush.bf16.msra.mxu0 %v2755
      %2811 = vmatpush.bf16.msra.mxu0 %v2753
      %2812 = vmatpush.bf16.msra.mxu0 %v2751
      %2813 = vmatpush.bf16.msra.mxu0 %v2749
      %2814 = vmatpush.bf16.msra.mxu0 %v2747
      %2815 = vmatpush.bf16.msra.mxu0 %v2745
      %2816 = vmatpush.bf16.msra.mxu0 %v2743
      %2817 = vmatmul.bf16.gmra.mxu0 %v2626
      %v2818 = vpop.f32.mrf.mxu0
      %v2819 = vadd.f32 %v2801, %v2818
      %v2820 = vpop.f32.mrf.mxu0
      %v2821 = vadd.f32 %v2803, %v2820
      %2822 = vmatmul.bf16.gmra.mxu0 %v2625
      %v2823 = vpop.f32.mrf.mxu0
      %v2824 = vadd.f32 %v2806, %v2823
      %v2825 = vpop.f32.mrf.mxu0
      %2826 = vdwg.mxu0
      %2827 = vmatpush.bf16.msra.mxu0 %v2742
      %2828 = vmatpush.bf16.msra.mxu0 %v2740
      %2829 = vmatpush.bf16.msra.mxu0 %v2738
      %2830 = vmatpush.bf16.msra.mxu0 %v2736
      %2831 = vmatpush.bf16.msra.mxu0 %v2734
      %2832 = vmatpush.bf16.msra.mxu0 %v2732
      %2833 = vmatpush.bf16.msra.mxu0 %v2730
      %2834 = vmatpush.bf16.msra.mxu0 %v2728
      %2835 = vmatmul.bf16.gmra.mxu0 %v2623
      %v2836 = vpop.f32.mrf.mxu0
      %v2837 = vadd.f32 0.0, %v2836
      %v2838 = vpop.f32.mrf.mxu0
      %v2839 = vadd.f32 0.0, %v2838
      %2840 = vmatmul.bf16.gmra.mxu0 %v2622
      %v2841 = vpop.f32.mrf.mxu0
      %v2842 = vadd.f32 0.0, %v2841
      %v2843 = vpop.f32.mrf.mxu0
      %2844 = vdwg.mxu0
      %2845 = vmatpush.bf16.msra.mxu0 %v2758
      %2846 = vmatpush.bf16.msra.mxu0 %v2756
      %2847 = vmatpush.bf16.msra.mxu0 %v2754
      %2848 = vmatpush.bf16.msra.mxu0 %v2752
      %2849 = vmatpush.bf16.msra.mxu0 %v2750
      %2850 = vmatpush.bf16.msra.mxu0 %v2748
      %2851 = vmatpush.bf16.msra.mxu0 %v2746
      %2852 = vmatpush.bf16.msra.mxu0 %v2744
      %2853 = vmatmul.bf16.gmra.mxu0 %v2626
      %v2854 = vpop.f32.mrf.mxu0
      %v2855 = vadd.f32 %v2837, %v2854
      %v2856 = vpop.f32.mrf.mxu0
      %v2857 = vadd.f32 %v2839, %v2856
      %2858 = vmatmul.bf16.gmra.mxu0 %v2625
      %v2859 = vpop.f32.mrf.mxu0
      %v2860 = vadd.f32 %v2842, %v2859
      %v2861 = vpop.f32.mrf.mxu0
      %2862 = vdwg.mxu0
      %v2863 = vadd.f32 %v2570, %v2819
      %v2864 = vadd.f32 %v2571, %v2855
      %v2865 = vadd.f32 %v2572, %v2821
      %v2866 = vadd.f32 %v2573, %v2857
      %v2867 = vadd.f32 %v2574, %v2824
      %v2868 = vadd.f32 %v2575, %v2860
      %v2869 = vmax.f32 %v2863, 0.0
      %v2870 = vmax.f32 %v2864, 0.0
      %v2871 = vmax.f32 %v2865, 0.0
      %v2872 = vmax.f32 %v2866, 0.0
      %v2873 = vmax.f32 %v2867, 0.0
      %v2874 = vmax.f32 %v2868, 0.0
      %2875 = vst [vmem:[%s170] sm:$0xff] %v2869
      %2876 = vst [vmem:[%s170 + $0x8] sm:$0xff] %v2870
      %2877 = vst [vmem:[%s170 + $0x10] sm:$0xff] %v2871
      %2878 = vst [vmem:[%s170 + $0x18] sm:$0xff] %v2872
      %2879 = vst [vmem:[%s170 + $0x20] sm:$0xff] %v2873
      %2880 = vst [vmem:[%s170 + $0x28] sm:$0xff] %v2874
      %p2881 = scmp.lt.s32.totalorder %s14, 2
      %s2882 = scalar_select %p2881, %s14, 2
      %s2883 = smul.addr %s2882, 6
      %s2884 = smul.addr %s2883, 8
      %s2885 = scalar_lea.vmem %s3, %s2884
      // Predicated region
      $region33: #{repnet_forward.11} parent=31 // pred_check
        %p2886 = pneg %p100
      $region34: #{repnet_forward.11} parent=31 // pred_check_branch
        %2888 = sbr.rel (%p2886) target = $region36
      $region35: #{repnet_forward.11} parent=31 // pred_region
        _
      $region36: #{repnet_forward.11} parent=31 // pred_fallthru
        _
    $region32: #{repnet_forward.11} parent=5 // pred_fallthru
      _
    %p2889 = scmp.le.s32.totalorder 2, %s9
    // Predicated region
    $region37: #{repnet_forward.11} parent=5 // pred_check
      %p2890 = pneg %p2889
    $region38: #{repnet_forward.11} parent=5 // pred_check_branch
      %2892 = sbr.rel (%p2890) target = $region40
    $region39: #{repnet_forward.11} parent=5 // pred_region
      %s2893 = ssub.s32 %s9, 2
      // Predicated region
      $region41: #{repnet_forward.11} parent=39 // pred_check
        %p2894 = pneg %p106
      $region42: #{repnet_forward.11} parent=39 // pred_check_branch
        %2896 = sbr.rel (%p2894) target = $region44
      $region43: #{repnet_forward.11} parent=39 // pred_region
        %p2897 = scmp.lt.s32.totalorder %s15, 2
        %s2898 = scalar_select %p2897, %s15, 2
        %s2899 = smul.addr %s2898, 6
        %s2900 = smul.addr %s2899, 8
        %s2901 = scalar_lea.vmem %s3, %s2900
      $region44: #{repnet_forward.11} parent=39 // pred_fallthru
        _
    $region40: #{repnet_forward.11} parent=5 // pred_fallthru
      _
  $region6: #{repnet_forward.11} parent=0 // loop_footer
    %s13 = sadd.s32 1, %s9
  $region7: #{repnet_forward.11} parent=0 // loop_footer_branch
    %8 = sbr.rel target = $region3
  $region8: #{repnet_forward.11} parent=0 // loop_exit
    _

</llo_original>
